<compile_context>
chip_gen: v6e
topology: v6e:2x2x1
jax: 0.10.0
libtpu: 0.0.40
codegen_flags: <defaults>
</compile_context>

<pallas_src>
import jax
import jax.numpy as jnp
from jax import lax
from jax.experimental import pallas as pl
from jax.experimental.pallas import tpu as pltpu


# ----------------------------- helpers ---------------------------------------

def _round_up(v, m):
    return ((v + m - 1) // m) * m


def _pack_gates(w_t, H, Hp, rows=None):
    """(rows_in, 4H) with columns [i|f|g|o] -> zero-padded (rows, 4*Hp).

    Gate g's H columns land at lanes [g*Hp, g*Hp + H); everything else is zero, so
    padded hidden lanes stay exactly 0 through the recurrence."""
    rows_in = w_t.shape[0]
    rows = rows_in if rows is None else rows
    out = jnp.zeros((rows, 4 * Hp), w_t.dtype)
    for g in range(4):
        out = out.at[:rows_in, g * Hp:g * Hp + H].set(w_t[:, g * H:(g + 1) * H])
    return out


def _full_spec(a):
    nd = a.ndim
    return pl.BlockSpec(a.shape, lambda i, _z=(0,) * nd: _z)


# ----------------------------- fused Pallas kernel ---------------------------

def _make_fused_lstm_kernel(L, T, Bt, Hp, matmul_dtype):
    """Fused (all layers, wavefronted) + FC + sigmoid kernel for fixed shapes."""
    G = 4 * Hp

    def mm(a, b):
        # MXU matmul: operands in matmul_dtype (bf16 default), f32 accumulation.
        return jnp.dot(a.astype(matmul_dtype), b, preferred_element_type=jnp.float32)

    def kernel(*refs):
        # ref layout:
        #   [0]                      x       (T, Bt, D) or (T*Bt, D), f32, time-major
        #   [1+3l : 4+3l] layer l:   W_ih^T (Din,4Hp) mm_dtype, W_hh^T (Hp,4Hp) mm_dtype,
        #                            bias (1,4Hp) f32  (= b_ih + b_hh, gate-grouped)
        #   [1+3L]                   fc_w^T  (Hp, O)  mm_dtype
        #   [2+3L]                   fc_b    (1, O)   f32
        #   [3+3L]                   out     (Bt, O)  f32
        #   [4+3L]  scratch          xz      (T*Bt, 4Hp) f32  (layer-0 projection)
        x_ref = refs[0]
        layer_refs = refs[1:1 + 3 * L]
        fcw_ref = refs[1 + 3 * L]
        fcb_ref = refs[2 + 3 * L]
        out_ref = refs[3 + 3 * L]
        xz_ref = refs[4 + 3 * L]

        wih_refs = [layer_refs[3 * l] for l in range(L)]
        whh_refs = [layer_refs[3 * l + 1] for l in range(L)]
        b_refs = [layer_refs[3 * l + 2] for l in range(L)]

        # Hoisted layer-0 input projection: ONE (T*Bt, D) @ (D, 4Hp) MXU matmul,
        # bias folded in once.  (Reshape only merges leading dims; Bt % 8 == 0.)
        xv = x_ref[...]
        x2 = xv.reshape(T * Bt, xv.shape[-1])
        xz_ref[...] = mm(x2, wih_refs[0][...]) + b_refs[0][...]

        # Per-step bias broadcast for layers > 0, hoisted out of the recurrence
        # (JAX does not CSE broadcast_in_dim inside the unrolled loop).
        biasb = [None] + [jnp.broadcast_to(b_refs[l][...], (Bt, G)) for l in range(1, L)]

        def cell(z, c):
            # Gate groups are 128-lane aligned -> pure vreg slices (no XLU rotates).
            # PyTorch gate order [i, f, g, o]; all elementwise math stays f32.
            i = jax.nn.sigmoid(z[:, 0 * Hp:1 * Hp])
            f = jax.nn.sigmoid(z[:, 1 * Hp:2 * Hp])
            g = jnp.tanh(z[:, 2 * Hp:3 * Hp])
            o = jax.nn.sigmoid(z[:, 3 * Hp:4 * Hp])
            c_new = f * c + i * g
            return o * jnp.tanh(c_new), c_new

        # Layer wavefront: at step s, layer l processes timestep t = s - l.
        # All reads use the PREVIOUS step's carry (hs/cs), so layer l sees
        # h_{l-1}(t), which layer l-1 produced at step s-1.
        S = T + L - 1

        def wstep(s, carry):
            hs, cs = carry
            new_h, new_c = list(hs), list(cs)
            for l in range(L):
                if l == 0:
                    t0 = jnp.minimum(s, T - 1)              # clamp; guarded below
                    row = pl.multiple_of(t0 * Bt, Bt)       # sublane-aligned slice
                    z = xz_ref[pl.ds(row, Bt), :] + mm(hs[0], whh_refs[0][...])
                else:
                    z = (mm(hs[l - 1], wih_refs[l][...])
                         + mm(hs[l], whh_refs[l][...])
                         + biasb[l])
                h_new, c_new = cell(z, cs[l])
                if L == 1:
                    new_h[l], new_c[l] = h_new, c_new
                else:
                    if l == 0:
                        active = s < T
                    elif l == L - 1:
                        active = s >= l
                    else:
                        active = jnp.logical_and(s >= l, s < l + T)
                    new_h[l] = jnp.where(active, h_new, hs[l])
                    new_c[l] = jnp.where(active, c_new, cs[l])
            return tuple(new_h), tuple(new_c)

        zeros = jnp.zeros((Bt, Hp), jnp.float32)            # zero h0/c0 (as in module)
        init = (tuple([zeros] * L), tuple([zeros] * L))
        unroll = True if S <= 32 else 8
        hs, _ = lax.fori_loop(0, S, wstep, init, unroll=unroll)

        # Fused FC + sigmoid on the last timestep's hidden state (out[:, -1, :]).
        logits = mm(hs[L - 1], fcw_ref[...]) + fcb_ref[...]
        out_ref[...] = jax.nn.sigmoid(logits)

    return kernel


# ----------------------------- wrapper ----------------------------------------

def lstm_model_forward(x, params, matmul_dtype=jnp.bfloat16):
    """Equivalent of LSTM.forward(x): multi-layer LSTM -> last step -> fc -> sigmoid."""
    x = jnp.asarray(x, jnp.float32)
    B, T, D = x.shape
    layers = params["layers"]
    L = len(layers)
    H = layers[0][1].shape[1]                       # w_hh: (4H, H)
    O = params["fc_w"].shape[0]
    Hp = _round_up(max(H, 128), 128)                # each gate padded to its own 128-lane group

    # Batch padding: 16 rows covers the bf16 (16,128) packed-sublane tile.
    B_pad = _round_up(max(B, 16), 16)
    # v7x: split the batch over 2 TensorCores when it is big enough for 16-row tiles per core.
    n_btiles = 2 if B_pad >= 32 else 1
    B_pad = _round_up(B_pad, 16 * n_btiles)
    bt = B_pad // n_btiles

    if B_pad != B:
        x = jnp.pad(x, ((0, B_pad - B), (0, 0), (0, 0)))
    x_tm = jnp.transpose(x, (1, 0, 2))              # (T, B_pad, D) time-major

    if n_btiles == 1:
        x_in = x_tm.reshape(T * B_pad, D)
        x_spec = _full_spec(x_in)
    else:
        x_in = x_tm
        x_spec = pl.BlockSpec((T, bt, D), lambda i: (0, i, 0))

    inputs = [x_in]
    for li, (w_ih, w_hh, b_ih, b_hh) in enumerate(layers):
        d_in = w_ih.shape[1]
        rows_in = d_in if li == 0 else Hp           # layers > 0 consume the Hp-padded h
        wih_t = _pack_gates(jnp.asarray(w_ih, jnp.float32).T, H, Hp, rows_in).astype(matmul_dtype)
        whh_t = _pack_gates(jnp.asarray(w_hh, jnp.float32).T, H, Hp, Hp).astype(matmul_dtype)
        bias = _pack_gates((jnp.asarray(b_ih, jnp.float32)
                            + jnp.asarray(b_hh, jnp.float32))[None, :], H, Hp)   # f32
        inputs += [wih_t, whh_t, bias]
    fcw_t = jnp.zeros((Hp, O), jnp.float32).at[:H, :].set(
        jnp.asarray(params["fc_w"], jnp.float32).T).astype(matmul_dtype)
    fcb = jnp.asarray(params["fc_b"], jnp.float32)[None, :]                      # f32
    inputs += [fcw_t, fcb]

    in_specs = [x_spec] + [_full_spec(a) for a in inputs[1:]]
    out_specs = pl.BlockSpec((bt, O), lambda i: (i, 0))

    # VMEM plan derived from actual buffer sizes (double-buffered blocks + scratch).
    def _nbytes(a):
        return int(a.size) * a.dtype.itemsize
    block_bytes = (T * bt * D * 4) + sum(_nbytes(a) for a in inputs[1:]) + bt * O * 4
    scratch_bytes = T * bt * 4 * Hp * 4
    needed = 2 * block_bytes + scratch_bytes
    vmem_limit = int(min(128 * 2 ** 20, max(32 * 2 ** 20, 2 * needed)))

    kernel = _make_fused_lstm_kernel(L, T, bt, Hp, matmul_dtype)

    out = pl.pallas_call(
        kernel,
        out_shape=jax.ShapeDtypeStruct((B_pad, O), jnp.float32),
        grid=(n_btiles,),
        in_specs=in_specs,
        out_specs=out_specs,
        scratch_shapes=[pltpu.VMEM((T * bt, 4 * Hp), jnp.float32)],
        compiler_params=pltpu.CompilerParams(
            dimension_semantics=("parallel",),      # batch tiles -> both v7x TensorCores
            vmem_limit_bytes=vmem_limit),
    )(*inputs)
    return out[:B]


# ----------------------------- param init -------------------------------------

def init_params(key, input_size, hidden_size, num_layers, output_size):
    """Deterministic init, PyTorch-style U(-1/sqrt(H), 1/sqrt(H))."""
    bound = 1.0 / jnp.sqrt(jnp.float32(hidden_size))
    layers = []
    for layer in range(num_layers):
        d_in = input_size if layer == 0 else hidden_size
        key, k1, k2, k3, k4 = jax.random.split(key, 5)
        w_ih = jax.random.uniform(k1, (4 * hidden_size, d_in), jnp.float32, -bound, bound)
        w_hh = jax.random.uniform(k2, (4 * hidden_size, hidden_size), jnp.float32, -bound, bound)
        b_ih = jax.random.uniform(k3, (4 * hidden_size,), jnp.float32, -bound, bound)
        b_hh = jax.random.uniform(k4, (4 * hidden_size,), jnp.float32, -bound, bound)
        layers.append((w_ih, w_hh, b_ih, b_hh))
    key, k1, k2 = jax.random.split(key, 3)
    fc_w = jax.random.uniform(k1, (output_size, hidden_size), jnp.float32, -bound, bound)
    fc_b = jax.random.uniform(k2, (output_size,), jnp.float32, -bound, bound)
    return {"layers": layers, "fc_w": fc_w, "fc_b": fc_b}


# ----------------------------- pure-JAX reference ------------------------------

def lstm_model_reference(x, params):
    P = jax.lax.Precision.HIGHEST
    h_seq = jnp.asarray(x, jnp.float32)
    for (w_ih, w_hh, b_ih, b_hh) in params["layers"]:
        B, T, _ = h_seq.shape
        H = w_hh.shape[1]

        def step(carry, x_t):
            h, c = carry
            z = (jnp.dot(x_t, w_ih.T, precision=P) + b_ih
                 + jnp.dot(h, w_hh.T, precision=P) + b_hh)
            i = jax.nn.sigmoid(z[:, 0 * H:1 * H])
            f = jax.nn.sigmoid(z[:, 1 * H:2 * H])
            g = jnp.tanh(z[:, 2 * H:3 * H])
            o = jax.nn.sigmoid(z[:, 3 * H:4 * H])
            c = f * c + i * g
            h = o * jnp.tanh(c)
            return (h, c), h

        init = (jnp.zeros((B, H), jnp.float32), jnp.zeros((B, H), jnp.float32))
        _, ys = lax.scan(step, init, jnp.swapaxes(h_seq, 0, 1))
        h_seq = jnp.swapaxes(ys, 0, 1)
    h_last = h_seq[:, -1, :]
    return jax.nn.sigmoid(jnp.dot(h_last, params["fc_w"].T, precision=P) + params["fc_b"])


# ----------------------------- main --------------------------------------------

if __name__ == "__main__":
    batch, seq, input_size = 8, 8, 16
    hidden_size, num_layers, output_size = 32, 2, 4

    key = jax.random.PRNGKey(0)
    key, kx = jax.random.split(key)
    x = jax.random.normal(kx, (batch, seq, input_size), jnp.float32)
    params = init_params(key, input_size, hidden_size, num_layers, output_size)

    ref = lstm_model_reference(x, params)

    # Exact-parity f32 path (tight tolerance)...
    out_f32 = jax.block_until_ready(lstm_model_forward(x, params, matmul_dtype=jnp.float32))
    # ...and the default fast bf16-MXU path (own, looser tolerance).
    out = jax.block_until_ready(lstm_model_forward(x, params))

    assert out.shape == (batch, output_size)
    assert bool(jnp.all(jnp.isfinite(out)))
    assert bool(jnp.all((out >= 0.0) & (out <= 1.0)))                 # sigmoid range
    assert bool(jnp.allclose(out_f32, ref, atol=1e-4, rtol=1e-4))     # f32 path: tight
    assert bool(jnp.allclose(out, ref, atol=3e-2, rtol=3e-2))         # bf16 path: bf16 tol
    print("KERNEL_OK")
</pallas_src>

<mosaic_0001>
module attributes {stable_mosaic.version = 11 : i64} {
  func.func @kernel(%arg0: i32, %arg1: memref<128x16xf32, #tpu.memory_space<vmem>>, %arg2: memref<16x512xf32, #tpu.memory_space<vmem>>, %arg3: memref<128x512xf32, #tpu.memory_space<vmem>>, %arg4: memref<1x512xf32, #tpu.memory_space<vmem>>, %arg5: memref<128x512xf32, #tpu.memory_space<vmem>>, %arg6: memref<128x512xf32, #tpu.memory_space<vmem>>, %arg7: memref<1x512xf32, #tpu.memory_space<vmem>>, %arg8: memref<128x4xf32, #tpu.memory_space<vmem>>, %arg9: memref<1x4xf32, #tpu.memory_space<vmem>>, %arg10: memref<16x4xf32, #tpu.memory_space<vmem>>, %arg11: memref<128x512xf32, #tpu.memory_space<vmem>>) attributes {dimension_semantics = [#tpu.dimension_semantics<parallel>], iteration_bounds = array<i64: 1>, scalar_prefetch = 0 : i64, scratch_operands = 1 : i64, tpu.core_type = #tpu.core_type<tc>, window_params = [{pipeline_mode = #tpu.pipeline_mode<synchronous>, transform_indices = @transform_0, window_bounds = array<i64: 128, 16>}, {pipeline_mode = #tpu.pipeline_mode<synchronous>, transform_indices = @transform_1, window_bounds = array<i64: 16, 512>}, {pipeline_mode = #tpu.pipeline_mode<synchronous>, transform_indices = @transform_2, window_bounds = array<i64: 128, 512>}, {pipeline_mode = #tpu.pipeline_mode<synchronous>, transform_indices = @transform_3, window_bounds = array<i64: 1, 512>}, {pipeline_mode = #tpu.pipeline_mode<synchronous>, transform_indices = @transform_4, window_bounds = array<i64: 128, 512>}, {pipeline_mode = #tpu.pipeline_mode<synchronous>, transform_indices = @transform_5, window_bounds = array<i64: 128, 512>}, {pipeline_mode = #tpu.pipeline_mode<synchronous>, transform_indices = @transform_6, window_bounds = array<i64: 1, 512>}, {pipeline_mode = #tpu.pipeline_mode<synchronous>, transform_indices = @transform_7, window_bounds = array<i64: 128, 4>}, {pipeline_mode = #tpu.pipeline_mode<synchronous>, transform_indices = @transform_8, window_bounds = array<i64: 1, 4>}, {transform_indices = @transform_9, window_bounds = array<i64: 16, 4>}]} {
    %c0 = arith.constant 0 : index
    %c0_0 = arith.constant 0 : index
    %0 = vector.load %arg1[%c0, %c0_0] : memref<128x16xf32, #tpu.memory_space<vmem>>, vector<128x16xf32>
    %c0_1 = arith.constant 0 : index
    %c0_2 = arith.constant 0 : index
    %1 = vector.load %arg2[%c0_1, %c0_2] : memref<16x512xf32, #tpu.memory_space<vmem>>, vector<16x512xf32>
    %cst = arith.constant dense<0.000000e+00> : vector<128x512xf32>
    %2 = tpu.matmul %0, %1, %cst {dimension_numbers = #tpu.dot_dimension_numbers<[1], [0], [0], [1], [0, 0, 1, 1], [], []>} : vector<128x16xf32>, vector<16x512xf32>, vector<128x512xf32> -> vector<128x512xf32>
    %c0_3 = arith.constant 0 : index
    %c0_4 = arith.constant 0 : index
    %3 = vector.load %arg4[%c0_3, %c0_4] : memref<1x512xf32, #tpu.memory_space<vmem>>, vector<1x512xf32>
    %4 = vector.broadcast %3 : vector<1x512xf32> to vector<128x512xf32>
    %5 = arith.addf %2, %4 : vector<128x512xf32>
    %c0_5 = arith.constant 0 : index
    %c0_6 = arith.constant 0 : index
    %6 = vector.load %arg11[%c0_5, %c0_6] : memref<128x512xf32, #tpu.memory_space<vmem>>, vector<128x512xf32>
    tpu.vector_store %arg11[%c0_5, %c0_6], %5 {strides = array<i32>} : memref<128x512xf32, #tpu.memory_space<vmem>>, vector<128x512xf32>,
    %c0_7 = arith.constant 0 : index
    %c0_8 = arith.constant 0 : index
    %7 = vector.load %arg7[%c0_7, %c0_8] : memref<1x512xf32, #tpu.memory_space<vmem>>, vector<1x512xf32>
    %8 = vector.shape_cast %7 : vector<1x512xf32> to vector<1x512xf32>
    %9 = vector.broadcast %8 : vector<1x512xf32> to vector<16x512xf32>
    %cst_9 = arith.constant 0.000000e+00 : f32
    %10 = vector.broadcast %cst_9 : f32 to vector<16x128xf32>
    %c0_i32 = arith.constant 0 : i32
    %c7_i32 = arith.constant 7 : i32
    %11 = arith.minsi %c0_i32, %c7_i32 : i32
    %c16_i32 = arith.constant 16 : i32
    %12 = arith.muli %11, %c16_i32 : i32
    %13 = tpu.assume_multiple %12, 16 : i32
    %14 = arith.index_cast %13 : i32 to index
    %c0_10 = arith.constant 0 : index
    %15 = vector.load %arg11[%14, %c0_10] : memref<128x512xf32, #tpu.memory_space<vmem>>, vector<16x512xf32>
    %c0_11 = arith.constant 0 : index
    %c0_12 = arith.constant 0 : index
    %16 = vector.load %arg3[%c0_11, %c0_12] : memref<128x512xf32, #tpu.memory_space<vmem>>, vector<128x512xf32>
    %cst_13 = arith.constant dense<0.000000e+00> : vector<16x512xf32>
    %17 = tpu.matmul %10, %16, %cst_13 {dimension_numbers = #tpu.dot_dimension_numbers<[1], [0], [0], [1], [0, 0, 1, 1], [], []>} : vector<16x128xf32>, vector<128x512xf32>, vector<16x512xf32> -> vector<16x512xf32>
    %18 = arith.addf %15, %17 : vector<16x512xf32>
    %19 = vector.extract_strided_slice %18 {offsets = [0, 0], sizes = [16, 128], strides = [1, 1]} : vector<16x512xf32> to vector<16x128xf32>
    %20 = arith.negf %19 : vector<16x128xf32>
    %21 = math.exp %20 : vector<16x128xf32>
    %cst_14 = arith.constant 1.000000e+00 : f32
    %22 = vector.broadcast %cst_14 : f32 to vector<16x128xf32>
    %23 = arith.addf %22, %21 : vector<16x128xf32>
    %24 = arith.divf %22, %23 : vector<16x128xf32>
    %25 = vector.extract_strided_slice %18 {offsets = [0, 128], sizes = [16, 128], strides = [1, 1]} : vector<16x512xf32> to vector<16x128xf32>
    %26 = arith.negf %25 : vector<16x128xf32>
    %27 = math.exp %26 : vector<16x128xf32>
    %cst_15 = arith.constant 1.000000e+00 : f32
    %28 = vector.broadcast %cst_15 : f32 to vector<16x128xf32>
    %29 = arith.addf %28, %27 : vector<16x128xf32>
    %30 = arith.divf %28, %29 : vector<16x128xf32>
    %31 = vector.extract_strided_slice %18 {offsets = [0, 256], sizes = [16, 128], strides = [1, 1]} : vector<16x512xf32> to vector<16x128xf32>
    %32 = math.tanh %31 : vector<16x128xf32>
    %33 = vector.extract_strided_slice %18 {offsets = [0, 384], sizes = [16, 128], strides = [1, 1]} : vector<16x512xf32> to vector<16x128xf32>
    %34 = arith.negf %33 : vector<16x128xf32>
    %35 = math.exp %34 : vector<16x128xf32>
    %cst_16 = arith.constant 1.000000e+00 : f32
    %36 = vector.broadcast %cst_16 : f32 to vector<16x128xf32>
    %37 = arith.addf %36, %35 : vector<16x128xf32>
    %38 = arith.divf %36, %37 : vector<16x128xf32>
    %39 = arith.mulf %30, %10 : vector<16x128xf32>
    %40 = arith.mulf %24, %32 : vector<16x128xf32>
    %41 = arith.addf %39, %40 : vector<16x128xf32>
    %42 = math.tanh %41 : vector<16x128xf32>
    %43 = arith.mulf %38, %42 : vector<16x128xf32>
    %c8_i32 = arith.constant 8 : i32
    %44 = arith.cmpi slt, %c0_i32, %c8_i32 : i32
    %45 = arith.select %44, %43, %10 : vector<16x128xf32>
    %46 = arith.select %44, %41, %10 : vector<16x128xf32>
    %c0_17 = arith.constant 0 : index
    %c0_18 = arith.constant 0 : index
    %47 = vector.load %arg5[%c0_17, %c0_18] : memref<128x512xf32, #tpu.memory_space<vmem>>, vector<128x512xf32>
    %cst_19 = arith.constant dense<0.000000e+00> : vector<16x512xf32>
    %48 = tpu.matmul %10, %47, %cst_19 {dimension_numbers = #tpu.dot_dimension_numbers<[1], [0], [0], [1], [0, 0, 1, 1], [], []>} : vector<16x128xf32>, vector<128x512xf32>, vector<16x512xf32> -> vector<16x512xf32>
    %c0_20 = arith.constant 0 : index
    %c0_21 = arith.constant 0 : index
    %49 = vector.load %arg6[%c0_20, %c0_21] : memref<128x512xf32, #tpu.memory_space<vmem>>, vector<128x512xf32>
    %cst_22 = arith.constant dense<0.000000e+00> : vector<16x512xf32>
    %50 = tpu.matmul %10, %49, %cst_22 {dimension_numbers = #tpu.dot_dimension_numbers<[1], [0], [0], [1], [0, 0, 1, 1], [], []>} : vector<16x128xf32>, vector<128x512xf32>, vector<16x512xf32> -> vector<16x512xf32>
    %51 = arith.addf %48, %50 : vector<16x512xf32>
    %52 = arith.addf %51, %9 : vector<16x512xf32>
    %53 = vector.extract_strided_slice %52 {offsets = [0, 0], sizes = [16, 128], strides = [1, 1]} : vector<16x512xf32> to vector<16x128xf32>
    %54 = arith.negf %53 : vector<16x128xf32>
    %55 = math.exp %54 : vector<16x128xf32>
    %cst_23 = arith.constant 1.000000e+00 : f32
    %56 = vector.broadcast %cst_23 : f32 to vector<16x128xf32>
    %57 = arith.addf %56, %55 : vector<16x128xf32>
    %58 = arith.divf %56, %57 : vector<16x128xf32>
    %59 = vector.extract_strided_slice %52 {offsets = [0, 128], sizes = [16, 128], strides = [1, 1]} : vector<16x512xf32> to vector<16x128xf32>
    %60 = arith.negf %59 : vector<16x128xf32>
    %61 = math.exp %60 : vector<16x128xf32>
    %cst_24 = arith.constant 1.000000e+00 : f32
    %62 = vector.broadcast %cst_24 : f32 to vector<16x128xf32>
    %63 = arith.addf %62, %61 : vector<16x128xf32>
    %64 = arith.divf %62, %63 : vector<16x128xf32>
    %65 = vector.extract_strided_slice %52 {offsets = [0, 256], sizes = [16, 128], strides = [1, 1]} : vector<16x512xf32> to vector<16x128xf32>
    %66 = math.tanh %65 : vector<16x128xf32>
    %67 = vector.extract_strided_slice %52 {offsets = [0, 384], sizes = [16, 128], strides = [1, 1]} : vector<16x512xf32> to vector<16x128xf32>
    %68 = arith.negf %67 : vector<16x128xf32>
    %69 = math.exp %68 : vector<16x128xf32>
    %cst_25 = arith.constant 1.000000e+00 : f32
    %70 = vector.broadcast %cst_25 : f32 to vector<16x128xf32>
    %71 = arith.addf %70, %69 : vector<16x128xf32>
    %72 = arith.divf %70, %71 : vector<16x128xf32>
    %73 = arith.mulf %64, %10 : vector<16x128xf32>
    %74 = arith.mulf %58, %66 : vector<16x128xf32>
    %75 = arith.addf %73, %74 : vector<16x128xf32>
    %76 = math.tanh %75 : vector<16x128xf32>
    %77 = arith.mulf %72, %76 : vector<16x128xf32>
    %c1_i32 = arith.constant 1 : i32
    %78 = arith.cmpi sge, %c0_i32, %c1_i32 : i32
    %79 = arith.select %78, %77, %10 : vector<16x128xf32>
    %80 = arith.select %78, %75, %10 : vector<16x128xf32>
    %c1_i32_26 = arith.constant 1 : i32
    %c7_i32_27 = arith.constant 7 : i32
    %81 = arith.minsi %c1_i32_26, %c7_i32_27 : i32
    %c16_i32_28 = arith.constant 16 : i32
    %82 = arith.muli %81, %c16_i32_28 : i32
    %83 = tpu.assume_multiple %82, 16 : i32
    %84 = arith.index_cast %83 : i32 to index
    %c0_29 = arith.constant 0 : index
    %85 = vector.load %arg11[%84, %c0_29] : memref<128x512xf32, #tpu.memory_space<vmem>>, vector<16x512xf32>
    %c0_30 = arith.constant 0 : index
    %c0_31 = arith.constant 0 : index
    %86 = vector.load %arg3[%c0_30, %c0_31] : memref<128x512xf32, #tpu.memory_space<vmem>>, vector<128x512xf32>
    %cst_32 = arith.constant dense<0.000000e+00> : vector<16x512xf32>
    %87 = tpu.matmul %45, %86, %cst_32 {dimension_numbers = #tpu.dot_dimension_numbers<[1], [0], [0], [1], [0, 0, 1, 1], [], []>} : vector<16x128xf32>, vector<128x512xf32>, vector<16x512xf32> -> vector<16x512xf32>
    %88 = arith.addf %85, %87 : vector<16x512xf32>
    %89 = vector.extract_strided_slice %88 {offsets = [0, 0], sizes = [16, 128], strides = [1, 1]} : vector<16x512xf32> to vector<16x128xf32>
    %90 = arith.negf %89 : vector<16x128xf32>
    %91 = math.exp %90 : vector<16x128xf32>
    %cst_33 = arith.constant 1.000000e+00 : f32
    %92 = vector.broadcast %cst_33 : f32 to vector<16x128xf32>
    %93 = arith.addf %92, %91 : vector<16x128xf32>
    %94 = arith.divf %92, %93 : vector<16x128xf32>
    %95 = vector.extract_strided_slice %88 {offsets = [0, 128], sizes = [16, 128], strides = [1, 1]} : vector<16x512xf32> to vector<16x128xf32>
    %96 = arith.negf %95 : vector<16x128xf32>
    %97 = math.exp %96 : vector<16x128xf32>
    %cst_34 = arith.constant 1.000000e+00 : f32
    %98 = vector.broadcast %cst_34 : f32 to vector<16x128xf32>
    %99 = arith.addf %98, %97 : vector<16x128xf32>
    %100 = arith.divf %98, %99 : vector<16x128xf32>
    %101 = vector.extract_strided_slice %88 {offsets = [0, 256], sizes = [16, 128], strides = [1, 1]} : vector<16x512xf32> to vector<16x128xf32>
    %102 = math.tanh %101 : vector<16x128xf32>
    %103 = vector.extract_strided_slice %88 {offsets = [0, 384], sizes = [16, 128], strides = [1, 1]} : vector<16x512xf32> to vector<16x128xf32>
    %104 = arith.negf %103 : vector<16x128xf32>
    %105 = math.exp %104 : vector<16x128xf32>
    %cst_35 = arith.constant 1.000000e+00 : f32
    %106 = vector.broadcast %cst_35 : f32 to vector<16x128xf32>
    %107 = arith.addf %106, %105 : vector<16x128xf32>
    %108 = arith.divf %106, %107 : vector<16x128xf32>
    %109 = arith.mulf %100, %46 : vector<16x128xf32>
    %110 = arith.mulf %94, %102 : vector<16x128xf32>
    %111 = arith.addf %109, %110 : vector<16x128xf32>
    %112 = math.tanh %111 : vector<16x128xf32>
    %113 = arith.mulf %108, %112 : vector<16x128xf32>
    %c8_i32_36 = arith.constant 8 : i32
    %114 = arith.cmpi slt, %c1_i32_26, %c8_i32_36 : i32
    %115 = arith.select %114, %113, %45 : vector<16x128xf32>
    %116 = arith.select %114, %111, %46 : vector<16x128xf32>
    %c0_37 = arith.constant 0 : index
    %c0_38 = arith.constant 0 : index
    %117 = vector.load %arg5[%c0_37, %c0_38] : memref<128x512xf32, #tpu.memory_space<vmem>>, vector<128x512xf32>
    %cst_39 = arith.constant dense<0.000000e+00> : vector<16x512xf32>
    %118 = tpu.matmul %45, %117, %cst_39 {dimension_numbers = #tpu.dot_dimension_numbers<[1], [0], [0], [1], [0, 0, 1, 1], [], []>} : vector<16x128xf32>, vector<128x512xf32>, vector<16x512xf32> -> vector<16x512xf32>
    %c0_40 = arith.constant 0 : index
    %c0_41 = arith.constant 0 : index
    %119 = vector.load %arg6[%c0_40, %c0_41] : memref<128x512xf32, #tpu.memory_space<vmem>>, vector<128x512xf32>
    %cst_42 = arith.constant dense<0.000000e+00> : vector<16x512xf32>
    %120 = tpu.matmul %79, %119, %cst_42 {dimension_numbers = #tpu.dot_dimension_numbers<[1], [0], [0], [1], [0, 0, 1, 1], [], []>} : vector<16x128xf32>, vector<128x512xf32>, vector<16x512xf32> -> vector<16x512xf32>
    %121 = arith.addf %118, %120 : vector<16x512xf32>
    %122 = arith.addf %121, %9 : vector<16x512xf32>
    %123 = vector.extract_strided_slice %122 {offsets = [0, 0], sizes = [16, 128], strides = [1, 1]} : vector<16x512xf32> to vector<16x128xf32>
    %124 = arith.negf %123 : vector<16x128xf32>
    %125 = math.exp %124 : vector<16x128xf32>
    %cst_43 = arith.constant 1.000000e+00 : f32
    %126 = vector.broadcast %cst_43 : f32 to vector<16x128xf32>
    %127 = arith.addf %126, %125 : vector<16x128xf32>
    %128 = arith.divf %126, %127 : vector<16x128xf32>
    %129 = vector.extract_strided_slice %122 {offsets = [0, 128], sizes = [16, 128], strides = [1, 1]} : vector<16x512xf32> to vector<16x128xf32>
    %130 = arith.negf %129 : vector<16x128xf32>
    %131 = math.exp %130 : vector<16x128xf32>
    %cst_44 = arith.constant 1.000000e+00 : f32
    %132 = vector.broadcast %cst_44 : f32 to vector<16x128xf32>
    %133 = arith.addf %132, %131 : vector<16x128xf32>
    %134 = arith.divf %132, %133 : vector<16x128xf32>
    %135 = vector.extract_strided_slice %122 {offsets = [0, 256], sizes = [16, 128], strides = [1, 1]} : vector<16x512xf32> to vector<16x128xf32>
    %136 = math.tanh %135 : vector<16x128xf32>
    %137 = vector.extract_strided_slice %122 {offsets = [0, 384], sizes = [16, 128], strides = [1, 1]} : vector<16x512xf32> to vector<16x128xf32>
    %138 = arith.negf %137 : vector<16x128xf32>
    %139 = math.exp %138 : vector<16x128xf32>
    %cst_45 = arith.constant 1.000000e+00 : f32
    %140 = vector.broadcast %cst_45 : f32 to vector<16x128xf32>
    %141 = arith.addf %140, %139 : vector<16x128xf32>
    %142 = arith.divf %140, %141 : vector<16x128xf32>
    %143 = arith.mulf %134, %80 : vector<16x128xf32>
    %144 = arith.mulf %128, %136 : vector<16x128xf32>
    %145 = arith.addf %143, %144 : vector<16x128xf32>
    %146 = math.tanh %145 : vector<16x128xf32>
    %147 = arith.mulf %142, %146 : vector<16x128xf32>
    %c1_i32_46 = arith.constant 1 : i32
    %148 = arith.cmpi sge, %c1_i32_26, %c1_i32_46 : i32
    %149 = arith.select %148, %147, %79 : vector<16x128xf32>
    %150 = arith.select %148, %145, %80 : vector<16x128xf32>
    %c2_i32 = arith.constant 2 : i32
    %c7_i32_47 = arith.constant 7 : i32
    %151 = arith.minsi %c2_i32, %c7_i32_47 : i32
    %c16_i32_48 = arith.constant 16 : i32
    %152 = arith.muli %151, %c16_i32_48 : i32
    %153 = tpu.assume_multiple %152, 16 : i32
    %154 = arith.index_cast %153 : i32 to index
    %c0_49 = arith.constant 0 : index
    %155 = vector.load %arg11[%154, %c0_49] : memref<128x512xf32, #tpu.memory_space<vmem>>, vector<16x512xf32>
    %c0_50 = arith.constant 0 : index
    %c0_51 = arith.constant 0 : index
    %156 = vector.load %arg3[%c0_50, %c0_51] : memref<128x512xf32, #tpu.memory_space<vmem>>, vector<128x512xf32>
    %cst_52 = arith.constant dense<0.000000e+00> : vector<16x512xf32>
    %157 = tpu.matmul %115, %156, %cst_52 {dimension_numbers = #tpu.dot_dimension_numbers<[1], [0], [0], [1], [0, 0, 1, 1], [], []>} : vector<16x128xf32>, vector<128x512xf32>, vector<16x512xf32> -> vector<16x512xf32>
    %158 = arith.addf %155, %157 : vector<16x512xf32>
    %159 = vector.extract_strided_slice %158 {offsets = [0, 0], sizes = [16, 128], strides = [1, 1]} : vector<16x512xf32> to vector<16x128xf32>
    %160 = arith.negf %159 : vector<16x128xf32>
    %161 = math.exp %160 : vector<16x128xf32>
    %cst_53 = arith.constant 1.000000e+00 : f32
    %162 = vector.broadcast %cst_53 : f32 to vector<16x128xf32>
    %163 = arith.addf %162, %161 : vector<16x128xf32>
    %164 = arith.divf %162, %163 : vector<16x128xf32>
    %165 = vector.extract_strided_slice %158 {offsets = [0, 128], sizes = [16, 128], strides = [1, 1]} : vector<16x512xf32> to vector<16x128xf32>
    %166 = arith.negf %165 : vector<16x128xf32>
    %167 = math.exp %166 : vector<16x128xf32>
    %cst_54 = arith.constant 1.000000e+00 : f32
    %168 = vector.broadcast %cst_54 : f32 to vector<16x128xf32>
    %169 = arith.addf %168, %167 : vector<16x128xf32>
    %170 = arith.divf %168, %169 : vector<16x128xf32>
    %171 = vector.extract_strided_slice %158 {offsets = [0, 256], sizes = [16, 128], strides = [1, 1]} : vector<16x512xf32> to vector<16x128xf32>
    %172 = math.tanh %171 : vector<16x128xf32>
    %173 = vector.extract_strided_slice %158 {offsets = [0, 384], sizes = [16, 128], strides = [1, 1]} : vector<16x512xf32> to vector<16x128xf32>
    %174 = arith.negf %173 : vector<16x128xf32>
    %175 = math.exp %174 : vector<16x128xf32>
    %cst_55 = arith.constant 1.000000e+00 : f32
    %176 = vector.broadcast %cst_55 : f32 to vector<16x128xf32>
    %177 = arith.addf %176, %175 : vector<16x128xf32>
    %178 = arith.divf %176, %177 : vector<16x128xf32>
    %179 = arith.mulf %170, %116 : vector<16x128xf32>
    %180 = arith.mulf %164, %172 : vector<16x128xf32>
    %181 = arith.addf %179, %180 : vector<16x128xf32>
    %182 = math.tanh %181 : vector<16x128xf32>
    %183 = arith.mulf %178, %182 : vector<16x128xf32>
    %c8_i32_56 = arith.constant 8 : i32
    %184 = arith.cmpi slt, %c2_i32, %c8_i32_56 : i32
    %185 = arith.select %184, %183, %115 : vector<16x128xf32>
    %186 = arith.select %184, %181, %116 : vector<16x128xf32>
    %c0_57 = arith.constant 0 : index
    %c0_58 = arith.constant 0 : index
    %187 = vector.load %arg5[%c0_57, %c0_58] : memref<128x512xf32, #tpu.memory_space<vmem>>, vector<128x512xf32>
    %cst_59 = arith.constant dense<0.000000e+00> : vector<16x512xf32>
    %188 = tpu.matmul %115, %187, %cst_59 {dimension_numbers = #tpu.dot_dimension_numbers<[1], [0], [0], [1], [0, 0, 1, 1], [], []>} : vector<16x128xf32>, vector<128x512xf32>, vector<16x512xf32> -> vector<16x512xf32>
    %c0_60 = arith.constant 0 : index
    %c0_61 = arith.constant 0 : index
    %189 = vector.load %arg6[%c0_60, %c0_61] : memref<128x512xf32, #tpu.memory_space<vmem>>, vector<128x512xf32>
    %cst_62 = arith.constant dense<0.000000e+00> : vector<16x512xf32>
    %190 = tpu.matmul %149, %189, %cst_62 {dimension_numbers = #tpu.dot_dimension_numbers<[1], [0], [0], [1], [0, 0, 1, 1], [], []>} : vector<16x128xf32>, vector<128x512xf32>, vector<16x512xf32> -> vector<16x512xf32>
    %191 = arith.addf %188, %190 : vector<16x512xf32>
    %192 = arith.addf %191, %9 : vector<16x512xf32>
    %193 = vector.extract_strided_slice %192 {offsets = [0, 0], sizes = [16, 128], strides = [1, 1]} : vector<16x512xf32> to vector<16x128xf32>
    %194 = arith.negf %193 : vector<16x128xf32>
    %195 = math.exp %194 : vector<16x128xf32>
    %cst_63 = arith.constant 1.000000e+00 : f32
    %196 = vector.broadcast %cst_63 : f32 to vector<16x128xf32>
    %197 = arith.addf %196, %195 : vector<16x128xf32>
    %198 = arith.divf %196, %197 : vector<16x128xf32>
    %199 = vector.extract_strided_slice %192 {offsets = [0, 128], sizes = [16, 128], strides = [1, 1]} : vector<16x512xf32> to vector<16x128xf32>
    %200 = arith.negf %199 : vector<16x128xf32>
    %201 = math.exp %200 : vector<16x128xf32>
    %cst_64 = arith.constant 1.000000e+00 : f32
    %202 = vector.broadcast %cst_64 : f32 to vector<16x128xf32>
    %203 = arith.addf %202, %201 : vector<16x128xf32>
    %204 = arith.divf %202, %203 : vector<16x128xf32>
    %205 = vector.extract_strided_slice %192 {offsets = [0, 256], sizes = [16, 128], strides = [1, 1]} : vector<16x512xf32> to vector<16x128xf32>
    %206 = math.tanh %205 : vector<16x128xf32>
    %207 = vector.extract_strided_slice %192 {offsets = [0, 384], sizes = [16, 128], strides = [1, 1]} : vector<16x512xf32> to vector<16x128xf32>
    %208 = arith.negf %207 : vector<16x128xf32>
    %209 = math.exp %208 : vector<16x128xf32>
    %cst_65 = arith.constant 1.000000e+00 : f32
    %210 = vector.broadcast %cst_65 : f32 to vector<16x128xf32>
    %211 = arith.addf %210, %209 : vector<16x128xf32>
    %212 = arith.divf %210, %211 : vector<16x128xf32>
    %213 = arith.mulf %204, %150 : vector<16x128xf32>
    %214 = arith.mulf %198, %206 : vector<16x128xf32>
    %215 = arith.addf %213, %214 : vector<16x128xf32>
    %216 = math.tanh %215 : vector<16x128xf32>
    %217 = arith.mulf %212, %216 : vector<16x128xf32>
    %c1_i32_66 = arith.constant 1 : i32
    %218 = arith.cmpi sge, %c2_i32, %c1_i32_66 : i32
    %219 = arith.select %218, %217, %149 : vector<16x128xf32>
    %220 = arith.select %218, %215, %150 : vector<16x128xf32>
    %c3_i32 = arith.constant 3 : i32
    %c7_i32_67 = arith.constant 7 : i32
    %221 = arith.minsi %c3_i32, %c7_i32_67 : i32
    %c16_i32_68 = arith.constant 16 : i32
    %222 = arith.muli %221, %c16_i32_68 : i32
    %223 = tpu.assume_multiple %222, 16 : i32
    %224 = arith.index_cast %223 : i32 to index
    %c0_69 = arith.constant 0 : index
    %225 = vector.load %arg11[%224, %c0_69] : memref<128x512xf32, #tpu.memory_space<vmem>>, vector<16x512xf32>
    %c0_70 = arith.constant 0 : index
    %c0_71 = arith.constant 0 : index
    %226 = vector.load %arg3[%c0_70, %c0_71] : memref<128x512xf32, #tpu.memory_space<vmem>>, vector<128x512xf32>
    %cst_72 = arith.constant dense<0.000000e+00> : vector<16x512xf32>
    %227 = tpu.matmul %185, %226, %cst_72 {dimension_numbers = #tpu.dot_dimension_numbers<[1], [0], [0], [1], [0, 0, 1, 1], [], []>} : vector<16x128xf32>, vector<128x512xf32>, vector<16x512xf32> -> vector<16x512xf32>
    %228 = arith.addf %225, %227 : vector<16x512xf32>
    %229 = vector.extract_strided_slice %228 {offsets = [0, 0], sizes = [16, 128], strides = [1, 1]} : vector<16x512xf32> to vector<16x128xf32>
    %230 = arith.negf %229 : vector<16x128xf32>
    %231 = math.exp %230 : vector<16x128xf32>
    %cst_73 = arith.constant 1.000000e+00 : f32
    %232 = vector.broadcast %cst_73 : f32 to vector<16x128xf32>
    %233 = arith.addf %232, %231 : vector<16x128xf32>
    %234 = arith.divf %232, %233 : vector<16x128xf32>
    %235 = vector.extract_strided_slice %228 {offsets = [0, 128], sizes = [16, 128], strides = [1, 1]} : vector<16x512xf32> to vector<16x128xf32>
    %236 = arith.negf %235 : vector<16x128xf32>
    %237 = math.exp %236 : vector<16x128xf32>
    %cst_74 = arith.constant 1.000000e+00 : f32
    %238 = vector.broadcast %cst_74 : f32 to vector<16x128xf32>
    %239 = arith.addf %238, %237 : vector<16x128xf32>
    %240 = arith.divf %238, %239 : vector<16x128xf32>
    %241 = vector.extract_strided_slice %228 {offsets = [0, 256], sizes = [16, 128], strides = [1, 1]} : vector<16x512xf32> to vector<16x128xf32>
    %242 = math.tanh %241 : vector<16x128xf32>
    %243 = vector.extract_strided_slice %228 {offsets = [0, 384], sizes = [16, 128], strides = [1, 1]} : vector<16x512xf32> to vector<16x128xf32>
    %244 = arith.negf %243 : vector<16x128xf32>
    %245 = math.exp %244 : vector<16x128xf32>
    %cst_75 = arith.constant 1.000000e+00 : f32
    %246 = vector.broadcast %cst_75 : f32 to vector<16x128xf32>
    %247 = arith.addf %246, %245 : vector<16x128xf32>
    %248 = arith.divf %246, %247 : vector<16x128xf32>
    %249 = arith.mulf %240, %186 : vector<16x128xf32>
    %250 = arith.mulf %234, %242 : vector<16x128xf32>
    %251 = arith.addf %249, %250 : vector<16x128xf32>
    %252 = math.tanh %251 : vector<16x128xf32>
    %253 = arith.mulf %248, %252 : vector<16x128xf32>
    %c8_i32_76 = arith.constant 8 : i32
    %254 = arith.cmpi slt, %c3_i32, %c8_i32_76 : i32
    %255 = arith.select %254, %253, %185 : vector<16x128xf32>
    %256 = arith.select %254, %251, %186 : vector<16x128xf32>
    %c0_77 = arith.constant 0 : index
    %c0_78 = arith.constant 0 : index
    %257 = vector.load %arg5[%c0_77, %c0_78] : memref<128x512xf32, #tpu.memory_space<vmem>>, vector<128x512xf32>
    %cst_79 = arith.constant dense<0.000000e+00> : vector<16x512xf32>
    %258 = tpu.matmul %185, %257, %cst_79 {dimension_numbers = #tpu.dot_dimension_numbers<[1], [0], [0], [1], [0, 0, 1, 1], [], []>} : vector<16x128xf32>, vector<128x512xf32>, vector<16x512xf32> -> vector<16x512xf32>
    %c0_80 = arith.constant 0 : index
    %c0_81 = arith.constant 0 : index
    %259 = vector.load %arg6[%c0_80, %c0_81] : memref<128x512xf32, #tpu.memory_space<vmem>>, vector<128x512xf32>
    %cst_82 = arith.constant dense<0.000000e+00> : vector<16x512xf32>
    %260 = tpu.matmul %219, %259, %cst_82 {dimension_numbers = #tpu.dot_dimension_numbers<[1], [0], [0], [1], [0, 0, 1, 1], [], []>} : vector<16x128xf32>, vector<128x512xf32>, vector<16x512xf32> -> vector<16x512xf32>
    %261 = arith.addf %258, %260 : vector<16x512xf32>
    %262 = arith.addf %261, %9 : vector<16x512xf32>
    %263 = vector.extract_strided_slice %262 {offsets = [0, 0], sizes = [16, 128], strides = [1, 1]} : vector<16x512xf32> to vector<16x128xf32>
    %264 = arith.negf %263 : vector<16x128xf32>
    %265 = math.exp %264 : vector<16x128xf32>
    %cst_83 = arith.constant 1.000000e+00 : f32
    %266 = vector.broadcast %cst_83 : f32 to vector<16x128xf32>
    %267 = arith.addf %266, %265 : vector<16x128xf32>
    %268 = arith.divf %266, %267 : vector<16x128xf32>
    %269 = vector.extract_strided_slice %262 {offsets = [0, 128], sizes = [16, 128], strides = [1, 1]} : vector<16x512xf32> to vector<16x128xf32>
    %270 = arith.negf %269 : vector<16x128xf32>
    %271 = math.exp %270 : vector<16x128xf32>
    %cst_84 = arith.constant 1.000000e+00 : f32
    %272 = vector.broadcast %cst_84 : f32 to vector<16x128xf32>
    %273 = arith.addf %272, %271 : vector<16x128xf32>
    %274 = arith.divf %272, %273 : vector<16x128xf32>
    %275 = vector.extract_strided_slice %262 {offsets = [0, 256], sizes = [16, 128], strides = [1, 1]} : vector<16x512xf32> to vector<16x128xf32>
    %276 = math.tanh %275 : vector<16x128xf32>
    %277 = vector.extract_strided_slice %262 {offsets = [0, 384], sizes = [16, 128], strides = [1, 1]} : vector<16x512xf32> to vector<16x128xf32>
    %278 = arith.negf %277 : vector<16x128xf32>
    %279 = math.exp %278 : vector<16x128xf32>
    %cst_85 = arith.constant 1.000000e+00 : f32
    %280 = vector.broadcast %cst_85 : f32 to vector<16x128xf32>
    %281 = arith.addf %280, %279 : vector<16x128xf32>
    %282 = arith.divf %280, %281 : vector<16x128xf32>
    %283 = arith.mulf %274, %220 : vector<16x128xf32>
    %284 = arith.mulf %268, %276 : vector<16x128xf32>
    %285 = arith.addf %283, %284 : vector<16x128xf32>
    %286 = math.tanh %285 : vector<16x128xf32>
    %287 = arith.mulf %282, %286 : vector<16x128xf32>
    %c1_i32_86 = arith.constant 1 : i32
    %288 = arith.cmpi sge, %c3_i32, %c1_i32_86 : i32
    %289 = arith.select %288, %287, %219 : vector<16x128xf32>
    %290 = arith.select %288, %285, %220 : vector<16x128xf32>
    %c4_i32 = arith.constant 4 : i32
    %c7_i32_87 = arith.constant 7 : i32
    %291 = arith.minsi %c4_i32, %c7_i32_87 : i32
    %c16_i32_88 = arith.constant 16 : i32
    %292 = arith.muli %291, %c16_i32_88 : i32
    %293 = tpu.assume_multiple %292, 16 : i32
    %294 = arith.index_cast %293 : i32 to index
    %c0_89 = arith.constant 0 : index
    %295 = vector.load %arg11[%294, %c0_89] : memref<128x512xf32, #tpu.memory_space<vmem>>, vector<16x512xf32>
    %c0_90 = arith.constant 0 : index
    %c0_91 = arith.constant 0 : index
    %296 = vector.load %arg3[%c0_90, %c0_91] : memref<128x512xf32, #tpu.memory_space<vmem>>, vector<128x512xf32>
    %cst_92 = arith.constant dense<0.000000e+00> : vector<16x512xf32>
    %297 = tpu.matmul %255, %296, %cst_92 {dimension_numbers = #tpu.dot_dimension_numbers<[1], [0], [0], [1], [0, 0, 1, 1], [], []>} : vector<16x128xf32>, vector<128x512xf32>, vector<16x512xf32> -> vector<16x512xf32>
    %298 = arith.addf %295, %297 : vector<16x512xf32>
    %299 = vector.extract_strided_slice %298 {offsets = [0, 0], sizes = [16, 128], strides = [1, 1]} : vector<16x512xf32> to vector<16x128xf32>
    %300 = arith.negf %299 : vector<16x128xf32>
    %301 = math.exp %300 : vector<16x128xf32>
    %cst_93 = arith.constant 1.000000e+00 : f32
    %302 = vector.broadcast %cst_93 : f32 to vector<16x128xf32>
    %303 = arith.addf %302, %301 : vector<16x128xf32>
    %304 = arith.divf %302, %303 : vector<16x128xf32>
    %305 = vector.extract_strided_slice %298 {offsets = [0, 128], sizes = [16, 128], strides = [1, 1]} : vector<16x512xf32> to vector<16x128xf32>
    %306 = arith.negf %305 : vector<16x128xf32>
    %307 = math.exp %306 : vector<16x128xf32>
    %cst_94 = arith.constant 1.000000e+00 : f32
    %308 = vector.broadcast %cst_94 : f32 to vector<16x128xf32>
    %309 = arith.addf %308, %307 : vector<16x128xf32>
    %310 = arith.divf %308, %309 : vector<16x128xf32>
    %311 = vector.extract_strided_slice %298 {offsets = [0, 256], sizes = [16, 128], strides = [1, 1]} : vector<16x512xf32> to vector<16x128xf32>
    %312 = math.tanh %311 : vector<16x128xf32>
    %313 = vector.extract_strided_slice %298 {offsets = [0, 384], sizes = [16, 128], strides = [1, 1]} : vector<16x512xf32> to vector<16x128xf32>
    %314 = arith.negf %313 : vector<16x128xf32>
    %315 = math.exp %314 : vector<16x128xf32>
    %cst_95 = arith.constant 1.000000e+00 : f32
    %316 = vector.broadcast %cst_95 : f32 to vector<16x128xf32>
    %317 = arith.addf %316, %315 : vector<16x128xf32>
    %318 = arith.divf %316, %317 : vector<16x128xf32>
    %319 = arith.mulf %310, %256 : vector<16x128xf32>
    %320 = arith.mulf %304, %312 : vector<16x128xf32>
    %321 = arith.addf %319, %320 : vector<16x128xf32>
    %322 = math.tanh %321 : vector<16x128xf32>
    %323 = arith.mulf %318, %322 : vector<16x128xf32>
    %c8_i32_96 = arith.constant 8 : i32
    %324 = arith.cmpi slt, %c4_i32, %c8_i32_96 : i32
    %325 = arith.select %324, %323, %255 : vector<16x128xf32>
    %326 = arith.select %324, %321, %256 : vector<16x128xf32>
    %c0_97 = arith.constant 0 : index
    %c0_98 = arith.constant 0 : index
    %327 = vector.load %arg5[%c0_97, %c0_98] : memref<128x512xf32, #tpu.memory_space<vmem>>, vector<128x512xf32>
    %cst_99 = arith.constant dense<0.000000e+00> : vector<16x512xf32>
    %328 = tpu.matmul %255, %327, %cst_99 {dimension_numbers = #tpu.dot_dimension_numbers<[1], [0], [0], [1], [0, 0, 1, 1], [], []>} : vector<16x128xf32>, vector<128x512xf32>, vector<16x512xf32> -> vector<16x512xf32>
    %c0_100 = arith.constant 0 : index
    %c0_101 = arith.constant 0 : index
    %329 = vector.load %arg6[%c0_100, %c0_101] : memref<128x512xf32, #tpu.memory_space<vmem>>, vector<128x512xf32>
    %cst_102 = arith.constant dense<0.000000e+00> : vector<16x512xf32>
    %330 = tpu.matmul %289, %329, %cst_102 {dimension_numbers = #tpu.dot_dimension_numbers<[1], [0], [0], [1], [0, 0, 1, 1], [], []>} : vector<16x128xf32>, vector<128x512xf32>, vector<16x512xf32> -> vector<16x512xf32>
    %331 = arith.addf %328, %330 : vector<16x512xf32>
    %332 = arith.addf %331, %9 : vector<16x512xf32>
    %333 = vector.extract_strided_slice %332 {offsets = [0, 0], sizes = [16, 128], strides = [1, 1]} : vector<16x512xf32> to vector<16x128xf32>
    %334 = arith.negf %333 : vector<16x128xf32>
    %335 = math.exp %334 : vector<16x128xf32>
    %cst_103 = arith.constant 1.000000e+00 : f32
    %336 = vector.broadcast %cst_103 : f32 to vector<16x128xf32>
    %337 = arith.addf %336, %335 : vector<16x128xf32>
    %338 = arith.divf %336, %337 : vector<16x128xf32>
    %339 = vector.extract_strided_slice %332 {offsets = [0, 128], sizes = [16, 128], strides = [1, 1]} : vector<16x512xf32> to vector<16x128xf32>
    %340 = arith.negf %339 : vector<16x128xf32>
    %341 = math.exp %340 : vector<16x128xf32>
    %cst_104 = arith.constant 1.000000e+00 : f32
    %342 = vector.broadcast %cst_104 : f32 to vector<16x128xf32>
    %343 = arith.addf %342, %341 : vector<16x128xf32>
    %344 = arith.divf %342, %343 : vector<16x128xf32>
    %345 = vector.extract_strided_slice %332 {offsets = [0, 256], sizes = [16, 128], strides = [1, 1]} : vector<16x512xf32> to vector<16x128xf32>
    %346 = math.tanh %345 : vector<16x128xf32>
    %347 = vector.extract_strided_slice %332 {offsets = [0, 384], sizes = [16, 128], strides = [1, 1]} : vector<16x512xf32> to vector<16x128xf32>
    %348 = arith.negf %347 : vector<16x128xf32>
    %349 = math.exp %348 : vector<16x128xf32>
    %cst_105 = arith.constant 1.000000e+00 : f32
    %350 = vector.broadcast %cst_105 : f32 to vector<16x128xf32>
    %351 = arith.addf %350, %349 : vector<16x128xf32>
    %352 = arith.divf %350, %351 : vector<16x128xf32>
    %353 = arith.mulf %344, %290 : vector<16x128xf32>
    %354 = arith.mulf %338, %346 : vector<16x128xf32>
    %355 = arith.addf %353, %354 : vector<16x128xf32>
    %356 = math.tanh %355 : vector<16x128xf32>
    %357 = arith.mulf %352, %356 : vector<16x128xf32>
    %c1_i32_106 = arith.constant 1 : i32
    %358 = arith.cmpi sge, %c4_i32, %c1_i32_106 : i32
    %359 = arith.select %358, %357, %289 : vector<16x128xf32>
    %360 = arith.select %358, %355, %290 : vector<16x128xf32>
    %c5_i32 = arith.constant 5 : i32
    %c7_i32_107 = arith.constant 7 : i32
    %361 = arith.minsi %c5_i32, %c7_i32_107 : i32
    %c16_i32_108 = arith.constant 16 : i32
    %362 = arith.muli %361, %c16_i32_108 : i32
    %363 = tpu.assume_multiple %362, 16 : i32
    %364 = arith.index_cast %363 : i32 to index
    %c0_109 = arith.constant 0 : index
    %365 = vector.load %arg11[%364, %c0_109] : memref<128x512xf32, #tpu.memory_space<vmem>>, vector<16x512xf32>
    %c0_110 = arith.constant 0 : index
    %c0_111 = arith.constant 0 : index
    %366 = vector.load %arg3[%c0_110, %c0_111] : memref<128x512xf32, #tpu.memory_space<vmem>>, vector<128x512xf32>
    %cst_112 = arith.constant dense<0.000000e+00> : vector<16x512xf32>
    %367 = tpu.matmul %325, %366, %cst_112 {dimension_numbers = #tpu.dot_dimension_numbers<[1], [0], [0], [1], [0, 0, 1, 1], [], []>} : vector<16x128xf32>, vector<128x512xf32>, vector<16x512xf32> -> vector<16x512xf32>
    %368 = arith.addf %365, %367 : vector<16x512xf32>
    %369 = vector.extract_strided_slice %368 {offsets = [0, 0], sizes = [16, 128], strides = [1, 1]} : vector<16x512xf32> to vector<16x128xf32>
    %370 = arith.negf %369 : vector<16x128xf32>
    %371 = math.exp %370 : vector<16x128xf32>
    %cst_113 = arith.constant 1.000000e+00 : f32
    %372 = vector.broadcast %cst_113 : f32 to vector<16x128xf32>
    %373 = arith.addf %372, %371 : vector<16x128xf32>
    %374 = arith.divf %372, %373 : vector<16x128xf32>
    %375 = vector.extract_strided_slice %368 {offsets = [0, 128], sizes = [16, 128], strides = [1, 1]} : vector<16x512xf32> to vector<16x128xf32>
    %376 = arith.negf %375 : vector<16x128xf32>
    %377 = math.exp %376 : vector<16x128xf32>
    %cst_114 = arith.constant 1.000000e+00 : f32
    %378 = vector.broadcast %cst_114 : f32 to vector<16x128xf32>
    %379 = arith.addf %378, %377 : vector<16x128xf32>
    %380 = arith.divf %378, %379 : vector<16x128xf32>
    %381 = vector.extract_strided_slice %368 {offsets = [0, 256], sizes = [16, 128], strides = [1, 1]} : vector<16x512xf32> to vector<16x128xf32>
    %382 = math.tanh %381 : vector<16x128xf32>
    %383 = vector.extract_strided_slice %368 {offsets = [0, 384], sizes = [16, 128], strides = [1, 1]} : vector<16x512xf32> to vector<16x128xf32>
    %384 = arith.negf %383 : vector<16x128xf32>
    %385 = math.exp %384 : vector<16x128xf32>
    %cst_115 = arith.constant 1.000000e+00 : f32
    %386 = vector.broadcast %cst_115 : f32 to vector<16x128xf32>
    %387 = arith.addf %386, %385 : vector<16x128xf32>
    %388 = arith.divf %386, %387 : vector<16x128xf32>
    %389 = arith.mulf %380, %326 : vector<16x128xf32>
    %390 = arith.mulf %374, %382 : vector<16x128xf32>
    %391 = arith.addf %389, %390 : vector<16x128xf32>
    %392 = math.tanh %391 : vector<16x128xf32>
    %393 = arith.mulf %388, %392 : vector<16x128xf32>
    %c8_i32_116 = arith.constant 8 : i32
    %394 = arith.cmpi slt, %c5_i32, %c8_i32_116 : i32
    %395 = arith.select %394, %393, %325 : vector<16x128xf32>
    %396 = arith.select %394, %391, %326 : vector<16x128xf32>
    %c0_117 = arith.constant 0 : index
    %c0_118 = arith.constant 0 : index
    %397 = vector.load %arg5[%c0_117, %c0_118] : memref<128x512xf32, #tpu.memory_space<vmem>>, vector<128x512xf32>
    %cst_119 = arith.constant dense<0.000000e+00> : vector<16x512xf32>
    %398 = tpu.matmul %325, %397, %cst_119 {dimension_numbers = #tpu.dot_dimension_numbers<[1], [0], [0], [1], [0, 0, 1, 1], [], []>} : vector<16x128xf32>, vector<128x512xf32>, vector<16x512xf32> -> vector<16x512xf32>
    %c0_120 = arith.constant 0 : index
    %c0_121 = arith.constant 0 : index
    %399 = vector.load %arg6[%c0_120, %c0_121] : memref<128x512xf32, #tpu.memory_space<vmem>>, vector<128x512xf32>
    %cst_122 = arith.constant dense<0.000000e+00> : vector<16x512xf32>
    %400 = tpu.matmul %359, %399, %cst_122 {dimension_numbers = #tpu.dot_dimension_numbers<[1], [0], [0], [1], [0, 0, 1, 1], [], []>} : vector<16x128xf32>, vector<128x512xf32>, vector<16x512xf32> -> vector<16x512xf32>
    %401 = arith.addf %398, %400 : vector<16x512xf32>
    %402 = arith.addf %401, %9 : vector<16x512xf32>
    %403 = vector.extract_strided_slice %402 {offsets = [0, 0], sizes = [16, 128], strides = [1, 1]} : vector<16x512xf32> to vector<16x128xf32>
    %404 = arith.negf %403 : vector<16x128xf32>
    %405 = math.exp %404 : vector<16x128xf32>
    %cst_123 = arith.constant 1.000000e+00 : f32
    %406 = vector.broadcast %cst_123 : f32 to vector<16x128xf32>
    %407 = arith.addf %406, %405 : vector<16x128xf32>
    %408 = arith.divf %406, %407 : vector<16x128xf32>
    %409 = vector.extract_strided_slice %402 {offsets = [0, 128], sizes = [16, 128], strides = [1, 1]} : vector<16x512xf32> to vector<16x128xf32>
    %410 = arith.negf %409 : vector<16x128xf32>
    %411 = math.exp %410 : vector<16x128xf32>
    %cst_124 = arith.constant 1.000000e+00 : f32
    %412 = vector.broadcast %cst_124 : f32 to vector<16x128xf32>
    %413 = arith.addf %412, %411 : vector<16x128xf32>
    %414 = arith.divf %412, %413 : vector<16x128xf32>
    %415 = vector.extract_strided_slice %402 {offsets = [0, 256], sizes = [16, 128], strides = [1, 1]} : vector<16x512xf32> to vector<16x128xf32>
    %416 = math.tanh %415 : vector<16x128xf32>
    %417 = vector.extract_strided_slice %402 {offsets = [0, 384], sizes = [16, 128], strides = [1, 1]} : vector<16x512xf32> to vector<16x128xf32>
    %418 = arith.negf %417 : vector<16x128xf32>
    %419 = math.exp %418 : vector<16x128xf32>
    %cst_125 = arith.constant 1.000000e+00 : f32
    %420 = vector.broadcast %cst_125 : f32 to vector<16x128xf32>
    %421 = arith.addf %420, %419 : vector<16x128xf32>
    %422 = arith.divf %420, %421 : vector<16x128xf32>
    %423 = arith.mulf %414, %360 : vector<16x128xf32>
    %424 = arith.mulf %408, %416 : vector<16x128xf32>
    %425 = arith.addf %423, %424 : vector<16x128xf32>
    %426 = math.tanh %425 : vector<16x128xf32>
    %427 = arith.mulf %422, %426 : vector<16x128xf32>
    %c1_i32_126 = arith.constant 1 : i32
    %428 = arith.cmpi sge, %c5_i32, %c1_i32_126 : i32
    %429 = arith.select %428, %427, %359 : vector<16x128xf32>
    %430 = arith.select %428, %425, %360 : vector<16x128xf32>
    %c6_i32 = arith.constant 6 : i32
    %c7_i32_127 = arith.constant 7 : i32
    %431 = arith.minsi %c6_i32, %c7_i32_127 : i32
    %c16_i32_128 = arith.constant 16 : i32
    %432 = arith.muli %431, %c16_i32_128 : i32
    %433 = tpu.assume_multiple %432, 16 : i32
    %434 = arith.index_cast %433 : i32 to index
    %c0_129 = arith.constant 0 : index
    %435 = vector.load %arg11[%434, %c0_129] : memref<128x512xf32, #tpu.memory_space<vmem>>, vector<16x512xf32>
    %c0_130 = arith.constant 0 : index
    %c0_131 = arith.constant 0 : index
    %436 = vector.load %arg3[%c0_130, %c0_131] : memref<128x512xf32, #tpu.memory_space<vmem>>, vector<128x512xf32>
    %cst_132 = arith.constant dense<0.000000e+00> : vector<16x512xf32>
    %437 = tpu.matmul %395, %436, %cst_132 {dimension_numbers = #tpu.dot_dimension_numbers<[1], [0], [0], [1], [0, 0, 1, 1], [], []>} : vector<16x128xf32>, vector<128x512xf32>, vector<16x512xf32> -> vector<16x512xf32>
    %438 = arith.addf %435, %437 : vector<16x512xf32>
    %439 = vector.extract_strided_slice %438 {offsets = [0, 0], sizes = [16, 128], strides = [1, 1]} : vector<16x512xf32> to vector<16x128xf32>
    %440 = arith.negf %439 : vector<16x128xf32>
    %441 = math.exp %440 : vector<16x128xf32>
    %cst_133 = arith.constant 1.000000e+00 : f32
    %442 = vector.broadcast %cst_133 : f32 to vector<16x128xf32>
    %443 = arith.addf %442, %441 : vector<16x128xf32>
    %444 = arith.divf %442, %443 : vector<16x128xf32>
    %445 = vector.extract_strided_slice %438 {offsets = [0, 128], sizes = [16, 128], strides = [1, 1]} : vector<16x512xf32> to vector<16x128xf32>
    %446 = arith.negf %445 : vector<16x128xf32>
    %447 = math.exp %446 : vector<16x128xf32>
    %cst_134 = arith.constant 1.000000e+00 : f32
    %448 = vector.broadcast %cst_134 : f32 to vector<16x128xf32>
    %449 = arith.addf %448, %447 : vector<16x128xf32>
    %450 = arith.divf %448, %449 : vector<16x128xf32>
    %451 = vector.extract_strided_slice %438 {offsets = [0, 256], sizes = [16, 128], strides = [1, 1]} : vector<16x512xf32> to vector<16x128xf32>
    %452 = math.tanh %451 : vector<16x128xf32>
    %453 = vector.extract_strided_slice %438 {offsets = [0, 384], sizes = [16, 128], strides = [1, 1]} : vector<16x512xf32> to vector<16x128xf32>
    %454 = arith.negf %453 : vector<16x128xf32>
    %455 = math.exp %454 : vector<16x128xf32>
    %cst_135 = arith.constant 1.000000e+00 : f32
    %456 = vector.broadcast %cst_135 : f32 to vector<16x128xf32>
    %457 = arith.addf %456, %455 : vector<16x128xf32>
    %458 = arith.divf %456, %457 : vector<16x128xf32>
    %459 = arith.mulf %450, %396 : vector<16x128xf32>
    %460 = arith.mulf %444, %452 : vector<16x128xf32>
    %461 = arith.addf %459, %460 : vector<16x128xf32>
    %462 = math.tanh %461 : vector<16x128xf32>
    %463 = arith.mulf %458, %462 : vector<16x128xf32>
    %c8_i32_136 = arith.constant 8 : i32
    %464 = arith.cmpi slt, %c6_i32, %c8_i32_136 : i32
    %465 = arith.select %464, %463, %395 : vector<16x128xf32>
    %466 = arith.select %464, %461, %396 : vector<16x128xf32>
    %c0_137 = arith.constant 0 : index
    %c0_138 = arith.constant 0 : index
    %467 = vector.load %arg5[%c0_137, %c0_138] : memref<128x512xf32, #tpu.memory_space<vmem>>, vector<128x512xf32>
    %cst_139 = arith.constant dense<0.000000e+00> : vector<16x512xf32>
    %468 = tpu.matmul %395, %467, %cst_139 {dimension_numbers = #tpu.dot_dimension_numbers<[1], [0], [0], [1], [0, 0, 1, 1], [], []>} : vector<16x128xf32>, vector<128x512xf32>, vector<16x512xf32> -> vector<16x512xf32>
    %c0_140 = arith.constant 0 : index
    %c0_141 = arith.constant 0 : index
    %469 = vector.load %arg6[%c0_140, %c0_141] : memref<128x512xf32, #tpu.memory_space<vmem>>, vector<128x512xf32>
    %cst_142 = arith.constant dense<0.000000e+00> : vector<16x512xf32>
    %470 = tpu.matmul %429, %469, %cst_142 {dimension_numbers = #tpu.dot_dimension_numbers<[1], [0], [0], [1], [0, 0, 1, 1], [], []>} : vector<16x128xf32>, vector<128x512xf32>, vector<16x512xf32> -> vector<16x512xf32>
    %471 = arith.addf %468, %470 : vector<16x512xf32>
    %472 = arith.addf %471, %9 : vector<16x512xf32>
    %473 = vector.extract_strided_slice %472 {offsets = [0, 0], sizes = [16, 128], strides = [1, 1]} : vector<16x512xf32> to vector<16x128xf32>
    %474 = arith.negf %473 : vector<16x128xf32>
    %475 = math.exp %474 : vector<16x128xf32>
    %cst_143 = arith.constant 1.000000e+00 : f32
    %476 = vector.broadcast %cst_143 : f32 to vector<16x128xf32>
    %477 = arith.addf %476, %475 : vector<16x128xf32>
    %478 = arith.divf %476, %477 : vector<16x128xf32>
    %479 = vector.extract_strided_slice %472 {offsets = [0, 128], sizes = [16, 128], strides = [1, 1]} : vector<16x512xf32> to vector<16x128xf32>
    %480 = arith.negf %479 : vector<16x128xf32>
    %481 = math.exp %480 : vector<16x128xf32>
    %cst_144 = arith.constant 1.000000e+00 : f32
    %482 = vector.broadcast %cst_144 : f32 to vector<16x128xf32>
    %483 = arith.addf %482, %481 : vector<16x128xf32>
    %484 = arith.divf %482, %483 : vector<16x128xf32>
    %485 = vector.extract_strided_slice %472 {offsets = [0, 256], sizes = [16, 128], strides = [1, 1]} : vector<16x512xf32> to vector<16x128xf32>
    %486 = math.tanh %485 : vector<16x128xf32>
    %487 = vector.extract_strided_slice %472 {offsets = [0, 384], sizes = [16, 128], strides = [1, 1]} : vector<16x512xf32> to vector<16x128xf32>
    %488 = arith.negf %487 : vector<16x128xf32>
    %489 = math.exp %488 : vector<16x128xf32>
    %cst_145 = arith.constant 1.000000e+00 : f32
    %490 = vector.broadcast %cst_145 : f32 to vector<16x128xf32>
    %491 = arith.addf %490, %489 : vector<16x128xf32>
    %492 = arith.divf %490, %491 : vector<16x128xf32>
    %493 = arith.mulf %484, %430 : vector<16x128xf32>
    %494 = arith.mulf %478, %486 : vector<16x128xf32>
    %495 = arith.addf %493, %494 : vector<16x128xf32>
    %496 = math.tanh %495 : vector<16x128xf32>
    %497 = arith.mulf %492, %496 : vector<16x128xf32>
    %c1_i32_146 = arith.constant 1 : i32
    %498 = arith.cmpi sge, %c6_i32, %c1_i32_146 : i32
    %499 = arith.select %498, %497, %429 : vector<16x128xf32>
    %500 = arith.select %498, %495, %430 : vector<16x128xf32>
    %c7_i32_147 = arith.constant 7 : i32
    %c7_i32_148 = arith.constant 7 : i32
    %501 = arith.minsi %c7_i32_147, %c7_i32_148 : i32
    %c16_i32_149 = arith.constant 16 : i32
    %502 = arith.muli %501, %c16_i32_149 : i32
    %503 = tpu.assume_multiple %502, 16 : i32
    %504 = arith.index_cast %503 : i32 to index
    %c0_150 = arith.constant 0 : index
    %505 = vector.load %arg11[%504, %c0_150] : memref<128x512xf32, #tpu.memory_space<vmem>>, vector<16x512xf32>
    %c0_151 = arith.constant 0 : index
    %c0_152 = arith.constant 0 : index
    %506 = vector.load %arg3[%c0_151, %c0_152] : memref<128x512xf32, #tpu.memory_space<vmem>>, vector<128x512xf32>
    %cst_153 = arith.constant dense<0.000000e+00> : vector<16x512xf32>
    %507 = tpu.matmul %465, %506, %cst_153 {dimension_numbers = #tpu.dot_dimension_numbers<[1], [0], [0], [1], [0, 0, 1, 1], [], []>} : vector<16x128xf32>, vector<128x512xf32>, vector<16x512xf32> -> vector<16x512xf32>
    %508 = arith.addf %505, %507 : vector<16x512xf32>
    %509 = vector.extract_strided_slice %508 {offsets = [0, 0], sizes = [16, 128], strides = [1, 1]} : vector<16x512xf32> to vector<16x128xf32>
    %510 = arith.negf %509 : vector<16x128xf32>
    %511 = math.exp %510 : vector<16x128xf32>
    %cst_154 = arith.constant 1.000000e+00 : f32
    %512 = vector.broadcast %cst_154 : f32 to vector<16x128xf32>
    %513 = arith.addf %512, %511 : vector<16x128xf32>
    %514 = arith.divf %512, %513 : vector<16x128xf32>
    %515 = vector.extract_strided_slice %508 {offsets = [0, 128], sizes = [16, 128], strides = [1, 1]} : vector<16x512xf32> to vector<16x128xf32>
    %516 = arith.negf %515 : vector<16x128xf32>
    %517 = math.exp %516 : vector<16x128xf32>
    %cst_155 = arith.constant 1.000000e+00 : f32
    %518 = vector.broadcast %cst_155 : f32 to vector<16x128xf32>
    %519 = arith.addf %518, %517 : vector<16x128xf32>
    %520 = arith.divf %518, %519 : vector<16x128xf32>
    %521 = vector.extract_strided_slice %508 {offsets = [0, 256], sizes = [16, 128], strides = [1, 1]} : vector<16x512xf32> to vector<16x128xf32>
    %522 = math.tanh %521 : vector<16x128xf32>
    %523 = vector.extract_strided_slice %508 {offsets = [0, 384], sizes = [16, 128], strides = [1, 1]} : vector<16x512xf32> to vector<16x128xf32>
    %524 = arith.negf %523 : vector<16x128xf32>
    %525 = math.exp %524 : vector<16x128xf32>
    %cst_156 = arith.constant 1.000000e+00 : f32
    %526 = vector.broadcast %cst_156 : f32 to vector<16x128xf32>
    %527 = arith.addf %526, %525 : vector<16x128xf32>
    %528 = arith.divf %526, %527 : vector<16x128xf32>
    %529 = arith.mulf %520, %466 : vector<16x128xf32>
    %530 = arith.mulf %514, %522 : vector<16x128xf32>
    %531 = arith.addf %529, %530 : vector<16x128xf32>
    %532 = math.tanh %531 : vector<16x128xf32>
    %533 = arith.mulf %528, %532 : vector<16x128xf32>
    %c8_i32_157 = arith.constant 8 : i32
    %534 = arith.cmpi slt, %c7_i32_147, %c8_i32_157 : i32
    %535 = arith.select %534, %533, %465 : vector<16x128xf32>
    %536 = arith.select %534, %531, %466 : vector<16x128xf32>
    %c0_158 = arith.constant 0 : index
    %c0_159 = arith.constant 0 : index
    %537 = vector.load %arg5[%c0_158, %c0_159] : memref<128x512xf32, #tpu.memory_space<vmem>>, vector<128x512xf32>
    %cst_160 = arith.constant dense<0.000000e+00> : vector<16x512xf32>
    %538 = tpu.matmul %465, %537, %cst_160 {dimension_numbers = #tpu.dot_dimension_numbers<[1], [0], [0], [1], [0, 0, 1, 1], [], []>} : vector<16x128xf32>, vector<128x512xf32>, vector<16x512xf32> -> vector<16x512xf32>
    %c0_161 = arith.constant 0 : index
    %c0_162 = arith.constant 0 : index
    %539 = vector.load %arg6[%c0_161, %c0_162] : memref<128x512xf32, #tpu.memory_space<vmem>>, vector<128x512xf32>
    %cst_163 = arith.constant dense<0.000000e+00> : vector<16x512xf32>
    %540 = tpu.matmul %499, %539, %cst_163 {dimension_numbers = #tpu.dot_dimension_numbers<[1], [0], [0], [1], [0, 0, 1, 1], [], []>} : vector<16x128xf32>, vector<128x512xf32>, vector<16x512xf32> -> vector<16x512xf32>
    %541 = arith.addf %538, %540 : vector<16x512xf32>
    %542 = arith.addf %541, %9 : vector<16x512xf32>
    %543 = vector.extract_strided_slice %542 {offsets = [0, 0], sizes = [16, 128], strides = [1, 1]} : vector<16x512xf32> to vector<16x128xf32>
    %544 = arith.negf %543 : vector<16x128xf32>
    %545 = math.exp %544 : vector<16x128xf32>
    %cst_164 = arith.constant 1.000000e+00 : f32
    %546 = vector.broadcast %cst_164 : f32 to vector<16x128xf32>
    %547 = arith.addf %546, %545 : vector<16x128xf32>
    %548 = arith.divf %546, %547 : vector<16x128xf32>
    %549 = vector.extract_strided_slice %542 {offsets = [0, 128], sizes = [16, 128], strides = [1, 1]} : vector<16x512xf32> to vector<16x128xf32>
    %550 = arith.negf %549 : vector<16x128xf32>
    %551 = math.exp %550 : vector<16x128xf32>
    %cst_165 = arith.constant 1.000000e+00 : f32
    %552 = vector.broadcast %cst_165 : f32 to vector<16x128xf32>
    %553 = arith.addf %552, %551 : vector<16x128xf32>
    %554 = arith.divf %552, %553 : vector<16x128xf32>
    %555 = vector.extract_strided_slice %542 {offsets = [0, 256], sizes = [16, 128], strides = [1, 1]} : vector<16x512xf32> to vector<16x128xf32>
    %556 = math.tanh %555 : vector<16x128xf32>
    %557 = vector.extract_strided_slice %542 {offsets = [0, 384], sizes = [16, 128], strides = [1, 1]} : vector<16x512xf32> to vector<16x128xf32>
    %558 = arith.negf %557 : vector<16x128xf32>
    %559 = math.exp %558 : vector<16x128xf32>
    %cst_166 = arith.constant 1.000000e+00 : f32
    %560 = vector.broadcast %cst_166 : f32 to vector<16x128xf32>
    %561 = arith.addf %560, %559 : vector<16x128xf32>
    %562 = arith.divf %560, %561 : vector<16x128xf32>
    %563 = arith.mulf %554, %500 : vector<16x128xf32>
    %564 = arith.mulf %548, %556 : vector<16x128xf32>
    %565 = arith.addf %563, %564 : vector<16x128xf32>
    %566 = math.tanh %565 : vector<16x128xf32>
    %567 = arith.mulf %562, %566 : vector<16x128xf32>
    %c1_i32_167 = arith.constant 1 : i32
    %568 = arith.cmpi sge, %c7_i32_147, %c1_i32_167 : i32
    %569 = arith.select %568, %567, %499 : vector<16x128xf32>
    %570 = arith.select %568, %565, %500 : vector<16x128xf32>
    %c8_i32_168 = arith.constant 8 : i32
    %c7_i32_169 = arith.constant 7 : i32
    %571 = arith.minsi %c8_i32_168, %c7_i32_169 : i32
    %c16_i32_170 = arith.constant 16 : i32
    %572 = arith.muli %571, %c16_i32_170 : i32
    %573 = tpu.assume_multiple %572, 16 : i32
    %574 = arith.index_cast %573 : i32 to index
    %c0_171 = arith.constant 0 : index
    %575 = vector.load %arg11[%574, %c0_171] : memref<128x512xf32, #tpu.memory_space<vmem>>, vector<16x512xf32>
    %c0_172 = arith.constant 0 : index
    %c0_173 = arith.constant 0 : index
    %576 = vector.load %arg3[%c0_172, %c0_173] : memref<128x512xf32, #tpu.memory_space<vmem>>, vector<128x512xf32>
    %cst_174 = arith.constant dense<0.000000e+00> : vector<16x512xf32>
    %577 = tpu.matmul %535, %576, %cst_174 {dimension_numbers = #tpu.dot_dimension_numbers<[1], [0], [0], [1], [0, 0, 1, 1], [], []>} : vector<16x128xf32>, vector<128x512xf32>, vector<16x512xf32> -> vector<16x512xf32>
    %578 = arith.addf %575, %577 : vector<16x512xf32>
    %579 = vector.extract_strided_slice %578 {offsets = [0, 0], sizes = [16, 128], strides = [1, 1]} : vector<16x512xf32> to vector<16x128xf32>
    %580 = arith.negf %579 : vector<16x128xf32>
    %581 = math.exp %580 : vector<16x128xf32>
    %cst_175 = arith.constant 1.000000e+00 : f32
    %582 = vector.broadcast %cst_175 : f32 to vector<16x128xf32>
    %583 = arith.addf %582, %581 : vector<16x128xf32>
    %584 = arith.divf %582, %583 : vector<16x128xf32>
    %585 = vector.extract_strided_slice %578 {offsets = [0, 128], sizes = [16, 128], strides = [1, 1]} : vector<16x512xf32> to vector<16x128xf32>
    %586 = arith.negf %585 : vector<16x128xf32>
    %587 = math.exp %586 : vector<16x128xf32>
    %cst_176 = arith.constant 1.000000e+00 : f32
    %588 = vector.broadcast %cst_176 : f32 to vector<16x128xf32>
    %589 = arith.addf %588, %587 : vector<16x128xf32>
    %590 = arith.divf %588, %589 : vector<16x128xf32>
    %591 = vector.extract_strided_slice %578 {offsets = [0, 256], sizes = [16, 128], strides = [1, 1]} : vector<16x512xf32> to vector<16x128xf32>
    %592 = math.tanh %591 : vector<16x128xf32>
    %593 = vector.extract_strided_slice %578 {offsets = [0, 384], sizes = [16, 128], strides = [1, 1]} : vector<16x512xf32> to vector<16x128xf32>
    %594 = arith.negf %593 : vector<16x128xf32>
    %595 = math.exp %594 : vector<16x128xf32>
    %cst_177 = arith.constant 1.000000e+00 : f32
    %596 = vector.broadcast %cst_177 : f32 to vector<16x128xf32>
    %597 = arith.addf %596, %595 : vector<16x128xf32>
    %598 = arith.divf %596, %597 : vector<16x128xf32>
    %599 = arith.mulf %590, %536 : vector<16x128xf32>
    %600 = arith.mulf %584, %592 : vector<16x128xf32>
    %601 = arith.addf %599, %600 : vector<16x128xf32>
    %602 = math.tanh %601 : vector<16x128xf32>
    %603 = arith.mulf %598, %602 : vector<16x128xf32>
    %c8_i32_178 = arith.constant 8 : i32
    %604 = arith.cmpi slt, %c8_i32_168, %c8_i32_178 : i32
    %605 = arith.select %604, %603, %535 : vector<16x128xf32>
    %606 = arith.select %604, %601, %536 : vector<16x128xf32>
    %c0_179 = arith.constant 0 : index
    %c0_180 = arith.constant 0 : index
    %607 = vector.load %arg5[%c0_179, %c0_180] : memref<128x512xf32, #tpu.memory_space<vmem>>, vector<128x512xf32>
    %cst_181 = arith.constant dense<0.000000e+00> : vector<16x512xf32>
    %608 = tpu.matmul %535, %607, %cst_181 {dimension_numbers = #tpu.dot_dimension_numbers<[1], [0], [0], [1], [0, 0, 1, 1], [], []>} : vector<16x128xf32>, vector<128x512xf32>, vector<16x512xf32> -> vector<16x512xf32>
    %c0_182 = arith.constant 0 : index
    %c0_183 = arith.constant 0 : index
    %609 = vector.load %arg6[%c0_182, %c0_183] : memref<128x512xf32, #tpu.memory_space<vmem>>, vector<128x512xf32>
    %cst_184 = arith.constant dense<0.000000e+00> : vector<16x512xf32>
    %610 = tpu.matmul %569, %609, %cst_184 {dimension_numbers = #tpu.dot_dimension_numbers<[1], [0], [0], [1], [0, 0, 1, 1], [], []>} : vector<16x128xf32>, vector<128x512xf32>, vector<16x512xf32> -> vector<16x512xf32>
    %611 = arith.addf %608, %610 : vector<16x512xf32>
    %612 = arith.addf %611, %9 : vector<16x512xf32>
    %613 = vector.extract_strided_slice %612 {offsets = [0, 0], sizes = [16, 128], strides = [1, 1]} : vector<16x512xf32> to vector<16x128xf32>
    %614 = arith.negf %613 : vector<16x128xf32>
    %615 = math.exp %614 : vector<16x128xf32>
    %cst_185 = arith.constant 1.000000e+00 : f32
    %616 = vector.broadcast %cst_185 : f32 to vector<16x128xf32>
    %617 = arith.addf %616, %615 : vector<16x128xf32>
    %618 = arith.divf %616, %617 : vector<16x128xf32>
    %619 = vector.extract_strided_slice %612 {offsets = [0, 128], sizes = [16, 128], strides = [1, 1]} : vector<16x512xf32> to vector<16x128xf32>
    %620 = arith.negf %619 : vector<16x128xf32>
    %621 = math.exp %620 : vector<16x128xf32>
    %cst_186 = arith.constant 1.000000e+00 : f32
    %622 = vector.broadcast %cst_186 : f32 to vector<16x128xf32>
    %623 = arith.addf %622, %621 : vector<16x128xf32>
    %624 = arith.divf %622, %623 : vector<16x128xf32>
    %625 = vector.extract_strided_slice %612 {offsets = [0, 256], sizes = [16, 128], strides = [1, 1]} : vector<16x512xf32> to vector<16x128xf32>
    %626 = math.tanh %625 : vector<16x128xf32>
    %627 = vector.extract_strided_slice %612 {offsets = [0, 384], sizes = [16, 128], strides = [1, 1]} : vector<16x512xf32> to vector<16x128xf32>
    %628 = arith.negf %627 : vector<16x128xf32>
    %629 = math.exp %628 : vector<16x128xf32>
    %cst_187 = arith.constant 1.000000e+00 : f32
    %630 = vector.broadcast %cst_187 : f32 to vector<16x128xf32>
    %631 = arith.addf %630, %629 : vector<16x128xf32>
    %632 = arith.divf %630, %631 : vector<16x128xf32>
    %633 = arith.mulf %624, %570 : vector<16x128xf32>
    %634 = arith.mulf %618, %626 : vector<16x128xf32>
    %635 = arith.addf %633, %634 : vector<16x128xf32>
    %636 = math.tanh %635 : vector<16x128xf32>
    %637 = arith.mulf %632, %636 : vector<16x128xf32>
    %c1_i32_188 = arith.constant 1 : i32
    %638 = arith.cmpi sge, %c8_i32_168, %c1_i32_188 : i32
    %639 = arith.select %638, %637, %569 : vector<16x128xf32>
    %640 = arith.select %638, %635, %570 : vector<16x128xf32>
    %c9_i32 = arith.constant 9 : i32
    %c0_189 = arith.constant 0 : index
    %c0_190 = arith.constant 0 : index
    %641 = vector.load %arg8[%c0_189, %c0_190] : memref<128x4xf32, #tpu.memory_space<vmem>>, vector<128x4xf32>
    %cst_191 = arith.constant dense<0.000000e+00> : vector<16x4xf32>
    %642 = tpu.matmul %639, %641, %cst_191 {dimension_numbers = #tpu.dot_dimension_numbers<[1], [0], [0], [1], [0, 0, 1, 1], [], []>} : vector<16x128xf32>, vector<128x4xf32>, vector<16x4xf32> -> vector<16x4xf32>
    %c0_192 = arith.constant 0 : index
    %c0_193 = arith.constant 0 : index
    %643 = vector.load %arg9[%c0_192, %c0_193] : memref<1x4xf32, #tpu.memory_space<vmem>>, vector<1x4xf32>
    %644 = vector.broadcast %643 : vector<1x4xf32> to vector<16x4xf32>
    %645 = arith.addf %642, %644 : vector<16x4xf32>
    %646 = arith.negf %645 : vector<16x4xf32>
    %647 = math.exp %646 : vector<16x4xf32>
    %cst_194 = arith.constant 1.000000e+00 : f32
    %648 = vector.broadcast %cst_194 : f32 to vector<16x4xf32>
    %649 = arith.addf %648, %647 : vector<16x4xf32>
    %650 = arith.divf %648, %649 : vector<16x4xf32>
    %c0_195 = arith.constant 0 : index
    %c0_196 = arith.constant 0 : index
    %651 = vector.load %arg10[%c0_195, %c0_196] : memref<16x4xf32, #tpu.memory_space<vmem>>, vector<16x4xf32>
    tpu.vector_store %arg10[%c0_195, %c0_196], %650 {strides = array<i32>} : memref<16x4xf32, #tpu.memory_space<vmem>>, vector<16x4xf32>,
    return
  }
  func.func @transform_0(%arg0: i32) -> (i32, i32) {
    %c0_i32 = arith.constant 0 : i32
    %c0_i32_0 = arith.constant 0 : i32
    %c0_i32_1 = arith.constant 0 : i32
    return %c0_i32, %c0_i32_0 : i32, i32
  }
  func.func @transform_1(%arg0: i32) -> (i32, i32) {
    %c0_i32 = arith.constant 0 : i32
    %c0_i32_0 = arith.constant 0 : i32
    %c0_i32_1 = arith.constant 0 : i32
    return %c0_i32, %c0_i32_0 : i32, i32
  }
  func.func @transform_2(%arg0: i32) -> (i32, i32) {
    %c0_i32 = arith.constant 0 : i32
    %c0_i32_0 = arith.constant 0 : i32
    %c0_i32_1 = arith.constant 0 : i32
    return %c0_i32, %c0_i32_0 : i32, i32
  }
  func.func @transform_3(%arg0: i32) -> (i32, i32) {
    %c0_i32 = arith.constant 0 : i32
    %c0_i32_0 = arith.constant 0 : i32
    %c0_i32_1 = arith.constant 0 : i32
    return %c0_i32, %c0_i32_0 : i32, i32
  }
  func.func @transform_4(%arg0: i32) -> (i32, i32) {
    %c0_i32 = arith.constant 0 : i32
    %c0_i32_0 = arith.constant 0 : i32
    %c0_i32_1 = arith.constant 0 : i32
    return %c0_i32, %c0_i32_0 : i32, i32
  }
  func.func @transform_5(%arg0: i32) -> (i32, i32) {
    %c0_i32 = arith.constant 0 : i32
    %c0_i32_0 = arith.constant 0 : i32
    %c0_i32_1 = arith.constant 0 : i32
    return %c0_i32, %c0_i32_0 : i32, i32
  }
  func.func @transform_6(%arg0: i32) -> (i32, i32) {
    %c0_i32 = arith.constant 0 : i32
    %c0_i32_0 = arith.constant 0 : i32
    %c0_i32_1 = arith.constant 0 : i32
    return %c0_i32, %c0_i32_0 : i32, i32
  }
  func.func @transform_7(%arg0: i32) -> (i32, i32) {
    %c0_i32 = arith.constant 0 : i32
    %c0_i32_0 = arith.constant 0 : i32
    %c0_i32_1 = arith.constant 0 : i32
    return %c0_i32, %c0_i32_0 : i32, i32
  }
  func.func @transform_8(%arg0: i32) -> (i32, i32) {
    %c0_i32 = arith.constant 0 : i32
    %c0_i32_0 = arith.constant 0 : i32
    %c0_i32_1 = arith.constant 0 : i32
    return %c0_i32, %c0_i32_0 : i32, i32
  }
  func.func @transform_9(%arg0: i32) -> (i32, i32) {
    %c0_i32 = arith.constant 0 : i32
    %c0_i32_0 = arith.constant 0 : i32
    return %arg0, %c0_i32 : i32, i32
  }
}

</mosaic_0001>

<llo_original>
// kernel: tpu_custom_call.1
$region0: #{tpu_custom_call.1}
  #allocation0 [shape = 'u32[]', space=smem, size = 0x4, offset = 0x4, fixed_abs, tag = 'smem constant byte address 0x4 - core index']
  #allocation1 [shape = 'u32[144,128]{1,0:T(1,128)}', space=vmem, size = 0x12000, scoped, tag = 'internal scratch']
  #allocation2 [shape = 'f32[128,512]{1,0:T(8,128)}', space=vmem, size = 0x40000, scoped, tag = 'scratch operand']
  %s0 = inlined_call_operand.vmem [shape: f32[128,16], index: 0, kind: input, shape index: {}]
  %s1 = inlined_call_operand.vmem [shape: f32[16,512], index: 1, kind: input, shape index: {}]
  %s2 = inlined_call_operand.hbm [shape: f32[128,512], index: 2, kind: input, shape index: {}]
  %s3 = inlined_call_operand.vmem [shape: f32[1,512], index: 3, kind: input, shape index: {}]
  %s4 = inlined_call_operand.hbm [shape: f32[128,512], index: 4, kind: input, shape index: {}]
  %s5 = inlined_call_operand.hbm [shape: f32[128,512], index: 5, kind: input, shape index: {}]
  %s6 = inlined_call_operand.vmem [shape: f32[1,512], index: 6, kind: input, shape index: {}]
  %s7 = inlined_call_operand.vmem [shape: f32[128,4], index: 7, kind: input, shape index: {}]
  %s8 = inlined_call_operand.vmem [shape: f32[1,4], index: 8, kind: input, shape index: {}]
  %s9 = inlined_call_operand.vmem [shape: f32[16,4], index: 9, kind: output, shape index: {}]
  %s10 = sld [smem:[#allocation0]]
  $region58: #{tpu_custom_call.1} parent=0
    _
  %s12 = ssub.s32 1, %s10
  %s13 = scalar_select 0, %s12, %s10
  $region1: #{tpu_custom_call.1} parent=0
    #allocation3 [shape = 'u8[262144]{0}', space=vmem, size = 0x40000, scoped, tag = 'input window, operand 2, single buffered']
    #allocation4 [shape = 's32[1]{0}', space=sflag, size = 0x4, scoped, tag = 'scoped memory for tpu_custom_call.1']
    #allocation5 [shape = 'u8[262144]{0}', space=vmem, size = 0x40000, scoped, tag = 'input window, operand 4, single buffered']
    #allocation6 [shape = 's32[1]{0}', space=sflag, size = 0x4, scoped, tag = 'scoped memory for tpu_custom_call.1']
    #allocation7 [shape = 'u8[262144]{0}', space=vmem, size = 0x40000, scoped, tag = 'input window, operand 5, single buffered']
    %14 = vsyncpa [#allocation4], 0
    %15 = vsyncpa [#allocation6], 0
    // Predicated region
    $region2: #{tpu_custom_call.1} parent=1 // pred_check
      _
    $region3: #{tpu_custom_call.1} parent=1 // pred_check_branch
      %17 = sbr.rel (0) target = $region5
    $region4: #{tpu_custom_call.1} parent=1 // pred_region
      _
    $region5: #{tpu_custom_call.1} parent=1 // pred_fallthru
      _
    // Predicated region
    $region6: #{tpu_custom_call.1} parent=1 // pred_check
      _
    $region7: #{tpu_custom_call.1} parent=1 // pred_check_branch
      %19 = sbr.rel (0) target = $region9
    $region8: #{tpu_custom_call.1} parent=1 // pred_region
      _
    $region9: #{tpu_custom_call.1} parent=1 // pred_fallthru
      _
    // Predicated region
    $region10: #{tpu_custom_call.1} parent=1 // pred_check
      _
    $region11: #{tpu_custom_call.1} parent=1 // pred_check_branch
      %21 = sbr.rel (0) target = $region13
    $region12: #{tpu_custom_call.1} parent=1 // pred_region
      %s23 = ssub.s32 8192, 8192
      %24 = vsyncadd [#allocation4], %s23
      %s25 = sshll.u32 [#allocation3], 4
      %s26 = int_to_ptr.vmem [resolvable:$true] %s25
      %31 = dma.hbm_to_vmem [thread:$0]  %s2, 8192, %s26, [#allocation4], 512, 512, 32
    $region13: #{tpu_custom_call.1} parent=1 // pred_fallthru
      _
    // Predicated region
    $region14: #{tpu_custom_call.1} parent=1 // pred_check
      _
    $region15: #{tpu_custom_call.1} parent=1 // pred_check_branch
      %33 = sbr.rel (0) target = $region17
    $region16: #{tpu_custom_call.1} parent=1 // pred_region
      _
    $region17: #{tpu_custom_call.1} parent=1 // pred_fallthru
      _
    // Predicated region
    $region18: #{tpu_custom_call.1} parent=1 // pred_check
      _
    $region19: #{tpu_custom_call.1} parent=1 // pred_check_branch
      %35 = sbr.rel (0) target = $region21
    $region20: #{tpu_custom_call.1} parent=1 // pred_region
      %s37 = ssub.s32 8192, 8192
      %38 = vsyncadd [#allocation6], %s37
      %s39 = sshll.u32 [#allocation5], 4
      %s40 = int_to_ptr.vmem [resolvable:$true] %s39
      %45 = dma.hbm_to_vmem [thread:$0]  %s4, 8192, %s40, [#allocation6], 512, 512, 32
    $region21: #{tpu_custom_call.1} parent=1 // pred_fallthru
      _
    // Predicated region
    $region22: #{tpu_custom_call.1} parent=1 // pred_check
      _
    $region23: #{tpu_custom_call.1} parent=1 // pred_check_branch
      %47 = sbr.rel (0) target = $region25
    $region24: #{tpu_custom_call.1} parent=1 // pred_region
      %s49 = ssub.s32 8192, 8192
      %50 = vsyncadd [#allocation6], %s49
      %s51 = sshll.u32 [#allocation7], 4
      %s52 = int_to_ptr.vmem [resolvable:$true] %s51
      %57 = dma.hbm_to_vmem [thread:$0]  %s5, 8192, %s52, [#allocation6], 512, 512, 32
    $region25: #{tpu_custom_call.1} parent=1 // pred_fallthru
      _
    // Predicated region
    $region26: #{tpu_custom_call.1} parent=1 // pred_check
      _
    $region27: #{tpu_custom_call.1} parent=1 // pred_check_branch
      %59 = sbr.rel (0) target = $region29
    $region28: #{tpu_custom_call.1} parent=1 // pred_region
      _
    $region29: #{tpu_custom_call.1} parent=1 // pred_fallthru
      _
    // Predicated region
    $region30: #{tpu_custom_call.1} parent=1 // pred_check
      _
    $region31: #{tpu_custom_call.1} parent=1 // pred_check_branch
      %61 = sbr.rel (0) target = $region33
    $region32: #{tpu_custom_call.1} parent=1 // pred_region
      _
    $region33: #{tpu_custom_call.1} parent=1 // pred_fallthru
      _
    // Predicated region
    $region34: #{tpu_custom_call.1} parent=1 // pred_check
      _
    $region35: #{tpu_custom_call.1} parent=1 // pred_check_branch
      %63 = sbr.rel (0) target = $region37
    $region36: #{tpu_custom_call.1} parent=1 // pred_region
      _
    $region37: #{tpu_custom_call.1} parent=1 // pred_fallthru
      _
    // Predicated region
    $region38: #{tpu_custom_call.1} parent=1 // pred_check
      _
    $region39: #{tpu_custom_call.1} parent=1 // pred_check_branch
      %65 = sbr.rel (0) target = $region41
    $region40: #{tpu_custom_call.1} parent=1 // pred_region
      %66 = dma.done [#allocation4], 8192
    $region41: #{tpu_custom_call.1} parent=1 // pred_fallthru
      _
    // Predicated region
    $region42: #{tpu_custom_call.1} parent=1 // pred_check
      _
    $region43: #{tpu_custom_call.1} parent=1 // pred_check_branch
      %68 = sbr.rel (0) target = $region45
    $region44: #{tpu_custom_call.1} parent=1 // pred_region
      %69 = dma.done [#allocation6], 8192
    $region45: #{tpu_custom_call.1} parent=1 // pred_fallthru
      _
    // Predicated region
    $region46: #{tpu_custom_call.1} parent=1 // pred_check
      _
    $region47: #{tpu_custom_call.1} parent=1 // pred_check_branch
      %71 = sbr.rel (0) target = $region49
    $region48: #{tpu_custom_call.1} parent=1 // pred_region
      %72 = dma.done [#allocation6], 8192
    $region49: #{tpu_custom_call.1} parent=1 // pred_fallthru
      _
    %v73 = vld [vmem:[%s0] sm:$0xff]
    %v74 = vld [vmem:[%s0 + $0x8] sm:$0xff]
    %v75 = vld [vmem:[%s0 + $0x10] sm:$0xff]
    %v76 = vld [vmem:[%s0 + $0x18] sm:$0xff]
    %v77 = vld [vmem:[%s0 + $0x20] sm:$0xff]
    %v78 = vld [vmem:[%s0 + $0x28] sm:$0xff]
    %v79 = vld [vmem:[%s0 + $0x30] sm:$0xff]
    %v80 = vld [vmem:[%s0 + $0x38] sm:$0xff]
    %v81 = vld [vmem:[%s0 + $0x40] sm:$0xff]
    %v82 = vld [vmem:[%s0 + $0x48] sm:$0xff]
    %v83 = vld [vmem:[%s0 + $0x50] sm:$0xff]
    %v84 = vld [vmem:[%s0 + $0x58] sm:$0xff]
    %v85 = vld [vmem:[%s0 + $0x60] sm:$0xff]
    %v86 = vld [vmem:[%s0 + $0x68] sm:$0xff]
    %v87 = vld [vmem:[%s0 + $0x70] sm:$0xff]
    %v88 = vld [vmem:[%s0 + $0x78] sm:$0xff]
    %v89 = vld [vmem:[%s1] sm:$0xff]
    %v90 = vld [vmem:[%s1 + $0x8] sm:$0xff]
    %v91 = vld [vmem:[%s1 + $0x10] sm:$0xff]
    %v92 = vld [vmem:[%s1 + $0x18] sm:$0xff]
    %v93 = vld [vmem:[%s1 + $0x20] sm:$0xff]
    %v94 = vld [vmem:[%s1 + $0x28] sm:$0xff]
    %v95 = vld [vmem:[%s1 + $0x30] sm:$0xff]
    %v96 = vld [vmem:[%s1 + $0x38] sm:$0xff]
    %v97 = vld [vmem:[%s3] sm:$0xf]
    %v99 = vlaneseq
    %v100 = vshrl.u32 %v99, 7
    %v101 = vsub.s32 0, %v100
    %v102 = vrot.slane %v97, %v101
    %v103 = vlaneseq
    %v104 = vshrl.u32 %v103, 7
    %v105 = vsub.s32 1, %v104
    %v106 = vrot.slane %v97, %v105
    %v107 = vlaneseq
    %v108 = vshrl.u32 %v107, 7
    %v109 = vsub.s32 2, %v108
    %v110 = vrot.slane %v97, %v109
    %v111 = vlaneseq
    %v112 = vshrl.u32 %v111, 7
    %v113 = vsub.s32 3, %v112
    %v114 = vrot.slane %v97, %v113
    %vm119 = vcmask 130048
    %v121 = vsel %vm119, %v73, 0
    %v124 = vsel %vm119, %v74, 0
    %v127 = vsel %vm119, %v75, 0
    %v130 = vsel %vm119, %v76, 0
    %v133 = vsel %vm119, %v77, 0
    %v136 = vsel %vm119, %v78, 0
    %v139 = vsel %vm119, %v79, 0
    %v142 = vsel %vm119, %v80, 0
    %v145 = vsel %vm119, %v81, 0
    %v148 = vsel %vm119, %v82, 0
    %v151 = vsel %vm119, %v83, 0
    %v154 = vsel %vm119, %v84, 0
    %v157 = vsel %vm119, %v85, 0
    %v160 = vsel %vm119, %v86, 0
    %v163 = vsel %vm119, %v87, 0
    %v166 = vsel %vm119, %v88, 0
    %168 = vmatprep.subr.mxu0 0.0
    %169 = vmatpush1.msra.mxu0 0.0
    %170 = vmatprep.subr.mxu0 0.0
    %171 = vmatpush1.msra.mxu0 0.0
    %172 = vmatprep.subr.mxu0 0.0
    %173 = vmatpush1.msra.mxu0 0.0
    %174 = vmatprep.subr.mxu0 0.0
    %175 = vmatpush1.msra.mxu0 0.0
    %176 = vmatprep.subr.mxu0 0.0
    %177 = vmatpush1.msra.mxu0 0.0
    %178 = vmatprep.subr.mxu0 0.0
    %179 = vmatpush1.msra.mxu0 0.0
    %180 = vmatprep.subr.mxu0 0.0
    %181 = vmatpush1.msra.mxu0 0.0
    %182 = vmatprep.subr.mxu0 0.0
    %183 = vmatpush1.msra.mxu0 0.0
    %184 = vmatprep.subr.mxu0 0.0
    %185 = vmatpush1.msra.mxu0 0.0
    %186 = vmatprep.subr.mxu0 0.0
    %187 = vmatpush1.msra.mxu0 0.0
    %188 = vmatprep.subr.mxu0 0.0
    %189 = vmatpush1.msra.mxu0 0.0
    %190 = vmatprep.subr.mxu0 0.0
    %191 = vmatpush1.msra.mxu0 0.0
    %192 = vmatprep.subr.mxu0 0.0
    %193 = vmatpush1.msra.mxu0 0.0
    %194 = vmatprep.subr.mxu0 0.0
    %195 = vmatpush1.msra.mxu0 0.0
    %196 = vmatprep.subr.mxu0 %v94
    %197 = vmatpush1.msra.mxu0 %v93
    %198 = vmatprep.subr.mxu0 %v90
    %199 = vmatpush1.msra.mxu0 %v89
    %200 = vmatprep.subr.mxu0 0.0
    %201 = vmatpush2.msra.mxu0 0.0
    %202 = vmatprep.subr.mxu0 0.0
    %203 = vmatpush2.msra.mxu0 0.0
    %204 = vmatprep.subr.mxu0 0.0
    %205 = vmatpush2.msra.mxu0 0.0
    %206 = vmatprep.subr.mxu0 0.0
    %207 = vmatpush2.msra.mxu0 0.0
    %208 = vmatprep.subr.mxu0 0.0
    %209 = vmatpush2.msra.mxu0 0.0
    %210 = vmatprep.subr.mxu0 0.0
    %211 = vmatpush2.msra.mxu0 0.0
    %212 = vmatprep.subr.mxu0 0.0
    %213 = vmatpush2.msra.mxu0 0.0
    %214 = vmatprep.subr.mxu0 0.0
    %215 = vmatpush2.msra.mxu0 0.0
    %216 = vmatprep.subr.mxu0 0.0
    %217 = vmatpush2.msra.mxu0 0.0
    %218 = vmatprep.subr.mxu0 0.0
    %219 = vmatpush2.msra.mxu0 0.0
    %220 = vmatprep.subr.mxu0 0.0
    %221 = vmatpush2.msra.mxu0 0.0
    %222 = vmatprep.subr.mxu0 0.0
    %223 = vmatpush2.msra.mxu0 0.0
    %224 = vmatprep.subr.mxu0 0.0
    %225 = vmatpush2.msra.mxu0 0.0
    %226 = vmatprep.subr.mxu0 0.0
    %227 = vmatpush2.msra.mxu0 0.0
    %228 = vmatprep.subr.mxu0 0.0
    %229 = vmatpush2.msra.mxu0 0.0
    %230 = vmatprep.subr.mxu0 0.0
    %231 = vmatpush2.msra.mxu0 0.0
    %232 = vmatprep.mubr.f32.mxu0 0.0
    %233 = vmatmul.mubr.f32.gmra.mxu0 %v121
    %v234 = vpop.f32.mrf.mxu0
    %v235 = vadd.f32 %v102, %v234
    %v236 = vpop.f32.mrf.mxu0
    %v237 = vadd.f32 %v106, %v236
    %238 = vmatprep.mubr.f32.mxu0 0.0
    %239 = vmatmul.mubr.f32.gmra.mxu0 %v124
    %v240 = vpop.f32.mrf.mxu0
    %v241 = vadd.f32 %v102, %v240
    %v242 = vpop.f32.mrf.mxu0
    %v243 = vadd.f32 %v106, %v242
    %244 = vmatprep.mubr.f32.mxu0 0.0
    %245 = vmatmul.mubr.f32.gmra.mxu0 %v127
    %v246 = vpop.f32.mrf.mxu0
    %v247 = vadd.f32 %v102, %v246
    %v248 = vpop.f32.mrf.mxu0
    %v249 = vadd.f32 %v106, %v248
    %250 = vmatprep.mubr.f32.mxu0 0.0
    %251 = vmatmul.mubr.f32.gmra.mxu0 %v130
    %v252 = vpop.f32.mrf.mxu0
    %v253 = vadd.f32 %v102, %v252
    %v254 = vpop.f32.mrf.mxu0
    %v255 = vadd.f32 %v106, %v254
    %256 = vmatprep.mubr.f32.mxu0 0.0
    %257 = vmatmul.mubr.f32.gmra.mxu0 %v133
    %v258 = vpop.f32.mrf.mxu0
    %v259 = vadd.f32 %v102, %v258
    %v260 = vpop.f32.mrf.mxu0
    %v261 = vadd.f32 %v106, %v260
    %262 = vmatprep.mubr.f32.mxu0 0.0
    %263 = vmatmul.mubr.f32.gmra.mxu0 %v136
    %v264 = vpop.f32.mrf.mxu0
    %v265 = vadd.f32 %v102, %v264
    %v266 = vpop.f32.mrf.mxu0
    %v267 = vadd.f32 %v106, %v266
    %268 = vmatprep.mubr.f32.mxu0 0.0
    %269 = vmatmul.mubr.f32.gmra.mxu0 %v139
    %v270 = vpop.f32.mrf.mxu0
    %v271 = vadd.f32 %v102, %v270
    %v272 = vpop.f32.mrf.mxu0
    %v273 = vadd.f32 %v106, %v272
    %274 = vmatprep.mubr.f32.mxu0 0.0
    %275 = vmatmul.mubr.f32.gmra.mxu0 %v142
    %v276 = vpop.f32.mrf.mxu0
    %v277 = vadd.f32 %v102, %v276
    %v278 = vpop.f32.mrf.mxu0
    %v279 = vadd.f32 %v106, %v278
    %280 = vmatprep.mubr.f32.mxu0 0.0
    %281 = vmatmul.mubr.f32.gmra.mxu0 %v145
    %v282 = vpop.f32.mrf.mxu0
    %v283 = vadd.f32 %v102, %v282
    %v284 = vpop.f32.mrf.mxu0
    %v285 = vadd.f32 %v106, %v284
    %286 = vmatprep.mubr.f32.mxu0 0.0
    %287 = vmatmul.mubr.f32.gmra.mxu0 %v148
    %v288 = vpop.f32.mrf.mxu0
    %v289 = vadd.f32 %v102, %v288
    %v290 = vpop.f32.mrf.mxu0
    %v291 = vadd.f32 %v106, %v290
    %292 = vmatprep.mubr.f32.mxu0 0.0
    %293 = vmatmul.mubr.f32.gmra.mxu0 %v151
    %v294 = vpop.f32.mrf.mxu0
    %v295 = vadd.f32 %v102, %v294
    %v296 = vpop.f32.mrf.mxu0
    %v297 = vadd.f32 %v106, %v296
    %298 = vmatprep.mubr.f32.mxu0 0.0
    %299 = vmatmul.mubr.f32.gmra.mxu0 %v154
    %v300 = vpop.f32.mrf.mxu0
    %v301 = vadd.f32 %v102, %v300
    %v302 = vpop.f32.mrf.mxu0
    %v303 = vadd.f32 %v106, %v302
    %304 = vmatprep.mubr.f32.mxu0 0.0
    %305 = vmatmul.mubr.f32.gmra.mxu0 %v157
    %v306 = vpop.f32.mrf.mxu0
    %v307 = vadd.f32 %v102, %v306
    %v308 = vpop.f32.mrf.mxu0
    %v309 = vadd.f32 %v106, %v308
    %310 = vmatprep.mubr.f32.mxu0 0.0
    %311 = vmatmul.mubr.f32.gmra.mxu0 %v160
    %v312 = vpop.f32.mrf.mxu0
    %v313 = vadd.f32 %v102, %v312
    %v314 = vpop.f32.mrf.mxu0
    %v315 = vadd.f32 %v106, %v314
    %316 = vmatprep.mubr.f32.mxu0 0.0
    %317 = vmatmul.mubr.f32.gmra.mxu0 %v163
    %v318 = vpop.f32.mrf.mxu0
    %v319 = vadd.f32 %v102, %v318
    %v320 = vpop.f32.mrf.mxu0
    %v321 = vadd.f32 %v106, %v320
    %322 = vmatprep.mubr.f32.mxu0 0.0
    %323 = vmatmul.mubr.f32.gmra.mxu0 %v166
    %v324 = vpop.f32.mrf.mxu0
    %v325 = vadd.f32 %v102, %v324
    %v326 = vpop.f32.mrf.mxu0
    %v327 = vadd.f32 %v106, %v326
    %328 = vdwg.mxu0
    %329 = vmatprep.subr.mxu0 0.0
    %330 = vmatpush1.msra.mxu0 0.0
    %331 = vmatprep.subr.mxu0 0.0
    %332 = vmatpush1.msra.mxu0 0.0
    %333 = vmatprep.subr.mxu0 0.0
    %334 = vmatpush1.msra.mxu0 0.0
    %335 = vmatprep.subr.mxu0 0.0
    %336 = vmatpush1.msra.mxu0 0.0
    %337 = vmatprep.subr.mxu0 0.0
    %338 = vmatpush1.msra.mxu0 0.0
    %339 = vmatprep.subr.mxu0 0.0
    %340 = vmatpush1.msra.mxu0 0.0
    %341 = vmatprep.subr.mxu0 0.0
    %342 = vmatpush1.msra.mxu0 0.0
    %343 = vmatprep.subr.mxu0 0.0
    %344 = vmatpush1.msra.mxu0 0.0
    %345 = vmatprep.subr.mxu0 0.0
    %346 = vmatpush1.msra.mxu0 0.0
    %347 = vmatprep.subr.mxu0 0.0
    %348 = vmatpush1.msra.mxu0 0.0
    %349 = vmatprep.subr.mxu0 0.0
    %350 = vmatpush1.msra.mxu0 0.0
    %351 = vmatprep.subr.mxu0 0.0
    %352 = vmatpush1.msra.mxu0 0.0
    %353 = vmatprep.subr.mxu0 0.0
    %354 = vmatpush1.msra.mxu0 0.0
    %355 = vmatprep.subr.mxu0 0.0
    %356 = vmatpush1.msra.mxu0 0.0
    %357 = vmatprep.subr.mxu0 %v96
    %358 = vmatpush1.msra.mxu0 %v95
    %359 = vmatprep.subr.mxu0 %v92
    %360 = vmatpush1.msra.mxu0 %v91
    %361 = vmatprep.subr.mxu0 0.0
    %362 = vmatpush2.msra.mxu0 0.0
    %363 = vmatprep.subr.mxu0 0.0
    %364 = vmatpush2.msra.mxu0 0.0
    %365 = vmatprep.subr.mxu0 0.0
    %366 = vmatpush2.msra.mxu0 0.0
    %367 = vmatprep.subr.mxu0 0.0
    %368 = vmatpush2.msra.mxu0 0.0
    %369 = vmatprep.subr.mxu0 0.0
    %370 = vmatpush2.msra.mxu0 0.0
    %371 = vmatprep.subr.mxu0 0.0
    %372 = vmatpush2.msra.mxu0 0.0
    %373 = vmatprep.subr.mxu0 0.0
    %374 = vmatpush2.msra.mxu0 0.0
    %375 = vmatprep.subr.mxu0 0.0
    %376 = vmatpush2.msra.mxu0 0.0
    %377 = vmatprep.subr.mxu0 0.0
    %378 = vmatpush2.msra.mxu0 0.0
    %379 = vmatprep.subr.mxu0 0.0
    %380 = vmatpush2.msra.mxu0 0.0
    %381 = vmatprep.subr.mxu0 0.0
    %382 = vmatpush2.msra.mxu0 0.0
    %383 = vmatprep.subr.mxu0 0.0
    %384 = vmatpush2.msra.mxu0 0.0
    %385 = vmatprep.subr.mxu0 0.0
    %386 = vmatpush2.msra.mxu0 0.0
    %387 = vmatprep.subr.mxu0 0.0
    %388 = vmatpush2.msra.mxu0 0.0
    %389 = vmatprep.subr.mxu0 0.0
    %390 = vmatpush2.msra.mxu0 0.0
    %391 = vmatprep.subr.mxu0 0.0
    %392 = vmatpush2.msra.mxu0 0.0
    %393 = vmatprep.mubr.f32.mxu0 0.0
    %394 = vmatmul.mubr.f32.gmra.mxu0 %v121
    %v395 = vpop.f32.mrf.mxu0
    %v396 = vadd.f32 %v110, %v395
    %v397 = vpop.f32.mrf.mxu0
    %v398 = vadd.f32 %v114, %v397
    %399 = vmatprep.mubr.f32.mxu0 0.0
    %400 = vmatmul.mubr.f32.gmra.mxu0 %v124
    %v401 = vpop.f32.mrf.mxu0
    %v402 = vadd.f32 %v110, %v401
    %v403 = vpop.f32.mrf.mxu0
    %v404 = vadd.f32 %v114, %v403
    %405 = vmatprep.mubr.f32.mxu0 0.0
    %406 = vmatmul.mubr.f32.gmra.mxu0 %v127
    %v407 = vpop.f32.mrf.mxu0
    %v408 = vadd.f32 %v110, %v407
    %v409 = vpop.f32.mrf.mxu0
    %v410 = vadd.f32 %v114, %v409
    %411 = vmatprep.mubr.f32.mxu0 0.0
    %412 = vmatmul.mubr.f32.gmra.mxu0 %v130
    %v413 = vpop.f32.mrf.mxu0
    %v414 = vadd.f32 %v110, %v413
    %v415 = vpop.f32.mrf.mxu0
    %v416 = vadd.f32 %v114, %v415
    %417 = vmatprep.mubr.f32.mxu0 0.0
    %418 = vmatmul.mubr.f32.gmra.mxu0 %v133
    %v419 = vpop.f32.mrf.mxu0
    %v420 = vadd.f32 %v110, %v419
    %v421 = vpop.f32.mrf.mxu0
    %v422 = vadd.f32 %v114, %v421
    %423 = vmatprep.mubr.f32.mxu0 0.0
    %424 = vmatmul.mubr.f32.gmra.mxu0 %v136
    %v425 = vpop.f32.mrf.mxu0
    %v426 = vadd.f32 %v110, %v425
    %v427 = vpop.f32.mrf.mxu0
    %v428 = vadd.f32 %v114, %v427
    %429 = vmatprep.mubr.f32.mxu0 0.0
    %430 = vmatmul.mubr.f32.gmra.mxu0 %v139
    %v431 = vpop.f32.mrf.mxu0
    %v432 = vadd.f32 %v110, %v431
    %v433 = vpop.f32.mrf.mxu0
    %v434 = vadd.f32 %v114, %v433
    %435 = vmatprep.mubr.f32.mxu0 0.0
    %436 = vmatmul.mubr.f32.gmra.mxu0 %v142
    %v437 = vpop.f32.mrf.mxu0
    %v438 = vadd.f32 %v110, %v437
    %v439 = vpop.f32.mrf.mxu0
    %v440 = vadd.f32 %v114, %v439
    %441 = vmatprep.mubr.f32.mxu0 0.0
    %442 = vmatmul.mubr.f32.gmra.mxu0 %v145
    %v443 = vpop.f32.mrf.mxu0
    %v444 = vadd.f32 %v110, %v443
    %v445 = vpop.f32.mrf.mxu0
    %v446 = vadd.f32 %v114, %v445
    %447 = vmatprep.mubr.f32.mxu0 0.0
    %448 = vmatmul.mubr.f32.gmra.mxu0 %v148
    %v449 = vpop.f32.mrf.mxu0
    %v450 = vadd.f32 %v110, %v449
    %v451 = vpop.f32.mrf.mxu0
    %v452 = vadd.f32 %v114, %v451
    %453 = vmatprep.mubr.f32.mxu0 0.0
    %454 = vmatmul.mubr.f32.gmra.mxu0 %v151
    %v455 = vpop.f32.mrf.mxu0
    %v456 = vadd.f32 %v110, %v455
    %v457 = vpop.f32.mrf.mxu0
    %v458 = vadd.f32 %v114, %v457
    %459 = vmatprep.mubr.f32.mxu0 0.0
    %460 = vmatmul.mubr.f32.gmra.mxu0 %v154
    %v461 = vpop.f32.mrf.mxu0
    %v462 = vadd.f32 %v110, %v461
    %v463 = vpop.f32.mrf.mxu0
    %v464 = vadd.f32 %v114, %v463
    %465 = vmatprep.mubr.f32.mxu0 0.0
    %466 = vmatmul.mubr.f32.gmra.mxu0 %v157
    %v467 = vpop.f32.mrf.mxu0
    %v468 = vadd.f32 %v110, %v467
    %v469 = vpop.f32.mrf.mxu0
    %v470 = vadd.f32 %v114, %v469
    %471 = vmatprep.mubr.f32.mxu0 0.0
    %472 = vmatmul.mubr.f32.gmra.mxu0 %v160
    %v473 = vpop.f32.mrf.mxu0
    %v474 = vadd.f32 %v110, %v473
    %v475 = vpop.f32.mrf.mxu0
    %v476 = vadd.f32 %v114, %v475
    %477 = vmatprep.mubr.f32.mxu0 0.0
    %478 = vmatmul.mubr.f32.gmra.mxu0 %v163
    %v479 = vpop.f32.mrf.mxu0
    %v480 = vadd.f32 %v110, %v479
    %v481 = vpop.f32.mrf.mxu0
    %v482 = vadd.f32 %v114, %v481
    %483 = vmatprep.mubr.f32.mxu0 0.0
    %484 = vmatmul.mubr.f32.gmra.mxu0 %v166
    %v485 = vpop.f32.mrf.mxu0
    %v486 = vadd.f32 %v110, %v485
    %v487 = vpop.f32.mrf.mxu0
    %v488 = vadd.f32 %v114, %v487
    %489 = vdwg.mxu0
    %490 = vst [vmem:[#allocation2] sm:$0xff] %v235
    %491 = vst [vmem:[#allocation2 + $0x8] sm:$0xff] %v237
    %492 = vst [vmem:[#allocation2 + $0x10] sm:$0xff] %v396
    %493 = vst [vmem:[#allocation2 + $0x18] sm:$0xff] %v398
    %494 = vst [vmem:[#allocation2 + $0x20] sm:$0xff] %v241
    %495 = vst [vmem:[#allocation2 + $0x28] sm:$0xff] %v243
    %496 = vst [vmem:[#allocation2 + $0x30] sm:$0xff] %v402
    %497 = vst [vmem:[#allocation2 + $0x38] sm:$0xff] %v404
    %498 = vst [vmem:[#allocation2 + $0x40] sm:$0xff] %v247
    %499 = vst [vmem:[#allocation2 + $0x48] sm:$0xff] %v249
    %500 = vst [vmem:[#allocation2 + $0x50] sm:$0xff] %v408
    %501 = vst [vmem:[#allocation2 + $0x58] sm:$0xff] %v410
    %502 = vst [vmem:[#allocation2 + $0x60] sm:$0xff] %v253
    %503 = vst [vmem:[#allocation2 + $0x68] sm:$0xff] %v255
    %504 = vst [vmem:[#allocation2 + $0x70] sm:$0xff] %v414
    %505 = vst [vmem:[#allocation2 + $0x78] sm:$0xff] %v416
    %506 = vst [vmem:[#allocation2 + $0x80] sm:$0xff] %v259
    %507 = vst [vmem:[#allocation2 + $0x88] sm:$0xff] %v261
    %508 = vst [vmem:[#allocation2 + $0x90] sm:$0xff] %v420
    %509 = vst [vmem:[#allocation2 + $0x98] sm:$0xff] %v422
    %510 = vst [vmem:[#allocation2 + $0xa0] sm:$0xff] %v265
    %511 = vst [vmem:[#allocation2 + $0xa8] sm:$0xff] %v267
    %512 = vst [vmem:[#allocation2 + $0xb0] sm:$0xff] %v426
    %513 = vst [vmem:[#allocation2 + $0xb8] sm:$0xff] %v428
    %514 = vst [vmem:[#allocation2 + $0xc0] sm:$0xff] %v271
    %515 = vst [vmem:[#allocation2 + $0xc8] sm:$0xff] %v273
    %516 = vst [vmem:[#allocation2 + $0xd0] sm:$0xff] %v432
    %517 = vst [vmem:[#allocation2 + $0xd8] sm:$0xff] %v434
    %518 = vst [vmem:[#allocation2 + $0xe0] sm:$0xff] %v277
    %519 = vst [vmem:[#allocation2 + $0xe8] sm:$0xff] %v279
    %520 = vst [vmem:[#allocation2 + $0xf0] sm:$0xff] %v438
    %521 = vst [vmem:[#allocation2 + $0xf8] sm:$0xff] %v440
    %522 = vst [vmem:[#allocation2 + $0x100] sm:$0xff] %v283
    %523 = vst [vmem:[#allocation2 + $0x108] sm:$0xff] %v285
    %524 = vst [vmem:[#allocation2 + $0x110] sm:$0xff] %v444
    %525 = vst [vmem:[#allocation2 + $0x118] sm:$0xff] %v446
    %526 = vst [vmem:[#allocation2 + $0x120] sm:$0xff] %v289
    %527 = vst [vmem:[#allocation2 + $0x128] sm:$0xff] %v291
    %528 = vst [vmem:[#allocation2 + $0x130] sm:$0xff] %v450
    %529 = vst [vmem:[#allocation2 + $0x138] sm:$0xff] %v452
    %530 = vst [vmem:[#allocation2 + $0x140] sm:$0xff] %v295
    %531 = vst [vmem:[#allocation2 + $0x148] sm:$0xff] %v297
    %532 = vst [vmem:[#allocation2 + $0x150] sm:$0xff] %v456
    %533 = vst [vmem:[#allocation2 + $0x158] sm:$0xff] %v458
    %534 = vst [vmem:[#allocation2 + $0x160] sm:$0xff] %v301
    %535 = vst [vmem:[#allocation2 + $0x168] sm:$0xff] %v303
    %536 = vst [vmem:[#allocation2 + $0x170] sm:$0xff] %v462
    %537 = vst [vmem:[#allocation2 + $0x178] sm:$0xff] %v464
    %538 = vst [vmem:[#allocation2 + $0x180] sm:$0xff] %v307
    %539 = vst [vmem:[#allocation2 + $0x188] sm:$0xff] %v309
    %540 = vst [vmem:[#allocation2 + $0x190] sm:$0xff] %v468
    %541 = vst [vmem:[#allocation2 + $0x198] sm:$0xff] %v470
    %542 = vst [vmem:[#allocation2 + $0x1a0] sm:$0xff] %v313
    %543 = vst [vmem:[#allocation2 + $0x1a8] sm:$0xff] %v315
    %544 = vst [vmem:[#allocation2 + $0x1b0] sm:$0xff] %v474
    %545 = vst [vmem:[#allocation2 + $0x1b8] sm:$0xff] %v476
    %546 = vst [vmem:[#allocation2 + $0x1c0] sm:$0xff] %v319
    %547 = vst [vmem:[#allocation2 + $0x1c8] sm:$0xff] %v321
    %548 = vst [vmem:[#allocation2 + $0x1d0] sm:$0xff] %v480
    %549 = vst [vmem:[#allocation2 + $0x1d8] sm:$0xff] %v482
    %550 = vst [vmem:[#allocation2 + $0x1e0] sm:$0xff] %v325
    %551 = vst [vmem:[#allocation2 + $0x1e8] sm:$0xff] %v327
    %552 = vst [vmem:[#allocation2 + $0x1f0] sm:$0xff] %v486
    %553 = vst [vmem:[#allocation2 + $0x1f8] sm:$0xff] %v488
    %v554 = vld [vmem:[%s6] sm:$0xf]
    %v556 = vlaneseq
    %v557 = vshrl.u32 %v556, 7
    %v558 = vsub.s32 0, %v557
    %v559 = vrot.slane %v554, %v558
    %v560 = vlaneseq
    %v561 = vshrl.u32 %v560, 7
    %v562 = vsub.s32 1, %v561
    %v563 = vrot.slane %v554, %v562
    %v564 = vlaneseq
    %v565 = vshrl.u32 %v564, 7
    %v566 = vsub.s32 2, %v565
    %v567 = vrot.slane %v554, %v566
    %v568 = vlaneseq
    %v569 = vshrl.u32 %v568, 7
    %v570 = vsub.s32 3, %v569
    %v571 = vrot.slane %v554, %v570
    %s576 = smul.u32 0, 4
    %s577 = smul.addr %s576, 8
    %s578 = scalar_lea.vmem [#allocation2], %s577
    %v579 = vld [vmem:[%s578] sm:$0xff]
    %v580 = vld [vmem:[%s578 + $0x8] sm:$0xff]
    %v581 = vld [vmem:[%s578 + $0x10] sm:$0xff]
    %v582 = vld [vmem:[%s578 + $0x18] sm:$0xff]
    %v583 = vld [vmem:[%s578 + $0x20] sm:$0xff]
    %v584 = vld [vmem:[%s578 + $0x28] sm:$0xff]
    %v585 = vld [vmem:[%s578 + $0x30] sm:$0xff]
    %v586 = vld [vmem:[%s578 + $0x38] sm:$0xff]
    %v587 = vld [vmem:[#allocation3] sm:$0xff]
    %v588 = vld [vmem:[#allocation3 + $0x8] sm:$0xff]
    %v589 = vld [vmem:[#allocation3 + $0x10] sm:$0xff]
    %v590 = vld [vmem:[#allocation3 + $0x18] sm:$0xff]
    %v591 = vld [vmem:[#allocation3 + $0x20] sm:$0xff]
    %v592 = vld [vmem:[#allocation3 + $0x28] sm:$0xff]
    %v593 = vld [vmem:[#allocation3 + $0x30] sm:$0xff]
    %v594 = vld [vmem:[#allocation3 + $0x38] sm:$0xff]
    %v595 = vld [vmem:[#allocation3 + $0x40] sm:$0xff]
    %v596 = vld [vmem:[#allocation3 + $0x48] sm:$0xff]
    %v597 = vld [vmem:[#allocation3 + $0x50] sm:$0xff]
    %v598 = vld [vmem:[#allocation3 + $0x58] sm:$0xff]
    %v599 = vld [vmem:[#allocation3 + $0x60] sm:$0xff]
    %v600 = vld [vmem:[#allocation3 + $0x68] sm:$0xff]
    %v601 = vld [vmem:[#allocation3 + $0x70] sm:$0xff]
    %v602 = vld [vmem:[#allocation3 + $0x78] sm:$0xff]
    %v603 = vld [vmem:[#allocation3 + $0x80] sm:$0xff]
    %v604 = vld [vmem:[#allocation3 + $0x88] sm:$0xff]
    %v605 = vld [vmem:[#allocation3 + $0x90] sm:$0xff]
    %v606 = vld [vmem:[#allocation3 + $0x98] sm:$0xff]
    %v607 = vld [vmem:[#allocation3 + $0xa0] sm:$0xff]
    %v608 = vld [vmem:[#allocation3 + $0xa8] sm:$0xff]
    %v609 = vld [vmem:[#allocation3 + $0xb0] sm:$0xff]
    %v610 = vld [vmem:[#allocation3 + $0xb8] sm:$0xff]
    %v611 = vld [vmem:[#allocation3 + $0xc0] sm:$0xff]
    %v612 = vld [vmem:[#allocation3 + $0xc8] sm:$0xff]
    %v613 = vld [vmem:[#allocation3 + $0xd0] sm:$0xff]
    %v614 = vld [vmem:[#allocation3 + $0xd8] sm:$0xff]
    %v615 = vld [vmem:[#allocation3 + $0xe0] sm:$0xff]
    %v616 = vld [vmem:[#allocation3 + $0xe8] sm:$0xff]
    %v617 = vld [vmem:[#allocation3 + $0xf0] sm:$0xff]
    %v618 = vld [vmem:[#allocation3 + $0xf8] sm:$0xff]
    %v619 = vld [vmem:[#allocation3 + $0x100] sm:$0xff]
    %v620 = vld [vmem:[#allocation3 + $0x108] sm:$0xff]
    %v621 = vld [vmem:[#allocation3 + $0x110] sm:$0xff]
    %v622 = vld [vmem:[#allocation3 + $0x118] sm:$0xff]
    %v623 = vld [vmem:[#allocation3 + $0x120] sm:$0xff]
    %v624 = vld [vmem:[#allocation3 + $0x128] sm:$0xff]
    %v625 = vld [vmem:[#allocation3 + $0x130] sm:$0xff]
    %v626 = vld [vmem:[#allocation3 + $0x138] sm:$0xff]
    %v627 = vld [vmem:[#allocation3 + $0x140] sm:$0xff]
    %v628 = vld [vmem:[#allocation3 + $0x148] sm:$0xff]
    %v629 = vld [vmem:[#allocation3 + $0x150] sm:$0xff]
    %v630 = vld [vmem:[#allocation3 + $0x158] sm:$0xff]
    %v631 = vld [vmem:[#allocation3 + $0x160] sm:$0xff]
    %v632 = vld [vmem:[#allocation3 + $0x168] sm:$0xff]
    %v633 = vld [vmem:[#allocation3 + $0x170] sm:$0xff]
    %v634 = vld [vmem:[#allocation3 + $0x178] sm:$0xff]
    %v635 = vld [vmem:[#allocation3 + $0x180] sm:$0xff]
    %v636 = vld [vmem:[#allocation3 + $0x188] sm:$0xff]
    %v637 = vld [vmem:[#allocation3 + $0x190] sm:$0xff]
    %v638 = vld [vmem:[#allocation3 + $0x198] sm:$0xff]
    %v639 = vld [vmem:[#allocation3 + $0x1a0] sm:$0xff]
    %v640 = vld [vmem:[#allocation3 + $0x1a8] sm:$0xff]
    %v641 = vld [vmem:[#allocation3 + $0x1b0] sm:$0xff]
    %v642 = vld [vmem:[#allocation3 + $0x1b8] sm:$0xff]
    %v643 = vld [vmem:[#allocation3 + $0x1c0] sm:$0xff]
    %v644 = vld [vmem:[#allocation3 + $0x1c8] sm:$0xff]
    %v645 = vld [vmem:[#allocation3 + $0x1d0] sm:$0xff]
    %v646 = vld [vmem:[#allocation3 + $0x1d8] sm:$0xff]
    %v647 = vld [vmem:[#allocation3 + $0x1e0] sm:$0xff]
    %v648 = vld [vmem:[#allocation3 + $0x1e8] sm:$0xff]
    %v649 = vld [vmem:[#allocation3 + $0x1f0] sm:$0xff]
    %v650 = vld [vmem:[#allocation3 + $0x1f8] sm:$0xff]
    %651 = vmatprep.subr.mxu0 %v648
    %652 = vmatpush1.msra.mxu0 %v647
    %653 = vmatprep.subr.mxu0 %v644
    %654 = vmatpush1.msra.mxu0 %v643
    %655 = vmatprep.subr.mxu0 %v640
    %656 = vmatpush1.msra.mxu0 %v639
    %657 = vmatprep.subr.mxu0 %v636
    %658 = vmatpush1.msra.mxu0 %v635
    %659 = vmatprep.subr.mxu0 %v632
    %660 = vmatpush1.msra.mxu0 %v631
    %661 = vmatprep.subr.mxu0 %v628
    %662 = vmatpush1.msra.mxu0 %v627
    %663 = vmatprep.subr.mxu0 %v624
    %664 = vmatpush1.msra.mxu0 %v623
    %665 = vmatprep.subr.mxu0 %v620
    %666 = vmatpush1.msra.mxu0 %v619
    %667 = vmatprep.subr.mxu0 %v616
    %668 = vmatpush1.msra.mxu0 %v615
    %669 = vmatprep.subr.mxu0 %v612
    %670 = vmatpush1.msra.mxu0 %v611
    %671 = vmatprep.subr.mxu0 %v608
    %672 = vmatpush1.msra.mxu0 %v607
    %673 = vmatprep.subr.mxu0 %v604
    %674 = vmatpush1.msra.mxu0 %v603
    %675 = vmatprep.subr.mxu0 %v600
    %676 = vmatpush1.msra.mxu0 %v599
    %677 = vmatprep.subr.mxu0 %v596
    %678 = vmatpush1.msra.mxu0 %v595
    %679 = vmatprep.subr.mxu0 %v592
    %680 = vmatpush1.msra.mxu0 %v591
    %681 = vmatprep.subr.mxu0 %v588
    %682 = vmatpush1.msra.mxu0 %v587
    %683 = vmatprep.subr.mxu0 0.0
    %684 = vmatpush2.msra.mxu0 0.0
    %685 = vmatprep.subr.mxu0 0.0
    %686 = vmatpush2.msra.mxu0 0.0
    %687 = vmatprep.subr.mxu0 0.0
    %688 = vmatpush2.msra.mxu0 0.0
    %689 = vmatprep.subr.mxu0 0.0
    %690 = vmatpush2.msra.mxu0 0.0
    %691 = vmatprep.subr.mxu0 0.0
    %692 = vmatpush2.msra.mxu0 0.0
    %693 = vmatprep.subr.mxu0 0.0
    %694 = vmatpush2.msra.mxu0 0.0
    %695 = vmatprep.subr.mxu0 0.0
    %696 = vmatpush2.msra.mxu0 0.0
    %697 = vmatprep.subr.mxu0 0.0
    %698 = vmatpush2.msra.mxu0 0.0
    %699 = vmatprep.subr.mxu0 0.0
    %700 = vmatpush2.msra.mxu0 0.0
    %701 = vmatprep.subr.mxu0 0.0
    %702 = vmatpush2.msra.mxu0 0.0
    %703 = vmatprep.subr.mxu0 0.0
    %704 = vmatpush2.msra.mxu0 0.0
    %705 = vmatprep.subr.mxu0 0.0
    %706 = vmatpush2.msra.mxu0 0.0
    %707 = vmatprep.subr.mxu0 0.0
    %708 = vmatpush2.msra.mxu0 0.0
    %709 = vmatprep.subr.mxu0 0.0
    %710 = vmatpush2.msra.mxu0 0.0
    %711 = vmatprep.subr.mxu0 0.0
    %712 = vmatpush2.msra.mxu0 0.0
    %713 = vmatprep.subr.mxu0 0.0
    %714 = vmatpush2.msra.mxu0 0.0
    %715 = vmatprep.mubr.f32.mxu0 0.0
    %716 = vmatmul.mubr.f32.gmra.mxu0 0.0
    %v717 = vpop.f32.mrf.mxu0
    %v718 = vadd.f32 0.0, %v717
    %v719 = vpop.f32.mrf.mxu0
    %v720 = vadd.f32 0.0, %v719
    %721 = vmatprep.mubr.f32.mxu0 0.0
    %722 = vmatmul.mubr.f32.gmra.mxu0 0.0
    %v723 = vpop.f32.mrf.mxu0
    %v724 = vadd.f32 0.0, %v723
    %v725 = vpop.f32.mrf.mxu0
    %v726 = vadd.f32 0.0, %v725
    %727 = vdwg.mxu0
    %728 = vmatprep.subr.mxu0 %v650
    %729 = vmatpush1.msra.mxu0 %v649
    %730 = vmatprep.subr.mxu0 %v646
    %731 = vmatpush1.msra.mxu0 %v645
    %732 = vmatprep.subr.mxu0 %v642
    %733 = vmatpush1.msra.mxu0 %v641
    %734 = vmatprep.subr.mxu0 %v638
    %735 = vmatpush1.msra.mxu0 %v637
    %736 = vmatprep.subr.mxu0 %v634
    %737 = vmatpush1.msra.mxu0 %v633
    %738 = vmatprep.subr.mxu0 %v630
    %739 = vmatpush1.msra.mxu0 %v629
    %740 = vmatprep.subr.mxu0 %v626
    %741 = vmatpush1.msra.mxu0 %v625
    %742 = vmatprep.subr.mxu0 %v622
    %743 = vmatpush1.msra.mxu0 %v621
    %744 = vmatprep.subr.mxu0 %v618
    %745 = vmatpush1.msra.mxu0 %v617
    %746 = vmatprep.subr.mxu0 %v614
    %747 = vmatpush1.msra.mxu0 %v613
    %748 = vmatprep.subr.mxu0 %v610
    %749 = vmatpush1.msra.mxu0 %v609
    %750 = vmatprep.subr.mxu0 %v606
    %751 = vmatpush1.msra.mxu0 %v605
    %752 = vmatprep.subr.mxu0 %v602
    %753 = vmatpush1.msra.mxu0 %v601
    %754 = vmatprep.subr.mxu0 %v598
    %755 = vmatpush1.msra.mxu0 %v597
    %756 = vmatprep.subr.mxu0 %v594
    %757 = vmatpush1.msra.mxu0 %v593
    %758 = vmatprep.subr.mxu0 %v590
    %759 = vmatpush1.msra.mxu0 %v589
    %760 = vmatprep.subr.mxu0 0.0
    %761 = vmatpush2.msra.mxu0 0.0
    %762 = vmatprep.subr.mxu0 0.0
    %763 = vmatpush2.msra.mxu0 0.0
    %764 = vmatprep.subr.mxu0 0.0
    %765 = vmatpush2.msra.mxu0 0.0
    %766 = vmatprep.subr.mxu0 0.0
    %767 = vmatpush2.msra.mxu0 0.0
    %768 = vmatprep.subr.mxu0 0.0
    %769 = vmatpush2.msra.mxu0 0.0
    %770 = vmatprep.subr.mxu0 0.0
    %771 = vmatpush2.msra.mxu0 0.0
    %772 = vmatprep.subr.mxu0 0.0
    %773 = vmatpush2.msra.mxu0 0.0
    %774 = vmatprep.subr.mxu0 0.0
    %775 = vmatpush2.msra.mxu0 0.0
    %776 = vmatprep.subr.mxu0 0.0
    %777 = vmatpush2.msra.mxu0 0.0
    %778 = vmatprep.subr.mxu0 0.0
    %779 = vmatpush2.msra.mxu0 0.0
    %780 = vmatprep.subr.mxu0 0.0
    %781 = vmatpush2.msra.mxu0 0.0
    %782 = vmatprep.subr.mxu0 0.0
    %783 = vmatpush2.msra.mxu0 0.0
    %784 = vmatprep.subr.mxu0 0.0
    %785 = vmatpush2.msra.mxu0 0.0
    %786 = vmatprep.subr.mxu0 0.0
    %787 = vmatpush2.msra.mxu0 0.0
    %788 = vmatprep.subr.mxu0 0.0
    %789 = vmatpush2.msra.mxu0 0.0
    %790 = vmatprep.subr.mxu0 0.0
    %791 = vmatpush2.msra.mxu0 0.0
    %792 = vmatprep.mubr.f32.mxu0 0.0
    %793 = vmatmul.mubr.f32.gmra.mxu0 0.0
    %v794 = vpop.f32.mrf.mxu0
    %v795 = vadd.f32 0.0, %v794
    %v796 = vpop.f32.mrf.mxu0
    %v797 = vadd.f32 0.0, %v796
    %798 = vmatprep.mubr.f32.mxu0 0.0
    %799 = vmatmul.mubr.f32.gmra.mxu0 0.0
    %v800 = vpop.f32.mrf.mxu0
    %v801 = vadd.f32 0.0, %v800
    %v802 = vpop.f32.mrf.mxu0
    %v803 = vadd.f32 0.0, %v802
    %804 = vdwg.mxu0
    %v805 = vadd.f32 %v579, %v718
    %v806 = vadd.f32 %v580, %v720
    %v807 = vadd.f32 %v581, %v795
    %v808 = vadd.f32 %v582, %v797
    %v809 = vadd.f32 %v583, %v724
    %v810 = vadd.f32 %v584, %v726
    %v811 = vadd.f32 %v585, %v801
    %v812 = vadd.f32 %v586, %v803
    %v813 = vxor.u32 %v805, 2147483648
    %v814 = vxor.u32 %v809, 2147483648
    %v815 = vmul.f32 %v813, 1.442695
    %v816 = vpow.pop %v815
    %v817 = vmul.f32 %v814, 1.442695
    %v818 = vpow.pop %v817
    %v819 = vadd.f32 %v816, 1.0
    %v820 = vadd.f32 %v818, 1.0
    %v821 = vrcp.pop %v819
    %v822 = vmul.f32 1.0, %v821
    %v823 = vrcp.pop %v820
    %v824 = vmul.f32 1.0, %v823
    %v825 = vxor.u32 %v806, 2147483648
    %v826 = vxor.u32 %v810, 2147483648
    %v827 = vmul.f32 %v825, 1.442695
    %v828 = vpow.pop %v827
    %v829 = vmul.f32 %v826, 1.442695
    %v830 = vpow.pop %v829
    %v831 = vadd.f32 %v828, 1.0
    %v832 = vadd.f32 %v830, 1.0
    %v833 = vrcp.pop %v831
    %v834 = vmul.f32 1.0, %v833
    %v835 = vrcp.pop %v832
    %v836 = vmul.f32 1.0, %v835
    %v837 = vtanh.pop %v807
    %v838 = vtanh.pop %v811
    %v839 = vxor.u32 %v808, 2147483648
    %v840 = vxor.u32 %v812, 2147483648
    %v841 = vmul.f32 %v839, 1.442695
    %v842 = vpow.pop %v841
    %v843 = vmul.f32 %v840, 1.442695
    %v844 = vpow.pop %v843
    %v845 = vadd.f32 %v842, 1.0
    %v846 = vadd.f32 %v844, 1.0
    %v847 = vrcp.pop %v845
    %v848 = vmul.f32 1.0, %v847
    %v849 = vrcp.pop %v846
    %v850 = vmul.f32 1.0, %v849
    %v851 = vmul.f32 %v834, 0.0
    %v852 = vmul.f32 %v836, 0.0
    %v853 = vmul.f32 %v822, %v837
    %v854 = vmul.f32 %v824, %v838
    %v855 = vadd.f32 %v851, %v853
    %v856 = vadd.f32 %v852, %v854
    %v857 = vtanh.pop %v855
    %v858 = vtanh.pop %v856
    %v859 = vmul.f32 %v848, %v857
    %v860 = vmul.f32 %v850, %v858
    %s861 = smul.u32 2, 4
    %s862 = smul.addr %s861, 8
    %s863 = scalar_lea.vmem [#allocation2], %s862
    %v864 = vld [vmem:[%s863] sm:$0xff]
    %v865 = vld [vmem:[%s863 + $0x8] sm:$0xff]
    %v866 = vld [vmem:[%s863 + $0x10] sm:$0xff]
    %v867 = vld [vmem:[%s863 + $0x18] sm:$0xff]
    %v868 = vld [vmem:[%s863 + $0x20] sm:$0xff]
    %v869 = vld [vmem:[%s863 + $0x28] sm:$0xff]
    %v870 = vld [vmem:[%s863 + $0x30] sm:$0xff]
    %v871 = vld [vmem:[%s863 + $0x38] sm:$0xff]
    %872 = vmatprep.subr.mxu0 %v648
    %873 = vmatpush1.msra.mxu0 %v647
    %874 = vmatprep.subr.mxu0 %v644
    %875 = vmatpush1.msra.mxu0 %v643
    %876 = vmatprep.subr.mxu0 %v640
    %877 = vmatpush1.msra.mxu0 %v639
    %878 = vmatprep.subr.mxu0 %v636
    %879 = vmatpush1.msra.mxu0 %v635
    %880 = vmatprep.subr.mxu0 %v632
    %881 = vmatpush1.msra.mxu0 %v631
    %882 = vmatprep.subr.mxu0 %v628
    %883 = vmatpush1.msra.mxu0 %v627
    %884 = vmatprep.subr.mxu0 %v624
    %885 = vmatpush1.msra.mxu0 %v623
    %886 = vmatprep.subr.mxu0 %v620
    %887 = vmatpush1.msra.mxu0 %v619
    %888 = vmatprep.subr.mxu0 %v616
    %889 = vmatpush1.msra.mxu0 %v615
    %890 = vmatprep.subr.mxu0 %v612
    %891 = vmatpush1.msra.mxu0 %v611
    %892 = vmatprep.subr.mxu0 %v608
    %893 = vmatpush1.msra.mxu0 %v607
    %894 = vmatprep.subr.mxu0 %v604
    %895 = vmatpush1.msra.mxu0 %v603
    %896 = vmatprep.subr.mxu0 %v600
    %897 = vmatpush1.msra.mxu0 %v599
    %898 = vmatprep.subr.mxu0 %v596
    %899 = vmatpush1.msra.mxu0 %v595
    %900 = vmatprep.subr.mxu0 %v592
    %901 = vmatpush1.msra.mxu0 %v591
    %902 = vmatprep.subr.mxu0 %v588
    %903 = vmatpush1.msra.mxu0 %v587
    %904 = vmatprep.subr.mxu0 0.0
    %905 = vmatpush2.msra.mxu0 0.0
    %906 = vmatprep.subr.mxu0 0.0
    %907 = vmatpush2.msra.mxu0 0.0
    %908 = vmatprep.subr.mxu0 0.0
    %909 = vmatpush2.msra.mxu0 0.0
    %910 = vmatprep.subr.mxu0 0.0
    %911 = vmatpush2.msra.mxu0 0.0
    %912 = vmatprep.subr.mxu0 0.0
    %913 = vmatpush2.msra.mxu0 0.0
    %914 = vmatprep.subr.mxu0 0.0
    %915 = vmatpush2.msra.mxu0 0.0
    %916 = vmatprep.subr.mxu0 0.0
    %917 = vmatpush2.msra.mxu0 0.0
    %918 = vmatprep.subr.mxu0 0.0
    %919 = vmatpush2.msra.mxu0 0.0
    %920 = vmatprep.subr.mxu0 0.0
    %921 = vmatpush2.msra.mxu0 0.0
    %922 = vmatprep.subr.mxu0 0.0
    %923 = vmatpush2.msra.mxu0 0.0
    %924 = vmatprep.subr.mxu0 0.0
    %925 = vmatpush2.msra.mxu0 0.0
    %926 = vmatprep.subr.mxu0 0.0
    %927 = vmatpush2.msra.mxu0 0.0
    %928 = vmatprep.subr.mxu0 0.0
    %929 = vmatpush2.msra.mxu0 0.0
    %930 = vmatprep.subr.mxu0 0.0
    %931 = vmatpush2.msra.mxu0 0.0
    %932 = vmatprep.subr.mxu0 0.0
    %933 = vmatpush2.msra.mxu0 0.0
    %934 = vmatprep.subr.mxu0 0.0
    %935 = vmatpush2.msra.mxu0 0.0
    %936 = vmatprep.mubr.f32.mxu0 0.0
    %937 = vmatmul.mubr.f32.gmra.mxu0 %v859
    %v938 = vpop.f32.mrf.mxu0
    %v939 = vadd.f32 0.0, %v938
    %v940 = vpop.f32.mrf.mxu0
    %v941 = vadd.f32 0.0, %v940
    %942 = vmatprep.mubr.f32.mxu0 0.0
    %943 = vmatmul.mubr.f32.gmra.mxu0 %v860
    %v944 = vpop.f32.mrf.mxu0
    %v945 = vadd.f32 0.0, %v944
    %v946 = vpop.f32.mrf.mxu0
    %v947 = vadd.f32 0.0, %v946
    %948 = vdwg.mxu0
    %949 = vmatprep.subr.mxu0 %v650
    %950 = vmatpush1.msra.mxu0 %v649
    %951 = vmatprep.subr.mxu0 %v646
    %952 = vmatpush1.msra.mxu0 %v645
    %953 = vmatprep.subr.mxu0 %v642
    %954 = vmatpush1.msra.mxu0 %v641
    %955 = vmatprep.subr.mxu0 %v638
    %956 = vmatpush1.msra.mxu0 %v637
    %957 = vmatprep.subr.mxu0 %v634
    %958 = vmatpush1.msra.mxu0 %v633
    %959 = vmatprep.subr.mxu0 %v630
    %960 = vmatpush1.msra.mxu0 %v629
    %961 = vmatprep.subr.mxu0 %v626
    %962 = vmatpush1.msra.mxu0 %v625
    %963 = vmatprep.subr.mxu0 %v622
    %964 = vmatpush1.msra.mxu0 %v621
    %965 = vmatprep.subr.mxu0 %v618
    %966 = vmatpush1.msra.mxu0 %v617
    %967 = vmatprep.subr.mxu0 %v614
    %968 = vmatpush1.msra.mxu0 %v613
    %969 = vmatprep.subr.mxu0 %v610
    %970 = vmatpush1.msra.mxu0 %v609
    %971 = vmatprep.subr.mxu0 %v606
    %972 = vmatpush1.msra.mxu0 %v605
    %973 = vmatprep.subr.mxu0 %v602
    %974 = vmatpush1.msra.mxu0 %v601
    %975 = vmatprep.subr.mxu0 %v598
    %976 = vmatpush1.msra.mxu0 %v597
    %977 = vmatprep.subr.mxu0 %v594
    %978 = vmatpush1.msra.mxu0 %v593
    %979 = vmatprep.subr.mxu0 %v590
    %980 = vmatpush1.msra.mxu0 %v589
    %981 = vmatprep.subr.mxu0 0.0
    %982 = vmatpush2.msra.mxu0 0.0
    %983 = vmatprep.subr.mxu0 0.0
    %984 = vmatpush2.msra.mxu0 0.0
    %985 = vmatprep.subr.mxu0 0.0
    %986 = vmatpush2.msra.mxu0 0.0
    %987 = vmatprep.subr.mxu0 0.0
    %988 = vmatpush2.msra.mxu0 0.0
    %989 = vmatprep.subr.mxu0 0.0
    %990 = vmatpush2.msra.mxu0 0.0
    %991 = vmatprep.subr.mxu0 0.0
    %992 = vmatpush2.msra.mxu0 0.0
    %993 = vmatprep.subr.mxu0 0.0
    %994 = vmatpush2.msra.mxu0 0.0
    %995 = vmatprep.subr.mxu0 0.0
    %996 = vmatpush2.msra.mxu0 0.0
    %997 = vmatprep.subr.mxu0 0.0
    %998 = vmatpush2.msra.mxu0 0.0
    %999 = vmatprep.subr.mxu0 0.0
    %1000 = vmatpush2.msra.mxu0 0.0
    %1001 = vmatprep.subr.mxu0 0.0
    %1002 = vmatpush2.msra.mxu0 0.0
    %1003 = vmatprep.subr.mxu0 0.0
    %1004 = vmatpush2.msra.mxu0 0.0
    %1005 = vmatprep.subr.mxu0 0.0
    %1006 = vmatpush2.msra.mxu0 0.0
    %1007 = vmatprep.subr.mxu0 0.0
    %1008 = vmatpush2.msra.mxu0 0.0
    %1009 = vmatprep.subr.mxu0 0.0
    %1010 = vmatpush2.msra.mxu0 0.0
    %1011 = vmatprep.subr.mxu0 0.0
    %1012 = vmatpush2.msra.mxu0 0.0
    %1013 = vmatprep.mubr.f32.mxu0 0.0
    %1014 = vmatmul.mubr.f32.gmra.mxu0 %v859
    %v1015 = vpop.f32.mrf.mxu0
    %v1016 = vadd.f32 0.0, %v1015
    %v1017 = vpop.f32.mrf.mxu0
    %v1018 = vadd.f32 0.0, %v1017
    %1019 = vmatprep.mubr.f32.mxu0 0.0
    %1020 = vmatmul.mubr.f32.gmra.mxu0 %v860
    %v1021 = vpop.f32.mrf.mxu0
    %v1022 = vadd.f32 0.0, %v1021
    %v1023 = vpop.f32.mrf.mxu0
    %v1024 = vadd.f32 0.0, %v1023
    %1025 = vdwg.mxu0
    %v1026 = vadd.f32 %v864, %v939
    %v1027 = vadd.f32 %v865, %v941
    %v1028 = vadd.f32 %v866, %v1016
    %v1029 = vadd.f32 %v867, %v1018
    %v1030 = vadd.f32 %v868, %v945
    %v1031 = vadd.f32 %v869, %v947
    %v1032 = vadd.f32 %v870, %v1022
    %v1033 = vadd.f32 %v871, %v1024
    %v1034 = vxor.u32 %v1026, 2147483648
    %v1035 = vxor.u32 %v1030, 2147483648
    %v1036 = vmul.f32 %v1034, 1.442695
    %v1037 = vpow.pop %v1036
    %v1038 = vmul.f32 %v1035, 1.442695
    %v1039 = vpow.pop %v1038
    %v1040 = vadd.f32 %v1037, 1.0
    %v1041 = vadd.f32 %v1039, 1.0
    %v1042 = vrcp.pop %v1040
    %v1043 = vmul.f32 1.0, %v1042
    %v1044 = vrcp.pop %v1041
    %v1045 = vmul.f32 1.0, %v1044
    %v1046 = vxor.u32 %v1027, 2147483648
    %v1047 = vxor.u32 %v1031, 2147483648
    %v1048 = vmul.f32 %v1046, 1.442695
    %v1049 = vpow.pop %v1048
    %v1050 = vmul.f32 %v1047, 1.442695
    %v1051 = vpow.pop %v1050
    %v1052 = vadd.f32 %v1049, 1.0
    %v1053 = vadd.f32 %v1051, 1.0
    %v1054 = vrcp.pop %v1052
    %v1055 = vmul.f32 1.0, %v1054
    %v1056 = vrcp.pop %v1053
    %v1057 = vmul.f32 1.0, %v1056
    %v1058 = vtanh.pop %v1028
    %v1059 = vtanh.pop %v1032
    %v1060 = vxor.u32 %v1029, 2147483648
    %v1061 = vxor.u32 %v1033, 2147483648
    %v1062 = vmul.f32 %v1060, 1.442695
    %v1063 = vpow.pop %v1062
    %v1064 = vmul.f32 %v1061, 1.442695
    %v1065 = vpow.pop %v1064
    %v1066 = vadd.f32 %v1063, 1.0
    %v1067 = vadd.f32 %v1065, 1.0
    %v1068 = vrcp.pop %v1066
    %v1069 = vmul.f32 1.0, %v1068
    %v1070 = vrcp.pop %v1067
    %v1071 = vmul.f32 1.0, %v1070
    %v1072 = vmul.f32 %v1055, %v855
    %v1073 = vmul.f32 %v1057, %v856
    %v1074 = vmul.f32 %v1043, %v1058
    %v1075 = vmul.f32 %v1045, %v1059
    %v1076 = vadd.f32 %v1072, %v1074
    %v1077 = vadd.f32 %v1073, %v1075
    %v1078 = vtanh.pop %v1076
    %v1079 = vtanh.pop %v1077
    %v1080 = vmul.f32 %v1069, %v1078
    %v1081 = vmul.f32 %v1071, %v1079
    %v1082 = vld [vmem:[#allocation5] sm:$0xff]
    %v1083 = vld [vmem:[#allocation5 + $0x8] sm:$0xff]
    %v1084 = vld [vmem:[#allocation5 + $0x10] sm:$0xff]
    %v1085 = vld [vmem:[#allocation5 + $0x18] sm:$0xff]
    %v1086 = vld [vmem:[#allocation5 + $0x20] sm:$0xff]
    %v1087 = vld [vmem:[#allocation5 + $0x28] sm:$0xff]
    %v1088 = vld [vmem:[#allocation5 + $0x30] sm:$0xff]
    %v1089 = vld [vmem:[#allocation5 + $0x38] sm:$0xff]
    %v1090 = vld [vmem:[#allocation5 + $0x40] sm:$0xff]
    %v1091 = vld [vmem:[#allocation5 + $0x48] sm:$0xff]
    %v1092 = vld [vmem:[#allocation5 + $0x50] sm:$0xff]
    %v1093 = vld [vmem:[#allocation5 + $0x58] sm:$0xff]
    %v1094 = vld [vmem:[#allocation5 + $0x60] sm:$0xff]
    %v1095 = vld [vmem:[#allocation5 + $0x68] sm:$0xff]
    %v1096 = vld [vmem:[#allocation5 + $0x70] sm:$0xff]
    %v1097 = vld [vmem:[#allocation5 + $0x78] sm:$0xff]
    %v1098 = vld [vmem:[#allocation5 + $0x80] sm:$0xff]
    %v1099 = vld [vmem:[#allocation5 + $0x88] sm:$0xff]
    %v1100 = vld [vmem:[#allocation5 + $0x90] sm:$0xff]
    %v1101 = vld [vmem:[#allocation5 + $0x98] sm:$0xff]
    %v1102 = vld [vmem:[#allocation5 + $0xa0] sm:$0xff]
    %v1103 = vld [vmem:[#allocation5 + $0xa8] sm:$0xff]
    %v1104 = vld [vmem:[#allocation5 + $0xb0] sm:$0xff]
    %v1105 = vld [vmem:[#allocation5 + $0xb8] sm:$0xff]
    %v1106 = vld [vmem:[#allocation5 + $0xc0] sm:$0xff]
    %v1107 = vld [vmem:[#allocation5 + $0xc8] sm:$0xff]
    %v1108 = vld [vmem:[#allocation5 + $0xd0] sm:$0xff]
    %v1109 = vld [vmem:[#allocation5 + $0xd8] sm:$0xff]
    %v1110 = vld [vmem:[#allocation5 + $0xe0] sm:$0xff]
    %v1111 = vld [vmem:[#allocation5 + $0xe8] sm:$0xff]
    %v1112 = vld [vmem:[#allocation5 + $0xf0] sm:$0xff]
    %v1113 = vld [vmem:[#allocation5 + $0xf8] sm:$0xff]
    %v1114 = vld [vmem:[#allocation5 + $0x100] sm:$0xff]
    %v1115 = vld [vmem:[#allocation5 + $0x108] sm:$0xff]
    %v1116 = vld [vmem:[#allocation5 + $0x110] sm:$0xff]
    %v1117 = vld [vmem:[#allocation5 + $0x118] sm:$0xff]
    %v1118 = vld [vmem:[#allocation5 + $0x120] sm:$0xff]
    %v1119 = vld [vmem:[#allocation5 + $0x128] sm:$0xff]
    %v1120 = vld [vmem:[#allocation5 + $0x130] sm:$0xff]
    %v1121 = vld [vmem:[#allocation5 + $0x138] sm:$0xff]
    %v1122 = vld [vmem:[#allocation5 + $0x140] sm:$0xff]
    %v1123 = vld [vmem:[#allocation5 + $0x148] sm:$0xff]
    %v1124 = vld [vmem:[#allocation5 + $0x150] sm:$0xff]
    %v1125 = vld [vmem:[#allocation5 + $0x158] sm:$0xff]
    %v1126 = vld [vmem:[#allocation5 + $0x160] sm:$0xff]
    %v1127 = vld [vmem:[#allocation5 + $0x168] sm:$0xff]
    %v1128 = vld [vmem:[#allocation5 + $0x170] sm:$0xff]
    %v1129 = vld [vmem:[#allocation5 + $0x178] sm:$0xff]
    %v1130 = vld [vmem:[#allocation5 + $0x180] sm:$0xff]
    %v1131 = vld [vmem:[#allocation5 + $0x188] sm:$0xff]
    %v1132 = vld [vmem:[#allocation5 + $0x190] sm:$0xff]
    %v1133 = vld [vmem:[#allocation5 + $0x198] sm:$0xff]
    %v1134 = vld [vmem:[#allocation5 + $0x1a0] sm:$0xff]
    %v1135 = vld [vmem:[#allocation5 + $0x1a8] sm:$0xff]
    %v1136 = vld [vmem:[#allocation5 + $0x1b0] sm:$0xff]
    %v1137 = vld [vmem:[#allocation5 + $0x1b8] sm:$0xff]
    %v1138 = vld [vmem:[#allocation5 + $0x1c0] sm:$0xff]
    %v1139 = vld [vmem:[#allocation5 + $0x1c8] sm:$0xff]
    %v1140 = vld [vmem:[#allocation5 + $0x1d0] sm:$0xff]
    %v1141 = vld [vmem:[#allocation5 + $0x1d8] sm:$0xff]
    %v1142 = vld [vmem:[#allocation5 + $0x1e0] sm:$0xff]
    %v1143 = vld [vmem:[#allocation5 + $0x1e8] sm:$0xff]
    %v1144 = vld [vmem:[#allocation5 + $0x1f0] sm:$0xff]
    %v1145 = vld [vmem:[#allocation5 + $0x1f8] sm:$0xff]
    %v1146 = vld [vmem:[#allocation7] sm:$0xff]
    %v1147 = vld [vmem:[#allocation7 + $0x8] sm:$0xff]
    %v1148 = vld [vmem:[#allocation7 + $0x10] sm:$0xff]
    %v1149 = vld [vmem:[#allocation7 + $0x18] sm:$0xff]
    %v1150 = vld [vmem:[#allocation7 + $0x20] sm:$0xff]
    %v1151 = vld [vmem:[#allocation7 + $0x28] sm:$0xff]
    %v1152 = vld [vmem:[#allocation7 + $0x30] sm:$0xff]
    %v1153 = vld [vmem:[#allocation7 + $0x38] sm:$0xff]
    %v1154 = vld [vmem:[#allocation7 + $0x40] sm:$0xff]
    %v1155 = vld [vmem:[#allocation7 + $0x48] sm:$0xff]
    %v1156 = vld [vmem:[#allocation7 + $0x50] sm:$0xff]
    %v1157 = vld [vmem:[#allocation7 + $0x58] sm:$0xff]
    %v1158 = vld [vmem:[#allocation7 + $0x60] sm:$0xff]
    %v1159 = vld [vmem:[#allocation7 + $0x68] sm:$0xff]
    %v1160 = vld [vmem:[#allocation7 + $0x70] sm:$0xff]
    %v1161 = vld [vmem:[#allocation7 + $0x78] sm:$0xff]
    %v1162 = vld [vmem:[#allocation7 + $0x80] sm:$0xff]
    %v1163 = vld [vmem:[#allocation7 + $0x88] sm:$0xff]
    %v1164 = vld [vmem:[#allocation7 + $0x90] sm:$0xff]
    %v1165 = vld [vmem:[#allocation7 + $0x98] sm:$0xff]
    %v1166 = vld [vmem:[#allocation7 + $0xa0] sm:$0xff]
    %v1167 = vld [vmem:[#allocation7 + $0xa8] sm:$0xff]
    %v1168 = vld [vmem:[#allocation7 + $0xb0] sm:$0xff]
    %v1169 = vld [vmem:[#allocation7 + $0xb8] sm:$0xff]
    %v1170 = vld [vmem:[#allocation7 + $0xc0] sm:$0xff]
    %v1171 = vld [vmem:[#allocation7 + $0xc8] sm:$0xff]
    %v1172 = vld [vmem:[#allocation7 + $0xd0] sm:$0xff]
    %v1173 = vld [vmem:[#allocation7 + $0xd8] sm:$0xff]
    %v1174 = vld [vmem:[#allocation7 + $0xe0] sm:$0xff]
    %v1175 = vld [vmem:[#allocation7 + $0xe8] sm:$0xff]
    %v1176 = vld [vmem:[#allocation7 + $0xf0] sm:$0xff]
    %v1177 = vld [vmem:[#allocation7 + $0xf8] sm:$0xff]
    %v1178 = vld [vmem:[#allocation7 + $0x100] sm:$0xff]
    %v1179 = vld [vmem:[#allocation7 + $0x108] sm:$0xff]
    %v1180 = vld [vmem:[#allocation7 + $0x110] sm:$0xff]
    %v1181 = vld [vmem:[#allocation7 + $0x118] sm:$0xff]
    %v1182 = vld [vmem:[#allocation7 + $0x120] sm:$0xff]
    %v1183 = vld [vmem:[#allocation7 + $0x128] sm:$0xff]
    %v1184 = vld [vmem:[#allocation7 + $0x130] sm:$0xff]
    %v1185 = vld [vmem:[#allocation7 + $0x138] sm:$0xff]
    %v1186 = vld [vmem:[#allocation7 + $0x140] sm:$0xff]
    %v1187 = vld [vmem:[#allocation7 + $0x148] sm:$0xff]
    %v1188 = vld [vmem:[#allocation7 + $0x150] sm:$0xff]
    %v1189 = vld [vmem:[#allocation7 + $0x158] sm:$0xff]
    %v1190 = vld [vmem:[#allocation7 + $0x160] sm:$0xff]
    %v1191 = vld [vmem:[#allocation7 + $0x168] sm:$0xff]
    %v1192 = vld [vmem:[#allocation7 + $0x170] sm:$0xff]
    %v1193 = vld [vmem:[#allocation7 + $0x178] sm:$0xff]
    %v1194 = vld [vmem:[#allocation7 + $0x180] sm:$0xff]
    %v1195 = vld [vmem:[#allocation7 + $0x188] sm:$0xff]
    %v1196 = vld [vmem:[#allocation7 + $0x190] sm:$0xff]
    %v1197 = vld [vmem:[#allocation7 + $0x198] sm:$0xff]
    %v1198 = vld [vmem:[#allocation7 + $0x1a0] sm:$0xff]
    %v1199 = vld [vmem:[#allocation7 + $0x1a8] sm:$0xff]
    %v1200 = vld [vmem:[#allocation7 + $0x1b0] sm:$0xff]
    %v1201 = vld [vmem:[#allocation7 + $0x1b8] sm:$0xff]
    %v1202 = vld [vmem:[#allocation7 + $0x1c0] sm:$0xff]
    %v1203 = vld [vmem:[#allocation7 + $0x1c8] sm:$0xff]
    %v1204 = vld [vmem:[#allocation7 + $0x1d0] sm:$0xff]
    %v1205 = vld [vmem:[#allocation7 + $0x1d8] sm:$0xff]
    %v1206 = vld [vmem:[#allocation7 + $0x1e0] sm:$0xff]
    %v1207 = vld [vmem:[#allocation7 + $0x1e8] sm:$0xff]
    %v1208 = vld [vmem:[#allocation7 + $0x1f0] sm:$0xff]
    %v1209 = vld [vmem:[#allocation7 + $0x1f8] sm:$0xff]
    %1210 = vmatprep.subr.mxu0 %v1207
    %1211 = vmatpush1.msra.mxu0 %v1206
    %1212 = vmatprep.subr.mxu0 %v1203
    %1213 = vmatpush1.msra.mxu0 %v1202
    %1214 = vmatprep.subr.mxu0 %v1199
    %1215 = vmatpush1.msra.mxu0 %v1198
    %1216 = vmatprep.subr.mxu0 %v1195
    %1217 = vmatpush1.msra.mxu0 %v1194
    %1218 = vmatprep.subr.mxu0 %v1191
    %1219 = vmatpush1.msra.mxu0 %v1190
    %1220 = vmatprep.subr.mxu0 %v1187
    %1221 = vmatpush1.msra.mxu0 %v1186
    %1222 = vmatprep.subr.mxu0 %v1183
    %1223 = vmatpush1.msra.mxu0 %v1182
    %1224 = vmatprep.subr.mxu0 %v1179
    %1225 = vmatpush1.msra.mxu0 %v1178
    %1226 = vmatprep.subr.mxu0 %v1175
    %1227 = vmatpush1.msra.mxu0 %v1174
    %1228 = vmatprep.subr.mxu0 %v1171
    %1229 = vmatpush1.msra.mxu0 %v1170
    %1230 = vmatprep.subr.mxu0 %v1167
    %1231 = vmatpush1.msra.mxu0 %v1166
    %1232 = vmatprep.subr.mxu0 %v1163
    %1233 = vmatpush1.msra.mxu0 %v1162
    %1234 = vmatprep.subr.mxu0 %v1159
    %1235 = vmatpush1.msra.mxu0 %v1158
    %1236 = vmatprep.subr.mxu0 %v1155
    %1237 = vmatpush1.msra.mxu0 %v1154
    %1238 = vmatprep.subr.mxu0 %v1151
    %1239 = vmatpush1.msra.mxu0 %v1150
    %1240 = vmatprep.subr.mxu0 %v1147
    %1241 = vmatpush1.msra.mxu0 %v1146
    %1242 = vmatprep.subr.mxu0 0.0
    %1243 = vmatpush2.msra.mxu0 0.0
    %1244 = vmatprep.subr.mxu0 0.0
    %1245 = vmatpush2.msra.mxu0 0.0
    %1246 = vmatprep.subr.mxu0 0.0
    %1247 = vmatpush2.msra.mxu0 0.0
    %1248 = vmatprep.subr.mxu0 0.0
    %1249 = vmatpush2.msra.mxu0 0.0
    %1250 = vmatprep.subr.mxu0 0.0
    %1251 = vmatpush2.msra.mxu0 0.0
    %1252 = vmatprep.subr.mxu0 0.0
    %1253 = vmatpush2.msra.mxu0 0.0
    %1254 = vmatprep.subr.mxu0 0.0
    %1255 = vmatpush2.msra.mxu0 0.0
    %1256 = vmatprep.subr.mxu0 0.0
    %1257 = vmatpush2.msra.mxu0 0.0
    %1258 = vmatprep.subr.mxu0 0.0
    %1259 = vmatpush2.msra.mxu0 0.0
    %1260 = vmatprep.subr.mxu0 0.0
    %1261 = vmatpush2.msra.mxu0 0.0
    %1262 = vmatprep.subr.mxu0 0.0
    %1263 = vmatpush2.msra.mxu0 0.0
    %1264 = vmatprep.subr.mxu0 0.0
    %1265 = vmatpush2.msra.mxu0 0.0
    %1266 = vmatprep.subr.mxu0 0.0
    %1267 = vmatpush2.msra.mxu0 0.0
    %1268 = vmatprep.subr.mxu0 0.0
    %1269 = vmatpush2.msra.mxu0 0.0
    %1270 = vmatprep.subr.mxu0 0.0
    %1271 = vmatpush2.msra.mxu0 0.0
    %1272 = vmatprep.subr.mxu0 0.0
    %1273 = vmatpush2.msra.mxu0 0.0
    %1274 = vmatprep.mubr.f32.mxu0 0.0
    %1275 = vmatmul.mubr.f32.gmra.mxu0 0.0
    %v1276 = vpop.f32.mrf.mxu0
    %v1277 = vadd.f32 0.0, %v1276
    %v1278 = vpop.f32.mrf.mxu0
    %v1279 = vadd.f32 0.0, %v1278
    %1280 = vmatprep.mubr.f32.mxu0 0.0
    %1281 = vmatmul.mubr.f32.gmra.mxu0 0.0
    %v1282 = vpop.f32.mrf.mxu0
    %v1283 = vadd.f32 0.0, %v1282
    %v1284 = vpop.f32.mrf.mxu0
    %v1285 = vadd.f32 0.0, %v1284
    %1286 = vdwg.mxu0
    %1287 = vmatprep.subr.mxu0 %v1209
    %1288 = vmatpush1.msra.mxu0 %v1208
    %1289 = vmatprep.subr.mxu0 %v1205
    %1290 = vmatpush1.msra.mxu0 %v1204
    %1291 = vmatprep.subr.mxu0 %v1201
    %1292 = vmatpush1.msra.mxu0 %v1200
    %1293 = vmatprep.subr.mxu0 %v1197
    %1294 = vmatpush1.msra.mxu0 %v1196
    %1295 = vmatprep.subr.mxu0 %v1193
    %1296 = vmatpush1.msra.mxu0 %v1192
    %1297 = vmatprep.subr.mxu0 %v1189
    %1298 = vmatpush1.msra.mxu0 %v1188
    %1299 = vmatprep.subr.mxu0 %v1185
    %1300 = vmatpush1.msra.mxu0 %v1184
    %1301 = vmatprep.subr.mxu0 %v1181
    %1302 = vmatpush1.msra.mxu0 %v1180
    %1303 = vmatprep.subr.mxu0 %v1177
    %1304 = vmatpush1.msra.mxu0 %v1176
    %1305 = vmatprep.subr.mxu0 %v1173
    %1306 = vmatpush1.msra.mxu0 %v1172
    %1307 = vmatprep.subr.mxu0 %v1169
    %1308 = vmatpush1.msra.mxu0 %v1168
    %1309 = vmatprep.subr.mxu0 %v1165
    %1310 = vmatpush1.msra.mxu0 %v1164
    %1311 = vmatprep.subr.mxu0 %v1161
    %1312 = vmatpush1.msra.mxu0 %v1160
    %1313 = vmatprep.subr.mxu0 %v1157
    %1314 = vmatpush1.msra.mxu0 %v1156
    %1315 = vmatprep.subr.mxu0 %v1153
    %1316 = vmatpush1.msra.mxu0 %v1152
    %1317 = vmatprep.subr.mxu0 %v1149
    %1318 = vmatpush1.msra.mxu0 %v1148
    %1319 = vmatprep.subr.mxu0 0.0
    %1320 = vmatpush2.msra.mxu0 0.0
    %1321 = vmatprep.subr.mxu0 0.0
    %1322 = vmatpush2.msra.mxu0 0.0
    %1323 = vmatprep.subr.mxu0 0.0
    %1324 = vmatpush2.msra.mxu0 0.0
    %1325 = vmatprep.subr.mxu0 0.0
    %1326 = vmatpush2.msra.mxu0 0.0
    %1327 = vmatprep.subr.mxu0 0.0
    %1328 = vmatpush2.msra.mxu0 0.0
    %1329 = vmatprep.subr.mxu0 0.0
    %1330 = vmatpush2.msra.mxu0 0.0
    %1331 = vmatprep.subr.mxu0 0.0
    %1332 = vmatpush2.msra.mxu0 0.0
    %1333 = vmatprep.subr.mxu0 0.0
    %1334 = vmatpush2.msra.mxu0 0.0
    %1335 = vmatprep.subr.mxu0 0.0
    %1336 = vmatpush2.msra.mxu0 0.0
    %1337 = vmatprep.subr.mxu0 0.0
    %1338 = vmatpush2.msra.mxu0 0.0
    %1339 = vmatprep.subr.mxu0 0.0
    %1340 = vmatpush2.msra.mxu0 0.0
    %1341 = vmatprep.subr.mxu0 0.0
    %1342 = vmatpush2.msra.mxu0 0.0
    %1343 = vmatprep.subr.mxu0 0.0
    %1344 = vmatpush2.msra.mxu0 0.0
    %1345 = vmatprep.subr.mxu0 0.0
    %1346 = vmatpush2.msra.mxu0 0.0
    %1347 = vmatprep.subr.mxu0 0.0
    %1348 = vmatpush2.msra.mxu0 0.0
    %1349 = vmatprep.subr.mxu0 0.0
    %1350 = vmatpush2.msra.mxu0 0.0
    %1351 = vmatprep.mubr.f32.mxu0 0.0
    %1352 = vmatmul.mubr.f32.gmra.mxu0 0.0
    %v1353 = vpop.f32.mrf.mxu0
    %v1354 = vadd.f32 0.0, %v1353
    %v1355 = vpop.f32.mrf.mxu0
    %v1356 = vadd.f32 0.0, %v1355
    %1357 = vmatprep.mubr.f32.mxu0 0.0
    %1358 = vmatmul.mubr.f32.gmra.mxu0 0.0
    %v1359 = vpop.f32.mrf.mxu0
    %v1360 = vadd.f32 0.0, %v1359
    %v1361 = vpop.f32.mrf.mxu0
    %v1362 = vadd.f32 0.0, %v1361
    %1363 = vdwg.mxu0
    %1364 = vmatprep.subr.mxu0 %v1143
    %1365 = vmatpush1.msra.mxu0 %v1142
    %1366 = vmatprep.subr.mxu0 %v1139
    %1367 = vmatpush1.msra.mxu0 %v1138
    %1368 = vmatprep.subr.mxu0 %v1135
    %1369 = vmatpush1.msra.mxu0 %v1134
    %1370 = vmatprep.subr.mxu0 %v1131
    %1371 = vmatpush1.msra.mxu0 %v1130
    %1372 = vmatprep.subr.mxu0 %v1127
    %1373 = vmatpush1.msra.mxu0 %v1126
    %1374 = vmatprep.subr.mxu0 %v1123
    %1375 = vmatpush1.msra.mxu0 %v1122
    %1376 = vmatprep.subr.mxu0 %v1119
    %1377 = vmatpush1.msra.mxu0 %v1118
    %1378 = vmatprep.subr.mxu0 %v1115
    %1379 = vmatpush1.msra.mxu0 %v1114
    %1380 = vmatprep.subr.mxu0 %v1111
    %1381 = vmatpush1.msra.mxu0 %v1110
    %1382 = vmatprep.subr.mxu0 %v1107
    %1383 = vmatpush1.msra.mxu0 %v1106
    %1384 = vmatprep.subr.mxu0 %v1103
    %1385 = vmatpush1.msra.mxu0 %v1102
    %1386 = vmatprep.subr.mxu0 %v1099
    %1387 = vmatpush1.msra.mxu0 %v1098
    %1388 = vmatprep.subr.mxu0 %v1095
    %1389 = vmatpush1.msra.mxu0 %v1094
    %1390 = vmatprep.subr.mxu0 %v1091
    %1391 = vmatpush1.msra.mxu0 %v1090
    %1392 = vmatprep.subr.mxu0 %v1087
    %1393 = vmatpush1.msra.mxu0 %v1086
    %1394 = vmatprep.subr.mxu0 %v1083
    %1395 = vmatpush1.msra.mxu0 %v1082
    %1396 = vmatprep.subr.mxu0 0.0
    %1397 = vmatpush2.msra.mxu0 0.0
    %1398 = vmatprep.subr.mxu0 0.0
    %1399 = vmatpush2.msra.mxu0 0.0
    %1400 = vmatprep.subr.mxu0 0.0
    %1401 = vmatpush2.msra.mxu0 0.0
    %1402 = vmatprep.subr.mxu0 0.0
    %1403 = vmatpush2.msra.mxu0 0.0
    %1404 = vmatprep.subr.mxu0 0.0
    %1405 = vmatpush2.msra.mxu0 0.0
    %1406 = vmatprep.subr.mxu0 0.0
    %1407 = vmatpush2.msra.mxu0 0.0
    %1408 = vmatprep.subr.mxu0 0.0
    %1409 = vmatpush2.msra.mxu0 0.0
    %1410 = vmatprep.subr.mxu0 0.0
    %1411 = vmatpush2.msra.mxu0 0.0
    %1412 = vmatprep.subr.mxu0 0.0
    %1413 = vmatpush2.msra.mxu0 0.0
    %1414 = vmatprep.subr.mxu0 0.0
    %1415 = vmatpush2.msra.mxu0 0.0
    %1416 = vmatprep.subr.mxu0 0.0
    %1417 = vmatpush2.msra.mxu0 0.0
    %1418 = vmatprep.subr.mxu0 0.0
    %1419 = vmatpush2.msra.mxu0 0.0
    %1420 = vmatprep.subr.mxu0 0.0
    %1421 = vmatpush2.msra.mxu0 0.0
    %1422 = vmatprep.subr.mxu0 0.0
    %1423 = vmatpush2.msra.mxu0 0.0
    %1424 = vmatprep.subr.mxu0 0.0
    %1425 = vmatpush2.msra.mxu0 0.0
    %1426 = vmatprep.subr.mxu0 0.0
    %1427 = vmatpush2.msra.mxu0 0.0
    %1428 = vmatprep.mubr.f32.mxu0 0.0
    %1429 = vmatmul.mubr.f32.gmra.mxu0 %v859
    %v1430 = vpop.f32.mrf.mxu0
    %v1431 = vadd.f32 %v1277, %v1430
    %v1432 = vpop.f32.mrf.mxu0
    %v1433 = vadd.f32 %v1279, %v1432
    %1434 = vmatprep.mubr.f32.mxu0 0.0
    %1435 = vmatmul.mubr.f32.gmra.mxu0 %v860
    %v1436 = vpop.f32.mrf.mxu0
    %v1437 = vadd.f32 %v1283, %v1436
    %v1438 = vpop.f32.mrf.mxu0
    %v1439 = vadd.f32 %v1285, %v1438
    %1440 = vdwg.mxu0
    %1441 = vmatprep.subr.mxu0 %v1145
    %1442 = vmatpush1.msra.mxu0 %v1144
    %1443 = vmatprep.subr.mxu0 %v1141
    %1444 = vmatpush1.msra.mxu0 %v1140
    %1445 = vmatprep.subr.mxu0 %v1137
    %1446 = vmatpush1.msra.mxu0 %v1136
    %1447 = vmatprep.subr.mxu0 %v1133
    %1448 = vmatpush1.msra.mxu0 %v1132
    %1449 = vmatprep.subr.mxu0 %v1129
    %1450 = vmatpush1.msra.mxu0 %v1128
    %1451 = vmatprep.subr.mxu0 %v1125
    %1452 = vmatpush1.msra.mxu0 %v1124
    %1453 = vmatprep.subr.mxu0 %v1121
    %1454 = vmatpush1.msra.mxu0 %v1120
    %1455 = vmatprep.subr.mxu0 %v1117
    %1456 = vmatpush1.msra.mxu0 %v1116
    %1457 = vmatprep.subr.mxu0 %v1113
    %1458 = vmatpush1.msra.mxu0 %v1112
    %1459 = vmatprep.subr.mxu0 %v1109
    %1460 = vmatpush1.msra.mxu0 %v1108
    %1461 = vmatprep.subr.mxu0 %v1105
    %1462 = vmatpush1.msra.mxu0 %v1104
    %1463 = vmatprep.subr.mxu0 %v1101
    %1464 = vmatpush1.msra.mxu0 %v1100
    %1465 = vmatprep.subr.mxu0 %v1097
    %1466 = vmatpush1.msra.mxu0 %v1096
    %1467 = vmatprep.subr.mxu0 %v1093
    %1468 = vmatpush1.msra.mxu0 %v1092
    %1469 = vmatprep.subr.mxu0 %v1089
    %1470 = vmatpush1.msra.mxu0 %v1088
    %1471 = vmatprep.subr.mxu0 %v1085
    %1472 = vmatpush1.msra.mxu0 %v1084
    %1473 = vmatprep.subr.mxu0 0.0
    %1474 = vmatpush2.msra.mxu0 0.0
    %1475 = vmatprep.subr.mxu0 0.0
    %1476 = vmatpush2.msra.mxu0 0.0
    %1477 = vmatprep.subr.mxu0 0.0
    %1478 = vmatpush2.msra.mxu0 0.0
    %1479 = vmatprep.subr.mxu0 0.0
    %1480 = vmatpush2.msra.mxu0 0.0
    %1481 = vmatprep.subr.mxu0 0.0
    %1482 = vmatpush2.msra.mxu0 0.0
    %1483 = vmatprep.subr.mxu0 0.0
    %1484 = vmatpush2.msra.mxu0 0.0
    %1485 = vmatprep.subr.mxu0 0.0
    %1486 = vmatpush2.msra.mxu0 0.0
    %1487 = vmatprep.subr.mxu0 0.0
    %1488 = vmatpush2.msra.mxu0 0.0
    %1489 = vmatprep.subr.mxu0 0.0
    %1490 = vmatpush2.msra.mxu0 0.0
    %1491 = vmatprep.subr.mxu0 0.0
    %1492 = vmatpush2.msra.mxu0 0.0
    %1493 = vmatprep.subr.mxu0 0.0
    %1494 = vmatpush2.msra.mxu0 0.0
    %1495 = vmatprep.subr.mxu0 0.0
    %1496 = vmatpush2.msra.mxu0 0.0
    %1497 = vmatprep.subr.mxu0 0.0
    %1498 = vmatpush2.msra.mxu0 0.0
    %1499 = vmatprep.subr.mxu0 0.0
    %1500 = vmatpush2.msra.mxu0 0.0
    %1501 = vmatprep.subr.mxu0 0.0
    %1502 = vmatpush2.msra.mxu0 0.0
    %1503 = vmatprep.subr.mxu0 0.0
    %1504 = vmatpush2.msra.mxu0 0.0
    %1505 = vmatprep.mubr.f32.mxu0 0.0
    %1506 = vmatmul.mubr.f32.gmra.mxu0 %v859
    %v1507 = vpop.f32.mrf.mxu0
    %v1508 = vadd.f32 %v1354, %v1507
    %v1509 = vpop.f32.mrf.mxu0
    %v1510 = vadd.f32 %v1356, %v1509
    %1511 = vmatprep.mubr.f32.mxu0 0.0
    %1512 = vmatmul.mubr.f32.gmra.mxu0 %v860
    %v1513 = vpop.f32.mrf.mxu0
    %v1514 = vadd.f32 %v1360, %v1513
    %v1515 = vpop.f32.mrf.mxu0
    %v1516 = vadd.f32 %v1362, %v1515
    %1517 = vdwg.mxu0
    %v1518 = vadd.f32 %v1431, %v559
    %v1519 = vadd.f32 %v1433, %v563
    %v1520 = vadd.f32 %v1508, %v567
    %v1521 = vadd.f32 %v1510, %v571
    %v1522 = vadd.f32 %v1437, %v559
    %v1523 = vadd.f32 %v1439, %v563
    %v1524 = vadd.f32 %v1514, %v567
    %v1525 = vadd.f32 %v1516, %v571
    %v1526 = vxor.u32 %v1518, 2147483648
    %v1527 = vxor.u32 %v1522, 2147483648
    %v1528 = vmul.f32 %v1526, 1.442695
    %v1529 = vpow.pop %v1528
    %v1530 = vmul.f32 %v1527, 1.442695
    %v1531 = vpow.pop %v1530
    %v1532 = vadd.f32 %v1529, 1.0
    %v1533 = vadd.f32 %v1531, 1.0
    %v1534 = vrcp.pop %v1532
    %v1535 = vmul.f32 1.0, %v1534
    %v1536 = vrcp.pop %v1533
    %v1537 = vmul.f32 1.0, %v1536
    %v1538 = vxor.u32 %v1519, 2147483648
    %v1539 = vxor.u32 %v1523, 2147483648
    %v1540 = vmul.f32 %v1538, 1.442695
    %v1541 = vpow.pop %v1540
    %v1542 = vmul.f32 %v1539, 1.442695
    %v1543 = vpow.pop %v1542
    %v1544 = vadd.f32 %v1541, 1.0
    %v1545 = vadd.f32 %v1543, 1.0
    %v1546 = vrcp.pop %v1544
    %v1547 = vmul.f32 1.0, %v1546
    %v1548 = vrcp.pop %v1545
    %v1549 = vmul.f32 1.0, %v1548
    %v1550 = vtanh.pop %v1520
    %v1551 = vtanh.pop %v1524
    %v1552 = vxor.u32 %v1521, 2147483648
    %v1553 = vxor.u32 %v1525, 2147483648
    %v1554 = vmul.f32 %v1552, 1.442695
    %v1555 = vpow.pop %v1554
    %v1556 = vmul.f32 %v1553, 1.442695
    %v1557 = vpow.pop %v1556
    %v1558 = vadd.f32 %v1555, 1.0
    %v1559 = vadd.f32 %v1557, 1.0
    %v1560 = vrcp.pop %v1558
    %v1561 = vmul.f32 1.0, %v1560
    %v1562 = vrcp.pop %v1559
    %v1563 = vmul.f32 1.0, %v1562
    %v1564 = vmul.f32 %v1547, 0.0
    %v1565 = vmul.f32 %v1549, 0.0
    %v1566 = vmul.f32 %v1535, %v1550
    %v1567 = vmul.f32 %v1537, %v1551
    %v1568 = vadd.f32 %v1564, %v1566
    %v1569 = vadd.f32 %v1565, %v1567
    %v1570 = vtanh.pop %v1568
    %v1571 = vtanh.pop %v1569
    %v1572 = vmul.f32 %v1561, %v1570
    %v1573 = vmul.f32 %v1563, %v1571
    %s1574 = smul.u32 4, 4
    %s1575 = smul.addr %s1574, 8
    %s1576 = scalar_lea.vmem [#allocation2], %s1575
    %v1577 = vld [vmem:[%s1576] sm:$0xff]
    %v1578 = vld [vmem:[%s1576 + $0x8] sm:$0xff]
    %v1579 = vld [vmem:[%s1576 + $0x10] sm:$0xff]
    %v1580 = vld [vmem:[%s1576 + $0x18] sm:$0xff]
    %v1581 = vld [vmem:[%s1576 + $0x20] sm:$0xff]
    %v1582 = vld [vmem:[%s1576 + $0x28] sm:$0xff]
    %v1583 = vld [vmem:[%s1576 + $0x30] sm:$0xff]
    %v1584 = vld [vmem:[%s1576 + $0x38] sm:$0xff]
    %1585 = vmatprep.subr.mxu0 %v648
    %1586 = vmatpush1.msra.mxu0 %v647
    %1587 = vmatprep.subr.mxu0 %v644
    %1588 = vmatpush1.msra.mxu0 %v643
    %1589 = vmatprep.subr.mxu0 %v640
    %1590 = vmatpush1.msra.mxu0 %v639
    %1591 = vmatprep.subr.mxu0 %v636
    %1592 = vmatpush1.msra.mxu0 %v635
    %1593 = vmatprep.subr.mxu0 %v632
    %1594 = vmatpush1.msra.mxu0 %v631
    %1595 = vmatprep.subr.mxu0 %v628
    %1596 = vmatpush1.msra.mxu0 %v627
    %1597 = vmatprep.subr.mxu0 %v624
    %1598 = vmatpush1.msra.mxu0 %v623
    %1599 = vmatprep.subr.mxu0 %v620
    %1600 = vmatpush1.msra.mxu0 %v619
    %1601 = vmatprep.subr.mxu0 %v616
    %1602 = vmatpush1.msra.mxu0 %v615
    %1603 = vmatprep.subr.mxu0 %v612
    %1604 = vmatpush1.msra.mxu0 %v611
    %1605 = vmatprep.subr.mxu0 %v608
    %1606 = vmatpush1.msra.mxu0 %v607
    %1607 = vmatprep.subr.mxu0 %v604
    %1608 = vmatpush1.msra.mxu0 %v603
    %1609 = vmatprep.subr.mxu0 %v600
    %1610 = vmatpush1.msra.mxu0 %v599
    %1611 = vmatprep.subr.mxu0 %v596
    %1612 = vmatpush1.msra.mxu0 %v595
    %1613 = vmatprep.subr.mxu0 %v592
    %1614 = vmatpush1.msra.mxu0 %v591
    %1615 = vmatprep.subr.mxu0 %v588
    %1616 = vmatpush1.msra.mxu0 %v587
    %1617 = vmatprep.subr.mxu0 0.0
    %1618 = vmatpush2.msra.mxu0 0.0
    %1619 = vmatprep.subr.mxu0 0.0
    %1620 = vmatpush2.msra.mxu0 0.0
    %1621 = vmatprep.subr.mxu0 0.0
    %1622 = vmatpush2.msra.mxu0 0.0
    %1623 = vmatprep.subr.mxu0 0.0
    %1624 = vmatpush2.msra.mxu0 0.0
    %1625 = vmatprep.subr.mxu0 0.0
    %1626 = vmatpush2.msra.mxu0 0.0
    %1627 = vmatprep.subr.mxu0 0.0
    %1628 = vmatpush2.msra.mxu0 0.0
    %1629 = vmatprep.subr.mxu0 0.0
    %1630 = vmatpush2.msra.mxu0 0.0
    %1631 = vmatprep.subr.mxu0 0.0
    %1632 = vmatpush2.msra.mxu0 0.0
    %1633 = vmatprep.subr.mxu0 0.0
    %1634 = vmatpush2.msra.mxu0 0.0
    %1635 = vmatprep.subr.mxu0 0.0
    %1636 = vmatpush2.msra.mxu0 0.0
    %1637 = vmatprep.subr.mxu0 0.0
    %1638 = vmatpush2.msra.mxu0 0.0
    %1639 = vmatprep.subr.mxu0 0.0
    %1640 = vmatpush2.msra.mxu0 0.0
    %1641 = vmatprep.subr.mxu0 0.0
    %1642 = vmatpush2.msra.mxu0 0.0
    %1643 = vmatprep.subr.mxu0 0.0
    %1644 = vmatpush2.msra.mxu0 0.0
    %1645 = vmatprep.subr.mxu0 0.0
    %1646 = vmatpush2.msra.mxu0 0.0
    %1647 = vmatprep.subr.mxu0 0.0
    %1648 = vmatpush2.msra.mxu0 0.0
    %1649 = vmatprep.mubr.f32.mxu0 0.0
    %1650 = vmatmul.mubr.f32.gmra.mxu0 %v1080
    %v1651 = vpop.f32.mrf.mxu0
    %v1652 = vadd.f32 0.0, %v1651
    %v1653 = vpop.f32.mrf.mxu0
    %v1654 = vadd.f32 0.0, %v1653
    %1655 = vmatprep.mubr.f32.mxu0 0.0
    %1656 = vmatmul.mubr.f32.gmra.mxu0 %v1081
    %v1657 = vpop.f32.mrf.mxu0
    %v1658 = vadd.f32 0.0, %v1657
    %v1659 = vpop.f32.mrf.mxu0
    %v1660 = vadd.f32 0.0, %v1659
    %1661 = vdwg.mxu0
    %1662 = vmatprep.subr.mxu0 %v650
    %1663 = vmatpush1.msra.mxu0 %v649
    %1664 = vmatprep.subr.mxu0 %v646
    %1665 = vmatpush1.msra.mxu0 %v645
    %1666 = vmatprep.subr.mxu0 %v642
    %1667 = vmatpush1.msra.mxu0 %v641
    %1668 = vmatprep.subr.mxu0 %v638
    %1669 = vmatpush1.msra.mxu0 %v637
    %1670 = vmatprep.subr.mxu0 %v634
    %1671 = vmatpush1.msra.mxu0 %v633
    %1672 = vmatprep.subr.mxu0 %v630
    %1673 = vmatpush1.msra.mxu0 %v629
    %1674 = vmatprep.subr.mxu0 %v626
    %1675 = vmatpush1.msra.mxu0 %v625
    %1676 = vmatprep.subr.mxu0 %v622
    %1677 = vmatpush1.msra.mxu0 %v621
    %1678 = vmatprep.subr.mxu0 %v618
    %1679 = vmatpush1.msra.mxu0 %v617
    %1680 = vmatprep.subr.mxu0 %v614
    %1681 = vmatpush1.msra.mxu0 %v613
    %1682 = vmatprep.subr.mxu0 %v610
    %1683 = vmatpush1.msra.mxu0 %v609
    %1684 = vmatprep.subr.mxu0 %v606
    %1685 = vmatpush1.msra.mxu0 %v605
    %1686 = vmatprep.subr.mxu0 %v602
    %1687 = vmatpush1.msra.mxu0 %v601
    %1688 = vmatprep.subr.mxu0 %v598
    %1689 = vmatpush1.msra.mxu0 %v597
    %1690 = vmatprep.subr.mxu0 %v594
    %1691 = vmatpush1.msra.mxu0 %v593
    %1692 = vmatprep.subr.mxu0 %v590
    %1693 = vmatpush1.msra.mxu0 %v589
    %1694 = vmatprep.subr.mxu0 0.0
    %1695 = vmatpush2.msra.mxu0 0.0
    %1696 = vmatprep.subr.mxu0 0.0
    %1697 = vmatpush2.msra.mxu0 0.0
    %1698 = vmatprep.subr.mxu0 0.0
    %1699 = vmatpush2.msra.mxu0 0.0
    %1700 = vmatprep.subr.mxu0 0.0
    %1701 = vmatpush2.msra.mxu0 0.0
    %1702 = vmatprep.subr.mxu0 0.0
    %1703 = vmatpush2.msra.mxu0 0.0
    %1704 = vmatprep.subr.mxu0 0.0
    %1705 = vmatpush2.msra.mxu0 0.0
    %1706 = vmatprep.subr.mxu0 0.0
    %1707 = vmatpush2.msra.mxu0 0.0
    %1708 = vmatprep.subr.mxu0 0.0
    %1709 = vmatpush2.msra.mxu0 0.0
    %1710 = vmatprep.subr.mxu0 0.0
    %1711 = vmatpush2.msra.mxu0 0.0
    %1712 = vmatprep.subr.mxu0 0.0
    %1713 = vmatpush2.msra.mxu0 0.0
    %1714 = vmatprep.subr.mxu0 0.0
    %1715 = vmatpush2.msra.mxu0 0.0
    %1716 = vmatprep.subr.mxu0 0.0
    %1717 = vmatpush2.msra.mxu0 0.0
    %1718 = vmatprep.subr.mxu0 0.0
    %1719 = vmatpush2.msra.mxu0 0.0
    %1720 = vmatprep.subr.mxu0 0.0
    %1721 = vmatpush2.msra.mxu0 0.0
    %1722 = vmatprep.subr.mxu0 0.0
    %1723 = vmatpush2.msra.mxu0 0.0
    %1724 = vmatprep.subr.mxu0 0.0
    %1725 = vmatpush2.msra.mxu0 0.0
    %1726 = vmatprep.mubr.f32.mxu0 0.0
    %1727 = vmatmul.mubr.f32.gmra.mxu0 %v1080
    %v1728 = vpop.f32.mrf.mxu0
    %v1729 = vadd.f32 0.0, %v1728
    %v1730 = vpop.f32.mrf.mxu0
    %v1731 = vadd.f32 0.0, %v1730
    %1732 = vmatprep.mubr.f32.mxu0 0.0
    %1733 = vmatmul.mubr.f32.gmra.mxu0 %v1081
    %v1734 = vpop.f32.mrf.mxu0
    %v1735 = vadd.f32 0.0, %v1734
    %v1736 = vpop.f32.mrf.mxu0
    %v1737 = vadd.f32 0.0, %v1736
    %1738 = vdwg.mxu0
    %v1739 = vadd.f32 %v1577, %v1652
    %v1740 = vadd.f32 %v1578, %v1654
    %v1741 = vadd.f32 %v1579, %v1729
    %v1742 = vadd.f32 %v1580, %v1731
    %v1743 = vadd.f32 %v1581, %v1658
    %v1744 = vadd.f32 %v1582, %v1660
    %v1745 = vadd.f32 %v1583, %v1735
    %v1746 = vadd.f32 %v1584, %v1737
    %v1747 = vxor.u32 %v1739, 2147483648
    %v1748 = vxor.u32 %v1743, 2147483648
    %v1749 = vmul.f32 %v1747, 1.442695
    %v1750 = vpow.pop %v1749
    %v1751 = vmul.f32 %v1748, 1.442695
    %v1752 = vpow.pop %v1751
    %v1753 = vadd.f32 %v1750, 1.0
    %v1754 = vadd.f32 %v1752, 1.0
    %v1755 = vrcp.pop %v1753
    %v1756 = vmul.f32 1.0, %v1755
    %v1757 = vrcp.pop %v1754
    %v1758 = vmul.f32 1.0, %v1757
    %v1759 = vxor.u32 %v1740, 2147483648
    %v1760 = vxor.u32 %v1744, 2147483648
    %v1761 = vmul.f32 %v1759, 1.442695
    %v1762 = vpow.pop %v1761
    %v1763 = vmul.f32 %v1760, 1.442695
    %v1764 = vpow.pop %v1763
    %v1765 = vadd.f32 %v1762, 1.0
    %v1766 = vadd.f32 %v1764, 1.0
    %v1767 = vrcp.pop %v1765
    %v1768 = vmul.f32 1.0, %v1767
    %v1769 = vrcp.pop %v1766
    %v1770 = vmul.f32 1.0, %v1769
    %v1771 = vtanh.pop %v1741
    %v1772 = vtanh.pop %v1745
    %v1773 = vxor.u32 %v1742, 2147483648
    %v1774 = vxor.u32 %v1746, 2147483648
    %v1775 = vmul.f32 %v1773, 1.442695
    %v1776 = vpow.pop %v1775
    %v1777 = vmul.f32 %v1774, 1.442695
    %v1778 = vpow.pop %v1777
    %v1779 = vadd.f32 %v1776, 1.0
    %v1780 = vadd.f32 %v1778, 1.0
    %v1781 = vrcp.pop %v1779
    %v1782 = vmul.f32 1.0, %v1781
    %v1783 = vrcp.pop %v1780
    %v1784 = vmul.f32 1.0, %v1783
    %v1785 = vmul.f32 %v1768, %v1076
    %v1786 = vmul.f32 %v1770, %v1077
    %v1787 = vmul.f32 %v1756, %v1771
    %v1788 = vmul.f32 %v1758, %v1772
    %v1789 = vadd.f32 %v1785, %v1787
    %v1790 = vadd.f32 %v1786, %v1788
    %v1791 = vtanh.pop %v1789
    %v1792 = vtanh.pop %v1790
    %v1793 = vmul.f32 %v1782, %v1791
    %v1794 = vmul.f32 %v1784, %v1792
    %1795 = vmatprep.subr.mxu0 %v1207
    %1796 = vmatpush1.msra.mxu0 %v1206
    %1797 = vmatprep.subr.mxu0 %v1203
    %1798 = vmatpush1.msra.mxu0 %v1202
    %1799 = vmatprep.subr.mxu0 %v1199
    %1800 = vmatpush1.msra.mxu0 %v1198
    %1801 = vmatprep.subr.mxu0 %v1195
    %1802 = vmatpush1.msra.mxu0 %v1194
    %1803 = vmatprep.subr.mxu0 %v1191
    %1804 = vmatpush1.msra.mxu0 %v1190
    %1805 = vmatprep.subr.mxu0 %v1187
    %1806 = vmatpush1.msra.mxu0 %v1186
    %1807 = vmatprep.subr.mxu0 %v1183
    %1808 = vmatpush1.msra.mxu0 %v1182
    %1809 = vmatprep.subr.mxu0 %v1179
    %1810 = vmatpush1.msra.mxu0 %v1178
    %1811 = vmatprep.subr.mxu0 %v1175
    %1812 = vmatpush1.msra.mxu0 %v1174
    %1813 = vmatprep.subr.mxu0 %v1171
    %1814 = vmatpush1.msra.mxu0 %v1170
    %1815 = vmatprep.subr.mxu0 %v1167
    %1816 = vmatpush1.msra.mxu0 %v1166
    %1817 = vmatprep.subr.mxu0 %v1163
    %1818 = vmatpush1.msra.mxu0 %v1162
    %1819 = vmatprep.subr.mxu0 %v1159
    %1820 = vmatpush1.msra.mxu0 %v1158
    %1821 = vmatprep.subr.mxu0 %v1155
    %1822 = vmatpush1.msra.mxu0 %v1154
    %1823 = vmatprep.subr.mxu0 %v1151
    %1824 = vmatpush1.msra.mxu0 %v1150
    %1825 = vmatprep.subr.mxu0 %v1147
    %1826 = vmatpush1.msra.mxu0 %v1146
    %1827 = vmatprep.subr.mxu0 0.0
    %1828 = vmatpush2.msra.mxu0 0.0
    %1829 = vmatprep.subr.mxu0 0.0
    %1830 = vmatpush2.msra.mxu0 0.0
    %1831 = vmatprep.subr.mxu0 0.0
    %1832 = vmatpush2.msra.mxu0 0.0
    %1833 = vmatprep.subr.mxu0 0.0
    %1834 = vmatpush2.msra.mxu0 0.0
    %1835 = vmatprep.subr.mxu0 0.0
    %1836 = vmatpush2.msra.mxu0 0.0
    %1837 = vmatprep.subr.mxu0 0.0
    %1838 = vmatpush2.msra.mxu0 0.0
    %1839 = vmatprep.subr.mxu0 0.0
    %1840 = vmatpush2.msra.mxu0 0.0
    %1841 = vmatprep.subr.mxu0 0.0
    %1842 = vmatpush2.msra.mxu0 0.0
    %1843 = vmatprep.subr.mxu0 0.0
    %1844 = vmatpush2.msra.mxu0 0.0
    %1845 = vmatprep.subr.mxu0 0.0
    %1846 = vmatpush2.msra.mxu0 0.0
    %1847 = vmatprep.subr.mxu0 0.0
    %1848 = vmatpush2.msra.mxu0 0.0
    %1849 = vmatprep.subr.mxu0 0.0
    %1850 = vmatpush2.msra.mxu0 0.0
    %1851 = vmatprep.subr.mxu0 0.0
    %1852 = vmatpush2.msra.mxu0 0.0
    %1853 = vmatprep.subr.mxu0 0.0
    %1854 = vmatpush2.msra.mxu0 0.0
    %1855 = vmatprep.subr.mxu0 0.0
    %1856 = vmatpush2.msra.mxu0 0.0
    %1857 = vmatprep.subr.mxu0 0.0
    %1858 = vmatpush2.msra.mxu0 0.0
    %1859 = vmatprep.mubr.f32.mxu0 0.0
    %1860 = vmatmul.mubr.f32.gmra.mxu0 %v1572
    %v1861 = vpop.f32.mrf.mxu0
    %v1862 = vadd.f32 0.0, %v1861
    %v1863 = vpop.f32.mrf.mxu0
    %v1864 = vadd.f32 0.0, %v1863
    %1865 = vmatprep.mubr.f32.mxu0 0.0
    %1866 = vmatmul.mubr.f32.gmra.mxu0 %v1573
    %v1867 = vpop.f32.mrf.mxu0
    %v1868 = vadd.f32 0.0, %v1867
    %v1869 = vpop.f32.mrf.mxu0
    %v1870 = vadd.f32 0.0, %v1869
    %1871 = vdwg.mxu0
    %1872 = vmatprep.subr.mxu0 %v1209
    %1873 = vmatpush1.msra.mxu0 %v1208
    %1874 = vmatprep.subr.mxu0 %v1205
    %1875 = vmatpush1.msra.mxu0 %v1204
    %1876 = vmatprep.subr.mxu0 %v1201
    %1877 = vmatpush1.msra.mxu0 %v1200
    %1878 = vmatprep.subr.mxu0 %v1197
    %1879 = vmatpush1.msra.mxu0 %v1196
    %1880 = vmatprep.subr.mxu0 %v1193
    %1881 = vmatpush1.msra.mxu0 %v1192
    %1882 = vmatprep.subr.mxu0 %v1189
    %1883 = vmatpush1.msra.mxu0 %v1188
    %1884 = vmatprep.subr.mxu0 %v1185
    %1885 = vmatpush1.msra.mxu0 %v1184
    %1886 = vmatprep.subr.mxu0 %v1181
    %1887 = vmatpush1.msra.mxu0 %v1180
    %1888 = vmatprep.subr.mxu0 %v1177
    %1889 = vmatpush1.msra.mxu0 %v1176
    %1890 = vmatprep.subr.mxu0 %v1173
    %1891 = vmatpush1.msra.mxu0 %v1172
    %1892 = vmatprep.subr.mxu0 %v1169
    %1893 = vmatpush1.msra.mxu0 %v1168
    %1894 = vmatprep.subr.mxu0 %v1165
    %1895 = vmatpush1.msra.mxu0 %v1164
    %1896 = vmatprep.subr.mxu0 %v1161
    %1897 = vmatpush1.msra.mxu0 %v1160
    %1898 = vmatprep.subr.mxu0 %v1157
    %1899 = vmatpush1.msra.mxu0 %v1156
    %1900 = vmatprep.subr.mxu0 %v1153
    %1901 = vmatpush1.msra.mxu0 %v1152
    %1902 = vmatprep.subr.mxu0 %v1149
    %1903 = vmatpush1.msra.mxu0 %v1148
    %1904 = vmatprep.subr.mxu0 0.0
    %1905 = vmatpush2.msra.mxu0 0.0
    %1906 = vmatprep.subr.mxu0 0.0
    %1907 = vmatpush2.msra.mxu0 0.0
    %1908 = vmatprep.subr.mxu0 0.0
    %1909 = vmatpush2.msra.mxu0 0.0
    %1910 = vmatprep.subr.mxu0 0.0
    %1911 = vmatpush2.msra.mxu0 0.0
    %1912 = vmatprep.subr.mxu0 0.0
    %1913 = vmatpush2.msra.mxu0 0.0
    %1914 = vmatprep.subr.mxu0 0.0
    %1915 = vmatpush2.msra.mxu0 0.0
    %1916 = vmatprep.subr.mxu0 0.0
    %1917 = vmatpush2.msra.mxu0 0.0
    %1918 = vmatprep.subr.mxu0 0.0
    %1919 = vmatpush2.msra.mxu0 0.0
    %1920 = vmatprep.subr.mxu0 0.0
    %1921 = vmatpush2.msra.mxu0 0.0
    %1922 = vmatprep.subr.mxu0 0.0
    %1923 = vmatpush2.msra.mxu0 0.0
    %1924 = vmatprep.subr.mxu0 0.0
    %1925 = vmatpush2.msra.mxu0 0.0
    %1926 = vmatprep.subr.mxu0 0.0
    %1927 = vmatpush2.msra.mxu0 0.0
    %1928 = vmatprep.subr.mxu0 0.0
    %1929 = vmatpush2.msra.mxu0 0.0
    %1930 = vmatprep.subr.mxu0 0.0
    %1931 = vmatpush2.msra.mxu0 0.0
    %1932 = vmatprep.subr.mxu0 0.0
    %1933 = vmatpush2.msra.mxu0 0.0
    %1934 = vmatprep.subr.mxu0 0.0
    %1935 = vmatpush2.msra.mxu0 0.0
    %1936 = vmatprep.mubr.f32.mxu0 0.0
    %1937 = vmatmul.mubr.f32.gmra.mxu0 %v1572
    %v1938 = vpop.f32.mrf.mxu0
    %v1939 = vadd.f32 0.0, %v1938
    %v1940 = vpop.f32.mrf.mxu0
    %v1941 = vadd.f32 0.0, %v1940
    %1942 = vmatprep.mubr.f32.mxu0 0.0
    %1943 = vmatmul.mubr.f32.gmra.mxu0 %v1573
    %v1944 = vpop.f32.mrf.mxu0
    %v1945 = vadd.f32 0.0, %v1944
    %v1946 = vpop.f32.mrf.mxu0
    %v1947 = vadd.f32 0.0, %v1946
    %1948 = vdwg.mxu0
    %1949 = vmatprep.subr.mxu0 %v1143
    %1950 = vmatpush1.msra.mxu0 %v1142
    %1951 = vmatprep.subr.mxu0 %v1139
    %1952 = vmatpush1.msra.mxu0 %v1138
    %1953 = vmatprep.subr.mxu0 %v1135
    %1954 = vmatpush1.msra.mxu0 %v1134
    %1955 = vmatprep.subr.mxu0 %v1131
    %1956 = vmatpush1.msra.mxu0 %v1130
    %1957 = vmatprep.subr.mxu0 %v1127
    %1958 = vmatpush1.msra.mxu0 %v1126
    %1959 = vmatprep.subr.mxu0 %v1123
    %1960 = vmatpush1.msra.mxu0 %v1122
    %1961 = vmatprep.subr.mxu0 %v1119
    %1962 = vmatpush1.msra.mxu0 %v1118
    %1963 = vmatprep.subr.mxu0 %v1115
    %1964 = vmatpush1.msra.mxu0 %v1114
    %1965 = vmatprep.subr.mxu0 %v1111
    %1966 = vmatpush1.msra.mxu0 %v1110
    %1967 = vmatprep.subr.mxu0 %v1107
    %1968 = vmatpush1.msra.mxu0 %v1106
    %1969 = vmatprep.subr.mxu0 %v1103
    %1970 = vmatpush1.msra.mxu0 %v1102
    %1971 = vmatprep.subr.mxu0 %v1099
    %1972 = vmatpush1.msra.mxu0 %v1098
    %1973 = vmatprep.subr.mxu0 %v1095
    %1974 = vmatpush1.msra.mxu0 %v1094
    %1975 = vmatprep.subr.mxu0 %v1091
    %1976 = vmatpush1.msra.mxu0 %v1090
    %1977 = vmatprep.subr.mxu0 %v1087
    %1978 = vmatpush1.msra.mxu0 %v1086
    %1979 = vmatprep.subr.mxu0 %v1083
    %1980 = vmatpush1.msra.mxu0 %v1082
    %1981 = vmatprep.subr.mxu0 0.0
    %1982 = vmatpush2.msra.mxu0 0.0
    %1983 = vmatprep.subr.mxu0 0.0
    %1984 = vmatpush2.msra.mxu0 0.0
    %1985 = vmatprep.subr.mxu0 0.0
    %1986 = vmatpush2.msra.mxu0 0.0
    %1987 = vmatprep.subr.mxu0 0.0
    %1988 = vmatpush2.msra.mxu0 0.0
    %1989 = vmatprep.subr.mxu0 0.0
    %1990 = vmatpush2.msra.mxu0 0.0
    %1991 = vmatprep.subr.mxu0 0.0
    %1992 = vmatpush2.msra.mxu0 0.0
    %1993 = vmatprep.subr.mxu0 0.0
    %1994 = vmatpush2.msra.mxu0 0.0
    %1995 = vmatprep.subr.mxu0 0.0
    %1996 = vmatpush2.msra.mxu0 0.0
    %1997 = vmatprep.subr.mxu0 0.0
    %1998 = vmatpush2.msra.mxu0 0.0
    %1999 = vmatprep.subr.mxu0 0.0
    %2000 = vmatpush2.msra.mxu0 0.0
    %2001 = vmatprep.subr.mxu0 0.0
    %2002 = vmatpush2.msra.mxu0 0.0
    %2003 = vmatprep.subr.mxu0 0.0
    %2004 = vmatpush2.msra.mxu0 0.0
    %2005 = vmatprep.subr.mxu0 0.0
    %2006 = vmatpush2.msra.mxu0 0.0
    %2007 = vmatprep.subr.mxu0 0.0
    %2008 = vmatpush2.msra.mxu0 0.0
    %2009 = vmatprep.subr.mxu0 0.0
    %2010 = vmatpush2.msra.mxu0 0.0
    %2011 = vmatprep.subr.mxu0 0.0
    %2012 = vmatpush2.msra.mxu0 0.0
    %2013 = vmatprep.mubr.f32.mxu0 0.0
    %2014 = vmatmul.mubr.f32.gmra.mxu0 %v1080
    %v2015 = vpop.f32.mrf.mxu0
    %v2016 = vadd.f32 %v1862, %v2015
    %v2017 = vpop.f32.mrf.mxu0
    %v2018 = vadd.f32 %v1864, %v2017
    %2019 = vmatprep.mubr.f32.mxu0 0.0
    %2020 = vmatmul.mubr.f32.gmra.mxu0 %v1081
    %v2021 = vpop.f32.mrf.mxu0
    %v2022 = vadd.f32 %v1868, %v2021
    %v2023 = vpop.f32.mrf.mxu0
    %v2024 = vadd.f32 %v1870, %v2023
    %2025 = vdwg.mxu0
    %2026 = vmatprep.subr.mxu0 %v1145
    %2027 = vmatpush1.msra.mxu0 %v1144
    %2028 = vmatprep.subr.mxu0 %v1141
    %2029 = vmatpush1.msra.mxu0 %v1140
    %2030 = vmatprep.subr.mxu0 %v1137
    %2031 = vmatpush1.msra.mxu0 %v1136
    %2032 = vmatprep.subr.mxu0 %v1133
    %2033 = vmatpush1.msra.mxu0 %v1132
    %2034 = vmatprep.subr.mxu0 %v1129
    %2035 = vmatpush1.msra.mxu0 %v1128
    %2036 = vmatprep.subr.mxu0 %v1125
    %2037 = vmatpush1.msra.mxu0 %v1124
    %2038 = vmatprep.subr.mxu0 %v1121
    %2039 = vmatpush1.msra.mxu0 %v1120
    %2040 = vmatprep.subr.mxu0 %v1117
    %2041 = vmatpush1.msra.mxu0 %v1116
    %2042 = vmatprep.subr.mxu0 %v1113
    %2043 = vmatpush1.msra.mxu0 %v1112
    %2044 = vmatprep.subr.mxu0 %v1109
    %2045 = vmatpush1.msra.mxu0 %v1108
    %2046 = vmatprep.subr.mxu0 %v1105
    %2047 = vmatpush1.msra.mxu0 %v1104
    %2048 = vmatprep.subr.mxu0 %v1101
    %2049 = vmatpush1.msra.mxu0 %v1100
    %2050 = vmatprep.subr.mxu0 %v1097
    %2051 = vmatpush1.msra.mxu0 %v1096
    %2052 = vmatprep.subr.mxu0 %v1093
    %2053 = vmatpush1.msra.mxu0 %v1092
    %2054 = vmatprep.subr.mxu0 %v1089
    %2055 = vmatpush1.msra.mxu0 %v1088
    %2056 = vmatprep.subr.mxu0 %v1085
    %2057 = vmatpush1.msra.mxu0 %v1084
    %2058 = vmatprep.subr.mxu0 0.0
    %2059 = vmatpush2.msra.mxu0 0.0
    %2060 = vmatprep.subr.mxu0 0.0
    %2061 = vmatpush2.msra.mxu0 0.0
    %2062 = vmatprep.subr.mxu0 0.0
    %2063 = vmatpush2.msra.mxu0 0.0
    %2064 = vmatprep.subr.mxu0 0.0
    %2065 = vmatpush2.msra.mxu0 0.0
    %2066 = vmatprep.subr.mxu0 0.0
    %2067 = vmatpush2.msra.mxu0 0.0
    %2068 = vmatprep.subr.mxu0 0.0
    %2069 = vmatpush2.msra.mxu0 0.0
    %2070 = vmatprep.subr.mxu0 0.0
    %2071 = vmatpush2.msra.mxu0 0.0
    %2072 = vmatprep.subr.mxu0 0.0
    %2073 = vmatpush2.msra.mxu0 0.0
    %2074 = vmatprep.subr.mxu0 0.0
    %2075 = vmatpush2.msra.mxu0 0.0
    %2076 = vmatprep.subr.mxu0 0.0
    %2077 = vmatpush2.msra.mxu0 0.0
    %2078 = vmatprep.subr.mxu0 0.0
    %2079 = vmatpush2.msra.mxu0 0.0
    %2080 = vmatprep.subr.mxu0 0.0
    %2081 = vmatpush2.msra.mxu0 0.0
    %2082 = vmatprep.subr.mxu0 0.0
    %2083 = vmatpush2.msra.mxu0 0.0
    %2084 = vmatprep.subr.mxu0 0.0
    %2085 = vmatpush2.msra.mxu0 0.0
    %2086 = vmatprep.subr.mxu0 0.0
    %2087 = vmatpush2.msra.mxu0 0.0
    %2088 = vmatprep.subr.mxu0 0.0
    %2089 = vmatpush2.msra.mxu0 0.0
    %2090 = vmatprep.mubr.f32.mxu0 0.0
    %2091 = vmatmul.mubr.f32.gmra.mxu0 %v1080
    %v2092 = vpop.f32.mrf.mxu0
    %v2093 = vadd.f32 %v1939, %v2092
    %v2094 = vpop.f32.mrf.mxu0
    %v2095 = vadd.f32 %v1941, %v2094
    %2096 = vmatprep.mubr.f32.mxu0 0.0
    %2097 = vmatmul.mubr.f32.gmra.mxu0 %v1081
    %v2098 = vpop.f32.mrf.mxu0
    %v2099 = vadd.f32 %v1945, %v2098
    %v2100 = vpop.f32.mrf.mxu0
    %v2101 = vadd.f32 %v1947, %v2100
    %2102 = vdwg.mxu0
    %v2103 = vadd.f32 %v2016, %v559
    %v2104 = vadd.f32 %v2018, %v563
    %v2105 = vadd.f32 %v2093, %v567
    %v2106 = vadd.f32 %v2095, %v571
    %v2107 = vadd.f32 %v2022, %v559
    %v2108 = vadd.f32 %v2024, %v563
    %v2109 = vadd.f32 %v2099, %v567
    %v2110 = vadd.f32 %v2101, %v571
    %v2111 = vxor.u32 %v2103, 2147483648
    %v2112 = vxor.u32 %v2107, 2147483648
    %v2113 = vmul.f32 %v2111, 1.442695
    %v2114 = vpow.pop %v2113
    %v2115 = vmul.f32 %v2112, 1.442695
    %v2116 = vpow.pop %v2115
    %v2117 = vadd.f32 %v2114, 1.0
    %v2118 = vadd.f32 %v2116, 1.0
    %v2119 = vrcp.pop %v2117
    %v2120 = vmul.f32 1.0, %v2119
    %v2121 = vrcp.pop %v2118
    %v2122 = vmul.f32 1.0, %v2121
    %v2123 = vxor.u32 %v2104, 2147483648
    %v2124 = vxor.u32 %v2108, 2147483648
    %v2125 = vmul.f32 %v2123, 1.442695
    %v2126 = vpow.pop %v2125
    %v2127 = vmul.f32 %v2124, 1.442695
    %v2128 = vpow.pop %v2127
    %v2129 = vadd.f32 %v2126, 1.0
    %v2130 = vadd.f32 %v2128, 1.0
    %v2131 = vrcp.pop %v2129
    %v2132 = vmul.f32 1.0, %v2131
    %v2133 = vrcp.pop %v2130
    %v2134 = vmul.f32 1.0, %v2133
    %v2135 = vtanh.pop %v2105
    %v2136 = vtanh.pop %v2109
    %v2137 = vxor.u32 %v2106, 2147483648
    %v2138 = vxor.u32 %v2110, 2147483648
    %v2139 = vmul.f32 %v2137, 1.442695
    %v2140 = vpow.pop %v2139
    %v2141 = vmul.f32 %v2138, 1.442695
    %v2142 = vpow.pop %v2141
    %v2143 = vadd.f32 %v2140, 1.0
    %v2144 = vadd.f32 %v2142, 1.0
    %v2145 = vrcp.pop %v2143
    %v2146 = vmul.f32 1.0, %v2145
    %v2147 = vrcp.pop %v2144
    %v2148 = vmul.f32 1.0, %v2147
    %v2149 = vmul.f32 %v2132, %v1568
    %v2150 = vmul.f32 %v2134, %v1569
    %v2151 = vmul.f32 %v2120, %v2135
    %v2152 = vmul.f32 %v2122, %v2136
    %v2153 = vadd.f32 %v2149, %v2151
    %v2154 = vadd.f32 %v2150, %v2152
    %v2155 = vtanh.pop %v2153
    %v2156 = vtanh.pop %v2154
    %v2157 = vmul.f32 %v2146, %v2155
    %v2158 = vmul.f32 %v2148, %v2156
    %s2159 = smul.u32 6, 4
    %s2160 = smul.addr %s2159, 8
    %s2161 = scalar_lea.vmem [#allocation2], %s2160
    %v2162 = vld [vmem:[%s2161] sm:$0xff]
    %v2163 = vld [vmem:[%s2161 + $0x8] sm:$0xff]
    %v2164 = vld [vmem:[%s2161 + $0x10] sm:$0xff]
    %v2165 = vld [vmem:[%s2161 + $0x18] sm:$0xff]
    %v2166 = vld [vmem:[%s2161 + $0x20] sm:$0xff]
    %v2167 = vld [vmem:[%s2161 + $0x28] sm:$0xff]
    %v2168 = vld [vmem:[%s2161 + $0x30] sm:$0xff]
    %v2169 = vld [vmem:[%s2161 + $0x38] sm:$0xff]
    %2170 = vmatprep.subr.mxu0 %v648
    %2171 = vmatpush1.msra.mxu0 %v647
    %2172 = vmatprep.subr.mxu0 %v644
    %2173 = vmatpush1.msra.mxu0 %v643
    %2174 = vmatprep.subr.mxu0 %v640
    %2175 = vmatpush1.msra.mxu0 %v639
    %2176 = vmatprep.subr.mxu0 %v636
    %2177 = vmatpush1.msra.mxu0 %v635
    %2178 = vmatprep.subr.mxu0 %v632
    %2179 = vmatpush1.msra.mxu0 %v631
    %2180 = vmatprep.subr.mxu0 %v628
    %2181 = vmatpush1.msra.mxu0 %v627
    %2182 = vmatprep.subr.mxu0 %v624
    %2183 = vmatpush1.msra.mxu0 %v623
    %2184 = vmatprep.subr.mxu0 %v620
    %2185 = vmatpush1.msra.mxu0 %v619
    %2186 = vmatprep.subr.mxu0 %v616
    %2187 = vmatpush1.msra.mxu0 %v615
    %2188 = vmatprep.subr.mxu0 %v612
    %2189 = vmatpush1.msra.mxu0 %v611
    %2190 = vmatprep.subr.mxu0 %v608
    %2191 = vmatpush1.msra.mxu0 %v607
    %2192 = vmatprep.subr.mxu0 %v604
    %2193 = vmatpush1.msra.mxu0 %v603
    %2194 = vmatprep.subr.mxu0 %v600
    %2195 = vmatpush1.msra.mxu0 %v599
    %2196 = vmatprep.subr.mxu0 %v596
    %2197 = vmatpush1.msra.mxu0 %v595
    %2198 = vmatprep.subr.mxu0 %v592
    %2199 = vmatpush1.msra.mxu0 %v591
    %2200 = vmatprep.subr.mxu0 %v588
    %2201 = vmatpush1.msra.mxu0 %v587
    %2202 = vmatprep.subr.mxu0 0.0
    %2203 = vmatpush2.msra.mxu0 0.0
    %2204 = vmatprep.subr.mxu0 0.0
    %2205 = vmatpush2.msra.mxu0 0.0
    %2206 = vmatprep.subr.mxu0 0.0
    %2207 = vmatpush2.msra.mxu0 0.0
    %2208 = vmatprep.subr.mxu0 0.0
    %2209 = vmatpush2.msra.mxu0 0.0
    %2210 = vmatprep.subr.mxu0 0.0
    %2211 = vmatpush2.msra.mxu0 0.0
    %2212 = vmatprep.subr.mxu0 0.0
    %2213 = vmatpush2.msra.mxu0 0.0
    %2214 = vmatprep.subr.mxu0 0.0
    %2215 = vmatpush2.msra.mxu0 0.0
    %2216 = vmatprep.subr.mxu0 0.0
    %2217 = vmatpush2.msra.mxu0 0.0
    %2218 = vmatprep.subr.mxu0 0.0
    %2219 = vmatpush2.msra.mxu0 0.0
    %2220 = vmatprep.subr.mxu0 0.0
    %2221 = vmatpush2.msra.mxu0 0.0
    %2222 = vmatprep.subr.mxu0 0.0
    %2223 = vmatpush2.msra.mxu0 0.0
    %2224 = vmatprep.subr.mxu0 0.0
    %2225 = vmatpush2.msra.mxu0 0.0
    %2226 = vmatprep.subr.mxu0 0.0
    %2227 = vmatpush2.msra.mxu0 0.0
    %2228 = vmatprep.subr.mxu0 0.0
    %2229 = vmatpush2.msra.mxu0 0.0
    %2230 = vmatprep.subr.mxu0 0.0
    %2231 = vmatpush2.msra.mxu0 0.0
    %2232 = vmatprep.subr.mxu0 0.0
    %2233 = vmatpush2.msra.mxu0 0.0
    %2234 = vmatprep.mubr.f32.mxu0 0.0
    %2235 = vmatmul.mubr.f32.gmra.mxu0 %v1793
    %v2236 = vpop.f32.mrf.mxu0
    %v2237 = vadd.f32 0.0, %v2236
    %v2238 = vpop.f32.mrf.mxu0
    %v2239 = vadd.f32 0.0, %v2238
    %2240 = vmatprep.mubr.f32.mxu0 0.0
    %2241 = vmatmul.mubr.f32.gmra.mxu0 %v1794
    %v2242 = vpop.f32.mrf.mxu0
    %v2243 = vadd.f32 0.0, %v2242
    %v2244 = vpop.f32.mrf.mxu0
    %v2245 = vadd.f32 0.0, %v2244
    %2246 = vdwg.mxu0
    %2247 = vmatprep.subr.mxu0 %v650
    %2248 = vmatpush1.msra.mxu0 %v649
    %2249 = vmatprep.subr.mxu0 %v646
    %2250 = vmatpush1.msra.mxu0 %v645
    %2251 = vmatprep.subr.mxu0 %v642
    %2252 = vmatpush1.msra.mxu0 %v641
    %2253 = vmatprep.subr.mxu0 %v638
    %2254 = vmatpush1.msra.mxu0 %v637
    %2255 = vmatprep.subr.mxu0 %v634
    %2256 = vmatpush1.msra.mxu0 %v633
    %2257 = vmatprep.subr.mxu0 %v630
    %2258 = vmatpush1.msra.mxu0 %v629
    %2259 = vmatprep.subr.mxu0 %v626
    %2260 = vmatpush1.msra.mxu0 %v625
    %2261 = vmatprep.subr.mxu0 %v622
    %2262 = vmatpush1.msra.mxu0 %v621
    %2263 = vmatprep.subr.mxu0 %v618
    %2264 = vmatpush1.msra.mxu0 %v617
    %2265 = vmatprep.subr.mxu0 %v614
    %2266 = vmatpush1.msra.mxu0 %v613
    %2267 = vmatprep.subr.mxu0 %v610
    %2268 = vmatpush1.msra.mxu0 %v609
    %2269 = vmatprep.subr.mxu0 %v606
    %2270 = vmatpush1.msra.mxu0 %v605
    %2271 = vmatprep.subr.mxu0 %v602
    %2272 = vmatpush1.msra.mxu0 %v601
    %2273 = vmatprep.subr.mxu0 %v598
    %2274 = vmatpush1.msra.mxu0 %v597
    %2275 = vmatprep.subr.mxu0 %v594
    %2276 = vmatpush1.msra.mxu0 %v593
    %2277 = vmatprep.subr.mxu0 %v590
    %2278 = vmatpush1.msra.mxu0 %v589
    %2279 = vmatprep.subr.mxu0 0.0
    %2280 = vmatpush2.msra.mxu0 0.0
    %2281 = vmatprep.subr.mxu0 0.0
    %2282 = vmatpush2.msra.mxu0 0.0
    %2283 = vmatprep.subr.mxu0 0.0
    %2284 = vmatpush2.msra.mxu0 0.0
    %2285 = vmatprep.subr.mxu0 0.0
    %2286 = vmatpush2.msra.mxu0 0.0
    %2287 = vmatprep.subr.mxu0 0.0
    %2288 = vmatpush2.msra.mxu0 0.0
    %2289 = vmatprep.subr.mxu0 0.0
    %2290 = vmatpush2.msra.mxu0 0.0
    %2291 = vmatprep.subr.mxu0 0.0
    %2292 = vmatpush2.msra.mxu0 0.0
    %2293 = vmatprep.subr.mxu0 0.0
    %2294 = vmatpush2.msra.mxu0 0.0
    %2295 = vmatprep.subr.mxu0 0.0
    %2296 = vmatpush2.msra.mxu0 0.0
    %2297 = vmatprep.subr.mxu0 0.0
    %2298 = vmatpush2.msra.mxu0 0.0
    %2299 = vmatprep.subr.mxu0 0.0
    %2300 = vmatpush2.msra.mxu0 0.0
    %2301 = vmatprep.subr.mxu0 0.0
    %2302 = vmatpush2.msra.mxu0 0.0
    %2303 = vmatprep.subr.mxu0 0.0
    %2304 = vmatpush2.msra.mxu0 0.0
    %2305 = vmatprep.subr.mxu0 0.0
    %2306 = vmatpush2.msra.mxu0 0.0
    %2307 = vmatprep.subr.mxu0 0.0
    %2308 = vmatpush2.msra.mxu0 0.0
    %2309 = vmatprep.subr.mxu0 0.0
    %2310 = vmatpush2.msra.mxu0 0.0
    %2311 = vmatprep.mubr.f32.mxu0 0.0
    %2312 = vmatmul.mubr.f32.gmra.mxu0 %v1793
    %v2313 = vpop.f32.mrf.mxu0
    %v2314 = vadd.f32 0.0, %v2313
    %v2315 = vpop.f32.mrf.mxu0
    %v2316 = vadd.f32 0.0, %v2315
    %2317 = vmatprep.mubr.f32.mxu0 0.0
    %2318 = vmatmul.mubr.f32.gmra.mxu0 %v1794
    %v2319 = vpop.f32.mrf.mxu0
    %v2320 = vadd.f32 0.0, %v2319
    %v2321 = vpop.f32.mrf.mxu0
    %v2322 = vadd.f32 0.0, %v2321
    %2323 = vdwg.mxu0
    %v2324 = vadd.f32 %v2162, %v2237
    %v2325 = vadd.f32 %v2163, %v2239
    %v2326 = vadd.f32 %v2164, %v2314
    %v2327 = vadd.f32 %v2165, %v2316
    %v2328 = vadd.f32 %v2166, %v2243
    %v2329 = vadd.f32 %v2167, %v2245
    %v2330 = vadd.f32 %v2168, %v2320
    %v2331 = vadd.f32 %v2169, %v2322
    %v2332 = vxor.u32 %v2324, 2147483648
    %v2333 = vxor.u32 %v2328, 2147483648
    %v2334 = vmul.f32 %v2332, 1.442695
    %v2335 = vpow.pop %v2334
    %v2336 = vmul.f32 %v2333, 1.442695
    %v2337 = vpow.pop %v2336
    %v2338 = vadd.f32 %v2335, 1.0
    %v2339 = vadd.f32 %v2337, 1.0
    %v2340 = vrcp.pop %v2338
    %v2341 = vmul.f32 1.0, %v2340
    %v2342 = vrcp.pop %v2339
    %v2343 = vmul.f32 1.0, %v2342
    %v2344 = vxor.u32 %v2325, 2147483648
    %v2345 = vxor.u32 %v2329, 2147483648
    %v2346 = vmul.f32 %v2344, 1.442695
    %v2347 = vpow.pop %v2346
    %v2348 = vmul.f32 %v2345, 1.442695
    %v2349 = vpow.pop %v2348
    %v2350 = vadd.f32 %v2347, 1.0
    %v2351 = vadd.f32 %v2349, 1.0
    %v2352 = vrcp.pop %v2350
    %v2353 = vmul.f32 1.0, %v2352
    %v2354 = vrcp.pop %v2351
    %v2355 = vmul.f32 1.0, %v2354
    %v2356 = vtanh.pop %v2326
    %v2357 = vtanh.pop %v2330
    %v2358 = vxor.u32 %v2327, 2147483648
    %v2359 = vxor.u32 %v2331, 2147483648
    %v2360 = vmul.f32 %v2358, 1.442695
    %v2361 = vpow.pop %v2360
    %v2362 = vmul.f32 %v2359, 1.442695
    %v2363 = vpow.pop %v2362
    %v2364 = vadd.f32 %v2361, 1.0
    %v2365 = vadd.f32 %v2363, 1.0
    %v2366 = vrcp.pop %v2364
    %v2367 = vmul.f32 1.0, %v2366
    %v2368 = vrcp.pop %v2365
    %v2369 = vmul.f32 1.0, %v2368
    %v2370 = vmul.f32 %v2353, %v1789
    %v2371 = vmul.f32 %v2355, %v1790
    %v2372 = vmul.f32 %v2341, %v2356
    %v2373 = vmul.f32 %v2343, %v2357
    %v2374 = vadd.f32 %v2370, %v2372
    %v2375 = vadd.f32 %v2371, %v2373
    %v2376 = vtanh.pop %v2374
    %v2377 = vtanh.pop %v2375
    %v2378 = vmul.f32 %v2367, %v2376
    %v2379 = vmul.f32 %v2369, %v2377
    %2380 = vmatprep.subr.mxu0 %v1207
    %2381 = vmatpush1.msra.mxu0 %v1206
    %2382 = vmatprep.subr.mxu0 %v1203
    %2383 = vmatpush1.msra.mxu0 %v1202
    %2384 = vmatprep.subr.mxu0 %v1199
    %2385 = vmatpush1.msra.mxu0 %v1198
    %2386 = vmatprep.subr.mxu0 %v1195
    %2387 = vmatpush1.msra.mxu0 %v1194
    %2388 = vmatprep.subr.mxu0 %v1191
    %2389 = vmatpush1.msra.mxu0 %v1190
    %2390 = vmatprep.subr.mxu0 %v1187
    %2391 = vmatpush1.msra.mxu0 %v1186
    %2392 = vmatprep.subr.mxu0 %v1183
    %2393 = vmatpush1.msra.mxu0 %v1182
    %2394 = vmatprep.subr.mxu0 %v1179
    %2395 = vmatpush1.msra.mxu0 %v1178
    %2396 = vmatprep.subr.mxu0 %v1175
    %2397 = vmatpush1.msra.mxu0 %v1174
    %2398 = vmatprep.subr.mxu0 %v1171
    %2399 = vmatpush1.msra.mxu0 %v1170
    %2400 = vmatprep.subr.mxu0 %v1167
    %2401 = vmatpush1.msra.mxu0 %v1166
    %2402 = vmatprep.subr.mxu0 %v1163
    %2403 = vmatpush1.msra.mxu0 %v1162
    %2404 = vmatprep.subr.mxu0 %v1159
    %2405 = vmatpush1.msra.mxu0 %v1158
    %2406 = vmatprep.subr.mxu0 %v1155
    %2407 = vmatpush1.msra.mxu0 %v1154
    %2408 = vmatprep.subr.mxu0 %v1151
    %2409 = vmatpush1.msra.mxu0 %v1150
    %2410 = vmatprep.subr.mxu0 %v1147
    %2411 = vmatpush1.msra.mxu0 %v1146
    %2412 = vmatprep.subr.mxu0 0.0
    %2413 = vmatpush2.msra.mxu0 0.0
    %2414 = vmatprep.subr.mxu0 0.0
    %2415 = vmatpush2.msra.mxu0 0.0
    %2416 = vmatprep.subr.mxu0 0.0
    %2417 = vmatpush2.msra.mxu0 0.0
    %2418 = vmatprep.subr.mxu0 0.0
    %2419 = vmatpush2.msra.mxu0 0.0
    %2420 = vmatprep.subr.mxu0 0.0
    %2421 = vmatpush2.msra.mxu0 0.0
    %2422 = vmatprep.subr.mxu0 0.0
    %2423 = vmatpush2.msra.mxu0 0.0
    %2424 = vmatprep.subr.mxu0 0.0
    %2425 = vmatpush2.msra.mxu0 0.0
    %2426 = vmatprep.subr.mxu0 0.0
    %2427 = vmatpush2.msra.mxu0 0.0
    %2428 = vmatprep.subr.mxu0 0.0
    %2429 = vmatpush2.msra.mxu0 0.0
    %2430 = vmatprep.subr.mxu0 0.0
    %2431 = vmatpush2.msra.mxu0 0.0
    %2432 = vmatprep.subr.mxu0 0.0
    %2433 = vmatpush2.msra.mxu0 0.0
    %2434 = vmatprep.subr.mxu0 0.0
    %2435 = vmatpush2.msra.mxu0 0.0
    %2436 = vmatprep.subr.mxu0 0.0
    %2437 = vmatpush2.msra.mxu0 0.0
    %2438 = vmatprep.subr.mxu0 0.0
    %2439 = vmatpush2.msra.mxu0 0.0
    %2440 = vmatprep.subr.mxu0 0.0
    %2441 = vmatpush2.msra.mxu0 0.0
    %2442 = vmatprep.subr.mxu0 0.0
    %2443 = vmatpush2.msra.mxu0 0.0
    %2444 = vmatprep.mubr.f32.mxu0 0.0
    %2445 = vmatmul.mubr.f32.gmra.mxu0 %v2157
    %v2446 = vpop.f32.mrf.mxu0
    %v2447 = vadd.f32 0.0, %v2446
    %v2448 = vpop.f32.mrf.mxu0
    %v2449 = vadd.f32 0.0, %v2448
    %2450 = vmatprep.mubr.f32.mxu0 0.0
    %2451 = vmatmul.mubr.f32.gmra.mxu0 %v2158
    %v2452 = vpop.f32.mrf.mxu0
    %v2453 = vadd.f32 0.0, %v2452
    %v2454 = vpop.f32.mrf.mxu0
    %v2455 = vadd.f32 0.0, %v2454
    %2456 = vdwg.mxu0
    %2457 = vmatprep.subr.mxu0 %v1209
    %2458 = vmatpush1.msra.mxu0 %v1208
    %2459 = vmatprep.subr.mxu0 %v1205
    %2460 = vmatpush1.msra.mxu0 %v1204
    %2461 = vmatprep.subr.mxu0 %v1201
    %2462 = vmatpush1.msra.mxu0 %v1200
    %2463 = vmatprep.subr.mxu0 %v1197
    %2464 = vmatpush1.msra.mxu0 %v1196
    %2465 = vmatprep.subr.mxu0 %v1193
    %2466 = vmatpush1.msra.mxu0 %v1192
    %2467 = vmatprep.subr.mxu0 %v1189
    %2468 = vmatpush1.msra.mxu0 %v1188
    %2469 = vmatprep.subr.mxu0 %v1185
    %2470 = vmatpush1.msra.mxu0 %v1184
    %2471 = vmatprep.subr.mxu0 %v1181
    %2472 = vmatpush1.msra.mxu0 %v1180
    %2473 = vmatprep.subr.mxu0 %v1177
    %2474 = vmatpush1.msra.mxu0 %v1176
    %2475 = vmatprep.subr.mxu0 %v1173
    %2476 = vmatpush1.msra.mxu0 %v1172
    %2477 = vmatprep.subr.mxu0 %v1169
    %2478 = vmatpush1.msra.mxu0 %v1168
    %2479 = vmatprep.subr.mxu0 %v1165
    %2480 = vmatpush1.msra.mxu0 %v1164
    %2481 = vmatprep.subr.mxu0 %v1161
    %2482 = vmatpush1.msra.mxu0 %v1160
    %2483 = vmatprep.subr.mxu0 %v1157
    %2484 = vmatpush1.msra.mxu0 %v1156
    %2485 = vmatprep.subr.mxu0 %v1153
    %2486 = vmatpush1.msra.mxu0 %v1152
    %2487 = vmatprep.subr.mxu0 %v1149
    %2488 = vmatpush1.msra.mxu0 %v1148
    %2489 = vmatprep.subr.mxu0 0.0
    %2490 = vmatpush2.msra.mxu0 0.0
    %2491 = vmatprep.subr.mxu0 0.0
    %2492 = vmatpush2.msra.mxu0 0.0
    %2493 = vmatprep.subr.mxu0 0.0
    %2494 = vmatpush2.msra.mxu0 0.0
    %2495 = vmatprep.subr.mxu0 0.0
    %2496 = vmatpush2.msra.mxu0 0.0
    %2497 = vmatprep.subr.mxu0 0.0
    %2498 = vmatpush2.msra.mxu0 0.0
    %2499 = vmatprep.subr.mxu0 0.0
    %2500 = vmatpush2.msra.mxu0 0.0
    %2501 = vmatprep.subr.mxu0 0.0
    %2502 = vmatpush2.msra.mxu0 0.0
    %2503 = vmatprep.subr.mxu0 0.0
    %2504 = vmatpush2.msra.mxu0 0.0
    %2505 = vmatprep.subr.mxu0 0.0
    %2506 = vmatpush2.msra.mxu0 0.0
    %2507 = vmatprep.subr.mxu0 0.0
    %2508 = vmatpush2.msra.mxu0 0.0
    %2509 = vmatprep.subr.mxu0 0.0
    %2510 = vmatpush2.msra.mxu0 0.0
    %2511 = vmatprep.subr.mxu0 0.0
    %2512 = vmatpush2.msra.mxu0 0.0
    %2513 = vmatprep.subr.mxu0 0.0
    %2514 = vmatpush2.msra.mxu0 0.0
    %2515 = vmatprep.subr.mxu0 0.0
    %2516 = vmatpush2.msra.mxu0 0.0
    %2517 = vmatprep.subr.mxu0 0.0
    %2518 = vmatpush2.msra.mxu0 0.0
    %2519 = vmatprep.subr.mxu0 0.0
    %2520 = vmatpush2.msra.mxu0 0.0
    %2521 = vmatprep.mubr.f32.mxu0 0.0
    %2522 = vmatmul.mubr.f32.gmra.mxu0 %v2157
    %v2523 = vpop.f32.mrf.mxu0
    %v2524 = vadd.f32 0.0, %v2523
    %v2525 = vpop.f32.mrf.mxu0
    %v2526 = vadd.f32 0.0, %v2525
    %2527 = vmatprep.mubr.f32.mxu0 0.0
    %2528 = vmatmul.mubr.f32.gmra.mxu0 %v2158
    %v2529 = vpop.f32.mrf.mxu0
    %v2530 = vadd.f32 0.0, %v2529
    %v2531 = vpop.f32.mrf.mxu0
    %v2532 = vadd.f32 0.0, %v2531
    %2533 = vdwg.mxu0
    %2534 = vmatprep.subr.mxu0 %v1143
    %2535 = vmatpush1.msra.mxu0 %v1142
    %2536 = vmatprep.subr.mxu0 %v1139
    %2537 = vmatpush1.msra.mxu0 %v1138
    %2538 = vmatprep.subr.mxu0 %v1135
    %2539 = vmatpush1.msra.mxu0 %v1134
    %2540 = vmatprep.subr.mxu0 %v1131
    %2541 = vmatpush1.msra.mxu0 %v1130
    %2542 = vmatprep.subr.mxu0 %v1127
    %2543 = vmatpush1.msra.mxu0 %v1126
    %2544 = vmatprep.subr.mxu0 %v1123
    %2545 = vmatpush1.msra.mxu0 %v1122
    %2546 = vmatprep.subr.mxu0 %v1119
    %2547 = vmatpush1.msra.mxu0 %v1118
    %2548 = vmatprep.subr.mxu0 %v1115
    %2549 = vmatpush1.msra.mxu0 %v1114
    %2550 = vmatprep.subr.mxu0 %v1111
    %2551 = vmatpush1.msra.mxu0 %v1110
    %2552 = vmatprep.subr.mxu0 %v1107
    %2553 = vmatpush1.msra.mxu0 %v1106
    %2554 = vmatprep.subr.mxu0 %v1103
    %2555 = vmatpush1.msra.mxu0 %v1102
    %2556 = vmatprep.subr.mxu0 %v1099
    %2557 = vmatpush1.msra.mxu0 %v1098
    %2558 = vmatprep.subr.mxu0 %v1095
    %2559 = vmatpush1.msra.mxu0 %v1094
    %2560 = vmatprep.subr.mxu0 %v1091
    %2561 = vmatpush1.msra.mxu0 %v1090
    %2562 = vmatprep.subr.mxu0 %v1087
    %2563 = vmatpush1.msra.mxu0 %v1086
    %2564 = vmatprep.subr.mxu0 %v1083
    %2565 = vmatpush1.msra.mxu0 %v1082
    %2566 = vmatprep.subr.mxu0 0.0
    %2567 = vmatpush2.msra.mxu0 0.0
    %2568 = vmatprep.subr.mxu0 0.0
    %2569 = vmatpush2.msra.mxu0 0.0
    %2570 = vmatprep.subr.mxu0 0.0
    %2571 = vmatpush2.msra.mxu0 0.0
    %2572 = vmatprep.subr.mxu0 0.0
    %2573 = vmatpush2.msra.mxu0 0.0
    %2574 = vmatprep.subr.mxu0 0.0
    %2575 = vmatpush2.msra.mxu0 0.0
    %2576 = vmatprep.subr.mxu0 0.0
    %2577 = vmatpush2.msra.mxu0 0.0
    %2578 = vmatprep.subr.mxu0 0.0
    %2579 = vmatpush2.msra.mxu0 0.0
    %2580 = vmatprep.subr.mxu0 0.0
    %2581 = vmatpush2.msra.mxu0 0.0
    %2582 = vmatprep.subr.mxu0 0.0
    %2583 = vmatpush2.msra.mxu0 0.0
    %2584 = vmatprep.subr.mxu0 0.0
    %2585 = vmatpush2.msra.mxu0 0.0
    %2586 = vmatprep.subr.mxu0 0.0
    %2587 = vmatpush2.msra.mxu0 0.0
    %2588 = vmatprep.subr.mxu0 0.0
    %2589 = vmatpush2.msra.mxu0 0.0
    %2590 = vmatprep.subr.mxu0 0.0
    %2591 = vmatpush2.msra.mxu0 0.0
    %2592 = vmatprep.subr.mxu0 0.0
    %2593 = vmatpush2.msra.mxu0 0.0
    %2594 = vmatprep.subr.mxu0 0.0
    %2595 = vmatpush2.msra.mxu0 0.0
    %2596 = vmatprep.subr.mxu0 0.0
    %2597 = vmatpush2.msra.mxu0 0.0
    %2598 = vmatprep.mubr.f32.mxu0 0.0
    %2599 = vmatmul.mubr.f32.gmra.mxu0 %v1793
    %v2600 = vpop.f32.mrf.mxu0
    %v2601 = vadd.f32 %v2447, %v2600
    %v2602 = vpop.f32.mrf.mxu0
    %v2603 = vadd.f32 %v2449, %v2602
    %2604 = vmatprep.mubr.f32.mxu0 0.0
    %2605 = vmatmul.mubr.f32.gmra.mxu0 %v1794
    %v2606 = vpop.f32.mrf.mxu0
    %v2607 = vadd.f32 %v2453, %v2606
    %v2608 = vpop.f32.mrf.mxu0
    %v2609 = vadd.f32 %v2455, %v2608
    %2610 = vdwg.mxu0
    %2611 = vmatprep.subr.mxu0 %v1145
    %2612 = vmatpush1.msra.mxu0 %v1144
    %2613 = vmatprep.subr.mxu0 %v1141
    %2614 = vmatpush1.msra.mxu0 %v1140
    %2615 = vmatprep.subr.mxu0 %v1137
    %2616 = vmatpush1.msra.mxu0 %v1136
    %2617 = vmatprep.subr.mxu0 %v1133
    %2618 = vmatpush1.msra.mxu0 %v1132
    %2619 = vmatprep.subr.mxu0 %v1129
    %2620 = vmatpush1.msra.mxu0 %v1128
    %2621 = vmatprep.subr.mxu0 %v1125
    %2622 = vmatpush1.msra.mxu0 %v1124
    %2623 = vmatprep.subr.mxu0 %v1121
    %2624 = vmatpush1.msra.mxu0 %v1120
    %2625 = vmatprep.subr.mxu0 %v1117
    %2626 = vmatpush1.msra.mxu0 %v1116
    %2627 = vmatprep.subr.mxu0 %v1113
    %2628 = vmatpush1.msra.mxu0 %v1112
    %2629 = vmatprep.subr.mxu0 %v1109
    %2630 = vmatpush1.msra.mxu0 %v1108
    %2631 = vmatprep.subr.mxu0 %v1105
    %2632 = vmatpush1.msra.mxu0 %v1104
    %2633 = vmatprep.subr.mxu0 %v1101
    %2634 = vmatpush1.msra.mxu0 %v1100
    %2635 = vmatprep.subr.mxu0 %v1097
    %2636 = vmatpush1.msra.mxu0 %v1096
    %2637 = vmatprep.subr.mxu0 %v1093
    %2638 = vmatpush1.msra.mxu0 %v1092
    %2639 = vmatprep.subr.mxu0 %v1089
    %2640 = vmatpush1.msra.mxu0 %v1088
    %2641 = vmatprep.subr.mxu0 %v1085
    %2642 = vmatpush1.msra.mxu0 %v1084
    %2643 = vmatprep.subr.mxu0 0.0
    %2644 = vmatpush2.msra.mxu0 0.0
    %2645 = vmatprep.subr.mxu0 0.0
    %2646 = vmatpush2.msra.mxu0 0.0
    %2647 = vmatprep.subr.mxu0 0.0
    %2648 = vmatpush2.msra.mxu0 0.0
    %2649 = vmatprep.subr.mxu0 0.0
    %2650 = vmatpush2.msra.mxu0 0.0
    %2651 = vmatprep.subr.mxu0 0.0
    %2652 = vmatpush2.msra.mxu0 0.0
    %2653 = vmatprep.subr.mxu0 0.0
    %2654 = vmatpush2.msra.mxu0 0.0
    %2655 = vmatprep.subr.mxu0 0.0
    %2656 = vmatpush2.msra.mxu0 0.0
    %2657 = vmatprep.subr.mxu0 0.0
    %2658 = vmatpush2.msra.mxu0 0.0
    %2659 = vmatprep.subr.mxu0 0.0
    %2660 = vmatpush2.msra.mxu0 0.0
    %2661 = vmatprep.subr.mxu0 0.0
    %2662 = vmatpush2.msra.mxu0 0.0
    %2663 = vmatprep.subr.mxu0 0.0
    %2664 = vmatpush2.msra.mxu0 0.0
    %2665 = vmatprep.subr.mxu0 0.0
    %2666 = vmatpush2.msra.mxu0 0.0
    %2667 = vmatprep.subr.mxu0 0.0
    %2668 = vmatpush2.msra.mxu0 0.0
    %2669 = vmatprep.subr.mxu0 0.0
    %2670 = vmatpush2.msra.mxu0 0.0
    %2671 = vmatprep.subr.mxu0 0.0
    %2672 = vmatpush2.msra.mxu0 0.0
    %2673 = vmatprep.subr.mxu0 0.0
    %2674 = vmatpush2.msra.mxu0 0.0
    %2675 = vmatprep.mubr.f32.mxu0 0.0
    %2676 = vmatmul.mubr.f32.gmra.mxu0 %v1793
    %v2677 = vpop.f32.mrf.mxu0
    %v2678 = vadd.f32 %v2524, %v2677
    %v2679 = vpop.f32.mrf.mxu0
    %v2680 = vadd.f32 %v2526, %v2679
    %2681 = vmatprep.mubr.f32.mxu0 0.0
    %2682 = vmatmul.mubr.f32.gmra.mxu0 %v1794
    %v2683 = vpop.f32.mrf.mxu0
    %v2684 = vadd.f32 %v2530, %v2683
    %v2685 = vpop.f32.mrf.mxu0
    %v2686 = vadd.f32 %v2532, %v2685
    %2687 = vdwg.mxu0
    %v2688 = vadd.f32 %v2601, %v559
    %v2689 = vadd.f32 %v2603, %v563
    %v2690 = vadd.f32 %v2678, %v567
    %v2691 = vadd.f32 %v2680, %v571
    %v2692 = vadd.f32 %v2607, %v559
    %v2693 = vadd.f32 %v2609, %v563
    %v2694 = vadd.f32 %v2684, %v567
    %v2695 = vadd.f32 %v2686, %v571
    %v2696 = vxor.u32 %v2688, 2147483648
    %v2697 = vxor.u32 %v2692, 2147483648
    %v2698 = vmul.f32 %v2696, 1.442695
    %v2699 = vpow.pop %v2698
    %v2700 = vmul.f32 %v2697, 1.442695
    %v2701 = vpow.pop %v2700
    %v2702 = vadd.f32 %v2699, 1.0
    %v2703 = vadd.f32 %v2701, 1.0
    %v2704 = vrcp.pop %v2702
    %v2705 = vmul.f32 1.0, %v2704
    %v2706 = vrcp.pop %v2703
    %v2707 = vmul.f32 1.0, %v2706
    %v2708 = vxor.u32 %v2689, 2147483648
    %v2709 = vxor.u32 %v2693, 2147483648
    %v2710 = vmul.f32 %v2708, 1.442695
    %v2711 = vpow.pop %v2710
    %v2712 = vmul.f32 %v2709, 1.442695
    %v2713 = vpow.pop %v2712
    %v2714 = vadd.f32 %v2711, 1.0
    %v2715 = vadd.f32 %v2713, 1.0
    %v2716 = vrcp.pop %v2714
    %v2717 = vmul.f32 1.0, %v2716
    %v2718 = vrcp.pop %v2715
    %v2719 = vmul.f32 1.0, %v2718
    %v2720 = vtanh.pop %v2690
    %v2721 = vtanh.pop %v2694
    %v2722 = vxor.u32 %v2691, 2147483648
    %v2723 = vxor.u32 %v2695, 2147483648
    %v2724 = vmul.f32 %v2722, 1.442695
    %v2725 = vpow.pop %v2724
    %v2726 = vmul.f32 %v2723, 1.442695
    %v2727 = vpow.pop %v2726
    %v2728 = vadd.f32 %v2725, 1.0
    %v2729 = vadd.f32 %v2727, 1.0
    %v2730 = vrcp.pop %v2728
    %v2731 = vmul.f32 1.0, %v2730
    %v2732 = vrcp.pop %v2729
    %v2733 = vmul.f32 1.0, %v2732
    %v2734 = vmul.f32 %v2717, %v2153
    %v2735 = vmul.f32 %v2719, %v2154
    %v2736 = vmul.f32 %v2705, %v2720
    %v2737 = vmul.f32 %v2707, %v2721
    %v2738 = vadd.f32 %v2734, %v2736
    %v2739 = vadd.f32 %v2735, %v2737
    %v2740 = vtanh.pop %v2738
    %v2741 = vtanh.pop %v2739
    %v2742 = vmul.f32 %v2731, %v2740
    %v2743 = vmul.f32 %v2733, %v2741
    %s2744 = smul.u32 8, 4
    %s2745 = smul.addr %s2744, 8
    %s2746 = scalar_lea.vmem [#allocation2], %s2745
    %v2747 = vld [vmem:[%s2746] sm:$0xff]
    %v2748 = vld [vmem:[%s2746 + $0x8] sm:$0xff]
    %v2749 = vld [vmem:[%s2746 + $0x10] sm:$0xff]
    %v2750 = vld [vmem:[%s2746 + $0x18] sm:$0xff]
    %v2751 = vld [vmem:[%s2746 + $0x20] sm:$0xff]
    %v2752 = vld [vmem:[%s2746 + $0x28] sm:$0xff]
    %v2753 = vld [vmem:[%s2746 + $0x30] sm:$0xff]
    %v2754 = vld [vmem:[%s2746 + $0x38] sm:$0xff]
    %2755 = vmatprep.subr.mxu0 %v648
    %2756 = vmatpush1.msra.mxu0 %v647
    %2757 = vmatprep.subr.mxu0 %v644
    %2758 = vmatpush1.msra.mxu0 %v643
    %2759 = vmatprep.subr.mxu0 %v640
    %2760 = vmatpush1.msra.mxu0 %v639
    %2761 = vmatprep.subr.mxu0 %v636
    %2762 = vmatpush1.msra.mxu0 %v635
    %2763 = vmatprep.subr.mxu0 %v632
    %2764 = vmatpush1.msra.mxu0 %v631
    %2765 = vmatprep.subr.mxu0 %v628
    %2766 = vmatpush1.msra.mxu0 %v627
    %2767 = vmatprep.subr.mxu0 %v624
    %2768 = vmatpush1.msra.mxu0 %v623
    %2769 = vmatprep.subr.mxu0 %v620
    %2770 = vmatpush1.msra.mxu0 %v619
    %2771 = vmatprep.subr.mxu0 %v616
    %2772 = vmatpush1.msra.mxu0 %v615
    %2773 = vmatprep.subr.mxu0 %v612
    %2774 = vmatpush1.msra.mxu0 %v611
    %2775 = vmatprep.subr.mxu0 %v608
    %2776 = vmatpush1.msra.mxu0 %v607
    %2777 = vmatprep.subr.mxu0 %v604
    %2778 = vmatpush1.msra.mxu0 %v603
    %2779 = vmatprep.subr.mxu0 %v600
    %2780 = vmatpush1.msra.mxu0 %v599
    %2781 = vmatprep.subr.mxu0 %v596
    %2782 = vmatpush1.msra.mxu0 %v595
    %2783 = vmatprep.subr.mxu0 %v592
    %2784 = vmatpush1.msra.mxu0 %v591
    %2785 = vmatprep.subr.mxu0 %v588
    %2786 = vmatpush1.msra.mxu0 %v587
    %2787 = vmatprep.subr.mxu0 0.0
    %2788 = vmatpush2.msra.mxu0 0.0
    %2789 = vmatprep.subr.mxu0 0.0
    %2790 = vmatpush2.msra.mxu0 0.0
    %2791 = vmatprep.subr.mxu0 0.0
    %2792 = vmatpush2.msra.mxu0 0.0
    %2793 = vmatprep.subr.mxu0 0.0
    %2794 = vmatpush2.msra.mxu0 0.0
    %2795 = vmatprep.subr.mxu0 0.0
    %2796 = vmatpush2.msra.mxu0 0.0
    %2797 = vmatprep.subr.mxu0 0.0
    %2798 = vmatpush2.msra.mxu0 0.0
    %2799 = vmatprep.subr.mxu0 0.0
    %2800 = vmatpush2.msra.mxu0 0.0
    %2801 = vmatprep.subr.mxu0 0.0
    %2802 = vmatpush2.msra.mxu0 0.0
    %2803 = vmatprep.subr.mxu0 0.0
    %2804 = vmatpush2.msra.mxu0 0.0
    %2805 = vmatprep.subr.mxu0 0.0
    %2806 = vmatpush2.msra.mxu0 0.0
    %2807 = vmatprep.subr.mxu0 0.0
    %2808 = vmatpush2.msra.mxu0 0.0
    %2809 = vmatprep.subr.mxu0 0.0
    %2810 = vmatpush2.msra.mxu0 0.0
    %2811 = vmatprep.subr.mxu0 0.0
    %2812 = vmatpush2.msra.mxu0 0.0
    %2813 = vmatprep.subr.mxu0 0.0
    %2814 = vmatpush2.msra.mxu0 0.0
    %2815 = vmatprep.subr.mxu0 0.0
    %2816 = vmatpush2.msra.mxu0 0.0
    %2817 = vmatprep.subr.mxu0 0.0
    %2818 = vmatpush2.msra.mxu0 0.0
    %2819 = vmatprep.mubr.f32.mxu0 0.0
    %2820 = vmatmul.mubr.f32.gmra.mxu0 %v2378
    %v2821 = vpop.f32.mrf.mxu0
    %v2822 = vadd.f32 0.0, %v2821
    %v2823 = vpop.f32.mrf.mxu0
    %v2824 = vadd.f32 0.0, %v2823
    %2825 = vmatprep.mubr.f32.mxu0 0.0
    %2826 = vmatmul.mubr.f32.gmra.mxu0 %v2379
    %v2827 = vpop.f32.mrf.mxu0
    %v2828 = vadd.f32 0.0, %v2827
    %v2829 = vpop.f32.mrf.mxu0
    %v2830 = vadd.f32 0.0, %v2829
    %2831 = vdwg.mxu0
    %2832 = vmatprep.subr.mxu0 %v650
    %2833 = vmatpush1.msra.mxu0 %v649
    %2834 = vmatprep.subr.mxu0 %v646
    %2835 = vmatpush1.msra.mxu0 %v645
    %2836 = vmatprep.subr.mxu0 %v642
    %2837 = vmatpush1.msra.mxu0 %v641
    %2838 = vmatprep.subr.mxu0 %v638
    %2839 = vmatpush1.msra.mxu0 %v637
    %2840 = vmatprep.subr.mxu0 %v634
    %2841 = vmatpush1.msra.mxu0 %v633
    %2842 = vmatprep.subr.mxu0 %v630
    %2843 = vmatpush1.msra.mxu0 %v629
    %2844 = vmatprep.subr.mxu0 %v626
    %2845 = vmatpush1.msra.mxu0 %v625
    %2846 = vmatprep.subr.mxu0 %v622
    %2847 = vmatpush1.msra.mxu0 %v621
    %2848 = vmatprep.subr.mxu0 %v618
    %2849 = vmatpush1.msra.mxu0 %v617
    %2850 = vmatprep.subr.mxu0 %v614
    %2851 = vmatpush1.msra.mxu0 %v613
    %2852 = vmatprep.subr.mxu0 %v610
    %2853 = vmatpush1.msra.mxu0 %v609
    %2854 = vmatprep.subr.mxu0 %v606
    %2855 = vmatpush1.msra.mxu0 %v605
    %2856 = vmatprep.subr.mxu0 %v602
    %2857 = vmatpush1.msra.mxu0 %v601
    %2858 = vmatprep.subr.mxu0 %v598
    %2859 = vmatpush1.msra.mxu0 %v597
    %2860 = vmatprep.subr.mxu0 %v594
    %2861 = vmatpush1.msra.mxu0 %v593
    %2862 = vmatprep.subr.mxu0 %v590
    %2863 = vmatpush1.msra.mxu0 %v589
    %2864 = vmatprep.subr.mxu0 0.0
    %2865 = vmatpush2.msra.mxu0 0.0
    %2866 = vmatprep.subr.mxu0 0.0
    %2867 = vmatpush2.msra.mxu0 0.0
    %2868 = vmatprep.subr.mxu0 0.0
    %2869 = vmatpush2.msra.mxu0 0.0
    %2870 = vmatprep.subr.mxu0 0.0
    %2871 = vmatpush2.msra.mxu0 0.0
    %2872 = vmatprep.subr.mxu0 0.0
    %2873 = vmatpush2.msra.mxu0 0.0
    %2874 = vmatprep.subr.mxu0 0.0
    %2875 = vmatpush2.msra.mxu0 0.0
    %2876 = vmatprep.subr.mxu0 0.0
    %2877 = vmatpush2.msra.mxu0 0.0
    %2878 = vmatprep.subr.mxu0 0.0
    %2879 = vmatpush2.msra.mxu0 0.0
    %2880 = vmatprep.subr.mxu0 0.0
    %2881 = vmatpush2.msra.mxu0 0.0
    %2882 = vmatprep.subr.mxu0 0.0
    %2883 = vmatpush2.msra.mxu0 0.0
    %2884 = vmatprep.subr.mxu0 0.0
    %2885 = vmatpush2.msra.mxu0 0.0
    %2886 = vmatprep.subr.mxu0 0.0
    %2887 = vmatpush2.msra.mxu0 0.0
    %2888 = vmatprep.subr.mxu0 0.0
    %2889 = vmatpush2.msra.mxu0 0.0
    %2890 = vmatprep.subr.mxu0 0.0
    %2891 = vmatpush2.msra.mxu0 0.0
    %2892 = vmatprep.subr.mxu0 0.0
    %2893 = vmatpush2.msra.mxu0 0.0
    %2894 = vmatprep.subr.mxu0 0.0
    %2895 = vmatpush2.msra.mxu0 0.0
    %2896 = vmatprep.mubr.f32.mxu0 0.0
    %2897 = vmatmul.mubr.f32.gmra.mxu0 %v2378
    %v2898 = vpop.f32.mrf.mxu0
    %v2899 = vadd.f32 0.0, %v2898
    %v2900 = vpop.f32.mrf.mxu0
    %v2901 = vadd.f32 0.0, %v2900
    %2902 = vmatprep.mubr.f32.mxu0 0.0
    %2903 = vmatmul.mubr.f32.gmra.mxu0 %v2379
    %v2904 = vpop.f32.mrf.mxu0
    %v2905 = vadd.f32 0.0, %v2904
    %v2906 = vpop.f32.mrf.mxu0
    %v2907 = vadd.f32 0.0, %v2906
    %2908 = vdwg.mxu0
    %v2909 = vadd.f32 %v2747, %v2822
    %v2910 = vadd.f32 %v2748, %v2824
    %v2911 = vadd.f32 %v2749, %v2899
    %v2912 = vadd.f32 %v2750, %v2901
    %v2913 = vadd.f32 %v2751, %v2828
    %v2914 = vadd.f32 %v2752, %v2830
    %v2915 = vadd.f32 %v2753, %v2905
    %v2916 = vadd.f32 %v2754, %v2907
    %v2917 = vxor.u32 %v2909, 2147483648
    %v2918 = vxor.u32 %v2913, 2147483648
    %v2919 = vmul.f32 %v2917, 1.442695
    %v2920 = vpow.pop %v2919
    %v2921 = vmul.f32 %v2918, 1.442695
    %v2922 = vpow.pop %v2921
    %v2923 = vadd.f32 %v2920, 1.0
    %v2924 = vadd.f32 %v2922, 1.0
    %v2925 = vrcp.pop %v2923
    %v2926 = vmul.f32 1.0, %v2925
    %v2927 = vrcp.pop %v2924
    %v2928 = vmul.f32 1.0, %v2927
    %v2929 = vxor.u32 %v2910, 2147483648
    %v2930 = vxor.u32 %v2914, 2147483648
    %v2931 = vmul.f32 %v2929, 1.442695
    %v2932 = vpow.pop %v2931
    %v2933 = vmul.f32 %v2930, 1.442695
    %v2934 = vpow.pop %v2933
    %v2935 = vadd.f32 %v2932, 1.0
    %v2936 = vadd.f32 %v2934, 1.0
    %v2937 = vrcp.pop %v2935
    %v2938 = vmul.f32 1.0, %v2937
    %v2939 = vrcp.pop %v2936
    %v2940 = vmul.f32 1.0, %v2939
    %v2941 = vtanh.pop %v2911
    %v2942 = vtanh.pop %v2915
    %v2943 = vxor.u32 %v2912, 2147483648
    %v2944 = vxor.u32 %v2916, 2147483648
    %v2945 = vmul.f32 %v2943, 1.442695
    %v2946 = vpow.pop %v2945
    %v2947 = vmul.f32 %v2944, 1.442695
    %v2948 = vpow.pop %v2947
    %v2949 = vadd.f32 %v2946, 1.0
    %v2950 = vadd.f32 %v2948, 1.0
    %v2951 = vrcp.pop %v2949
    %v2952 = vmul.f32 1.0, %v2951
    %v2953 = vrcp.pop %v2950
    %v2954 = vmul.f32 1.0, %v2953
    %v2955 = vmul.f32 %v2938, %v2374
    %v2956 = vmul.f32 %v2940, %v2375
    %v2957 = vmul.f32 %v2926, %v2941
    %v2958 = vmul.f32 %v2928, %v2942
    %v2959 = vadd.f32 %v2955, %v2957
    %v2960 = vadd.f32 %v2956, %v2958
    %v2961 = vtanh.pop %v2959
    %v2962 = vtanh.pop %v2960
    %v2963 = vmul.f32 %v2952, %v2961
    %v2964 = vmul.f32 %v2954, %v2962
    %2965 = vmatprep.subr.mxu0 %v1207
    %2966 = vmatpush1.msra.mxu0 %v1206
    %2967 = vmatprep.subr.mxu0 %v1203
    %2968 = vmatpush1.msra.mxu0 %v1202
    %2969 = vmatprep.subr.mxu0 %v1199
    %2970 = vmatpush1.msra.mxu0 %v1198
    %2971 = vmatprep.subr.mxu0 %v1195
    %2972 = vmatpush1.msra.mxu0 %v1194
    %2973 = vmatprep.subr.mxu0 %v1191
    %2974 = vmatpush1.msra.mxu0 %v1190
    %2975 = vmatprep.subr.mxu0 %v1187
    %2976 = vmatpush1.msra.mxu0 %v1186
    %2977 = vmatprep.subr.mxu0 %v1183
    %2978 = vmatpush1.msra.mxu0 %v1182
    %2979 = vmatprep.subr.mxu0 %v1179
    %2980 = vmatpush1.msra.mxu0 %v1178
    %2981 = vmatprep.subr.mxu0 %v1175
    %2982 = vmatpush1.msra.mxu0 %v1174
    %2983 = vmatprep.subr.mxu0 %v1171
    %2984 = vmatpush1.msra.mxu0 %v1170
    %2985 = vmatprep.subr.mxu0 %v1167
    %2986 = vmatpush1.msra.mxu0 %v1166
    %2987 = vmatprep.subr.mxu0 %v1163
    %2988 = vmatpush1.msra.mxu0 %v1162
    %2989 = vmatprep.subr.mxu0 %v1159
    %2990 = vmatpush1.msra.mxu0 %v1158
    %2991 = vmatprep.subr.mxu0 %v1155
    %2992 = vmatpush1.msra.mxu0 %v1154
    %2993 = vmatprep.subr.mxu0 %v1151
    %2994 = vmatpush1.msra.mxu0 %v1150
    %2995 = vmatprep.subr.mxu0 %v1147
    %2996 = vmatpush1.msra.mxu0 %v1146
    %2997 = vmatprep.subr.mxu0 0.0
    %2998 = vmatpush2.msra.mxu0 0.0
    %2999 = vmatprep.subr.mxu0 0.0
    %3000 = vmatpush2.msra.mxu0 0.0
    %3001 = vmatprep.subr.mxu0 0.0
    %3002 = vmatpush2.msra.mxu0 0.0
    %3003 = vmatprep.subr.mxu0 0.0
    %3004 = vmatpush2.msra.mxu0 0.0
    %3005 = vmatprep.subr.mxu0 0.0
    %3006 = vmatpush2.msra.mxu0 0.0
    %3007 = vmatprep.subr.mxu0 0.0
    %3008 = vmatpush2.msra.mxu0 0.0
    %3009 = vmatprep.subr.mxu0 0.0
    %3010 = vmatpush2.msra.mxu0 0.0
    %3011 = vmatprep.subr.mxu0 0.0
    %3012 = vmatpush2.msra.mxu0 0.0
    %3013 = vmatprep.subr.mxu0 0.0
    %3014 = vmatpush2.msra.mxu0 0.0
    %3015 = vmatprep.subr.mxu0 0.0
    %3016 = vmatpush2.msra.mxu0 0.0
    %3017 = vmatprep.subr.mxu0 0.0
    %3018 = vmatpush2.msra.mxu0 0.0
    %3019 = vmatprep.subr.mxu0 0.0
    %3020 = vmatpush2.msra.mxu0 0.0
    %3021 = vmatprep.subr.mxu0 0.0
    %3022 = vmatpush2.msra.mxu0 0.0
    %3023 = vmatprep.subr.mxu0 0.0
    %3024 = vmatpush2.msra.mxu0 0.0
    %3025 = vmatprep.subr.mxu0 0.0
    %3026 = vmatpush2.msra.mxu0 0.0
    %3027 = vmatprep.subr.mxu0 0.0
    %3028 = vmatpush2.msra.mxu0 0.0
    %3029 = vmatprep.mubr.f32.mxu0 0.0
    %3030 = vmatmul.mubr.f32.gmra.mxu0 %v2742
    %v3031 = vpop.f32.mrf.mxu0
    %v3032 = vadd.f32 0.0, %v3031
    %v3033 = vpop.f32.mrf.mxu0
    %v3034 = vadd.f32 0.0, %v3033
    %3035 = vmatprep.mubr.f32.mxu0 0.0
    %3036 = vmatmul.mubr.f32.gmra.mxu0 %v2743
    %v3037 = vpop.f32.mrf.mxu0
    %v3038 = vadd.f32 0.0, %v3037
    %v3039 = vpop.f32.mrf.mxu0
    %v3040 = vadd.f32 0.0, %v3039
    %3041 = vdwg.mxu0
    %3042 = vmatprep.subr.mxu0 %v1209
    %3043 = vmatpush1.msra.mxu0 %v1208
    %3044 = vmatprep.subr.mxu0 %v1205
    %3045 = vmatpush1.msra.mxu0 %v1204
    %3046 = vmatprep.subr.mxu0 %v1201
    %3047 = vmatpush1.msra.mxu0 %v1200
    %3048 = vmatprep.subr.mxu0 %v1197
    %3049 = vmatpush1.msra.mxu0 %v1196
    %3050 = vmatprep.subr.mxu0 %v1193
    %3051 = vmatpush1.msra.mxu0 %v1192
    %3052 = vmatprep.subr.mxu0 %v1189
    %3053 = vmatpush1.msra.mxu0 %v1188
    %3054 = vmatprep.subr.mxu0 %v1185
    %3055 = vmatpush1.msra.mxu0 %v1184
    %3056 = vmatprep.subr.mxu0 %v1181
    %3057 = vmatpush1.msra.mxu0 %v1180
    %3058 = vmatprep.subr.mxu0 %v1177
    %3059 = vmatpush1.msra.mxu0 %v1176
    %3060 = vmatprep.subr.mxu0 %v1173
    %3061 = vmatpush1.msra.mxu0 %v1172
    %3062 = vmatprep.subr.mxu0 %v1169
    %3063 = vmatpush1.msra.mxu0 %v1168
    %3064 = vmatprep.subr.mxu0 %v1165
    %3065 = vmatpush1.msra.mxu0 %v1164
    %3066 = vmatprep.subr.mxu0 %v1161
    %3067 = vmatpush1.msra.mxu0 %v1160
    %3068 = vmatprep.subr.mxu0 %v1157
    %3069 = vmatpush1.msra.mxu0 %v1156
    %3070 = vmatprep.subr.mxu0 %v1153
    %3071 = vmatpush1.msra.mxu0 %v1152
    %3072 = vmatprep.subr.mxu0 %v1149
    %3073 = vmatpush1.msra.mxu0 %v1148
    %3074 = vmatprep.subr.mxu0 0.0
    %3075 = vmatpush2.msra.mxu0 0.0
    %3076 = vmatprep.subr.mxu0 0.0
    %3077 = vmatpush2.msra.mxu0 0.0
    %3078 = vmatprep.subr.mxu0 0.0
    %3079 = vmatpush2.msra.mxu0 0.0
    %3080 = vmatprep.subr.mxu0 0.0
    %3081 = vmatpush2.msra.mxu0 0.0
    %3082 = vmatprep.subr.mxu0 0.0
    %3083 = vmatpush2.msra.mxu0 0.0
    %3084 = vmatprep.subr.mxu0 0.0
    %3085 = vmatpush2.msra.mxu0 0.0
    %3086 = vmatprep.subr.mxu0 0.0
    %3087 = vmatpush2.msra.mxu0 0.0
    %3088 = vmatprep.subr.mxu0 0.0
    %3089 = vmatpush2.msra.mxu0 0.0
    %3090 = vmatprep.subr.mxu0 0.0
    %3091 = vmatpush2.msra.mxu0 0.0
    %3092 = vmatprep.subr.mxu0 0.0
    %3093 = vmatpush2.msra.mxu0 0.0
    %3094 = vmatprep.subr.mxu0 0.0
    %3095 = vmatpush2.msra.mxu0 0.0
    %3096 = vmatprep.subr.mxu0 0.0
    %3097 = vmatpush2.msra.mxu0 0.0
    %3098 = vmatprep.subr.mxu0 0.0
    %3099 = vmatpush2.msra.mxu0 0.0
    %3100 = vmatprep.subr.mxu0 0.0
    %3101 = vmatpush2.msra.mxu0 0.0
    %3102 = vmatprep.subr.mxu0 0.0
    %3103 = vmatpush2.msra.mxu0 0.0
    %3104 = vmatprep.subr.mxu0 0.0
    %3105 = vmatpush2.msra.mxu0 0.0
    %3106 = vmatprep.mubr.f32.mxu0 0.0
    %3107 = vmatmul.mubr.f32.gmra.mxu0 %v2742
    %v3108 = vpop.f32.mrf.mxu0
    %v3109 = vadd.f32 0.0, %v3108
    %v3110 = vpop.f32.mrf.mxu0
    %v3111 = vadd.f32 0.0, %v3110
    %3112 = vmatprep.mubr.f32.mxu0 0.0
    %3113 = vmatmul.mubr.f32.gmra.mxu0 %v2743
    %v3114 = vpop.f32.mrf.mxu0
    %v3115 = vadd.f32 0.0, %v3114
    %v3116 = vpop.f32.mrf.mxu0
    %v3117 = vadd.f32 0.0, %v3116
    %3118 = vdwg.mxu0
    %3119 = vmatprep.subr.mxu0 %v1143
    %3120 = vmatpush1.msra.mxu0 %v1142
    %3121 = vmatprep.subr.mxu0 %v1139
    %3122 = vmatpush1.msra.mxu0 %v1138
    %3123 = vmatprep.subr.mxu0 %v1135
    %3124 = vmatpush1.msra.mxu0 %v1134
    %3125 = vmatprep.subr.mxu0 %v1131
    %3126 = vmatpush1.msra.mxu0 %v1130
    %3127 = vmatprep.subr.mxu0 %v1127
    %3128 = vmatpush1.msra.mxu0 %v1126
    %3129 = vmatprep.subr.mxu0 %v1123
    %3130 = vmatpush1.msra.mxu0 %v1122
    %3131 = vmatprep.subr.mxu0 %v1119
    %3132 = vmatpush1.msra.mxu0 %v1118
    %3133 = vmatprep.subr.mxu0 %v1115
    %3134 = vmatpush1.msra.mxu0 %v1114
    %3135 = vmatprep.subr.mxu0 %v1111
    %3136 = vmatpush1.msra.mxu0 %v1110
    %3137 = vmatprep.subr.mxu0 %v1107
    %3138 = vmatpush1.msra.mxu0 %v1106
    %3139 = vmatprep.subr.mxu0 %v1103
    %3140 = vmatpush1.msra.mxu0 %v1102
    %3141 = vmatprep.subr.mxu0 %v1099
    %3142 = vmatpush1.msra.mxu0 %v1098
    %3143 = vmatprep.subr.mxu0 %v1095
    %3144 = vmatpush1.msra.mxu0 %v1094
    %3145 = vmatprep.subr.mxu0 %v1091
    %3146 = vmatpush1.msra.mxu0 %v1090
    %3147 = vmatprep.subr.mxu0 %v1087
    %3148 = vmatpush1.msra.mxu0 %v1086
    %3149 = vmatprep.subr.mxu0 %v1083
    %3150 = vmatpush1.msra.mxu0 %v1082
    %3151 = vmatprep.subr.mxu0 0.0
    %3152 = vmatpush2.msra.mxu0 0.0
    %3153 = vmatprep.subr.mxu0 0.0
    %3154 = vmatpush2.msra.mxu0 0.0
    %3155 = vmatprep.subr.mxu0 0.0
    %3156 = vmatpush2.msra.mxu0 0.0
    %3157 = vmatprep.subr.mxu0 0.0
    %3158 = vmatpush2.msra.mxu0 0.0
    %3159 = vmatprep.subr.mxu0 0.0
    %3160 = vmatpush2.msra.mxu0 0.0
    %3161 = vmatprep.subr.mxu0 0.0
    %3162 = vmatpush2.msra.mxu0 0.0
    %3163 = vmatprep.subr.mxu0 0.0
    %3164 = vmatpush2.msra.mxu0 0.0
    %3165 = vmatprep.subr.mxu0 0.0
    %3166 = vmatpush2.msra.mxu0 0.0
    %3167 = vmatprep.subr.mxu0 0.0
    %3168 = vmatpush2.msra.mxu0 0.0
    %3169 = vmatprep.subr.mxu0 0.0
    %3170 = vmatpush2.msra.mxu0 0.0
    %3171 = vmatprep.subr.mxu0 0.0
    %3172 = vmatpush2.msra.mxu0 0.0
    %3173 = vmatprep.subr.mxu0 0.0
    %3174 = vmatpush2.msra.mxu0 0.0
    %3175 = vmatprep.subr.mxu0 0.0
    %3176 = vmatpush2.msra.mxu0 0.0
    %3177 = vmatprep.subr.mxu0 0.0
    %3178 = vmatpush2.msra.mxu0 0.0
    %3179 = vmatprep.subr.mxu0 0.0
    %3180 = vmatpush2.msra.mxu0 0.0
    %3181 = vmatprep.subr.mxu0 0.0
    %3182 = vmatpush2.msra.mxu0 0.0
    %3183 = vmatprep.mubr.f32.mxu0 0.0
    %3184 = vmatmul.mubr.f32.gmra.mxu0 %v2378
    %v3185 = vpop.f32.mrf.mxu0
    %v3186 = vadd.f32 %v3032, %v3185
    %v3187 = vpop.f32.mrf.mxu0
    %v3188 = vadd.f32 %v3034, %v3187
    %3189 = vmatprep.mubr.f32.mxu0 0.0
    %3190 = vmatmul.mubr.f32.gmra.mxu0 %v2379
    %v3191 = vpop.f32.mrf.mxu0
    %v3192 = vadd.f32 %v3038, %v3191
    %v3193 = vpop.f32.mrf.mxu0
    %v3194 = vadd.f32 %v3040, %v3193
    %3195 = vdwg.mxu0
    %3196 = vmatprep.subr.mxu0 %v1145
    %3197 = vmatpush1.msra.mxu0 %v1144
    %3198 = vmatprep.subr.mxu0 %v1141
    %3199 = vmatpush1.msra.mxu0 %v1140
    %3200 = vmatprep.subr.mxu0 %v1137
    %3201 = vmatpush1.msra.mxu0 %v1136
    %3202 = vmatprep.subr.mxu0 %v1133
    %3203 = vmatpush1.msra.mxu0 %v1132
    %3204 = vmatprep.subr.mxu0 %v1129
    %3205 = vmatpush1.msra.mxu0 %v1128
    %3206 = vmatprep.subr.mxu0 %v1125
    %3207 = vmatpush1.msra.mxu0 %v1124
    %3208 = vmatprep.subr.mxu0 %v1121
    %3209 = vmatpush1.msra.mxu0 %v1120
    %3210 = vmatprep.subr.mxu0 %v1117
    %3211 = vmatpush1.msra.mxu0 %v1116
    %3212 = vmatprep.subr.mxu0 %v1113
    %3213 = vmatpush1.msra.mxu0 %v1112
    %3214 = vmatprep.subr.mxu0 %v1109
    %3215 = vmatpush1.msra.mxu0 %v1108
    %3216 = vmatprep.subr.mxu0 %v1105
    %3217 = vmatpush1.msra.mxu0 %v1104
    %3218 = vmatprep.subr.mxu0 %v1101
    %3219 = vmatpush1.msra.mxu0 %v1100
    %3220 = vmatprep.subr.mxu0 %v1097
    %3221 = vmatpush1.msra.mxu0 %v1096
    %3222 = vmatprep.subr.mxu0 %v1093
    %3223 = vmatpush1.msra.mxu0 %v1092
    %3224 = vmatprep.subr.mxu0 %v1089
    %3225 = vmatpush1.msra.mxu0 %v1088
    %3226 = vmatprep.subr.mxu0 %v1085
    %3227 = vmatpush1.msra.mxu0 %v1084
    %3228 = vmatprep.subr.mxu0 0.0
    %3229 = vmatpush2.msra.mxu0 0.0
    %3230 = vmatprep.subr.mxu0 0.0
    %3231 = vmatpush2.msra.mxu0 0.0
    %3232 = vmatprep.subr.mxu0 0.0
    %3233 = vmatpush2.msra.mxu0 0.0
    %3234 = vmatprep.subr.mxu0 0.0
    %3235 = vmatpush2.msra.mxu0 0.0
    %3236 = vmatprep.subr.mxu0 0.0
    %3237 = vmatpush2.msra.mxu0 0.0
    %3238 = vmatprep.subr.mxu0 0.0
    %3239 = vmatpush2.msra.mxu0 0.0
    %3240 = vmatprep.subr.mxu0 0.0
    %3241 = vmatpush2.msra.mxu0 0.0
    %3242 = vmatprep.subr.mxu0 0.0
    %3243 = vmatpush2.msra.mxu0 0.0
    %3244 = vmatprep.subr.mxu0 0.0
    %3245 = vmatpush2.msra.mxu0 0.0
    %3246 = vmatprep.subr.mxu0 0.0
    %3247 = vmatpush2.msra.mxu0 0.0
    %3248 = vmatprep.subr.mxu0 0.0
    %3249 = vmatpush2.msra.mxu0 0.0
    %3250 = vmatprep.subr.mxu0 0.0
    %3251 = vmatpush2.msra.mxu0 0.0
    %3252 = vmatprep.subr.mxu0 0.0
    %3253 = vmatpush2.msra.mxu0 0.0
    %3254 = vmatprep.subr.mxu0 0.0
    %3255 = vmatpush2.msra.mxu0 0.0
    %3256 = vmatprep.subr.mxu0 0.0
    %3257 = vmatpush2.msra.mxu0 0.0
    %3258 = vmatprep.subr.mxu0 0.0
    %3259 = vmatpush2.msra.mxu0 0.0
    %3260 = vmatprep.mubr.f32.mxu0 0.0
    %3261 = vmatmul.mubr.f32.gmra.mxu0 %v2378
    %v3262 = vpop.f32.mrf.mxu0
    %v3263 = vadd.f32 %v3109, %v3262
    %v3264 = vpop.f32.mrf.mxu0
    %v3265 = vadd.f32 %v3111, %v3264
    %3266 = vmatprep.mubr.f32.mxu0 0.0
    %3267 = vmatmul.mubr.f32.gmra.mxu0 %v2379
    %v3268 = vpop.f32.mrf.mxu0
    %v3269 = vadd.f32 %v3115, %v3268
    %v3270 = vpop.f32.mrf.mxu0
    %v3271 = vadd.f32 %v3117, %v3270
    %3272 = vdwg.mxu0
    %v3273 = vadd.f32 %v3186, %v559
    %v3274 = vadd.f32 %v3188, %v563
    %v3275 = vadd.f32 %v3263, %v567
    %v3276 = vadd.f32 %v3265, %v571
    %v3277 = vadd.f32 %v3192, %v559
    %v3278 = vadd.f32 %v3194, %v563
    %v3279 = vadd.f32 %v3269, %v567
    %v3280 = vadd.f32 %v3271, %v571
    %v3281 = vxor.u32 %v3273, 2147483648
    %v3282 = vxor.u32 %v3277, 2147483648
    %v3283 = vmul.f32 %v3281, 1.442695
    %v3284 = vpow.pop %v3283
    %v3285 = vmul.f32 %v3282, 1.442695
    %v3286 = vpow.pop %v3285
    %v3287 = vadd.f32 %v3284, 1.0
    %v3288 = vadd.f32 %v3286, 1.0
    %v3289 = vrcp.pop %v3287
    %v3290 = vmul.f32 1.0, %v3289
    %v3291 = vrcp.pop %v3288
    %v3292 = vmul.f32 1.0, %v3291
    %v3293 = vxor.u32 %v3274, 2147483648
    %v3294 = vxor.u32 %v3278, 2147483648
    %v3295 = vmul.f32 %v3293, 1.442695
    %v3296 = vpow.pop %v3295
    %v3297 = vmul.f32 %v3294, 1.442695
    %v3298 = vpow.pop %v3297
    %v3299 = vadd.f32 %v3296, 1.0
    %v3300 = vadd.f32 %v3298, 1.0
    %v3301 = vrcp.pop %v3299
    %v3302 = vmul.f32 1.0, %v3301
    %v3303 = vrcp.pop %v3300
    %v3304 = vmul.f32 1.0, %v3303
    %v3305 = vtanh.pop %v3275
    %v3306 = vtanh.pop %v3279
    %v3307 = vxor.u32 %v3276, 2147483648
    %v3308 = vxor.u32 %v3280, 2147483648
    %v3309 = vmul.f32 %v3307, 1.442695
    %v3310 = vpow.pop %v3309
    %v3311 = vmul.f32 %v3308, 1.442695
    %v3312 = vpow.pop %v3311
    %v3313 = vadd.f32 %v3310, 1.0
    %v3314 = vadd.f32 %v3312, 1.0
    %v3315 = vrcp.pop %v3313
    %v3316 = vmul.f32 1.0, %v3315
    %v3317 = vrcp.pop %v3314
    %v3318 = vmul.f32 1.0, %v3317
    %v3319 = vmul.f32 %v3302, %v2738
    %v3320 = vmul.f32 %v3304, %v2739
    %v3321 = vmul.f32 %v3290, %v3305
    %v3322 = vmul.f32 %v3292, %v3306
    %v3323 = vadd.f32 %v3319, %v3321
    %v3324 = vadd.f32 %v3320, %v3322
    %v3325 = vtanh.pop %v3323
    %v3326 = vtanh.pop %v3324
    %v3327 = vmul.f32 %v3316, %v3325
    %v3328 = vmul.f32 %v3318, %v3326
    %s3329 = smul.u32 10, 4
    %s3330 = smul.addr %s3329, 8
    %s3331 = scalar_lea.vmem [#allocation2], %s3330
    %v3332 = vld [vmem:[%s3331] sm:$0xff]
    %v3333 = vld [vmem:[%s3331 + $0x8] sm:$0xff]
    %v3334 = vld [vmem:[%s3331 + $0x10] sm:$0xff]
    %v3335 = vld [vmem:[%s3331 + $0x18] sm:$0xff]
    %v3336 = vld [vmem:[%s3331 + $0x20] sm:$0xff]
    %v3337 = vld [vmem:[%s3331 + $0x28] sm:$0xff]
    %v3338 = vld [vmem:[%s3331 + $0x30] sm:$0xff]
    %v3339 = vld [vmem:[%s3331 + $0x38] sm:$0xff]
    %3340 = vmatprep.subr.mxu0 %v648
    %3341 = vmatpush1.msra.mxu0 %v647
    %3342 = vmatprep.subr.mxu0 %v644
    %3343 = vmatpush1.msra.mxu0 %v643
    %3344 = vmatprep.subr.mxu0 %v640
    %3345 = vmatpush1.msra.mxu0 %v639
    %3346 = vmatprep.subr.mxu0 %v636
    %3347 = vmatpush1.msra.mxu0 %v635
    %3348 = vmatprep.subr.mxu0 %v632
    %3349 = vmatpush1.msra.mxu0 %v631
    %3350 = vmatprep.subr.mxu0 %v628
    %3351 = vmatpush1.msra.mxu0 %v627
    %3352 = vmatprep.subr.mxu0 %v624
    %3353 = vmatpush1.msra.mxu0 %v623
    %3354 = vmatprep.subr.mxu0 %v620
    %3355 = vmatpush1.msra.mxu0 %v619
    %3356 = vmatprep.subr.mxu0 %v616
    %3357 = vmatpush1.msra.mxu0 %v615
    %3358 = vmatprep.subr.mxu0 %v612
    %3359 = vmatpush1.msra.mxu0 %v611
    %3360 = vmatprep.subr.mxu0 %v608
    %3361 = vmatpush1.msra.mxu0 %v607
    %3362 = vmatprep.subr.mxu0 %v604
    %3363 = vmatpush1.msra.mxu0 %v603
    %3364 = vmatprep.subr.mxu0 %v600
    %3365 = vmatpush1.msra.mxu0 %v599
    %3366 = vmatprep.subr.mxu0 %v596
    %3367 = vmatpush1.msra.mxu0 %v595
    %3368 = vmatprep.subr.mxu0 %v592
    %3369 = vmatpush1.msra.mxu0 %v591
    %3370 = vmatprep.subr.mxu0 %v588
    %3371 = vmatpush1.msra.mxu0 %v587
    %3372 = vmatprep.subr.mxu0 0.0
    %3373 = vmatpush2.msra.mxu0 0.0
    %3374 = vmatprep.subr.mxu0 0.0
    %3375 = vmatpush2.msra.mxu0 0.0
    %3376 = vmatprep.subr.mxu0 0.0
    %3377 = vmatpush2.msra.mxu0 0.0
    %3378 = vmatprep.subr.mxu0 0.0
    %3379 = vmatpush2.msra.mxu0 0.0
    %3380 = vmatprep.subr.mxu0 0.0
    %3381 = vmatpush2.msra.mxu0 0.0
    %3382 = vmatprep.subr.mxu0 0.0
    %3383 = vmatpush2.msra.mxu0 0.0
    %3384 = vmatprep.subr.mxu0 0.0
    %3385 = vmatpush2.msra.mxu0 0.0
    %3386 = vmatprep.subr.mxu0 0.0
    %3387 = vmatpush2.msra.mxu0 0.0
    %3388 = vmatprep.subr.mxu0 0.0
    %3389 = vmatpush2.msra.mxu0 0.0
    %3390 = vmatprep.subr.mxu0 0.0
    %3391 = vmatpush2.msra.mxu0 0.0
    %3392 = vmatprep.subr.mxu0 0.0
    %3393 = vmatpush2.msra.mxu0 0.0
    %3394 = vmatprep.subr.mxu0 0.0
    %3395 = vmatpush2.msra.mxu0 0.0
    %3396 = vmatprep.subr.mxu0 0.0
    %3397 = vmatpush2.msra.mxu0 0.0
    %3398 = vmatprep.subr.mxu0 0.0
    %3399 = vmatpush2.msra.mxu0 0.0
    %3400 = vmatprep.subr.mxu0 0.0
    %3401 = vmatpush2.msra.mxu0 0.0
    %3402 = vmatprep.subr.mxu0 0.0
    %3403 = vmatpush2.msra.mxu0 0.0
    %3404 = vmatprep.mubr.f32.mxu0 0.0
    %3405 = vmatmul.mubr.f32.gmra.mxu0 %v2963
    %v3406 = vpop.f32.mrf.mxu0
    %v3407 = vadd.f32 0.0, %v3406
    %v3408 = vpop.f32.mrf.mxu0
    %v3409 = vadd.f32 0.0, %v3408
    %3410 = vmatprep.mubr.f32.mxu0 0.0
    %3411 = vmatmul.mubr.f32.gmra.mxu0 %v2964
    %v3412 = vpop.f32.mrf.mxu0
    %v3413 = vadd.f32 0.0, %v3412
    %v3414 = vpop.f32.mrf.mxu0
    %v3415 = vadd.f32 0.0, %v3414
    %3416 = vdwg.mxu0
    %3417 = vmatprep.subr.mxu0 %v650
    %3418 = vmatpush1.msra.mxu0 %v649
    %3419 = vmatprep.subr.mxu0 %v646
    %3420 = vmatpush1.msra.mxu0 %v645
    %3421 = vmatprep.subr.mxu0 %v642
    %3422 = vmatpush1.msra.mxu0 %v641
    %3423 = vmatprep.subr.mxu0 %v638
    %3424 = vmatpush1.msra.mxu0 %v637
    %3425 = vmatprep.subr.mxu0 %v634
    %3426 = vmatpush1.msra.mxu0 %v633
    %3427 = vmatprep.subr.mxu0 %v630
    %3428 = vmatpush1.msra.mxu0 %v629
    %3429 = vmatprep.subr.mxu0 %v626
    %3430 = vmatpush1.msra.mxu0 %v625
    %3431 = vmatprep.subr.mxu0 %v622
    %3432 = vmatpush1.msra.mxu0 %v621
    %3433 = vmatprep.subr.mxu0 %v618
    %3434 = vmatpush1.msra.mxu0 %v617
    %3435 = vmatprep.subr.mxu0 %v614
    %3436 = vmatpush1.msra.mxu0 %v613
    %3437 = vmatprep.subr.mxu0 %v610
    %3438 = vmatpush1.msra.mxu0 %v609
    %3439 = vmatprep.subr.mxu0 %v606
    %3440 = vmatpush1.msra.mxu0 %v605
    %3441 = vmatprep.subr.mxu0 %v602
    %3442 = vmatpush1.msra.mxu0 %v601
    %3443 = vmatprep.subr.mxu0 %v598
    %3444 = vmatpush1.msra.mxu0 %v597
    %3445 = vmatprep.subr.mxu0 %v594
    %3446 = vmatpush1.msra.mxu0 %v593
    %3447 = vmatprep.subr.mxu0 %v590
    %3448 = vmatpush1.msra.mxu0 %v589
    %3449 = vmatprep.subr.mxu0 0.0
    %3450 = vmatpush2.msra.mxu0 0.0
    %3451 = vmatprep.subr.mxu0 0.0
    %3452 = vmatpush2.msra.mxu0 0.0
    %3453 = vmatprep.subr.mxu0 0.0
    %3454 = vmatpush2.msra.mxu0 0.0
    %3455 = vmatprep.subr.mxu0 0.0
    %3456 = vmatpush2.msra.mxu0 0.0
    %3457 = vmatprep.subr.mxu0 0.0
    %3458 = vmatpush2.msra.mxu0 0.0
    %3459 = vmatprep.subr.mxu0 0.0
    %3460 = vmatpush2.msra.mxu0 0.0
    %3461 = vmatprep.subr.mxu0 0.0
    %3462 = vmatpush2.msra.mxu0 0.0
    %3463 = vmatprep.subr.mxu0 0.0
    %3464 = vmatpush2.msra.mxu0 0.0
    %3465 = vmatprep.subr.mxu0 0.0
    %3466 = vmatpush2.msra.mxu0 0.0
    %3467 = vmatprep.subr.mxu0 0.0
    %3468 = vmatpush2.msra.mxu0 0.0
    %3469 = vmatprep.subr.mxu0 0.0
    %3470 = vmatpush2.msra.mxu0 0.0
    %3471 = vmatprep.subr.mxu0 0.0
    %3472 = vmatpush2.msra.mxu0 0.0
    %3473 = vmatprep.subr.mxu0 0.0
    %3474 = vmatpush2.msra.mxu0 0.0
    %3475 = vmatprep.subr.mxu0 0.0
    %3476 = vmatpush2.msra.mxu0 0.0
    %3477 = vmatprep.subr.mxu0 0.0
    %3478 = vmatpush2.msra.mxu0 0.0
    %3479 = vmatprep.subr.mxu0 0.0
    %3480 = vmatpush2.msra.mxu0 0.0
    %3481 = vmatprep.mubr.f32.mxu0 0.0
    %3482 = vmatmul.mubr.f32.gmra.mxu0 %v2963
    %v3483 = vpop.f32.mrf.mxu0
    %v3484 = vadd.f32 0.0, %v3483
    %v3485 = vpop.f32.mrf.mxu0
    %v3486 = vadd.f32 0.0, %v3485
    %3487 = vmatprep.mubr.f32.mxu0 0.0
    %3488 = vmatmul.mubr.f32.gmra.mxu0 %v2964
    %v3489 = vpop.f32.mrf.mxu0
    %v3490 = vadd.f32 0.0, %v3489
    %v3491 = vpop.f32.mrf.mxu0
    %v3492 = vadd.f32 0.0, %v3491
    %3493 = vdwg.mxu0
    %v3494 = vadd.f32 %v3332, %v3407
    %v3495 = vadd.f32 %v3333, %v3409
    %v3496 = vadd.f32 %v3334, %v3484
    %v3497 = vadd.f32 %v3335, %v3486
    %v3498 = vadd.f32 %v3336, %v3413
    %v3499 = vadd.f32 %v3337, %v3415
    %v3500 = vadd.f32 %v3338, %v3490
    %v3501 = vadd.f32 %v3339, %v3492
    %v3502 = vxor.u32 %v3494, 2147483648
    %v3503 = vxor.u32 %v3498, 2147483648
    %v3504 = vmul.f32 %v3502, 1.442695
    %v3505 = vpow.pop %v3504
    %v3506 = vmul.f32 %v3503, 1.442695
    %v3507 = vpow.pop %v3506
    %v3508 = vadd.f32 %v3505, 1.0
    %v3509 = vadd.f32 %v3507, 1.0
    %v3510 = vrcp.pop %v3508
    %v3511 = vmul.f32 1.0, %v3510
    %v3512 = vrcp.pop %v3509
    %v3513 = vmul.f32 1.0, %v3512
    %v3514 = vxor.u32 %v3495, 2147483648
    %v3515 = vxor.u32 %v3499, 2147483648
    %v3516 = vmul.f32 %v3514, 1.442695
    %v3517 = vpow.pop %v3516
    %v3518 = vmul.f32 %v3515, 1.442695
    %v3519 = vpow.pop %v3518
    %v3520 = vadd.f32 %v3517, 1.0
    %v3521 = vadd.f32 %v3519, 1.0
    %v3522 = vrcp.pop %v3520
    %v3523 = vmul.f32 1.0, %v3522
    %v3524 = vrcp.pop %v3521
    %v3525 = vmul.f32 1.0, %v3524
    %v3526 = vtanh.pop %v3496
    %v3527 = vtanh.pop %v3500
    %v3528 = vxor.u32 %v3497, 2147483648
    %v3529 = vxor.u32 %v3501, 2147483648
    %v3530 = vmul.f32 %v3528, 1.442695
    %v3531 = vpow.pop %v3530
    %v3532 = vmul.f32 %v3529, 1.442695
    %v3533 = vpow.pop %v3532
    %v3534 = vadd.f32 %v3531, 1.0
    %v3535 = vadd.f32 %v3533, 1.0
    %v3536 = vrcp.pop %v3534
    %v3537 = vmul.f32 1.0, %v3536
    %v3538 = vrcp.pop %v3535
    %v3539 = vmul.f32 1.0, %v3538
    %v3540 = vmul.f32 %v3523, %v2959
    %v3541 = vmul.f32 %v3525, %v2960
    %v3542 = vmul.f32 %v3511, %v3526
    %v3543 = vmul.f32 %v3513, %v3527
    %v3544 = vadd.f32 %v3540, %v3542
    %v3545 = vadd.f32 %v3541, %v3543
    %v3546 = vtanh.pop %v3544
    %v3547 = vtanh.pop %v3545
    %v3548 = vmul.f32 %v3537, %v3546
    %v3549 = vmul.f32 %v3539, %v3547
    %3550 = vmatprep.subr.mxu0 %v1207
    %3551 = vmatpush1.msra.mxu0 %v1206
    %3552 = vmatprep.subr.mxu0 %v1203
    %3553 = vmatpush1.msra.mxu0 %v1202
    %3554 = vmatprep.subr.mxu0 %v1199
    %3555 = vmatpush1.msra.mxu0 %v1198
    %3556 = vmatprep.subr.mxu0 %v1195
    %3557 = vmatpush1.msra.mxu0 %v1194
    %3558 = vmatprep.subr.mxu0 %v1191
    %3559 = vmatpush1.msra.mxu0 %v1190
    %3560 = vmatprep.subr.mxu0 %v1187
    %3561 = vmatpush1.msra.mxu0 %v1186
    %3562 = vmatprep.subr.mxu0 %v1183
    %3563 = vmatpush1.msra.mxu0 %v1182
    %3564 = vmatprep.subr.mxu0 %v1179
    %3565 = vmatpush1.msra.mxu0 %v1178
    %3566 = vmatprep.subr.mxu0 %v1175
    %3567 = vmatpush1.msra.mxu0 %v1174
    %3568 = vmatprep.subr.mxu0 %v1171
    %3569 = vmatpush1.msra.mxu0 %v1170
    %3570 = vmatprep.subr.mxu0 %v1167
    %3571 = vmatpush1.msra.mxu0 %v1166
    %3572 = vmatprep.subr.mxu0 %v1163
    %3573 = vmatpush1.msra.mxu0 %v1162
    %3574 = vmatprep.subr.mxu0 %v1159
    %3575 = vmatpush1.msra.mxu0 %v1158
    %3576 = vmatprep.subr.mxu0 %v1155
    %3577 = vmatpush1.msra.mxu0 %v1154
    %3578 = vmatprep.subr.mxu0 %v1151
    %3579 = vmatpush1.msra.mxu0 %v1150
    %3580 = vmatprep.subr.mxu0 %v1147
    %3581 = vmatpush1.msra.mxu0 %v1146
    %3582 = vmatprep.subr.mxu0 0.0
    %3583 = vmatpush2.msra.mxu0 0.0
    %3584 = vmatprep.subr.mxu0 0.0
    %3585 = vmatpush2.msra.mxu0 0.0
    %3586 = vmatprep.subr.mxu0 0.0
    %3587 = vmatpush2.msra.mxu0 0.0
    %3588 = vmatprep.subr.mxu0 0.0
    %3589 = vmatpush2.msra.mxu0 0.0
    %3590 = vmatprep.subr.mxu0 0.0
    %3591 = vmatpush2.msra.mxu0 0.0
    %3592 = vmatprep.subr.mxu0 0.0
    %3593 = vmatpush2.msra.mxu0 0.0
    %3594 = vmatprep.subr.mxu0 0.0
    %3595 = vmatpush2.msra.mxu0 0.0
    %3596 = vmatprep.subr.mxu0 0.0
    %3597 = vmatpush2.msra.mxu0 0.0
    %3598 = vmatprep.subr.mxu0 0.0
    %3599 = vmatpush2.msra.mxu0 0.0
    %3600 = vmatprep.subr.mxu0 0.0
    %3601 = vmatpush2.msra.mxu0 0.0
    %3602 = vmatprep.subr.mxu0 0.0
    %3603 = vmatpush2.msra.mxu0 0.0
    %3604 = vmatprep.subr.mxu0 0.0
    %3605 = vmatpush2.msra.mxu0 0.0
    %3606 = vmatprep.subr.mxu0 0.0
    %3607 = vmatpush2.msra.mxu0 0.0
    %3608 = vmatprep.subr.mxu0 0.0
    %3609 = vmatpush2.msra.mxu0 0.0
    %3610 = vmatprep.subr.mxu0 0.0
    %3611 = vmatpush2.msra.mxu0 0.0
    %3612 = vmatprep.subr.mxu0 0.0
    %3613 = vmatpush2.msra.mxu0 0.0
    %3614 = vmatprep.mubr.f32.mxu0 0.0
    %3615 = vmatmul.mubr.f32.gmra.mxu0 %v3327
    %v3616 = vpop.f32.mrf.mxu0
    %v3617 = vadd.f32 0.0, %v3616
    %v3618 = vpop.f32.mrf.mxu0
    %v3619 = vadd.f32 0.0, %v3618
    %3620 = vmatprep.mubr.f32.mxu0 0.0
    %3621 = vmatmul.mubr.f32.gmra.mxu0 %v3328
    %v3622 = vpop.f32.mrf.mxu0
    %v3623 = vadd.f32 0.0, %v3622
    %v3624 = vpop.f32.mrf.mxu0
    %v3625 = vadd.f32 0.0, %v3624
    %3626 = vdwg.mxu0
    %3627 = vmatprep.subr.mxu0 %v1209
    %3628 = vmatpush1.msra.mxu0 %v1208
    %3629 = vmatprep.subr.mxu0 %v1205
    %3630 = vmatpush1.msra.mxu0 %v1204
    %3631 = vmatprep.subr.mxu0 %v1201
    %3632 = vmatpush1.msra.mxu0 %v1200
    %3633 = vmatprep.subr.mxu0 %v1197
    %3634 = vmatpush1.msra.mxu0 %v1196
    %3635 = vmatprep.subr.mxu0 %v1193
    %3636 = vmatpush1.msra.mxu0 %v1192
    %3637 = vmatprep.subr.mxu0 %v1189
    %3638 = vmatpush1.msra.mxu0 %v1188
    %3639 = vmatprep.subr.mxu0 %v1185
    %3640 = vmatpush1.msra.mxu0 %v1184
    %3641 = vmatprep.subr.mxu0 %v1181
    %3642 = vmatpush1.msra.mxu0 %v1180
    %3643 = vmatprep.subr.mxu0 %v1177
    %3644 = vmatpush1.msra.mxu0 %v1176
    %3645 = vmatprep.subr.mxu0 %v1173
    %3646 = vmatpush1.msra.mxu0 %v1172
    %3647 = vmatprep.subr.mxu0 %v1169
    %3648 = vmatpush1.msra.mxu0 %v1168
    %3649 = vmatprep.subr.mxu0 %v1165
    %3650 = vmatpush1.msra.mxu0 %v1164
    %3651 = vmatprep.subr.mxu0 %v1161
    %3652 = vmatpush1.msra.mxu0 %v1160
    %3653 = vmatprep.subr.mxu0 %v1157
    %3654 = vmatpush1.msra.mxu0 %v1156
    %3655 = vmatprep.subr.mxu0 %v1153
    %3656 = vmatpush1.msra.mxu0 %v1152
    %3657 = vmatprep.subr.mxu0 %v1149
    %3658 = vmatpush1.msra.mxu0 %v1148
    %3659 = vmatprep.subr.mxu0 0.0
    %3660 = vmatpush2.msra.mxu0 0.0
    %3661 = vmatprep.subr.mxu0 0.0
    %3662 = vmatpush2.msra.mxu0 0.0
    %3663 = vmatprep.subr.mxu0 0.0
    %3664 = vmatpush2.msra.mxu0 0.0
    %3665 = vmatprep.subr.mxu0 0.0
    %3666 = vmatpush2.msra.mxu0 0.0
    %3667 = vmatprep.subr.mxu0 0.0
    %3668 = vmatpush2.msra.mxu0 0.0
    %3669 = vmatprep.subr.mxu0 0.0
    %3670 = vmatpush2.msra.mxu0 0.0
    %3671 = vmatprep.subr.mxu0 0.0
    %3672 = vmatpush2.msra.mxu0 0.0
    %3673 = vmatprep.subr.mxu0 0.0
    %3674 = vmatpush2.msra.mxu0 0.0
    %3675 = vmatprep.subr.mxu0 0.0
    %3676 = vmatpush2.msra.mxu0 0.0
    %3677 = vmatprep.subr.mxu0 0.0
    %3678 = vmatpush2.msra.mxu0 0.0
    %3679 = vmatprep.subr.mxu0 0.0
    %3680 = vmatpush2.msra.mxu0 0.0
    %3681 = vmatprep.subr.mxu0 0.0
    %3682 = vmatpush2.msra.mxu0 0.0
    %3683 = vmatprep.subr.mxu0 0.0
    %3684 = vmatpush2.msra.mxu0 0.0
    %3685 = vmatprep.subr.mxu0 0.0
    %3686 = vmatpush2.msra.mxu0 0.0
    %3687 = vmatprep.subr.mxu0 0.0
    %3688 = vmatpush2.msra.mxu0 0.0
    %3689 = vmatprep.subr.mxu0 0.0
    %3690 = vmatpush2.msra.mxu0 0.0
    %3691 = vmatprep.mubr.f32.mxu0 0.0
    %3692 = vmatmul.mubr.f32.gmra.mxu0 %v3327
    %v3693 = vpop.f32.mrf.mxu0
    %v3694 = vadd.f32 0.0, %v3693
    %v3695 = vpop.f32.mrf.mxu0
    %v3696 = vadd.f32 0.0, %v3695
    %3697 = vmatprep.mubr.f32.mxu0 0.0
    %3698 = vmatmul.mubr.f32.gmra.mxu0 %v3328
    %v3699 = vpop.f32.mrf.mxu0
    %v3700 = vadd.f32 0.0, %v3699
    %v3701 = vpop.f32.mrf.mxu0
    %v3702 = vadd.f32 0.0, %v3701
    %3703 = vdwg.mxu0
    %3704 = vmatprep.subr.mxu0 %v1143
    %3705 = vmatpush1.msra.mxu0 %v1142
    %3706 = vmatprep.subr.mxu0 %v1139
    %3707 = vmatpush1.msra.mxu0 %v1138
    %3708 = vmatprep.subr.mxu0 %v1135
    %3709 = vmatpush1.msra.mxu0 %v1134
    %3710 = vmatprep.subr.mxu0 %v1131
    %3711 = vmatpush1.msra.mxu0 %v1130
    %3712 = vmatprep.subr.mxu0 %v1127
    %3713 = vmatpush1.msra.mxu0 %v1126
    %3714 = vmatprep.subr.mxu0 %v1123
    %3715 = vmatpush1.msra.mxu0 %v1122
    %3716 = vmatprep.subr.mxu0 %v1119
    %3717 = vmatpush1.msra.mxu0 %v1118
    %3718 = vmatprep.subr.mxu0 %v1115
    %3719 = vmatpush1.msra.mxu0 %v1114
    %3720 = vmatprep.subr.mxu0 %v1111
    %3721 = vmatpush1.msra.mxu0 %v1110
    %3722 = vmatprep.subr.mxu0 %v1107
    %3723 = vmatpush1.msra.mxu0 %v1106
    %3724 = vmatprep.subr.mxu0 %v1103
    %3725 = vmatpush1.msra.mxu0 %v1102
    %3726 = vmatprep.subr.mxu0 %v1099
    %3727 = vmatpush1.msra.mxu0 %v1098
    %3728 = vmatprep.subr.mxu0 %v1095
    %3729 = vmatpush1.msra.mxu0 %v1094
    %3730 = vmatprep.subr.mxu0 %v1091
    %3731 = vmatpush1.msra.mxu0 %v1090
    %3732 = vmatprep.subr.mxu0 %v1087
    %3733 = vmatpush1.msra.mxu0 %v1086
    %3734 = vmatprep.subr.mxu0 %v1083
    %3735 = vmatpush1.msra.mxu0 %v1082
    %3736 = vmatprep.subr.mxu0 0.0
    %3737 = vmatpush2.msra.mxu0 0.0
    %3738 = vmatprep.subr.mxu0 0.0
    %3739 = vmatpush2.msra.mxu0 0.0
    %3740 = vmatprep.subr.mxu0 0.0
    %3741 = vmatpush2.msra.mxu0 0.0
    %3742 = vmatprep.subr.mxu0 0.0
    %3743 = vmatpush2.msra.mxu0 0.0
    %3744 = vmatprep.subr.mxu0 0.0
    %3745 = vmatpush2.msra.mxu0 0.0
    %3746 = vmatprep.subr.mxu0 0.0
    %3747 = vmatpush2.msra.mxu0 0.0
    %3748 = vmatprep.subr.mxu0 0.0
    %3749 = vmatpush2.msra.mxu0 0.0
    %3750 = vmatprep.subr.mxu0 0.0
    %3751 = vmatpush2.msra.mxu0 0.0
    %3752 = vmatprep.subr.mxu0 0.0
    %3753 = vmatpush2.msra.mxu0 0.0
    %3754 = vmatprep.subr.mxu0 0.0
    %3755 = vmatpush2.msra.mxu0 0.0
    %3756 = vmatprep.subr.mxu0 0.0
    %3757 = vmatpush2.msra.mxu0 0.0
    %3758 = vmatprep.subr.mxu0 0.0
    %3759 = vmatpush2.msra.mxu0 0.0
    %3760 = vmatprep.subr.mxu0 0.0
    %3761 = vmatpush2.msra.mxu0 0.0
    %3762 = vmatprep.subr.mxu0 0.0
    %3763 = vmatpush2.msra.mxu0 0.0
    %3764 = vmatprep.subr.mxu0 0.0
    %3765 = vmatpush2.msra.mxu0 0.0
    %3766 = vmatprep.subr.mxu0 0.0
    %3767 = vmatpush2.msra.mxu0 0.0
    %3768 = vmatprep.mubr.f32.mxu0 0.0
    %3769 = vmatmul.mubr.f32.gmra.mxu0 %v2963
    %v3770 = vpop.f32.mrf.mxu0
    %v3771 = vadd.f32 %v3617, %v3770
    %v3772 = vpop.f32.mrf.mxu0
    %v3773 = vadd.f32 %v3619, %v3772
    %3774 = vmatprep.mubr.f32.mxu0 0.0
    %3775 = vmatmul.mubr.f32.gmra.mxu0 %v2964
    %v3776 = vpop.f32.mrf.mxu0
    %v3777 = vadd.f32 %v3623, %v3776
    %v3778 = vpop.f32.mrf.mxu0
    %v3779 = vadd.f32 %v3625, %v3778
    %3780 = vdwg.mxu0
    %3781 = vmatprep.subr.mxu0 %v1145
    %3782 = vmatpush1.msra.mxu0 %v1144
    %3783 = vmatprep.subr.mxu0 %v1141
    %3784 = vmatpush1.msra.mxu0 %v1140
    %3785 = vmatprep.subr.mxu0 %v1137
    %3786 = vmatpush1.msra.mxu0 %v1136
    %3787 = vmatprep.subr.mxu0 %v1133
    %3788 = vmatpush1.msra.mxu0 %v1132
    %3789 = vmatprep.subr.mxu0 %v1129
    %3790 = vmatpush1.msra.mxu0 %v1128
    %3791 = vmatprep.subr.mxu0 %v1125
    %3792 = vmatpush1.msra.mxu0 %v1124
    %3793 = vmatprep.subr.mxu0 %v1121
    %3794 = vmatpush1.msra.mxu0 %v1120
    %3795 = vmatprep.subr.mxu0 %v1117
    %3796 = vmatpush1.msra.mxu0 %v1116
    %3797 = vmatprep.subr.mxu0 %v1113
    %3798 = vmatpush1.msra.mxu0 %v1112
    %3799 = vmatprep.subr.mxu0 %v1109
    %3800 = vmatpush1.msra.mxu0 %v1108
    %3801 = vmatprep.subr.mxu0 %v1105
    %3802 = vmatpush1.msra.mxu0 %v1104
    %3803 = vmatprep.subr.mxu0 %v1101
    %3804 = vmatpush1.msra.mxu0 %v1100
    %3805 = vmatprep.subr.mxu0 %v1097
    %3806 = vmatpush1.msra.mxu0 %v1096
    %3807 = vmatprep.subr.mxu0 %v1093
    %3808 = vmatpush1.msra.mxu0 %v1092
    %3809 = vmatprep.subr.mxu0 %v1089
    %3810 = vmatpush1.msra.mxu0 %v1088
    %3811 = vmatprep.subr.mxu0 %v1085
    %3812 = vmatpush1.msra.mxu0 %v1084
    %3813 = vmatprep.subr.mxu0 0.0
    %3814 = vmatpush2.msra.mxu0 0.0
    %3815 = vmatprep.subr.mxu0 0.0
    %3816 = vmatpush2.msra.mxu0 0.0
    %3817 = vmatprep.subr.mxu0 0.0
    %3818 = vmatpush2.msra.mxu0 0.0
    %3819 = vmatprep.subr.mxu0 0.0
    %3820 = vmatpush2.msra.mxu0 0.0
    %3821 = vmatprep.subr.mxu0 0.0
    %3822 = vmatpush2.msra.mxu0 0.0
    %3823 = vmatprep.subr.mxu0 0.0
    %3824 = vmatpush2.msra.mxu0 0.0
    %3825 = vmatprep.subr.mxu0 0.0
    %3826 = vmatpush2.msra.mxu0 0.0
    %3827 = vmatprep.subr.mxu0 0.0
    %3828 = vmatpush2.msra.mxu0 0.0
    %3829 = vmatprep.subr.mxu0 0.0
    %3830 = vmatpush2.msra.mxu0 0.0
    %3831 = vmatprep.subr.mxu0 0.0
    %3832 = vmatpush2.msra.mxu0 0.0
    %3833 = vmatprep.subr.mxu0 0.0
    %3834 = vmatpush2.msra.mxu0 0.0
    %3835 = vmatprep.subr.mxu0 0.0
    %3836 = vmatpush2.msra.mxu0 0.0
    %3837 = vmatprep.subr.mxu0 0.0
    %3838 = vmatpush2.msra.mxu0 0.0
    %3839 = vmatprep.subr.mxu0 0.0
    %3840 = vmatpush2.msra.mxu0 0.0
    %3841 = vmatprep.subr.mxu0 0.0
    %3842 = vmatpush2.msra.mxu0 0.0
    %3843 = vmatprep.subr.mxu0 0.0
    %3844 = vmatpush2.msra.mxu0 0.0
    %3845 = vmatprep.mubr.f32.mxu0 0.0
    %3846 = vmatmul.mubr.f32.gmra.mxu0 %v2963
    %v3847 = vpop.f32.mrf.mxu0
    %v3848 = vadd.f32 %v3694, %v3847
    %v3849 = vpop.f32.mrf.mxu0
    %v3850 = vadd.f32 %v3696, %v3849
    %3851 = vmatprep.mubr.f32.mxu0 0.0
    %3852 = vmatmul.mubr.f32.gmra.mxu0 %v2964
    %v3853 = vpop.f32.mrf.mxu0
    %v3854 = vadd.f32 %v3700, %v3853
    %v3855 = vpop.f32.mrf.mxu0
    %v3856 = vadd.f32 %v3702, %v3855
    %3857 = vdwg.mxu0
    %v3858 = vadd.f32 %v3771, %v559
    %v3859 = vadd.f32 %v3773, %v563
    %v3860 = vadd.f32 %v3848, %v567
    %v3861 = vadd.f32 %v3850, %v571
    %v3862 = vadd.f32 %v3777, %v559
    %v3863 = vadd.f32 %v3779, %v563
    %v3864 = vadd.f32 %v3854, %v567
    %v3865 = vadd.f32 %v3856, %v571
    %v3866 = vxor.u32 %v3858, 2147483648
    %v3867 = vxor.u32 %v3862, 2147483648
    %v3868 = vmul.f32 %v3866, 1.442695
    %v3869 = vpow.pop %v3868
    %v3870 = vmul.f32 %v3867, 1.442695
    %v3871 = vpow.pop %v3870
    %v3872 = vadd.f32 %v3869, 1.0
    %v3873 = vadd.f32 %v3871, 1.0
    %v3874 = vrcp.pop %v3872
    %v3875 = vmul.f32 1.0, %v3874
    %v3876 = vrcp.pop %v3873
    %v3877 = vmul.f32 1.0, %v3876
    %v3878 = vxor.u32 %v3859, 2147483648
    %v3879 = vxor.u32 %v3863, 2147483648
    %v3880 = vmul.f32 %v3878, 1.442695
    %v3881 = vpow.pop %v3880
    %v3882 = vmul.f32 %v3879, 1.442695
    %v3883 = vpow.pop %v3882
    %v3884 = vadd.f32 %v3881, 1.0
    %v3885 = vadd.f32 %v3883, 1.0
    %v3886 = vrcp.pop %v3884
    %v3887 = vmul.f32 1.0, %v3886
    %v3888 = vrcp.pop %v3885
    %v3889 = vmul.f32 1.0, %v3888
    %v3890 = vtanh.pop %v3860
    %v3891 = vtanh.pop %v3864
    %v3892 = vxor.u32 %v3861, 2147483648
    %v3893 = vxor.u32 %v3865, 2147483648
    %v3894 = vmul.f32 %v3892, 1.442695
    %v3895 = vpow.pop %v3894
    %v3896 = vmul.f32 %v3893, 1.442695
    %v3897 = vpow.pop %v3896
    %v3898 = vadd.f32 %v3895, 1.0
    %v3899 = vadd.f32 %v3897, 1.0
    %v3900 = vrcp.pop %v3898
    %v3901 = vmul.f32 1.0, %v3900
    %v3902 = vrcp.pop %v3899
    %v3903 = vmul.f32 1.0, %v3902
    %v3904 = vmul.f32 %v3887, %v3323
    %v3905 = vmul.f32 %v3889, %v3324
    %v3906 = vmul.f32 %v3875, %v3890
    %v3907 = vmul.f32 %v3877, %v3891
    %v3908 = vadd.f32 %v3904, %v3906
    %v3909 = vadd.f32 %v3905, %v3907
    %v3910 = vtanh.pop %v3908
    %v3911 = vtanh.pop %v3909
    %v3912 = vmul.f32 %v3901, %v3910
    %v3913 = vmul.f32 %v3903, %v3911
    %s3914 = smul.u32 12, 4
    %s3915 = smul.addr %s3914, 8
    %s3916 = scalar_lea.vmem [#allocation2], %s3915
    %v3917 = vld [vmem:[%s3916] sm:$0xff]
    %v3918 = vld [vmem:[%s3916 + $0x8] sm:$0xff]
    %v3919 = vld [vmem:[%s3916 + $0x10] sm:$0xff]
    %v3920 = vld [vmem:[%s3916 + $0x18] sm:$0xff]
    %v3921 = vld [vmem:[%s3916 + $0x20] sm:$0xff]
    %v3922 = vld [vmem:[%s3916 + $0x28] sm:$0xff]
    %v3923 = vld [vmem:[%s3916 + $0x30] sm:$0xff]
    %v3924 = vld [vmem:[%s3916 + $0x38] sm:$0xff]
    %3925 = vmatprep.subr.mxu0 %v648
    %3926 = vmatpush1.msra.mxu0 %v647
    %3927 = vmatprep.subr.mxu0 %v644
    %3928 = vmatpush1.msra.mxu0 %v643
    %3929 = vmatprep.subr.mxu0 %v640
    %3930 = vmatpush1.msra.mxu0 %v639
    %3931 = vmatprep.subr.mxu0 %v636
    %3932 = vmatpush1.msra.mxu0 %v635
    %3933 = vmatprep.subr.mxu0 %v632
    %3934 = vmatpush1.msra.mxu0 %v631
    %3935 = vmatprep.subr.mxu0 %v628
    %3936 = vmatpush1.msra.mxu0 %v627
    %3937 = vmatprep.subr.mxu0 %v624
    %3938 = vmatpush1.msra.mxu0 %v623
    %3939 = vmatprep.subr.mxu0 %v620
    %3940 = vmatpush1.msra.mxu0 %v619
    %3941 = vmatprep.subr.mxu0 %v616
    %3942 = vmatpush1.msra.mxu0 %v615
    %3943 = vmatprep.subr.mxu0 %v612
    %3944 = vmatpush1.msra.mxu0 %v611
    %3945 = vmatprep.subr.mxu0 %v608
    %3946 = vmatpush1.msra.mxu0 %v607
    %3947 = vmatprep.subr.mxu0 %v604
    %3948 = vmatpush1.msra.mxu0 %v603
    %3949 = vmatprep.subr.mxu0 %v600
    %3950 = vmatpush1.msra.mxu0 %v599
    %3951 = vmatprep.subr.mxu0 %v596
    %3952 = vmatpush1.msra.mxu0 %v595
    %3953 = vmatprep.subr.mxu0 %v592
    %3954 = vmatpush1.msra.mxu0 %v591
    %3955 = vmatprep.subr.mxu0 %v588
    %3956 = vmatpush1.msra.mxu0 %v587
    %3957 = vmatprep.subr.mxu0 0.0
    %3958 = vmatpush2.msra.mxu0 0.0
    %3959 = vmatprep.subr.mxu0 0.0
    %3960 = vmatpush2.msra.mxu0 0.0
    %3961 = vmatprep.subr.mxu0 0.0
    %3962 = vmatpush2.msra.mxu0 0.0
    %3963 = vmatprep.subr.mxu0 0.0
    %3964 = vmatpush2.msra.mxu0 0.0
    %3965 = vmatprep.subr.mxu0 0.0
    %3966 = vmatpush2.msra.mxu0 0.0
    %3967 = vmatprep.subr.mxu0 0.0
    %3968 = vmatpush2.msra.mxu0 0.0
    %3969 = vmatprep.subr.mxu0 0.0
    %3970 = vmatpush2.msra.mxu0 0.0
    %3971 = vmatprep.subr.mxu0 0.0
    %3972 = vmatpush2.msra.mxu0 0.0
    %3973 = vmatprep.subr.mxu0 0.0
    %3974 = vmatpush2.msra.mxu0 0.0
    %3975 = vmatprep.subr.mxu0 0.0
    %3976 = vmatpush2.msra.mxu0 0.0
    %3977 = vmatprep.subr.mxu0 0.0
    %3978 = vmatpush2.msra.mxu0 0.0
    %3979 = vmatprep.subr.mxu0 0.0
    %3980 = vmatpush2.msra.mxu0 0.0
    %3981 = vmatprep.subr.mxu0 0.0
    %3982 = vmatpush2.msra.mxu0 0.0
    %3983 = vmatprep.subr.mxu0 0.0
    %3984 = vmatpush2.msra.mxu0 0.0
    %3985 = vmatprep.subr.mxu0 0.0
    %3986 = vmatpush2.msra.mxu0 0.0
    %3987 = vmatprep.subr.mxu0 0.0
    %3988 = vmatpush2.msra.mxu0 0.0
    %3989 = vmatprep.mubr.f32.mxu0 0.0
    %3990 = vmatmul.mubr.f32.gmra.mxu0 %v3548
    %v3991 = vpop.f32.mrf.mxu0
    %v3992 = vadd.f32 0.0, %v3991
    %v3993 = vpop.f32.mrf.mxu0
    %v3994 = vadd.f32 0.0, %v3993
    %3995 = vmatprep.mubr.f32.mxu0 0.0
    %3996 = vmatmul.mubr.f32.gmra.mxu0 %v3549
    %v3997 = vpop.f32.mrf.mxu0
    %v3998 = vadd.f32 0.0, %v3997
    %v3999 = vpop.f32.mrf.mxu0
    %v4000 = vadd.f32 0.0, %v3999
    %4001 = vdwg.mxu0
    %4002 = vmatprep.subr.mxu0 %v650
    %4003 = vmatpush1.msra.mxu0 %v649
    %4004 = vmatprep.subr.mxu0 %v646
    %4005 = vmatpush1.msra.mxu0 %v645
    %4006 = vmatprep.subr.mxu0 %v642
    %4007 = vmatpush1.msra.mxu0 %v641
    %4008 = vmatprep.subr.mxu0 %v638
    %4009 = vmatpush1.msra.mxu0 %v637
    %4010 = vmatprep.subr.mxu0 %v634
    %4011 = vmatpush1.msra.mxu0 %v633
    %4012 = vmatprep.subr.mxu0 %v630
    %4013 = vmatpush1.msra.mxu0 %v629
    %4014 = vmatprep.subr.mxu0 %v626
    %4015 = vmatpush1.msra.mxu0 %v625
    %4016 = vmatprep.subr.mxu0 %v622
    %4017 = vmatpush1.msra.mxu0 %v621
    %4018 = vmatprep.subr.mxu0 %v618
    %4019 = vmatpush1.msra.mxu0 %v617
    %4020 = vmatprep.subr.mxu0 %v614
    %4021 = vmatpush1.msra.mxu0 %v613
    %4022 = vmatprep.subr.mxu0 %v610
    %4023 = vmatpush1.msra.mxu0 %v609
    %4024 = vmatprep.subr.mxu0 %v606
    %4025 = vmatpush1.msra.mxu0 %v605
    %4026 = vmatprep.subr.mxu0 %v602
    %4027 = vmatpush1.msra.mxu0 %v601
    %4028 = vmatprep.subr.mxu0 %v598
    %4029 = vmatpush1.msra.mxu0 %v597
    %4030 = vmatprep.subr.mxu0 %v594
    %4031 = vmatpush1.msra.mxu0 %v593
    %4032 = vmatprep.subr.mxu0 %v590
    %4033 = vmatpush1.msra.mxu0 %v589
    %4034 = vmatprep.subr.mxu0 0.0
    %4035 = vmatpush2.msra.mxu0 0.0
    %4036 = vmatprep.subr.mxu0 0.0
    %4037 = vmatpush2.msra.mxu0 0.0
    %4038 = vmatprep.subr.mxu0 0.0
    %4039 = vmatpush2.msra.mxu0 0.0
    %4040 = vmatprep.subr.mxu0 0.0
    %4041 = vmatpush2.msra.mxu0 0.0
    %4042 = vmatprep.subr.mxu0 0.0
    %4043 = vmatpush2.msra.mxu0 0.0
    %4044 = vmatprep.subr.mxu0 0.0
    %4045 = vmatpush2.msra.mxu0 0.0
    %4046 = vmatprep.subr.mxu0 0.0
    %4047 = vmatpush2.msra.mxu0 0.0
    %4048 = vmatprep.subr.mxu0 0.0
    %4049 = vmatpush2.msra.mxu0 0.0
    %4050 = vmatprep.subr.mxu0 0.0
    %4051 = vmatpush2.msra.mxu0 0.0
    %4052 = vmatprep.subr.mxu0 0.0
    %4053 = vmatpush2.msra.mxu0 0.0
    %4054 = vmatprep.subr.mxu0 0.0
    %4055 = vmatpush2.msra.mxu0 0.0
    %4056 = vmatprep.subr.mxu0 0.0
    %4057 = vmatpush2.msra.mxu0 0.0
    %4058 = vmatprep.subr.mxu0 0.0
    %4059 = vmatpush2.msra.mxu0 0.0
    %4060 = vmatprep.subr.mxu0 0.0
    %4061 = vmatpush2.msra.mxu0 0.0
    %4062 = vmatprep.subr.mxu0 0.0
    %4063 = vmatpush2.msra.mxu0 0.0
    %4064 = vmatprep.subr.mxu0 0.0
    %4065 = vmatpush2.msra.mxu0 0.0
    %4066 = vmatprep.mubr.f32.mxu0 0.0
    %4067 = vmatmul.mubr.f32.gmra.mxu0 %v3548
    %v4068 = vpop.f32.mrf.mxu0
    %v4069 = vadd.f32 0.0, %v4068
    %v4070 = vpop.f32.mrf.mxu0
    %v4071 = vadd.f32 0.0, %v4070
    %4072 = vmatprep.mubr.f32.mxu0 0.0
    %4073 = vmatmul.mubr.f32.gmra.mxu0 %v3549
    %v4074 = vpop.f32.mrf.mxu0
    %v4075 = vadd.f32 0.0, %v4074
    %v4076 = vpop.f32.mrf.mxu0
    %v4077 = vadd.f32 0.0, %v4076
    %4078 = vdwg.mxu0
    %v4079 = vadd.f32 %v3917, %v3992
    %v4080 = vadd.f32 %v3918, %v3994
    %v4081 = vadd.f32 %v3919, %v4069
    %v4082 = vadd.f32 %v3920, %v4071
    %v4083 = vadd.f32 %v3921, %v3998
    %v4084 = vadd.f32 %v3922, %v4000
    %v4085 = vadd.f32 %v3923, %v4075
    %v4086 = vadd.f32 %v3924, %v4077
    %v4087 = vxor.u32 %v4079, 2147483648
    %v4088 = vxor.u32 %v4083, 2147483648
    %v4089 = vmul.f32 %v4087, 1.442695
    %v4090 = vpow.pop %v4089
    %v4091 = vmul.f32 %v4088, 1.442695
    %v4092 = vpow.pop %v4091
    %v4093 = vadd.f32 %v4090, 1.0
    %v4094 = vadd.f32 %v4092, 1.0
    %v4095 = vrcp.pop %v4093
    %v4096 = vmul.f32 1.0, %v4095
    %v4097 = vrcp.pop %v4094
    %v4098 = vmul.f32 1.0, %v4097
    %v4099 = vxor.u32 %v4080, 2147483648
    %v4100 = vxor.u32 %v4084, 2147483648
    %v4101 = vmul.f32 %v4099, 1.442695
    %v4102 = vpow.pop %v4101
    %v4103 = vmul.f32 %v4100, 1.442695
    %v4104 = vpow.pop %v4103
    %v4105 = vadd.f32 %v4102, 1.0
    %v4106 = vadd.f32 %v4104, 1.0
    %v4107 = vrcp.pop %v4105
    %v4108 = vmul.f32 1.0, %v4107
    %v4109 = vrcp.pop %v4106
    %v4110 = vmul.f32 1.0, %v4109
    %v4111 = vtanh.pop %v4081
    %v4112 = vtanh.pop %v4085
    %v4113 = vxor.u32 %v4082, 2147483648
    %v4114 = vxor.u32 %v4086, 2147483648
    %v4115 = vmul.f32 %v4113, 1.442695
    %v4116 = vpow.pop %v4115
    %v4117 = vmul.f32 %v4114, 1.442695
    %v4118 = vpow.pop %v4117
    %v4119 = vadd.f32 %v4116, 1.0
    %v4120 = vadd.f32 %v4118, 1.0
    %v4121 = vrcp.pop %v4119
    %v4122 = vmul.f32 1.0, %v4121
    %v4123 = vrcp.pop %v4120
    %v4124 = vmul.f32 1.0, %v4123
    %v4125 = vmul.f32 %v4108, %v3544
    %v4126 = vmul.f32 %v4110, %v3545
    %v4127 = vmul.f32 %v4096, %v4111
    %v4128 = vmul.f32 %v4098, %v4112
    %v4129 = vadd.f32 %v4125, %v4127
    %v4130 = vadd.f32 %v4126, %v4128
    %v4131 = vtanh.pop %v4129
    %v4132 = vtanh.pop %v4130
    %v4133 = vmul.f32 %v4122, %v4131
    %v4134 = vmul.f32 %v4124, %v4132
    %4135 = vmatprep.subr.mxu0 %v1207
    %4136 = vmatpush1.msra.mxu0 %v1206
    %4137 = vmatprep.subr.mxu0 %v1203
    %4138 = vmatpush1.msra.mxu0 %v1202
    %4139 = vmatprep.subr.mxu0 %v1199
    %4140 = vmatpush1.msra.mxu0 %v1198
    %4141 = vmatprep.subr.mxu0 %v1195
    %4142 = vmatpush1.msra.mxu0 %v1194
    %4143 = vmatprep.subr.mxu0 %v1191
    %4144 = vmatpush1.msra.mxu0 %v1190
    %4145 = vmatprep.subr.mxu0 %v1187
    %4146 = vmatpush1.msra.mxu0 %v1186
    %4147 = vmatprep.subr.mxu0 %v1183
    %4148 = vmatpush1.msra.mxu0 %v1182
    %4149 = vmatprep.subr.mxu0 %v1179
    %4150 = vmatpush1.msra.mxu0 %v1178
    %4151 = vmatprep.subr.mxu0 %v1175
    %4152 = vmatpush1.msra.mxu0 %v1174
    %4153 = vmatprep.subr.mxu0 %v1171
    %4154 = vmatpush1.msra.mxu0 %v1170
    %4155 = vmatprep.subr.mxu0 %v1167
    %4156 = vmatpush1.msra.mxu0 %v1166
    %4157 = vmatprep.subr.mxu0 %v1163
    %4158 = vmatpush1.msra.mxu0 %v1162
    %4159 = vmatprep.subr.mxu0 %v1159
    %4160 = vmatpush1.msra.mxu0 %v1158
    %4161 = vmatprep.subr.mxu0 %v1155
    %4162 = vmatpush1.msra.mxu0 %v1154
    %4163 = vmatprep.subr.mxu0 %v1151
    %4164 = vmatpush1.msra.mxu0 %v1150
    %4165 = vmatprep.subr.mxu0 %v1147
    %4166 = vmatpush1.msra.mxu0 %v1146
    %4167 = vmatprep.subr.mxu0 0.0
    %4168 = vmatpush2.msra.mxu0 0.0
    %4169 = vmatprep.subr.mxu0 0.0
    %4170 = vmatpush2.msra.mxu0 0.0
    %4171 = vmatprep.subr.mxu0 0.0
    %4172 = vmatpush2.msra.mxu0 0.0
    %4173 = vmatprep.subr.mxu0 0.0
    %4174 = vmatpush2.msra.mxu0 0.0
    %4175 = vmatprep.subr.mxu0 0.0
    %4176 = vmatpush2.msra.mxu0 0.0
    %4177 = vmatprep.subr.mxu0 0.0
    %4178 = vmatpush2.msra.mxu0 0.0
    %4179 = vmatprep.subr.mxu0 0.0
    %4180 = vmatpush2.msra.mxu0 0.0
    %4181 = vmatprep.subr.mxu0 0.0
    %4182 = vmatpush2.msra.mxu0 0.0
    %4183 = vmatprep.subr.mxu0 0.0
    %4184 = vmatpush2.msra.mxu0 0.0
    %4185 = vmatprep.subr.mxu0 0.0
    %4186 = vmatpush2.msra.mxu0 0.0
    %4187 = vmatprep.subr.mxu0 0.0
    %4188 = vmatpush2.msra.mxu0 0.0
    %4189 = vmatprep.subr.mxu0 0.0
    %4190 = vmatpush2.msra.mxu0 0.0
    %4191 = vmatprep.subr.mxu0 0.0
    %4192 = vmatpush2.msra.mxu0 0.0
    %4193 = vmatprep.subr.mxu0 0.0
    %4194 = vmatpush2.msra.mxu0 0.0
    %4195 = vmatprep.subr.mxu0 0.0
    %4196 = vmatpush2.msra.mxu0 0.0
    %4197 = vmatprep.subr.mxu0 0.0
    %4198 = vmatpush2.msra.mxu0 0.0
    %4199 = vmatprep.mubr.f32.mxu0 0.0
    %4200 = vmatmul.mubr.f32.gmra.mxu0 %v3912
    %v4201 = vpop.f32.mrf.mxu0
    %v4202 = vadd.f32 0.0, %v4201
    %v4203 = vpop.f32.mrf.mxu0
    %v4204 = vadd.f32 0.0, %v4203
    %4205 = vmatprep.mubr.f32.mxu0 0.0
    %4206 = vmatmul.mubr.f32.gmra.mxu0 %v3913
    %v4207 = vpop.f32.mrf.mxu0
    %v4208 = vadd.f32 0.0, %v4207
    %v4209 = vpop.f32.mrf.mxu0
    %v4210 = vadd.f32 0.0, %v4209
    %4211 = vdwg.mxu0
    %4212 = vmatprep.subr.mxu0 %v1209
    %4213 = vmatpush1.msra.mxu0 %v1208
    %4214 = vmatprep.subr.mxu0 %v1205
    %4215 = vmatpush1.msra.mxu0 %v1204
    %4216 = vmatprep.subr.mxu0 %v1201
    %4217 = vmatpush1.msra.mxu0 %v1200
    %4218 = vmatprep.subr.mxu0 %v1197
    %4219 = vmatpush1.msra.mxu0 %v1196
    %4220 = vmatprep.subr.mxu0 %v1193
    %4221 = vmatpush1.msra.mxu0 %v1192
    %4222 = vmatprep.subr.mxu0 %v1189
    %4223 = vmatpush1.msra.mxu0 %v1188
    %4224 = vmatprep.subr.mxu0 %v1185
    %4225 = vmatpush1.msra.mxu0 %v1184
    %4226 = vmatprep.subr.mxu0 %v1181
    %4227 = vmatpush1.msra.mxu0 %v1180
    %4228 = vmatprep.subr.mxu0 %v1177
    %4229 = vmatpush1.msra.mxu0 %v1176
    %4230 = vmatprep.subr.mxu0 %v1173
    %4231 = vmatpush1.msra.mxu0 %v1172
    %4232 = vmatprep.subr.mxu0 %v1169
    %4233 = vmatpush1.msra.mxu0 %v1168
    %4234 = vmatprep.subr.mxu0 %v1165
    %4235 = vmatpush1.msra.mxu0 %v1164
    %4236 = vmatprep.subr.mxu0 %v1161
    %4237 = vmatpush1.msra.mxu0 %v1160
    %4238 = vmatprep.subr.mxu0 %v1157
    %4239 = vmatpush1.msra.mxu0 %v1156
    %4240 = vmatprep.subr.mxu0 %v1153
    %4241 = vmatpush1.msra.mxu0 %v1152
    %4242 = vmatprep.subr.mxu0 %v1149
    %4243 = vmatpush1.msra.mxu0 %v1148
    %4244 = vmatprep.subr.mxu0 0.0
    %4245 = vmatpush2.msra.mxu0 0.0
    %4246 = vmatprep.subr.mxu0 0.0
    %4247 = vmatpush2.msra.mxu0 0.0
    %4248 = vmatprep.subr.mxu0 0.0
    %4249 = vmatpush2.msra.mxu0 0.0
    %4250 = vmatprep.subr.mxu0 0.0
    %4251 = vmatpush2.msra.mxu0 0.0
    %4252 = vmatprep.subr.mxu0 0.0
    %4253 = vmatpush2.msra.mxu0 0.0
    %4254 = vmatprep.subr.mxu0 0.0
    %4255 = vmatpush2.msra.mxu0 0.0
    %4256 = vmatprep.subr.mxu0 0.0
    %4257 = vmatpush2.msra.mxu0 0.0
    %4258 = vmatprep.subr.mxu0 0.0
    %4259 = vmatpush2.msra.mxu0 0.0
    %4260 = vmatprep.subr.mxu0 0.0
    %4261 = vmatpush2.msra.mxu0 0.0
    %4262 = vmatprep.subr.mxu0 0.0
    %4263 = vmatpush2.msra.mxu0 0.0
    %4264 = vmatprep.subr.mxu0 0.0
    %4265 = vmatpush2.msra.mxu0 0.0
    %4266 = vmatprep.subr.mxu0 0.0
    %4267 = vmatpush2.msra.mxu0 0.0
    %4268 = vmatprep.subr.mxu0 0.0
    %4269 = vmatpush2.msra.mxu0 0.0
    %4270 = vmatprep.subr.mxu0 0.0
    %4271 = vmatpush2.msra.mxu0 0.0
    %4272 = vmatprep.subr.mxu0 0.0
    %4273 = vmatpush2.msra.mxu0 0.0
    %4274 = vmatprep.subr.mxu0 0.0
    %4275 = vmatpush2.msra.mxu0 0.0
    %4276 = vmatprep.mubr.f32.mxu0 0.0
    %4277 = vmatmul.mubr.f32.gmra.mxu0 %v3912
    %v4278 = vpop.f32.mrf.mxu0
    %v4279 = vadd.f32 0.0, %v4278
    %v4280 = vpop.f32.mrf.mxu0
    %v4281 = vadd.f32 0.0, %v4280
    %4282 = vmatprep.mubr.f32.mxu0 0.0
    %4283 = vmatmul.mubr.f32.gmra.mxu0 %v3913
    %v4284 = vpop.f32.mrf.mxu0
    %v4285 = vadd.f32 0.0, %v4284
    %v4286 = vpop.f32.mrf.mxu0
    %v4287 = vadd.f32 0.0, %v4286
    %4288 = vdwg.mxu0
    %4289 = vmatprep.subr.mxu0 %v1143
    %4290 = vmatpush1.msra.mxu0 %v1142
    %4291 = vmatprep.subr.mxu0 %v1139
    %4292 = vmatpush1.msra.mxu0 %v1138
    %4293 = vmatprep.subr.mxu0 %v1135
    %4294 = vmatpush1.msra.mxu0 %v1134
    %4295 = vmatprep.subr.mxu0 %v1131
    %4296 = vmatpush1.msra.mxu0 %v1130
    %4297 = vmatprep.subr.mxu0 %v1127
    %4298 = vmatpush1.msra.mxu0 %v1126
    %4299 = vmatprep.subr.mxu0 %v1123
    %4300 = vmatpush1.msra.mxu0 %v1122
    %4301 = vmatprep.subr.mxu0 %v1119
    %4302 = vmatpush1.msra.mxu0 %v1118
    %4303 = vmatprep.subr.mxu0 %v1115
    %4304 = vmatpush1.msra.mxu0 %v1114
    %4305 = vmatprep.subr.mxu0 %v1111
    %4306 = vmatpush1.msra.mxu0 %v1110
    %4307 = vmatprep.subr.mxu0 %v1107
    %4308 = vmatpush1.msra.mxu0 %v1106
    %4309 = vmatprep.subr.mxu0 %v1103
    %4310 = vmatpush1.msra.mxu0 %v1102
    %4311 = vmatprep.subr.mxu0 %v1099
    %4312 = vmatpush1.msra.mxu0 %v1098
    %4313 = vmatprep.subr.mxu0 %v1095
    %4314 = vmatpush1.msra.mxu0 %v1094
    %4315 = vmatprep.subr.mxu0 %v1091
    %4316 = vmatpush1.msra.mxu0 %v1090
    %4317 = vmatprep.subr.mxu0 %v1087
    %4318 = vmatpush1.msra.mxu0 %v1086
    %4319 = vmatprep.subr.mxu0 %v1083
    %4320 = vmatpush1.msra.mxu0 %v1082
    %4321 = vmatprep.subr.mxu0 0.0
    %4322 = vmatpush2.msra.mxu0 0.0
    %4323 = vmatprep.subr.mxu0 0.0
    %4324 = vmatpush2.msra.mxu0 0.0
    %4325 = vmatprep.subr.mxu0 0.0
    %4326 = vmatpush2.msra.mxu0 0.0
    %4327 = vmatprep.subr.mxu0 0.0
    %4328 = vmatpush2.msra.mxu0 0.0
    %4329 = vmatprep.subr.mxu0 0.0
    %4330 = vmatpush2.msra.mxu0 0.0
    %4331 = vmatprep.subr.mxu0 0.0
    %4332 = vmatpush2.msra.mxu0 0.0
    %4333 = vmatprep.subr.mxu0 0.0
    %4334 = vmatpush2.msra.mxu0 0.0
    %4335 = vmatprep.subr.mxu0 0.0
    %4336 = vmatpush2.msra.mxu0 0.0
    %4337 = vmatprep.subr.mxu0 0.0
    %4338 = vmatpush2.msra.mxu0 0.0
    %4339 = vmatprep.subr.mxu0 0.0
    %4340 = vmatpush2.msra.mxu0 0.0
    %4341 = vmatprep.subr.mxu0 0.0
    %4342 = vmatpush2.msra.mxu0 0.0
    %4343 = vmatprep.subr.mxu0 0.0
    %4344 = vmatpush2.msra.mxu0 0.0
    %4345 = vmatprep.subr.mxu0 0.0
    %4346 = vmatpush2.msra.mxu0 0.0
    %4347 = vmatprep.subr.mxu0 0.0
    %4348 = vmatpush2.msra.mxu0 0.0
    %4349 = vmatprep.subr.mxu0 0.0
    %4350 = vmatpush2.msra.mxu0 0.0
    %4351 = vmatprep.subr.mxu0 0.0
    %4352 = vmatpush2.msra.mxu0 0.0
    %4353 = vmatprep.mubr.f32.mxu0 0.0
    %4354 = vmatmul.mubr.f32.gmra.mxu0 %v3548
    %v4355 = vpop.f32.mrf.mxu0
    %v4356 = vadd.f32 %v4202, %v4355
    %v4357 = vpop.f32.mrf.mxu0
    %v4358 = vadd.f32 %v4204, %v4357
    %4359 = vmatprep.mubr.f32.mxu0 0.0
    %4360 = vmatmul.mubr.f32.gmra.mxu0 %v3549
    %v4361 = vpop.f32.mrf.mxu0
    %v4362 = vadd.f32 %v4208, %v4361
    %v4363 = vpop.f32.mrf.mxu0
    %v4364 = vadd.f32 %v4210, %v4363
    %4365 = vdwg.mxu0
    %4366 = vmatprep.subr.mxu0 %v1145
    %4367 = vmatpush1.msra.mxu0 %v1144
    %4368 = vmatprep.subr.mxu0 %v1141
    %4369 = vmatpush1.msra.mxu0 %v1140
    %4370 = vmatprep.subr.mxu0 %v1137
    %4371 = vmatpush1.msra.mxu0 %v1136
    %4372 = vmatprep.subr.mxu0 %v1133
    %4373 = vmatpush1.msra.mxu0 %v1132
    %4374 = vmatprep.subr.mxu0 %v1129
    %4375 = vmatpush1.msra.mxu0 %v1128
    %4376 = vmatprep.subr.mxu0 %v1125
    %4377 = vmatpush1.msra.mxu0 %v1124
    %4378 = vmatprep.subr.mxu0 %v1121
    %4379 = vmatpush1.msra.mxu0 %v1120
    %4380 = vmatprep.subr.mxu0 %v1117
    %4381 = vmatpush1.msra.mxu0 %v1116
    %4382 = vmatprep.subr.mxu0 %v1113
    %4383 = vmatpush1.msra.mxu0 %v1112
    %4384 = vmatprep.subr.mxu0 %v1109
    %4385 = vmatpush1.msra.mxu0 %v1108
    %4386 = vmatprep.subr.mxu0 %v1105
    %4387 = vmatpush1.msra.mxu0 %v1104
    %4388 = vmatprep.subr.mxu0 %v1101
    %4389 = vmatpush1.msra.mxu0 %v1100
    %4390 = vmatprep.subr.mxu0 %v1097
    %4391 = vmatpush1.msra.mxu0 %v1096
    %4392 = vmatprep.subr.mxu0 %v1093
    %4393 = vmatpush1.msra.mxu0 %v1092
    %4394 = vmatprep.subr.mxu0 %v1089
    %4395 = vmatpush1.msra.mxu0 %v1088
    %4396 = vmatprep.subr.mxu0 %v1085
    %4397 = vmatpush1.msra.mxu0 %v1084
    %4398 = vmatprep.subr.mxu0 0.0
    %4399 = vmatpush2.msra.mxu0 0.0
    %4400 = vmatprep.subr.mxu0 0.0
    %4401 = vmatpush2.msra.mxu0 0.0
    %4402 = vmatprep.subr.mxu0 0.0
    %4403 = vmatpush2.msra.mxu0 0.0
    %4404 = vmatprep.subr.mxu0 0.0
    %4405 = vmatpush2.msra.mxu0 0.0
    %4406 = vmatprep.subr.mxu0 0.0
    %4407 = vmatpush2.msra.mxu0 0.0
    %4408 = vmatprep.subr.mxu0 0.0
    %4409 = vmatpush2.msra.mxu0 0.0
    %4410 = vmatprep.subr.mxu0 0.0
    %4411 = vmatpush2.msra.mxu0 0.0
    %4412 = vmatprep.subr.mxu0 0.0
    %4413 = vmatpush2.msra.mxu0 0.0
    %4414 = vmatprep.subr.mxu0 0.0
    %4415 = vmatpush2.msra.mxu0 0.0
    %4416 = vmatprep.subr.mxu0 0.0
    %4417 = vmatpush2.msra.mxu0 0.0
    %4418 = vmatprep.subr.mxu0 0.0
    %4419 = vmatpush2.msra.mxu0 0.0
    %4420 = vmatprep.subr.mxu0 0.0
    %4421 = vmatpush2.msra.mxu0 0.0
    %4422 = vmatprep.subr.mxu0 0.0
    %4423 = vmatpush2.msra.mxu0 0.0
    %4424 = vmatprep.subr.mxu0 0.0
    %4425 = vmatpush2.msra.mxu0 0.0
    %4426 = vmatprep.subr.mxu0 0.0
    %4427 = vmatpush2.msra.mxu0 0.0
    %4428 = vmatprep.subr.mxu0 0.0
    %4429 = vmatpush2.msra.mxu0 0.0
    %4430 = vmatprep.mubr.f32.mxu0 0.0
    %4431 = vmatmul.mubr.f32.gmra.mxu0 %v3548
    %v4432 = vpop.f32.mrf.mxu0
    %v4433 = vadd.f32 %v4279, %v4432
    %v4434 = vpop.f32.mrf.mxu0
    %v4435 = vadd.f32 %v4281, %v4434
    %4436 = vmatprep.mubr.f32.mxu0 0.0
    %4437 = vmatmul.mubr.f32.gmra.mxu0 %v3549
    %v4438 = vpop.f32.mrf.mxu0
    %v4439 = vadd.f32 %v4285, %v4438
    %v4440 = vpop.f32.mrf.mxu0
    %v4441 = vadd.f32 %v4287, %v4440
    %4442 = vdwg.mxu0
    %v4443 = vadd.f32 %v4356, %v559
    %v4444 = vadd.f32 %v4358, %v563
    %v4445 = vadd.f32 %v4433, %v567
    %v4446 = vadd.f32 %v4435, %v571
    %v4447 = vadd.f32 %v4362, %v559
    %v4448 = vadd.f32 %v4364, %v563
    %v4449 = vadd.f32 %v4439, %v567
    %v4450 = vadd.f32 %v4441, %v571
    %v4451 = vxor.u32 %v4443, 2147483648
    %v4452 = vxor.u32 %v4447, 2147483648
    %v4453 = vmul.f32 %v4451, 1.442695
    %v4454 = vpow.pop %v4453
    %v4455 = vmul.f32 %v4452, 1.442695
    %v4456 = vpow.pop %v4455
    %v4457 = vadd.f32 %v4454, 1.0
    %v4458 = vadd.f32 %v4456, 1.0
    %v4459 = vrcp.pop %v4457
    %v4460 = vmul.f32 1.0, %v4459
    %v4461 = vrcp.pop %v4458
    %v4462 = vmul.f32 1.0, %v4461
    %v4463 = vxor.u32 %v4444, 2147483648
    %v4464 = vxor.u32 %v4448, 2147483648
    %v4465 = vmul.f32 %v4463, 1.442695
    %v4466 = vpow.pop %v4465
    %v4467 = vmul.f32 %v4464, 1.442695
    %v4468 = vpow.pop %v4467
    %v4469 = vadd.f32 %v4466, 1.0
    %v4470 = vadd.f32 %v4468, 1.0
    %v4471 = vrcp.pop %v4469
    %v4472 = vmul.f32 1.0, %v4471
    %v4473 = vrcp.pop %v4470
    %v4474 = vmul.f32 1.0, %v4473
    %v4475 = vtanh.pop %v4445
    %v4476 = vtanh.pop %v4449
    %v4477 = vxor.u32 %v4446, 2147483648
    %v4478 = vxor.u32 %v4450, 2147483648
    %v4479 = vmul.f32 %v4477, 1.442695
    %v4480 = vpow.pop %v4479
    %v4481 = vmul.f32 %v4478, 1.442695
    %v4482 = vpow.pop %v4481
    %v4483 = vadd.f32 %v4480, 1.0
    %v4484 = vadd.f32 %v4482, 1.0
    %v4485 = vrcp.pop %v4483
    %v4486 = vmul.f32 1.0, %v4485
    %v4487 = vrcp.pop %v4484
    %v4488 = vmul.f32 1.0, %v4487
    %v4489 = vmul.f32 %v4472, %v3908
    %v4490 = vmul.f32 %v4474, %v3909
    %v4491 = vmul.f32 %v4460, %v4475
    %v4492 = vmul.f32 %v4462, %v4476
    %v4493 = vadd.f32 %v4489, %v4491
    %v4494 = vadd.f32 %v4490, %v4492
    %v4495 = vtanh.pop %v4493
    %v4496 = vtanh.pop %v4494
    %v4497 = vmul.f32 %v4486, %v4495
    %v4498 = vmul.f32 %v4488, %v4496
    %s4499 = smul.u32 14, 4
    %s4500 = smul.addr %s4499, 8
    %s4501 = scalar_lea.vmem [#allocation2], %s4500
    %v4502 = vld [vmem:[%s4501] sm:$0xff]
    %v4503 = vld [vmem:[%s4501 + $0x8] sm:$0xff]
    %v4504 = vld [vmem:[%s4501 + $0x10] sm:$0xff]
    %v4505 = vld [vmem:[%s4501 + $0x18] sm:$0xff]
    %v4506 = vld [vmem:[%s4501 + $0x20] sm:$0xff]
    %v4507 = vld [vmem:[%s4501 + $0x28] sm:$0xff]
    %v4508 = vld [vmem:[%s4501 + $0x30] sm:$0xff]
    %v4509 = vld [vmem:[%s4501 + $0x38] sm:$0xff]
    %4510 = vmatprep.subr.mxu0 %v648
    %4511 = vmatpush1.msra.mxu0 %v647
    %4512 = vmatprep.subr.mxu0 %v644
    %4513 = vmatpush1.msra.mxu0 %v643
    %4514 = vmatprep.subr.mxu0 %v640
    %4515 = vmatpush1.msra.mxu0 %v639
    %4516 = vmatprep.subr.mxu0 %v636
    %4517 = vmatpush1.msra.mxu0 %v635
    %4518 = vmatprep.subr.mxu0 %v632
    %4519 = vmatpush1.msra.mxu0 %v631
    %4520 = vmatprep.subr.mxu0 %v628
    %4521 = vmatpush1.msra.mxu0 %v627
    %4522 = vmatprep.subr.mxu0 %v624
    %4523 = vmatpush1.msra.mxu0 %v623
    %4524 = vmatprep.subr.mxu0 %v620
    %4525 = vmatpush1.msra.mxu0 %v619
    %4526 = vmatprep.subr.mxu0 %v616
    %4527 = vmatpush1.msra.mxu0 %v615
    %4528 = vmatprep.subr.mxu0 %v612
    %4529 = vmatpush1.msra.mxu0 %v611
    %4530 = vmatprep.subr.mxu0 %v608
    %4531 = vmatpush1.msra.mxu0 %v607
    %4532 = vmatprep.subr.mxu0 %v604
    %4533 = vmatpush1.msra.mxu0 %v603
    %4534 = vmatprep.subr.mxu0 %v600
    %4535 = vmatpush1.msra.mxu0 %v599
    %4536 = vmatprep.subr.mxu0 %v596
    %4537 = vmatpush1.msra.mxu0 %v595
    %4538 = vmatprep.subr.mxu0 %v592
    %4539 = vmatpush1.msra.mxu0 %v591
    %4540 = vmatprep.subr.mxu0 %v588
    %4541 = vmatpush1.msra.mxu0 %v587
    %4542 = vmatprep.subr.mxu0 0.0
    %4543 = vmatpush2.msra.mxu0 0.0
    %4544 = vmatprep.subr.mxu0 0.0
    %4545 = vmatpush2.msra.mxu0 0.0
    %4546 = vmatprep.subr.mxu0 0.0
    %4547 = vmatpush2.msra.mxu0 0.0
    %4548 = vmatprep.subr.mxu0 0.0
    %4549 = vmatpush2.msra.mxu0 0.0
    %4550 = vmatprep.subr.mxu0 0.0
    %4551 = vmatpush2.msra.mxu0 0.0
    %4552 = vmatprep.subr.mxu0 0.0
    %4553 = vmatpush2.msra.mxu0 0.0
    %4554 = vmatprep.subr.mxu0 0.0
    %4555 = vmatpush2.msra.mxu0 0.0
    %4556 = vmatprep.subr.mxu0 0.0
    %4557 = vmatpush2.msra.mxu0 0.0
    %4558 = vmatprep.subr.mxu0 0.0
    %4559 = vmatpush2.msra.mxu0 0.0
    %4560 = vmatprep.subr.mxu0 0.0
    %4561 = vmatpush2.msra.mxu0 0.0
    %4562 = vmatprep.subr.mxu0 0.0
    %4563 = vmatpush2.msra.mxu0 0.0
    %4564 = vmatprep.subr.mxu0 0.0
    %4565 = vmatpush2.msra.mxu0 0.0
    %4566 = vmatprep.subr.mxu0 0.0
    %4567 = vmatpush2.msra.mxu0 0.0
    %4568 = vmatprep.subr.mxu0 0.0
    %4569 = vmatpush2.msra.mxu0 0.0
    %4570 = vmatprep.subr.mxu0 0.0
    %4571 = vmatpush2.msra.mxu0 0.0
    %4572 = vmatprep.subr.mxu0 0.0
    %4573 = vmatpush2.msra.mxu0 0.0
    %4574 = vmatprep.mubr.f32.mxu0 0.0
    %4575 = vmatmul.mubr.f32.gmra.mxu0 %v4133
    %v4576 = vpop.f32.mrf.mxu0
    %v4577 = vadd.f32 0.0, %v4576
    %v4578 = vpop.f32.mrf.mxu0
    %v4579 = vadd.f32 0.0, %v4578
    %4580 = vmatprep.mubr.f32.mxu0 0.0
    %4581 = vmatmul.mubr.f32.gmra.mxu0 %v4134
    %v4582 = vpop.f32.mrf.mxu0
    %v4583 = vadd.f32 0.0, %v4582
    %v4584 = vpop.f32.mrf.mxu0
    %v4585 = vadd.f32 0.0, %v4584
    %4586 = vdwg.mxu0
    %4587 = vmatprep.subr.mxu0 %v650
    %4588 = vmatpush1.msra.mxu0 %v649
    %4589 = vmatprep.subr.mxu0 %v646
    %4590 = vmatpush1.msra.mxu0 %v645
    %4591 = vmatprep.subr.mxu0 %v642
    %4592 = vmatpush1.msra.mxu0 %v641
    %4593 = vmatprep.subr.mxu0 %v638
    %4594 = vmatpush1.msra.mxu0 %v637
    %4595 = vmatprep.subr.mxu0 %v634
    %4596 = vmatpush1.msra.mxu0 %v633
    %4597 = vmatprep.subr.mxu0 %v630
    %4598 = vmatpush1.msra.mxu0 %v629
    %4599 = vmatprep.subr.mxu0 %v626
    %4600 = vmatpush1.msra.mxu0 %v625
    %4601 = vmatprep.subr.mxu0 %v622
    %4602 = vmatpush1.msra.mxu0 %v621
    %4603 = vmatprep.subr.mxu0 %v618
    %4604 = vmatpush1.msra.mxu0 %v617
    %4605 = vmatprep.subr.mxu0 %v614
    %4606 = vmatpush1.msra.mxu0 %v613
    %4607 = vmatprep.subr.mxu0 %v610
    %4608 = vmatpush1.msra.mxu0 %v609
    %4609 = vmatprep.subr.mxu0 %v606
    %4610 = vmatpush1.msra.mxu0 %v605
    %4611 = vmatprep.subr.mxu0 %v602
    %4612 = vmatpush1.msra.mxu0 %v601
    %4613 = vmatprep.subr.mxu0 %v598
    %4614 = vmatpush1.msra.mxu0 %v597
    %4615 = vmatprep.subr.mxu0 %v594
    %4616 = vmatpush1.msra.mxu0 %v593
    %4617 = vmatprep.subr.mxu0 %v590
    %4618 = vmatpush1.msra.mxu0 %v589
    %4619 = vmatprep.subr.mxu0 0.0
    %4620 = vmatpush2.msra.mxu0 0.0
    %4621 = vmatprep.subr.mxu0 0.0
    %4622 = vmatpush2.msra.mxu0 0.0
    %4623 = vmatprep.subr.mxu0 0.0
    %4624 = vmatpush2.msra.mxu0 0.0
    %4625 = vmatprep.subr.mxu0 0.0
    %4626 = vmatpush2.msra.mxu0 0.0
    %4627 = vmatprep.subr.mxu0 0.0
    %4628 = vmatpush2.msra.mxu0 0.0
    %4629 = vmatprep.subr.mxu0 0.0
    %4630 = vmatpush2.msra.mxu0 0.0
    %4631 = vmatprep.subr.mxu0 0.0
    %4632 = vmatpush2.msra.mxu0 0.0
    %4633 = vmatprep.subr.mxu0 0.0
    %4634 = vmatpush2.msra.mxu0 0.0
    %4635 = vmatprep.subr.mxu0 0.0
    %4636 = vmatpush2.msra.mxu0 0.0
    %4637 = vmatprep.subr.mxu0 0.0
    %4638 = vmatpush2.msra.mxu0 0.0
    %4639 = vmatprep.subr.mxu0 0.0
    %4640 = vmatpush2.msra.mxu0 0.0
    %4641 = vmatprep.subr.mxu0 0.0
    %4642 = vmatpush2.msra.mxu0 0.0
    %4643 = vmatprep.subr.mxu0 0.0
    %4644 = vmatpush2.msra.mxu0 0.0
    %4645 = vmatprep.subr.mxu0 0.0
    %4646 = vmatpush2.msra.mxu0 0.0
    %4647 = vmatprep.subr.mxu0 0.0
    %4648 = vmatpush2.msra.mxu0 0.0
    %4649 = vmatprep.subr.mxu0 0.0
    %4650 = vmatpush2.msra.mxu0 0.0
    %4651 = vmatprep.mubr.f32.mxu0 0.0
    %4652 = vmatmul.mubr.f32.gmra.mxu0 %v4133
    %v4653 = vpop.f32.mrf.mxu0
    %v4654 = vadd.f32 0.0, %v4653
    %v4655 = vpop.f32.mrf.mxu0
    %v4656 = vadd.f32 0.0, %v4655
    %4657 = vmatprep.mubr.f32.mxu0 0.0
    %4658 = vmatmul.mubr.f32.gmra.mxu0 %v4134
    %v4659 = vpop.f32.mrf.mxu0
    %v4660 = vadd.f32 0.0, %v4659
    %v4661 = vpop.f32.mrf.mxu0
    %v4662 = vadd.f32 0.0, %v4661
    %4663 = vdwg.mxu0
    %v4664 = vadd.f32 %v4502, %v4577
    %v4665 = vadd.f32 %v4503, %v4579
    %v4666 = vadd.f32 %v4504, %v4654
    %v4667 = vadd.f32 %v4505, %v4656
    %v4668 = vadd.f32 %v4506, %v4583
    %v4669 = vadd.f32 %v4507, %v4585
    %v4670 = vadd.f32 %v4508, %v4660
    %v4671 = vadd.f32 %v4509, %v4662
    %v4672 = vxor.u32 %v4664, 2147483648
    %v4673 = vxor.u32 %v4668, 2147483648
    %v4674 = vmul.f32 %v4672, 1.442695
    %v4675 = vpow.pop %v4674
    %v4676 = vmul.f32 %v4673, 1.442695
    %v4677 = vpow.pop %v4676
    %v4678 = vadd.f32 %v4675, 1.0
    %v4679 = vadd.f32 %v4677, 1.0
    %v4680 = vrcp.pop %v4678
    %v4681 = vmul.f32 1.0, %v4680
    %v4682 = vrcp.pop %v4679
    %v4683 = vmul.f32 1.0, %v4682
    %v4684 = vxor.u32 %v4665, 2147483648
    %v4685 = vxor.u32 %v4669, 2147483648
    %v4686 = vmul.f32 %v4684, 1.442695
    %v4687 = vpow.pop %v4686
    %v4688 = vmul.f32 %v4685, 1.442695
    %v4689 = vpow.pop %v4688
    %v4690 = vadd.f32 %v4687, 1.0
    %v4691 = vadd.f32 %v4689, 1.0
    %v4692 = vrcp.pop %v4690
    %v4693 = vmul.f32 1.0, %v4692
    %v4694 = vrcp.pop %v4691
    %v4695 = vmul.f32 1.0, %v4694
    %v4696 = vtanh.pop %v4666
    %v4697 = vtanh.pop %v4670
    %v4698 = vxor.u32 %v4667, 2147483648
    %v4699 = vxor.u32 %v4671, 2147483648
    %v4700 = vmul.f32 %v4698, 1.442695
    %v4701 = vpow.pop %v4700
    %v4702 = vmul.f32 %v4699, 1.442695
    %v4703 = vpow.pop %v4702
    %v4704 = vadd.f32 %v4701, 1.0
    %v4705 = vadd.f32 %v4703, 1.0
    %v4706 = vrcp.pop %v4704
    %v4707 = vmul.f32 1.0, %v4706
    %v4708 = vrcp.pop %v4705
    %v4709 = vmul.f32 1.0, %v4708
    %v4710 = vmul.f32 %v4693, %v4129
    %v4711 = vmul.f32 %v4695, %v4130
    %v4712 = vmul.f32 %v4681, %v4696
    %v4713 = vmul.f32 %v4683, %v4697
    %v4714 = vadd.f32 %v4710, %v4712
    %v4715 = vadd.f32 %v4711, %v4713
    %v4716 = vtanh.pop %v4714
    %v4717 = vtanh.pop %v4715
    %v4718 = vmul.f32 %v4707, %v4716
    %v4719 = vmul.f32 %v4709, %v4717
    %4720 = vmatprep.subr.mxu0 %v1207
    %4721 = vmatpush1.msra.mxu0 %v1206
    %4722 = vmatprep.subr.mxu0 %v1203
    %4723 = vmatpush1.msra.mxu0 %v1202
    %4724 = vmatprep.subr.mxu0 %v1199
    %4725 = vmatpush1.msra.mxu0 %v1198
    %4726 = vmatprep.subr.mxu0 %v1195
    %4727 = vmatpush1.msra.mxu0 %v1194
    %4728 = vmatprep.subr.mxu0 %v1191
    %4729 = vmatpush1.msra.mxu0 %v1190
    %4730 = vmatprep.subr.mxu0 %v1187
    %4731 = vmatpush1.msra.mxu0 %v1186
    %4732 = vmatprep.subr.mxu0 %v1183
    %4733 = vmatpush1.msra.mxu0 %v1182
    %4734 = vmatprep.subr.mxu0 %v1179
    %4735 = vmatpush1.msra.mxu0 %v1178
    %4736 = vmatprep.subr.mxu0 %v1175
    %4737 = vmatpush1.msra.mxu0 %v1174
    %4738 = vmatprep.subr.mxu0 %v1171
    %4739 = vmatpush1.msra.mxu0 %v1170
    %4740 = vmatprep.subr.mxu0 %v1167
    %4741 = vmatpush1.msra.mxu0 %v1166
    %4742 = vmatprep.subr.mxu0 %v1163
    %4743 = vmatpush1.msra.mxu0 %v1162
    %4744 = vmatprep.subr.mxu0 %v1159
    %4745 = vmatpush1.msra.mxu0 %v1158
    %4746 = vmatprep.subr.mxu0 %v1155
    %4747 = vmatpush1.msra.mxu0 %v1154
    %4748 = vmatprep.subr.mxu0 %v1151
    %4749 = vmatpush1.msra.mxu0 %v1150
    %4750 = vmatprep.subr.mxu0 %v1147
    %4751 = vmatpush1.msra.mxu0 %v1146
    %4752 = vmatprep.subr.mxu0 0.0
    %4753 = vmatpush2.msra.mxu0 0.0
    %4754 = vmatprep.subr.mxu0 0.0
    %4755 = vmatpush2.msra.mxu0 0.0
    %4756 = vmatprep.subr.mxu0 0.0
    %4757 = vmatpush2.msra.mxu0 0.0
    %4758 = vmatprep.subr.mxu0 0.0
    %4759 = vmatpush2.msra.mxu0 0.0
    %4760 = vmatprep.subr.mxu0 0.0
    %4761 = vmatpush2.msra.mxu0 0.0
    %4762 = vmatprep.subr.mxu0 0.0
    %4763 = vmatpush2.msra.mxu0 0.0
    %4764 = vmatprep.subr.mxu0 0.0
    %4765 = vmatpush2.msra.mxu0 0.0
    %4766 = vmatprep.subr.mxu0 0.0
    %4767 = vmatpush2.msra.mxu0 0.0
    %4768 = vmatprep.subr.mxu0 0.0
    %4769 = vmatpush2.msra.mxu0 0.0
    %4770 = vmatprep.subr.mxu0 0.0
    %4771 = vmatpush2.msra.mxu0 0.0
    %4772 = vmatprep.subr.mxu0 0.0
    %4773 = vmatpush2.msra.mxu0 0.0
    %4774 = vmatprep.subr.mxu0 0.0
    %4775 = vmatpush2.msra.mxu0 0.0
    %4776 = vmatprep.subr.mxu0 0.0
    %4777 = vmatpush2.msra.mxu0 0.0
    %4778 = vmatprep.subr.mxu0 0.0
    %4779 = vmatpush2.msra.mxu0 0.0
    %4780 = vmatprep.subr.mxu0 0.0
    %4781 = vmatpush2.msra.mxu0 0.0
    %4782 = vmatprep.subr.mxu0 0.0
    %4783 = vmatpush2.msra.mxu0 0.0
    %4784 = vmatprep.mubr.f32.mxu0 0.0
    %4785 = vmatmul.mubr.f32.gmra.mxu0 %v4497
    %v4786 = vpop.f32.mrf.mxu0
    %v4787 = vadd.f32 0.0, %v4786
    %v4788 = vpop.f32.mrf.mxu0
    %v4789 = vadd.f32 0.0, %v4788
    %4790 = vmatprep.mubr.f32.mxu0 0.0
    %4791 = vmatmul.mubr.f32.gmra.mxu0 %v4498
    %v4792 = vpop.f32.mrf.mxu0
    %v4793 = vadd.f32 0.0, %v4792
    %v4794 = vpop.f32.mrf.mxu0
    %v4795 = vadd.f32 0.0, %v4794
    %4796 = vdwg.mxu0
    %4797 = vmatprep.subr.mxu0 %v1209
    %4798 = vmatpush1.msra.mxu0 %v1208
    %4799 = vmatprep.subr.mxu0 %v1205
    %4800 = vmatpush1.msra.mxu0 %v1204
    %4801 = vmatprep.subr.mxu0 %v1201
    %4802 = vmatpush1.msra.mxu0 %v1200
    %4803 = vmatprep.subr.mxu0 %v1197
    %4804 = vmatpush1.msra.mxu0 %v1196
    %4805 = vmatprep.subr.mxu0 %v1193
    %4806 = vmatpush1.msra.mxu0 %v1192
    %4807 = vmatprep.subr.mxu0 %v1189
    %4808 = vmatpush1.msra.mxu0 %v1188
    %4809 = vmatprep.subr.mxu0 %v1185
    %4810 = vmatpush1.msra.mxu0 %v1184
    %4811 = vmatprep.subr.mxu0 %v1181
    %4812 = vmatpush1.msra.mxu0 %v1180
    %4813 = vmatprep.subr.mxu0 %v1177
    %4814 = vmatpush1.msra.mxu0 %v1176
    %4815 = vmatprep.subr.mxu0 %v1173
    %4816 = vmatpush1.msra.mxu0 %v1172
    %4817 = vmatprep.subr.mxu0 %v1169
    %4818 = vmatpush1.msra.mxu0 %v1168
    %4819 = vmatprep.subr.mxu0 %v1165
    %4820 = vmatpush1.msra.mxu0 %v1164
    %4821 = vmatprep.subr.mxu0 %v1161
    %4822 = vmatpush1.msra.mxu0 %v1160
    %4823 = vmatprep.subr.mxu0 %v1157
    %4824 = vmatpush1.msra.mxu0 %v1156
    %4825 = vmatprep.subr.mxu0 %v1153
    %4826 = vmatpush1.msra.mxu0 %v1152
    %4827 = vmatprep.subr.mxu0 %v1149
    %4828 = vmatpush1.msra.mxu0 %v1148
    %4829 = vmatprep.subr.mxu0 0.0
    %4830 = vmatpush2.msra.mxu0 0.0
    %4831 = vmatprep.subr.mxu0 0.0
    %4832 = vmatpush2.msra.mxu0 0.0
    %4833 = vmatprep.subr.mxu0 0.0
    %4834 = vmatpush2.msra.mxu0 0.0
    %4835 = vmatprep.subr.mxu0 0.0
    %4836 = vmatpush2.msra.mxu0 0.0
    %4837 = vmatprep.subr.mxu0 0.0
    %4838 = vmatpush2.msra.mxu0 0.0
    %4839 = vmatprep.subr.mxu0 0.0
    %4840 = vmatpush2.msra.mxu0 0.0
    %4841 = vmatprep.subr.mxu0 0.0
    %4842 = vmatpush2.msra.mxu0 0.0
    %4843 = vmatprep.subr.mxu0 0.0
    %4844 = vmatpush2.msra.mxu0 0.0
    %4845 = vmatprep.subr.mxu0 0.0
    %4846 = vmatpush2.msra.mxu0 0.0
    %4847 = vmatprep.subr.mxu0 0.0
    %4848 = vmatpush2.msra.mxu0 0.0
    %4849 = vmatprep.subr.mxu0 0.0
    %4850 = vmatpush2.msra.mxu0 0.0
    %4851 = vmatprep.subr.mxu0 0.0
    %4852 = vmatpush2.msra.mxu0 0.0
    %4853 = vmatprep.subr.mxu0 0.0
    %4854 = vmatpush2.msra.mxu0 0.0
    %4855 = vmatprep.subr.mxu0 0.0
    %4856 = vmatpush2.msra.mxu0 0.0
    %4857 = vmatprep.subr.mxu0 0.0
    %4858 = vmatpush2.msra.mxu0 0.0
    %4859 = vmatprep.subr.mxu0 0.0
    %4860 = vmatpush2.msra.mxu0 0.0
    %4861 = vmatprep.mubr.f32.mxu0 0.0
    %4862 = vmatmul.mubr.f32.gmra.mxu0 %v4497
    %v4863 = vpop.f32.mrf.mxu0
    %v4864 = vadd.f32 0.0, %v4863
    %v4865 = vpop.f32.mrf.mxu0
    %v4866 = vadd.f32 0.0, %v4865
    %4867 = vmatprep.mubr.f32.mxu0 0.0
    %4868 = vmatmul.mubr.f32.gmra.mxu0 %v4498
    %v4869 = vpop.f32.mrf.mxu0
    %v4870 = vadd.f32 0.0, %v4869
    %v4871 = vpop.f32.mrf.mxu0
    %v4872 = vadd.f32 0.0, %v4871
    %4873 = vdwg.mxu0
    %4874 = vmatprep.subr.mxu0 %v1143
    %4875 = vmatpush1.msra.mxu0 %v1142
    %4876 = vmatprep.subr.mxu0 %v1139
    %4877 = vmatpush1.msra.mxu0 %v1138
    %4878 = vmatprep.subr.mxu0 %v1135
    %4879 = vmatpush1.msra.mxu0 %v1134
    %4880 = vmatprep.subr.mxu0 %v1131
    %4881 = vmatpush1.msra.mxu0 %v1130
    %4882 = vmatprep.subr.mxu0 %v1127
    %4883 = vmatpush1.msra.mxu0 %v1126
    %4884 = vmatprep.subr.mxu0 %v1123
    %4885 = vmatpush1.msra.mxu0 %v1122
    %4886 = vmatprep.subr.mxu0 %v1119
    %4887 = vmatpush1.msra.mxu0 %v1118
    %4888 = vmatprep.subr.mxu0 %v1115
    %4889 = vmatpush1.msra.mxu0 %v1114
    %4890 = vmatprep.subr.mxu0 %v1111
    %4891 = vmatpush1.msra.mxu0 %v1110
    %4892 = vmatprep.subr.mxu0 %v1107
    %4893 = vmatpush1.msra.mxu0 %v1106
    %4894 = vmatprep.subr.mxu0 %v1103
    %4895 = vmatpush1.msra.mxu0 %v1102
    %4896 = vmatprep.subr.mxu0 %v1099
    %4897 = vmatpush1.msra.mxu0 %v1098
    %4898 = vmatprep.subr.mxu0 %v1095
    %4899 = vmatpush1.msra.mxu0 %v1094
    %4900 = vmatprep.subr.mxu0 %v1091
    %4901 = vmatpush1.msra.mxu0 %v1090
    %4902 = vmatprep.subr.mxu0 %v1087
    %4903 = vmatpush1.msra.mxu0 %v1086
    %4904 = vmatprep.subr.mxu0 %v1083
    %4905 = vmatpush1.msra.mxu0 %v1082
    %4906 = vmatprep.subr.mxu0 0.0
    %4907 = vmatpush2.msra.mxu0 0.0
    %4908 = vmatprep.subr.mxu0 0.0
    %4909 = vmatpush2.msra.mxu0 0.0
    %4910 = vmatprep.subr.mxu0 0.0
    %4911 = vmatpush2.msra.mxu0 0.0
    %4912 = vmatprep.subr.mxu0 0.0
    %4913 = vmatpush2.msra.mxu0 0.0
    %4914 = vmatprep.subr.mxu0 0.0
    %4915 = vmatpush2.msra.mxu0 0.0
    %4916 = vmatprep.subr.mxu0 0.0
    %4917 = vmatpush2.msra.mxu0 0.0
    %4918 = vmatprep.subr.mxu0 0.0
    %4919 = vmatpush2.msra.mxu0 0.0
    %4920 = vmatprep.subr.mxu0 0.0
    %4921 = vmatpush2.msra.mxu0 0.0
    %4922 = vmatprep.subr.mxu0 0.0
    %4923 = vmatpush2.msra.mxu0 0.0
    %4924 = vmatprep.subr.mxu0 0.0
    %4925 = vmatpush2.msra.mxu0 0.0
    %4926 = vmatprep.subr.mxu0 0.0
    %4927 = vmatpush2.msra.mxu0 0.0
    %4928 = vmatprep.subr.mxu0 0.0
    %4929 = vmatpush2.msra.mxu0 0.0
    %4930 = vmatprep.subr.mxu0 0.0
    %4931 = vmatpush2.msra.mxu0 0.0
    %4932 = vmatprep.subr.mxu0 0.0
    %4933 = vmatpush2.msra.mxu0 0.0
    %4934 = vmatprep.subr.mxu0 0.0
    %4935 = vmatpush2.msra.mxu0 0.0
    %4936 = vmatprep.subr.mxu0 0.0
    %4937 = vmatpush2.msra.mxu0 0.0
    %4938 = vmatprep.mubr.f32.mxu0 0.0
    %4939 = vmatmul.mubr.f32.gmra.mxu0 %v4133
    %v4940 = vpop.f32.mrf.mxu0
    %v4941 = vadd.f32 %v4787, %v4940
    %v4942 = vpop.f32.mrf.mxu0
    %v4943 = vadd.f32 %v4789, %v4942
    %4944 = vmatprep.mubr.f32.mxu0 0.0
    %4945 = vmatmul.mubr.f32.gmra.mxu0 %v4134
    %v4946 = vpop.f32.mrf.mxu0
    %v4947 = vadd.f32 %v4793, %v4946
    %v4948 = vpop.f32.mrf.mxu0
    %v4949 = vadd.f32 %v4795, %v4948
    %4950 = vdwg.mxu0
    %4951 = vmatprep.subr.mxu0 %v1145
    %4952 = vmatpush1.msra.mxu0 %v1144
    %4953 = vmatprep.subr.mxu0 %v1141
    %4954 = vmatpush1.msra.mxu0 %v1140
    %4955 = vmatprep.subr.mxu0 %v1137
    %4956 = vmatpush1.msra.mxu0 %v1136
    %4957 = vmatprep.subr.mxu0 %v1133
    %4958 = vmatpush1.msra.mxu0 %v1132
    %4959 = vmatprep.subr.mxu0 %v1129
    %4960 = vmatpush1.msra.mxu0 %v1128
    %4961 = vmatprep.subr.mxu0 %v1125
    %4962 = vmatpush1.msra.mxu0 %v1124
    %4963 = vmatprep.subr.mxu0 %v1121
    %4964 = vmatpush1.msra.mxu0 %v1120
    %4965 = vmatprep.subr.mxu0 %v1117
    %4966 = vmatpush1.msra.mxu0 %v1116
    %4967 = vmatprep.subr.mxu0 %v1113
    %4968 = vmatpush1.msra.mxu0 %v1112
    %4969 = vmatprep.subr.mxu0 %v1109
    %4970 = vmatpush1.msra.mxu0 %v1108
    %4971 = vmatprep.subr.mxu0 %v1105
    %4972 = vmatpush1.msra.mxu0 %v1104
    %4973 = vmatprep.subr.mxu0 %v1101
    %4974 = vmatpush1.msra.mxu0 %v1100
    %4975 = vmatprep.subr.mxu0 %v1097
    %4976 = vmatpush1.msra.mxu0 %v1096
    %4977 = vmatprep.subr.mxu0 %v1093
    %4978 = vmatpush1.msra.mxu0 %v1092
    %4979 = vmatprep.subr.mxu0 %v1089
    %4980 = vmatpush1.msra.mxu0 %v1088
    %4981 = vmatprep.subr.mxu0 %v1085
    %4982 = vmatpush1.msra.mxu0 %v1084
    %4983 = vmatprep.subr.mxu0 0.0
    %4984 = vmatpush2.msra.mxu0 0.0
    %4985 = vmatprep.subr.mxu0 0.0
    %4986 = vmatpush2.msra.mxu0 0.0
    %4987 = vmatprep.subr.mxu0 0.0
    %4988 = vmatpush2.msra.mxu0 0.0
    %4989 = vmatprep.subr.mxu0 0.0
    %4990 = vmatpush2.msra.mxu0 0.0
    %4991 = vmatprep.subr.mxu0 0.0
    %4992 = vmatpush2.msra.mxu0 0.0
    %4993 = vmatprep.subr.mxu0 0.0
    %4994 = vmatpush2.msra.mxu0 0.0
    %4995 = vmatprep.subr.mxu0 0.0
    %4996 = vmatpush2.msra.mxu0 0.0
    %4997 = vmatprep.subr.mxu0 0.0
    %4998 = vmatpush2.msra.mxu0 0.0
    %4999 = vmatprep.subr.mxu0 0.0
    %5000 = vmatpush2.msra.mxu0 0.0
    %5001 = vmatprep.subr.mxu0 0.0
    %5002 = vmatpush2.msra.mxu0 0.0
    %5003 = vmatprep.subr.mxu0 0.0
    %5004 = vmatpush2.msra.mxu0 0.0
    %5005 = vmatprep.subr.mxu0 0.0
    %5006 = vmatpush2.msra.mxu0 0.0
    %5007 = vmatprep.subr.mxu0 0.0
    %5008 = vmatpush2.msra.mxu0 0.0
    %5009 = vmatprep.subr.mxu0 0.0
    %5010 = vmatpush2.msra.mxu0 0.0
    %5011 = vmatprep.subr.mxu0 0.0
    %5012 = vmatpush2.msra.mxu0 0.0
    %5013 = vmatprep.subr.mxu0 0.0
    %5014 = vmatpush2.msra.mxu0 0.0
    %5015 = vmatprep.mubr.f32.mxu0 0.0
    %5016 = vmatmul.mubr.f32.gmra.mxu0 %v4133
    %v5017 = vpop.f32.mrf.mxu0
    %v5018 = vadd.f32 %v4864, %v5017
    %v5019 = vpop.f32.mrf.mxu0
    %v5020 = vadd.f32 %v4866, %v5019
    %5021 = vmatprep.mubr.f32.mxu0 0.0
    %5022 = vmatmul.mubr.f32.gmra.mxu0 %v4134
    %v5023 = vpop.f32.mrf.mxu0
    %v5024 = vadd.f32 %v4870, %v5023
    %v5025 = vpop.f32.mrf.mxu0
    %v5026 = vadd.f32 %v4872, %v5025
    %5027 = vdwg.mxu0
    %v5028 = vadd.f32 %v4941, %v559
    %v5029 = vadd.f32 %v4943, %v563
    %v5030 = vadd.f32 %v5018, %v567
    %v5031 = vadd.f32 %v5020, %v571
    %v5032 = vadd.f32 %v4947, %v559
    %v5033 = vadd.f32 %v4949, %v563
    %v5034 = vadd.f32 %v5024, %v567
    %v5035 = vadd.f32 %v5026, %v571
    %v5036 = vxor.u32 %v5028, 2147483648
    %v5037 = vxor.u32 %v5032, 2147483648
    %v5038 = vmul.f32 %v5036, 1.442695
    %v5039 = vpow.pop %v5038
    %v5040 = vmul.f32 %v5037, 1.442695
    %v5041 = vpow.pop %v5040
    %v5042 = vadd.f32 %v5039, 1.0
    %v5043 = vadd.f32 %v5041, 1.0
    %v5044 = vrcp.pop %v5042
    %v5045 = vmul.f32 1.0, %v5044
    %v5046 = vrcp.pop %v5043
    %v5047 = vmul.f32 1.0, %v5046
    %v5048 = vxor.u32 %v5029, 2147483648
    %v5049 = vxor.u32 %v5033, 2147483648
    %v5050 = vmul.f32 %v5048, 1.442695
    %v5051 = vpow.pop %v5050
    %v5052 = vmul.f32 %v5049, 1.442695
    %v5053 = vpow.pop %v5052
    %v5054 = vadd.f32 %v5051, 1.0
    %v5055 = vadd.f32 %v5053, 1.0
    %v5056 = vrcp.pop %v5054
    %v5057 = vmul.f32 1.0, %v5056
    %v5058 = vrcp.pop %v5055
    %v5059 = vmul.f32 1.0, %v5058
    %v5060 = vtanh.pop %v5030
    %v5061 = vtanh.pop %v5034
    %v5062 = vxor.u32 %v5031, 2147483648
    %v5063 = vxor.u32 %v5035, 2147483648
    %v5064 = vmul.f32 %v5062, 1.442695
    %v5065 = vpow.pop %v5064
    %v5066 = vmul.f32 %v5063, 1.442695
    %v5067 = vpow.pop %v5066
    %v5068 = vadd.f32 %v5065, 1.0
    %v5069 = vadd.f32 %v5067, 1.0
    %v5070 = vrcp.pop %v5068
    %v5071 = vmul.f32 1.0, %v5070
    %v5072 = vrcp.pop %v5069
    %v5073 = vmul.f32 1.0, %v5072
    %v5074 = vmul.f32 %v5057, %v4493
    %v5075 = vmul.f32 %v5059, %v4494
    %v5076 = vmul.f32 %v5045, %v5060
    %v5077 = vmul.f32 %v5047, %v5061
    %v5078 = vadd.f32 %v5074, %v5076
    %v5079 = vadd.f32 %v5075, %v5077
    %v5080 = vtanh.pop %v5078
    %v5081 = vtanh.pop %v5079
    %v5082 = vmul.f32 %v5071, %v5080
    %v5083 = vmul.f32 %v5073, %v5081
    %5084 = vmatprep.subr.mxu0 %v1207
    %5085 = vmatpush1.msra.mxu0 %v1206
    %5086 = vmatprep.subr.mxu0 %v1203
    %5087 = vmatpush1.msra.mxu0 %v1202
    %5088 = vmatprep.subr.mxu0 %v1199
    %5089 = vmatpush1.msra.mxu0 %v1198
    %5090 = vmatprep.subr.mxu0 %v1195
    %5091 = vmatpush1.msra.mxu0 %v1194
    %5092 = vmatprep.subr.mxu0 %v1191
    %5093 = vmatpush1.msra.mxu0 %v1190
    %5094 = vmatprep.subr.mxu0 %v1187
    %5095 = vmatpush1.msra.mxu0 %v1186
    %5096 = vmatprep.subr.mxu0 %v1183
    %5097 = vmatpush1.msra.mxu0 %v1182
    %5098 = vmatprep.subr.mxu0 %v1179
    %5099 = vmatpush1.msra.mxu0 %v1178
    %5100 = vmatprep.subr.mxu0 %v1175
    %5101 = vmatpush1.msra.mxu0 %v1174
    %5102 = vmatprep.subr.mxu0 %v1171
    %5103 = vmatpush1.msra.mxu0 %v1170
    %5104 = vmatprep.subr.mxu0 %v1167
    %5105 = vmatpush1.msra.mxu0 %v1166
    %5106 = vmatprep.subr.mxu0 %v1163
    %5107 = vmatpush1.msra.mxu0 %v1162
    %5108 = vmatprep.subr.mxu0 %v1159
    %5109 = vmatpush1.msra.mxu0 %v1158
    %5110 = vmatprep.subr.mxu0 %v1155
    %5111 = vmatpush1.msra.mxu0 %v1154
    %5112 = vmatprep.subr.mxu0 %v1151
    %5113 = vmatpush1.msra.mxu0 %v1150
    %5114 = vmatprep.subr.mxu0 %v1147
    %5115 = vmatpush1.msra.mxu0 %v1146
    %5116 = vmatprep.subr.mxu0 0.0
    %5117 = vmatpush2.msra.mxu0 0.0
    %5118 = vmatprep.subr.mxu0 0.0
    %5119 = vmatpush2.msra.mxu0 0.0
    %5120 = vmatprep.subr.mxu0 0.0
    %5121 = vmatpush2.msra.mxu0 0.0
    %5122 = vmatprep.subr.mxu0 0.0
    %5123 = vmatpush2.msra.mxu0 0.0
    %5124 = vmatprep.subr.mxu0 0.0
    %5125 = vmatpush2.msra.mxu0 0.0
    %5126 = vmatprep.subr.mxu0 0.0
    %5127 = vmatpush2.msra.mxu0 0.0
    %5128 = vmatprep.subr.mxu0 0.0
    %5129 = vmatpush2.msra.mxu0 0.0
    %5130 = vmatprep.subr.mxu0 0.0
    %5131 = vmatpush2.msra.mxu0 0.0
    %5132 = vmatprep.subr.mxu0 0.0
    %5133 = vmatpush2.msra.mxu0 0.0
    %5134 = vmatprep.subr.mxu0 0.0
    %5135 = vmatpush2.msra.mxu0 0.0
    %5136 = vmatprep.subr.mxu0 0.0
    %5137 = vmatpush2.msra.mxu0 0.0
    %5138 = vmatprep.subr.mxu0 0.0
    %5139 = vmatpush2.msra.mxu0 0.0
    %5140 = vmatprep.subr.mxu0 0.0
    %5141 = vmatpush2.msra.mxu0 0.0
    %5142 = vmatprep.subr.mxu0 0.0
    %5143 = vmatpush2.msra.mxu0 0.0
    %5144 = vmatprep.subr.mxu0 0.0
    %5145 = vmatpush2.msra.mxu0 0.0
    %5146 = vmatprep.subr.mxu0 0.0
    %5147 = vmatpush2.msra.mxu0 0.0
    %5148 = vmatprep.mubr.f32.mxu0 0.0
    %5149 = vmatmul.mubr.f32.gmra.mxu0 %v5082
    %v5150 = vpop.f32.mrf.mxu0
    %v5151 = vadd.f32 0.0, %v5150
    %v5152 = vpop.f32.mrf.mxu0
    %v5153 = vadd.f32 0.0, %v5152
    %5154 = vmatprep.mubr.f32.mxu0 0.0
    %5155 = vmatmul.mubr.f32.gmra.mxu0 %v5083
    %v5156 = vpop.f32.mrf.mxu0
    %v5157 = vadd.f32 0.0, %v5156
    %v5158 = vpop.f32.mrf.mxu0
    %v5159 = vadd.f32 0.0, %v5158
    %5160 = vdwg.mxu0
    %5161 = vmatprep.subr.mxu0 %v1209
    %5162 = vmatpush1.msra.mxu0 %v1208
    %5163 = vmatprep.subr.mxu0 %v1205
    %5164 = vmatpush1.msra.mxu0 %v1204
    %5165 = vmatprep.subr.mxu0 %v1201
    %5166 = vmatpush1.msra.mxu0 %v1200
    %5167 = vmatprep.subr.mxu0 %v1197
    %5168 = vmatpush1.msra.mxu0 %v1196
    %5169 = vmatprep.subr.mxu0 %v1193
    %5170 = vmatpush1.msra.mxu0 %v1192
    %5171 = vmatprep.subr.mxu0 %v1189
    %5172 = vmatpush1.msra.mxu0 %v1188
    %5173 = vmatprep.subr.mxu0 %v1185
    %5174 = vmatpush1.msra.mxu0 %v1184
    %5175 = vmatprep.subr.mxu0 %v1181
    %5176 = vmatpush1.msra.mxu0 %v1180
    %5177 = vmatprep.subr.mxu0 %v1177
    %5178 = vmatpush1.msra.mxu0 %v1176
    %5179 = vmatprep.subr.mxu0 %v1173
    %5180 = vmatpush1.msra.mxu0 %v1172
    %5181 = vmatprep.subr.mxu0 %v1169
    %5182 = vmatpush1.msra.mxu0 %v1168
    %5183 = vmatprep.subr.mxu0 %v1165
    %5184 = vmatpush1.msra.mxu0 %v1164
    %5185 = vmatprep.subr.mxu0 %v1161
    %5186 = vmatpush1.msra.mxu0 %v1160
    %5187 = vmatprep.subr.mxu0 %v1157
    %5188 = vmatpush1.msra.mxu0 %v1156
    %5189 = vmatprep.subr.mxu0 %v1153
    %5190 = vmatpush1.msra.mxu0 %v1152
    %5191 = vmatprep.subr.mxu0 %v1149
    %5192 = vmatpush1.msra.mxu0 %v1148
    %5193 = vmatprep.subr.mxu0 0.0
    %5194 = vmatpush2.msra.mxu0 0.0
    %5195 = vmatprep.subr.mxu0 0.0
    %5196 = vmatpush2.msra.mxu0 0.0
    %5197 = vmatprep.subr.mxu0 0.0
    %5198 = vmatpush2.msra.mxu0 0.0
    %5199 = vmatprep.subr.mxu0 0.0
    %5200 = vmatpush2.msra.mxu0 0.0
    %5201 = vmatprep.subr.mxu0 0.0
    %5202 = vmatpush2.msra.mxu0 0.0
    %5203 = vmatprep.subr.mxu0 0.0
    %5204 = vmatpush2.msra.mxu0 0.0
    %5205 = vmatprep.subr.mxu0 0.0
    %5206 = vmatpush2.msra.mxu0 0.0
    %5207 = vmatprep.subr.mxu0 0.0
    %5208 = vmatpush2.msra.mxu0 0.0
    %5209 = vmatprep.subr.mxu0 0.0
    %5210 = vmatpush2.msra.mxu0 0.0
    %5211 = vmatprep.subr.mxu0 0.0
    %5212 = vmatpush2.msra.mxu0 0.0
    %5213 = vmatprep.subr.mxu0 0.0
    %5214 = vmatpush2.msra.mxu0 0.0
    %5215 = vmatprep.subr.mxu0 0.0
    %5216 = vmatpush2.msra.mxu0 0.0
    %5217 = vmatprep.subr.mxu0 0.0
    %5218 = vmatpush2.msra.mxu0 0.0
    %5219 = vmatprep.subr.mxu0 0.0
    %5220 = vmatpush2.msra.mxu0 0.0
    %5221 = vmatprep.subr.mxu0 0.0
    %5222 = vmatpush2.msra.mxu0 0.0
    %5223 = vmatprep.subr.mxu0 0.0
    %5224 = vmatpush2.msra.mxu0 0.0
    %5225 = vmatprep.mubr.f32.mxu0 0.0
    %5226 = vmatmul.mubr.f32.gmra.mxu0 %v5082
    %v5227 = vpop.f32.mrf.mxu0
    %v5228 = vadd.f32 0.0, %v5227
    %v5229 = vpop.f32.mrf.mxu0
    %v5230 = vadd.f32 0.0, %v5229
    %5231 = vmatprep.mubr.f32.mxu0 0.0
    %5232 = vmatmul.mubr.f32.gmra.mxu0 %v5083
    %v5233 = vpop.f32.mrf.mxu0
    %v5234 = vadd.f32 0.0, %v5233
    %v5235 = vpop.f32.mrf.mxu0
    %v5236 = vadd.f32 0.0, %v5235
    %5237 = vdwg.mxu0
    %5238 = vmatprep.subr.mxu0 %v1143
    %5239 = vmatpush1.msra.mxu0 %v1142
    %5240 = vmatprep.subr.mxu0 %v1139
    %5241 = vmatpush1.msra.mxu0 %v1138
    %5242 = vmatprep.subr.mxu0 %v1135
    %5243 = vmatpush1.msra.mxu0 %v1134
    %5244 = vmatprep.subr.mxu0 %v1131
    %5245 = vmatpush1.msra.mxu0 %v1130
    %5246 = vmatprep.subr.mxu0 %v1127
    %5247 = vmatpush1.msra.mxu0 %v1126
    %5248 = vmatprep.subr.mxu0 %v1123
    %5249 = vmatpush1.msra.mxu0 %v1122
    %5250 = vmatprep.subr.mxu0 %v1119
    %5251 = vmatpush1.msra.mxu0 %v1118
    %5252 = vmatprep.subr.mxu0 %v1115
    %5253 = vmatpush1.msra.mxu0 %v1114
    %5254 = vmatprep.subr.mxu0 %v1111
    %5255 = vmatpush1.msra.mxu0 %v1110
    %5256 = vmatprep.subr.mxu0 %v1107
    %5257 = vmatpush1.msra.mxu0 %v1106
    %5258 = vmatprep.subr.mxu0 %v1103
    %5259 = vmatpush1.msra.mxu0 %v1102
    %5260 = vmatprep.subr.mxu0 %v1099
    %5261 = vmatpush1.msra.mxu0 %v1098
    %5262 = vmatprep.subr.mxu0 %v1095
    %5263 = vmatpush1.msra.mxu0 %v1094
    %5264 = vmatprep.subr.mxu0 %v1091
    %5265 = vmatpush1.msra.mxu0 %v1090
    %5266 = vmatprep.subr.mxu0 %v1087
    %5267 = vmatpush1.msra.mxu0 %v1086
    %5268 = vmatprep.subr.mxu0 %v1083
    %5269 = vmatpush1.msra.mxu0 %v1082
    %5270 = vmatprep.subr.mxu0 0.0
    %5271 = vmatpush2.msra.mxu0 0.0
    %5272 = vmatprep.subr.mxu0 0.0
    %5273 = vmatpush2.msra.mxu0 0.0
    %5274 = vmatprep.subr.mxu0 0.0
    %5275 = vmatpush2.msra.mxu0 0.0
    %5276 = vmatprep.subr.mxu0 0.0
    %5277 = vmatpush2.msra.mxu0 0.0
    %5278 = vmatprep.subr.mxu0 0.0
    %5279 = vmatpush2.msra.mxu0 0.0
    %5280 = vmatprep.subr.mxu0 0.0
    %5281 = vmatpush2.msra.mxu0 0.0
    %5282 = vmatprep.subr.mxu0 0.0
    %5283 = vmatpush2.msra.mxu0 0.0
    %5284 = vmatprep.subr.mxu0 0.0
    %5285 = vmatpush2.msra.mxu0 0.0
    %5286 = vmatprep.subr.mxu0 0.0
    %5287 = vmatpush2.msra.mxu0 0.0
    %5288 = vmatprep.subr.mxu0 0.0
    %5289 = vmatpush2.msra.mxu0 0.0
    %5290 = vmatprep.subr.mxu0 0.0
    %5291 = vmatpush2.msra.mxu0 0.0
    %5292 = vmatprep.subr.mxu0 0.0
    %5293 = vmatpush2.msra.mxu0 0.0
    %5294 = vmatprep.subr.mxu0 0.0
    %5295 = vmatpush2.msra.mxu0 0.0
    %5296 = vmatprep.subr.mxu0 0.0
    %5297 = vmatpush2.msra.mxu0 0.0
    %5298 = vmatprep.subr.mxu0 0.0
    %5299 = vmatpush2.msra.mxu0 0.0
    %5300 = vmatprep.subr.mxu0 0.0
    %5301 = vmatpush2.msra.mxu0 0.0
    %5302 = vmatprep.mubr.f32.mxu0 0.0
    %5303 = vmatmul.mubr.f32.gmra.mxu0 %v4718
    %v5304 = vpop.f32.mrf.mxu0
    %v5305 = vadd.f32 %v5151, %v5304
    %v5306 = vpop.f32.mrf.mxu0
    %v5307 = vadd.f32 %v5153, %v5306
    %5308 = vmatprep.mubr.f32.mxu0 0.0
    %5309 = vmatmul.mubr.f32.gmra.mxu0 %v4719
    %v5310 = vpop.f32.mrf.mxu0
    %v5311 = vadd.f32 %v5157, %v5310
    %v5312 = vpop.f32.mrf.mxu0
    %v5313 = vadd.f32 %v5159, %v5312
    %5314 = vdwg.mxu0
    %5315 = vmatprep.subr.mxu0 %v1145
    %5316 = vmatpush1.msra.mxu0 %v1144
    %5317 = vmatprep.subr.mxu0 %v1141
    %5318 = vmatpush1.msra.mxu0 %v1140
    %5319 = vmatprep.subr.mxu0 %v1137
    %5320 = vmatpush1.msra.mxu0 %v1136
    %5321 = vmatprep.subr.mxu0 %v1133
    %5322 = vmatpush1.msra.mxu0 %v1132
    %5323 = vmatprep.subr.mxu0 %v1129
    %5324 = vmatpush1.msra.mxu0 %v1128
    %5325 = vmatprep.subr.mxu0 %v1125
    %5326 = vmatpush1.msra.mxu0 %v1124
    %5327 = vmatprep.subr.mxu0 %v1121
    %5328 = vmatpush1.msra.mxu0 %v1120
    %5329 = vmatprep.subr.mxu0 %v1117
    %5330 = vmatpush1.msra.mxu0 %v1116
    %5331 = vmatprep.subr.mxu0 %v1113
    %5332 = vmatpush1.msra.mxu0 %v1112
    %5333 = vmatprep.subr.mxu0 %v1109
    %5334 = vmatpush1.msra.mxu0 %v1108
    %5335 = vmatprep.subr.mxu0 %v1105
    %5336 = vmatpush1.msra.mxu0 %v1104
    %5337 = vmatprep.subr.mxu0 %v1101
    %5338 = vmatpush1.msra.mxu0 %v1100
    %5339 = vmatprep.subr.mxu0 %v1097
    %5340 = vmatpush1.msra.mxu0 %v1096
    %5341 = vmatprep.subr.mxu0 %v1093
    %5342 = vmatpush1.msra.mxu0 %v1092
    %5343 = vmatprep.subr.mxu0 %v1089
    %5344 = vmatpush1.msra.mxu0 %v1088
    %5345 = vmatprep.subr.mxu0 %v1085
    %5346 = vmatpush1.msra.mxu0 %v1084
    %5347 = vmatprep.subr.mxu0 0.0
    %5348 = vmatpush2.msra.mxu0 0.0
    %5349 = vmatprep.subr.mxu0 0.0
    %5350 = vmatpush2.msra.mxu0 0.0
    %5351 = vmatprep.subr.mxu0 0.0
    %5352 = vmatpush2.msra.mxu0 0.0
    %5353 = vmatprep.subr.mxu0 0.0
    %5354 = vmatpush2.msra.mxu0 0.0
    %5355 = vmatprep.subr.mxu0 0.0
    %5356 = vmatpush2.msra.mxu0 0.0
    %5357 = vmatprep.subr.mxu0 0.0
    %5358 = vmatpush2.msra.mxu0 0.0
    %5359 = vmatprep.subr.mxu0 0.0
    %5360 = vmatpush2.msra.mxu0 0.0
    %5361 = vmatprep.subr.mxu0 0.0
    %5362 = vmatpush2.msra.mxu0 0.0
    %5363 = vmatprep.subr.mxu0 0.0
    %5364 = vmatpush2.msra.mxu0 0.0
    %5365 = vmatprep.subr.mxu0 0.0
    %5366 = vmatpush2.msra.mxu0 0.0
    %5367 = vmatprep.subr.mxu0 0.0
    %5368 = vmatpush2.msra.mxu0 0.0
    %5369 = vmatprep.subr.mxu0 0.0
    %5370 = vmatpush2.msra.mxu0 0.0
    %5371 = vmatprep.subr.mxu0 0.0
    %5372 = vmatpush2.msra.mxu0 0.0
    %5373 = vmatprep.subr.mxu0 0.0
    %5374 = vmatpush2.msra.mxu0 0.0
    %5375 = vmatprep.subr.mxu0 0.0
    %5376 = vmatpush2.msra.mxu0 0.0
    %5377 = vmatprep.subr.mxu0 0.0
    %5378 = vmatpush2.msra.mxu0 0.0
    %5379 = vmatprep.mubr.f32.mxu0 0.0
    %5380 = vmatmul.mubr.f32.gmra.mxu0 %v4718
    %v5381 = vpop.f32.mrf.mxu0
    %v5382 = vadd.f32 %v5228, %v5381
    %v5383 = vpop.f32.mrf.mxu0
    %v5384 = vadd.f32 %v5230, %v5383
    %5385 = vmatprep.mubr.f32.mxu0 0.0
    %5386 = vmatmul.mubr.f32.gmra.mxu0 %v4719
    %v5387 = vpop.f32.mrf.mxu0
    %v5388 = vadd.f32 %v5234, %v5387
    %v5389 = vpop.f32.mrf.mxu0
    %v5390 = vadd.f32 %v5236, %v5389
    %5391 = vdwg.mxu0
    %v5392 = vadd.f32 %v5305, %v559
    %v5393 = vadd.f32 %v5307, %v563
    %v5394 = vadd.f32 %v5382, %v567
    %v5395 = vadd.f32 %v5384, %v571
    %v5396 = vadd.f32 %v5311, %v559
    %v5397 = vadd.f32 %v5313, %v563
    %v5398 = vadd.f32 %v5388, %v567
    %v5399 = vadd.f32 %v5390, %v571
    %v5400 = vxor.u32 %v5392, 2147483648
    %v5401 = vxor.u32 %v5396, 2147483648
    %v5402 = vmul.f32 %v5400, 1.442695
    %v5403 = vpow.pop %v5402
    %v5404 = vmul.f32 %v5401, 1.442695
    %v5405 = vpow.pop %v5404
    %v5406 = vadd.f32 %v5403, 1.0
    %v5407 = vadd.f32 %v5405, 1.0
    %v5408 = vrcp.pop %v5406
    %v5409 = vmul.f32 1.0, %v5408
    %v5410 = vrcp.pop %v5407
    %v5411 = vmul.f32 1.0, %v5410
    %v5412 = vxor.u32 %v5393, 2147483648
    %v5413 = vxor.u32 %v5397, 2147483648
    %v5414 = vmul.f32 %v5412, 1.442695
    %v5415 = vpow.pop %v5414
    %v5416 = vmul.f32 %v5413, 1.442695
    %v5417 = vpow.pop %v5416
    %v5418 = vadd.f32 %v5415, 1.0
    %v5419 = vadd.f32 %v5417, 1.0
    %v5420 = vrcp.pop %v5418
    %v5421 = vmul.f32 1.0, %v5420
    %v5422 = vrcp.pop %v5419
    %v5423 = vmul.f32 1.0, %v5422
    %v5424 = vtanh.pop %v5394
    %v5425 = vtanh.pop %v5398
    %v5426 = vxor.u32 %v5395, 2147483648
    %v5427 = vxor.u32 %v5399, 2147483648
    %v5428 = vmul.f32 %v5426, 1.442695
    %v5429 = vpow.pop %v5428
    %v5430 = vmul.f32 %v5427, 1.442695
    %v5431 = vpow.pop %v5430
    %v5432 = vadd.f32 %v5429, 1.0
    %v5433 = vadd.f32 %v5431, 1.0
    %v5434 = vrcp.pop %v5432
    %v5435 = vmul.f32 1.0, %v5434
    %v5436 = vrcp.pop %v5433
    %v5437 = vmul.f32 1.0, %v5436
    %v5438 = vmul.f32 %v5421, %v5078
    %v5439 = vmul.f32 %v5423, %v5079
    %v5440 = vmul.f32 %v5409, %v5424
    %v5441 = vmul.f32 %v5411, %v5425
    %v5442 = vadd.f32 %v5438, %v5440
    %v5443 = vadd.f32 %v5439, %v5441
    %v5444 = vtanh.pop %v5442
    %v5445 = vtanh.pop %v5443
    %v5446 = vmul.f32 %v5435, %v5444
    %v5447 = vmul.f32 %v5437, %v5445
    %v5448 = vld [vmem:[%s7] sm:$0xff]
    %v5449 = vld [vmem:[%s7 + $0x8] sm:$0xff]
    %v5450 = vld [vmem:[%s7 + $0x10] sm:$0xff]
    %v5451 = vld [vmem:[%s7 + $0x18] sm:$0xff]
    %v5452 = vld [vmem:[%s7 + $0x20] sm:$0xff]
    %v5453 = vld [vmem:[%s7 + $0x28] sm:$0xff]
    %v5454 = vld [vmem:[%s7 + $0x30] sm:$0xff]
    %v5455 = vld [vmem:[%s7 + $0x38] sm:$0xff]
    %v5456 = vld [vmem:[%s7 + $0x40] sm:$0xff]
    %v5457 = vld [vmem:[%s7 + $0x48] sm:$0xff]
    %v5458 = vld [vmem:[%s7 + $0x50] sm:$0xff]
    %v5459 = vld [vmem:[%s7 + $0x58] sm:$0xff]
    %v5460 = vld [vmem:[%s7 + $0x60] sm:$0xff]
    %v5461 = vld [vmem:[%s7 + $0x68] sm:$0xff]
    %v5462 = vld [vmem:[%s7 + $0x70] sm:$0xff]
    %v5463 = vld [vmem:[%s7 + $0x78] sm:$0xff]
    %v5464 = vld [vmem:[%s8] sm:$0x1]
    %v5466 = vlaneseq
    %v5467 = vshrl.u32 %v5466, 7
    %v5468 = vsub.s32 0, %v5467
    %v5469 = vrot.slane %v5464, %v5468
    %5471 = vmatprep.subr.mxu0 0.0
    %5472 = vmatpush1.msra.mxu0 %v5463
    %5473 = vmatprep.subr.mxu0 0.0
    %5474 = vmatpush1.msra.mxu0 %v5462
    %5475 = vmatprep.subr.mxu0 0.0
    %5476 = vmatpush1.msra.mxu0 %v5461
    %5477 = vmatprep.subr.mxu0 0.0
    %5478 = vmatpush1.msra.mxu0 %v5460
    %5479 = vmatprep.subr.mxu0 0.0
    %5480 = vmatpush1.msra.mxu0 %v5459
    %5481 = vmatprep.subr.mxu0 0.0
    %5482 = vmatpush1.msra.mxu0 %v5458
    %5483 = vmatprep.subr.mxu0 0.0
    %5484 = vmatpush1.msra.mxu0 %v5457
    %5485 = vmatprep.subr.mxu0 0.0
    %5486 = vmatpush1.msra.mxu0 %v5456
    %5487 = vmatprep.subr.mxu0 0.0
    %5488 = vmatpush1.msra.mxu0 %v5455
    %5489 = vmatprep.subr.mxu0 0.0
    %5490 = vmatpush1.msra.mxu0 %v5454
    %5491 = vmatprep.subr.mxu0 0.0
    %5492 = vmatpush1.msra.mxu0 %v5453
    %5493 = vmatprep.subr.mxu0 0.0
    %5494 = vmatpush1.msra.mxu0 %v5452
    %5495 = vmatprep.subr.mxu0 0.0
    %5496 = vmatpush1.msra.mxu0 %v5451
    %5497 = vmatprep.subr.mxu0 0.0
    %5498 = vmatpush1.msra.mxu0 %v5450
    %5499 = vmatprep.subr.mxu0 0.0
    %5500 = vmatpush1.msra.mxu0 %v5449
    %5501 = vmatprep.subr.mxu0 0.0
    %5502 = vmatpush1.msra.mxu0 %v5448
    %5503 = vmatprep.subr.mxu0 0.0
    %5504 = vmatpush2.msra.mxu0 0.0
    %5505 = vmatprep.subr.mxu0 0.0
    %5506 = vmatpush2.msra.mxu0 0.0
    %5507 = vmatprep.subr.mxu0 0.0
    %5508 = vmatpush2.msra.mxu0 0.0
    %5509 = vmatprep.subr.mxu0 0.0
    %5510 = vmatpush2.msra.mxu0 0.0
    %5511 = vmatprep.subr.mxu0 0.0
    %5512 = vmatpush2.msra.mxu0 0.0
    %5513 = vmatprep.subr.mxu0 0.0
    %5514 = vmatpush2.msra.mxu0 0.0
    %5515 = vmatprep.subr.mxu0 0.0
    %5516 = vmatpush2.msra.mxu0 0.0
    %5517 = vmatprep.subr.mxu0 0.0
    %5518 = vmatpush2.msra.mxu0 0.0
    %5519 = vmatprep.subr.mxu0 0.0
    %5520 = vmatpush2.msra.mxu0 0.0
    %5521 = vmatprep.subr.mxu0 0.0
    %5522 = vmatpush2.msra.mxu0 0.0
    %5523 = vmatprep.subr.mxu0 0.0
    %5524 = vmatpush2.msra.mxu0 0.0
    %5525 = vmatprep.subr.mxu0 0.0
    %5526 = vmatpush2.msra.mxu0 0.0
    %5527 = vmatprep.subr.mxu0 0.0
    %5528 = vmatpush2.msra.mxu0 0.0
    %5529 = vmatprep.subr.mxu0 0.0
    %5530 = vmatpush2.msra.mxu0 0.0
    %5531 = vmatprep.subr.mxu0 0.0
    %5532 = vmatpush2.msra.mxu0 0.0
    %5533 = vmatprep.subr.mxu0 0.0
    %5534 = vmatpush2.msra.mxu0 0.0
    %5535 = vmatprep.mubr.f32.mxu0 0.0
    %5536 = vmatmul.mubr.f32.gmra.mxu0 %v5446
    %v5537 = vpop.f32.mrf.mxu0
    %v5538 = vadd.f32 %v5469, %v5537
    %v5539 = vpop.f32.mrf.mxu0
    %5540 = vmatprep.mubr.f32.mxu0 0.0
    %5541 = vmatmul.mubr.f32.gmra.mxu0 %v5447
    %v5542 = vpop.f32.mrf.mxu0
    %v5543 = vadd.f32 %v5469, %v5542
    %v5544 = vpop.f32.mrf.mxu0
    %5545 = vdwg.mxu0
    %v5546 = vxor.u32 %v5538, 2147483648
    %v5547 = vxor.u32 %v5543, 2147483648
    %v5548 = vmul.f32 %v5546, 1.442695
    %v5549 = vpow.pop %v5548
    %v5550 = vmul.f32 %v5547, 1.442695
    %v5551 = vpow.pop %v5550
    %v5552 = vadd.f32 %v5549, 1.0
    %v5553 = vadd.f32 %v5551, 1.0
    %v5554 = vrcp.pop %v5552
    %v5555 = vmul.f32 1.0, %v5554
    %v5556 = vrcp.pop %v5553
    %v5557 = vmul.f32 1.0, %v5556
    %vm5558 = vcmask 31744
    %5559 = vst.msk [vmem:[%s9] sm:$0xff] %vm5558, %v5555
    %5560 = vst.msk [vmem:[%s9 + $0x8] sm:$0xff] %vm5558, %v5557
    // Predicated region
    $region50: #{tpu_custom_call.1} parent=1 // pred_check
      _
    $region51: #{tpu_custom_call.1} parent=1 // pred_check_branch
      %5562 = sbr.rel (0) target = $region53
    $region52: #{tpu_custom_call.1} parent=1 // pred_region
      _
    $region53: #{tpu_custom_call.1} parent=1 // pred_fallthru
      _
    // Predicated region
    $region54: #{tpu_custom_call.1} parent=1 // pred_check
      _
    $region55: #{tpu_custom_call.1} parent=1 // pred_check_branch
      %5564 = sbr.rel (0) target = $region57
    $region56: #{tpu_custom_call.1} parent=1 // pred_region
      _
    $region57: #{tpu_custom_call.1} parent=1 // pred_fallthru
      _
    %5565 = vsyncpa [#allocation4], 1
    %5566 = vsyncpa [#allocation6], 1

</llo_original>
